<compile_context>
chip_gen: v7x
topology: tpu7x:2x2x1
jax: 0.10.0
libtpu: 0.0.40
codegen_flags: <defaults>
</compile_context>

<pallas_src>
import jax
import jax.numpy as jnp
from jax import lax
from jax.experimental import pallas as pl
from jax.experimental.pallas import tpu as pltpu


def _double_conv_kernel(x_ref, w1_ref, b1_ref, w2_ref, b2_ref, o_ref,
                        xpad_ref, ypad_ref):
    """One image of the fused DoubleConv.

    x_ref    : (1, Cin, H*W)    image, channels-major (free reshape of NCHW)
    w1_ref   : (9, Cin, Cout)   conv1 weights, tap-major (t = dy*3 + dx)
    b1_ref   : (1, Cout)
    w2_ref   : (9, Cout, Cout)  conv2 weights, tap-major
    b2_ref   : (1, Cout)
    o_ref    : (1, Cout, H*W)   output, channels-major (free reshape to NCHW)
    xpad_ref : (H+2, W+2, Cin)  zero-padded conv1 input (VMEM scratch)
    ypad_ref : (H+2, W+2, Cout) zero-padded conv2 input (VMEM scratch)
    """
    Hp, Wp, Cin = xpad_ref.shape
    Cout = ypad_ref.shape[-1]
    H, W = Hp - 2, Wp - 2
    HW = H * W

    # ---- Stage the zero-padded input in VMEM (no HBM padding pass anywhere).
    xpad_ref[...] = jnp.zeros_like(xpad_ref)
    x_hwc = jnp.transpose(x_ref[0].astype(jnp.float32), (1, 0)).reshape(H, W, Cin)
    xpad_ref[1:H + 1, 1:W + 1, :] = x_hwc

    # ---- conv1 + bias + ReLU6: nine shifted MXU matmuls, f32 accumulation.
    w1 = w1_ref[...].astype(jnp.float32)
    acc1 = jnp.zeros((HW, Cout), jnp.float32)
    for t in range(9):
        dy, dx = divmod(t, 3)
        patch = xpad_ref[dy:dy + H, dx:dx + W, :].reshape(HW, Cin)
        acc1 = acc1 + jnp.dot(patch, w1[t], preferred_element_type=jnp.float32)
    y = jnp.clip(acc1 + b1_ref[...].astype(jnp.float32), 0.0, 6.0)

    # ---- Stage conv1's output as the zero-padded conv2 input (stays in VMEM).
    ypad_ref[...] = jnp.zeros_like(ypad_ref)
    ypad_ref[1:H + 1, 1:W + 1, :] = y.reshape(H, W, Cout)

    # ---- conv2 + bias + ReLU6.
    w2 = w2_ref[...].astype(jnp.float32)
    acc2 = jnp.zeros((HW, Cout), jnp.float32)
    for t in range(9):
        dy, dx = divmod(t, 3)
        patch = ypad_ref[dy:dy + H, dx:dx + W, :].reshape(HW, Cout)
        acc2 = acc2 + jnp.dot(patch, w2[t], preferred_element_type=jnp.float32)
    out = jnp.clip(acc2 + b2_ref[...].astype(jnp.float32), 0.0, 6.0)

    # ---- Lane-dense store: (H*W, Cout) -> (Cout, H*W) == NCHW after free reshape.
    o_ref[0] = jnp.transpose(out, (1, 0)).astype(o_ref.dtype)


def double_conv(x_nchw, w1, b1, w2, b2):
    """PyTorch-equivalent DoubleConv forward: NCHW in, NCHW out.

    w1: (3, 3, Cin, Cout) HWIO; b1: (Cout,); w2: (3, 3, Cout, Cout); b2: (Cout,).
    """
    N, Cin, H, W = x_nchw.shape
    Cout = w1.shape[-1]
    HW = H * W

    x2 = x_nchw.reshape(N, Cin, HW)        # layout-preserving (free) reshape
    w1t = w1.reshape(9, Cin, Cout)         # tap-major matmul operands
    w2t = w2.reshape(9, Cout, Cout)
    b1r = b1.reshape(1, Cout)
    b2r = b2.reshape(1, Cout)

    out2 = pl.pallas_call(
        _double_conv_kernel,
        out_shape=jax.ShapeDtypeStruct((N, Cout, HW), x_nchw.dtype),
        grid_spec=pltpu.PrefetchScalarGridSpec(
            num_scalar_prefetch=0,
            grid=(N,),
            in_specs=[
                pl.BlockSpec((1, Cin, HW), lambda n: (n, 0, 0)),
                pl.BlockSpec((9, Cin, Cout), lambda n: (0, 0, 0)),
                pl.BlockSpec((1, Cout), lambda n: (0, 0)),
                pl.BlockSpec((9, Cout, Cout), lambda n: (0, 0, 0)),
                pl.BlockSpec((1, Cout), lambda n: (0, 0)),
            ],
            out_specs=pl.BlockSpec((1, Cout, HW), lambda n: (n, 0, 0)),
            scratch_shapes=[
                pltpu.VMEM((H + 2, W + 2, Cin), jnp.float32),
                pltpu.VMEM((H + 2, W + 2, Cout), jnp.float32),
            ],
        ),
        compiler_params=pltpu.CompilerParams(
            dimension_semantics=("parallel",)),
    )(x2, w1t, b1r, w2t, b2r)

    return out2.reshape(N, Cout, H, W)     # free reshape back to NCHW


def init_params(key, in_channels, out_channels, dtype=jnp.float32):
    """Deterministic synthetic init (Kaiming-uniform-like), HWIO weight layout."""
    k1, k2, k3, k4 = jax.random.split(key, 4)
    bound1 = 1.0 / jnp.sqrt(in_channels * 9)
    bound2 = 1.0 / jnp.sqrt(out_channels * 9)
    w1 = jax.random.uniform(k1, (3, 3, in_channels, out_channels),
                            dtype, -bound1, bound1)
    b1 = jax.random.uniform(k2, (out_channels,), dtype, -bound1, bound1)
    w2 = jax.random.uniform(k3, (3, 3, out_channels, out_channels),
                            dtype, -bound2, bound2)
    b2 = jax.random.uniform(k4, (out_channels,), dtype, -bound2, bound2)
    return w1, b1, w2, b2


def _reference(x_nchw, w1, b1, w2, b2):
    """Plain-JAX reference (same math as the PyTorch module)."""
    def conv_relu6(x, w, b):
        y = lax.conv_general_dilated(
            x, w, window_strides=(1, 1), padding=((1, 1), (1, 1)),
            dimension_numbers=("NCHW", "HWIO", "NCHW"),
            precision=lax.Precision.HIGHEST)
        return jnp.clip(y + b.reshape(1, -1, 1, 1), 0.0, 6.0)
    return conv_relu6(conv_relu6(x_nchw, w1, b1), w2, b2)


if __name__ == "__main__":
    key = jax.random.PRNGKey(0)
    kx, kp = jax.random.split(key)

    N, Cin, Cout, H, W = 2, 4, 8, 16, 16
    x = jax.random.normal(kx, (N, Cin, H, W), dtype=jnp.float32)
    w1, b1, w2, b2 = init_params(kp, Cin, Cout)

    out = jax.jit(double_conv)(x, w1, b1, w2, b2)
    out = jax.block_until_ready(out)
    assert out.shape == (N, Cout, H, W), out.shape

    ref = _reference(x, w1, b1, w2, b2)
    max_err = float(jnp.max(jnp.abs(out - ref)))
    assert jnp.allclose(out, ref, atol=2e-2, rtol=2e-2), max_err

    print("KERNEL_OK")
</pallas_src>

<mosaic_0001>
module attributes {stable_mosaic.version = 11 : i64} {
  func.func @_double_conv_kernel(%arg0: i32, %arg1: memref<1x4x256xf32, #tpu.memory_space<vmem>>, %arg2: memref<9x4x8xf32, #tpu.memory_space<vmem>>, %arg3: memref<1x8xf32, #tpu.memory_space<vmem>>, %arg4: memref<9x8x8xf32, #tpu.memory_space<vmem>>, %arg5: memref<1x8xf32, #tpu.memory_space<vmem>>, %arg6: memref<1x8x256xf32, #tpu.memory_space<vmem>>, %arg7: memref<18x18x4xf32, #tpu.memory_space<vmem>>, %arg8: memref<18x18x8xf32, #tpu.memory_space<vmem>>) attributes {dimension_semantics = [#tpu.dimension_semantics<parallel>], iteration_bounds = array<i64: 2>, scalar_prefetch = 0 : i64, scratch_operands = 2 : i64, tpu.core_type = #tpu.core_type<tc>, window_params = [{transform_indices = @transform_0, window_bounds = array<i64: 1, 4, 256>}, {pipeline_mode = #tpu.pipeline_mode<synchronous>, transform_indices = @transform_1, window_bounds = array<i64: 9, 4, 8>}, {pipeline_mode = #tpu.pipeline_mode<synchronous>, transform_indices = @transform_2, window_bounds = array<i64: 1, 8>}, {pipeline_mode = #tpu.pipeline_mode<synchronous>, transform_indices = @transform_3, window_bounds = array<i64: 9, 8, 8>}, {pipeline_mode = #tpu.pipeline_mode<synchronous>, transform_indices = @transform_4, window_bounds = array<i64: 1, 8>}, {transform_indices = @transform_5, window_bounds = array<i64: 1, 8, 256>}]} {
    %cst = arith.constant 0.000000e+00 : f32
    %0 = vector.broadcast %cst : f32 to vector<18x18x4xf32>
    %c0 = arith.constant 0 : index
    %c0_0 = arith.constant 0 : index
    %c0_1 = arith.constant 0 : index
    %1 = vector.load %arg7[%c0, %c0_0, %c0_1] : memref<18x18x4xf32, #tpu.memory_space<vmem>>, vector<18x18x4xf32>
    tpu.vector_store %arg7[%c0, %c0_0, %c0_1], %0 {strides = array<i32>} : memref<18x18x4xf32, #tpu.memory_space<vmem>>, vector<18x18x4xf32>,
    %c0_2 = arith.constant 0 : index
    %c0_3 = arith.constant 0 : index
    %c0_4 = arith.constant 0 : index
    %2 = vector.load %arg1[%c0_2, %c0_3, %c0_4] : memref<1x4x256xf32, #tpu.memory_space<vmem>>, vector<1x4x256xf32>
    %3 = vector.shape_cast %2 : vector<1x4x256xf32> to vector<4x256xf32>
    %4 = tpu.transpose %3, [1, 0] : vector<4x256xf32> -> vector<256x4xf32>
    %5 = vector.shape_cast %4 : vector<256x4xf32> to vector<16x16x4xf32>
    %c1 = arith.constant 1 : index
    %c1_5 = arith.constant 1 : index
    %c0_6 = arith.constant 0 : index
    %6 = vector.load %arg7[%c1, %c1_5, %c0_6] : memref<18x18x4xf32, #tpu.memory_space<vmem>>, vector<16x16x4xf32>
    tpu.vector_store %arg7[%c1, %c1_5, %c0_6], %5 {strides = array<i32>} : memref<18x18x4xf32, #tpu.memory_space<vmem>>, vector<16x16x4xf32>,
    %c0_7 = arith.constant 0 : index
    %c0_8 = arith.constant 0 : index
    %c0_9 = arith.constant 0 : index
    %7 = vector.load %arg2[%c0_7, %c0_8, %c0_9] : memref<9x4x8xf32, #tpu.memory_space<vmem>>, vector<9x4x8xf32>
    %cst_10 = arith.constant 0.000000e+00 : f32
    %8 = vector.broadcast %cst_10 : f32 to vector<256x8xf32>
    %c0_11 = arith.constant 0 : index
    %c0_12 = arith.constant 0 : index
    %c0_13 = arith.constant 0 : index
    %9 = vector.load %arg7[%c0_11, %c0_12, %c0_13] : memref<18x18x4xf32, #tpu.memory_space<vmem>>, vector<16x16x4xf32>
    %10 = vector.shape_cast %9 : vector<16x16x4xf32> to vector<256x4xf32>
    %11 = vector.extract_strided_slice %7 {offsets = [0, 0, 0], sizes = [1, 4, 8], strides = [1, 1, 1]} : vector<9x4x8xf32> to vector<1x4x8xf32>
    %12 = vector.shape_cast %11 : vector<1x4x8xf32> to vector<4x8xf32>
    %cst_14 = arith.constant dense<0.000000e+00> : vector<256x8xf32>
    %13 = tpu.matmul %10, %12, %cst_14 {dimension_numbers = #tpu.dot_dimension_numbers<[1], [0], [0], [1], [0, 0, 1, 1], [], []>} : vector<256x4xf32>, vector<4x8xf32>, vector<256x8xf32> -> vector<256x8xf32>
    %14 = arith.addf %8, %13 : vector<256x8xf32>
    %c0_15 = arith.constant 0 : index
    %c1_16 = arith.constant 1 : index
    %c0_17 = arith.constant 0 : index
    %15 = vector.load %arg7[%c0_15, %c1_16, %c0_17] : memref<18x18x4xf32, #tpu.memory_space<vmem>>, vector<16x16x4xf32>
    %16 = vector.shape_cast %15 : vector<16x16x4xf32> to vector<256x4xf32>
    %17 = vector.extract_strided_slice %7 {offsets = [1, 0, 0], sizes = [1, 4, 8], strides = [1, 1, 1]} : vector<9x4x8xf32> to vector<1x4x8xf32>
    %18 = vector.shape_cast %17 : vector<1x4x8xf32> to vector<4x8xf32>
    %cst_18 = arith.constant dense<0.000000e+00> : vector<256x8xf32>
    %19 = tpu.matmul %16, %18, %cst_18 {dimension_numbers = #tpu.dot_dimension_numbers<[1], [0], [0], [1], [0, 0, 1, 1], [], []>} : vector<256x4xf32>, vector<4x8xf32>, vector<256x8xf32> -> vector<256x8xf32>
    %20 = arith.addf %14, %19 : vector<256x8xf32>
    %c0_19 = arith.constant 0 : index
    %c2 = arith.constant 2 : index
    %c0_20 = arith.constant 0 : index
    %21 = vector.load %arg7[%c0_19, %c2, %c0_20] : memref<18x18x4xf32, #tpu.memory_space<vmem>>, vector<16x16x4xf32>
    %22 = vector.shape_cast %21 : vector<16x16x4xf32> to vector<256x4xf32>
    %23 = vector.extract_strided_slice %7 {offsets = [2, 0, 0], sizes = [1, 4, 8], strides = [1, 1, 1]} : vector<9x4x8xf32> to vector<1x4x8xf32>
    %24 = vector.shape_cast %23 : vector<1x4x8xf32> to vector<4x8xf32>
    %cst_21 = arith.constant dense<0.000000e+00> : vector<256x8xf32>
    %25 = tpu.matmul %22, %24, %cst_21 {dimension_numbers = #tpu.dot_dimension_numbers<[1], [0], [0], [1], [0, 0, 1, 1], [], []>} : vector<256x4xf32>, vector<4x8xf32>, vector<256x8xf32> -> vector<256x8xf32>
    %26 = arith.addf %20, %25 : vector<256x8xf32>
    %c1_22 = arith.constant 1 : index
    %c0_23 = arith.constant 0 : index
    %c0_24 = arith.constant 0 : index
    %27 = vector.load %arg7[%c1_22, %c0_23, %c0_24] : memref<18x18x4xf32, #tpu.memory_space<vmem>>, vector<16x16x4xf32>
    %28 = vector.shape_cast %27 : vector<16x16x4xf32> to vector<256x4xf32>
    %29 = vector.extract_strided_slice %7 {offsets = [3, 0, 0], sizes = [1, 4, 8], strides = [1, 1, 1]} : vector<9x4x8xf32> to vector<1x4x8xf32>
    %30 = vector.shape_cast %29 : vector<1x4x8xf32> to vector<4x8xf32>
    %cst_25 = arith.constant dense<0.000000e+00> : vector<256x8xf32>
    %31 = tpu.matmul %28, %30, %cst_25 {dimension_numbers = #tpu.dot_dimension_numbers<[1], [0], [0], [1], [0, 0, 1, 1], [], []>} : vector<256x4xf32>, vector<4x8xf32>, vector<256x8xf32> -> vector<256x8xf32>
    %32 = arith.addf %26, %31 : vector<256x8xf32>
    %c1_26 = arith.constant 1 : index
    %c1_27 = arith.constant 1 : index
    %c0_28 = arith.constant 0 : index
    %33 = vector.load %arg7[%c1_26, %c1_27, %c0_28] : memref<18x18x4xf32, #tpu.memory_space<vmem>>, vector<16x16x4xf32>
    %34 = vector.shape_cast %33 : vector<16x16x4xf32> to vector<256x4xf32>
    %35 = vector.extract_strided_slice %7 {offsets = [4, 0, 0], sizes = [1, 4, 8], strides = [1, 1, 1]} : vector<9x4x8xf32> to vector<1x4x8xf32>
    %36 = vector.shape_cast %35 : vector<1x4x8xf32> to vector<4x8xf32>
    %cst_29 = arith.constant dense<0.000000e+00> : vector<256x8xf32>
    %37 = tpu.matmul %34, %36, %cst_29 {dimension_numbers = #tpu.dot_dimension_numbers<[1], [0], [0], [1], [0, 0, 1, 1], [], []>} : vector<256x4xf32>, vector<4x8xf32>, vector<256x8xf32> -> vector<256x8xf32>
    %38 = arith.addf %32, %37 : vector<256x8xf32>
    %c1_30 = arith.constant 1 : index
    %c2_31 = arith.constant 2 : index
    %c0_32 = arith.constant 0 : index
    %39 = vector.load %arg7[%c1_30, %c2_31, %c0_32] : memref<18x18x4xf32, #tpu.memory_space<vmem>>, vector<16x16x4xf32>
    %40 = vector.shape_cast %39 : vector<16x16x4xf32> to vector<256x4xf32>
    %41 = vector.extract_strided_slice %7 {offsets = [5, 0, 0], sizes = [1, 4, 8], strides = [1, 1, 1]} : vector<9x4x8xf32> to vector<1x4x8xf32>
    %42 = vector.shape_cast %41 : vector<1x4x8xf32> to vector<4x8xf32>
    %cst_33 = arith.constant dense<0.000000e+00> : vector<256x8xf32>
    %43 = tpu.matmul %40, %42, %cst_33 {dimension_numbers = #tpu.dot_dimension_numbers<[1], [0], [0], [1], [0, 0, 1, 1], [], []>} : vector<256x4xf32>, vector<4x8xf32>, vector<256x8xf32> -> vector<256x8xf32>
    %44 = arith.addf %38, %43 : vector<256x8xf32>
    %c2_34 = arith.constant 2 : index
    %c0_35 = arith.constant 0 : index
    %c0_36 = arith.constant 0 : index
    %45 = vector.load %arg7[%c2_34, %c0_35, %c0_36] : memref<18x18x4xf32, #tpu.memory_space<vmem>>, vector<16x16x4xf32>
    %46 = vector.shape_cast %45 : vector<16x16x4xf32> to vector<256x4xf32>
    %47 = vector.extract_strided_slice %7 {offsets = [6, 0, 0], sizes = [1, 4, 8], strides = [1, 1, 1]} : vector<9x4x8xf32> to vector<1x4x8xf32>
    %48 = vector.shape_cast %47 : vector<1x4x8xf32> to vector<4x8xf32>
    %cst_37 = arith.constant dense<0.000000e+00> : vector<256x8xf32>
    %49 = tpu.matmul %46, %48, %cst_37 {dimension_numbers = #tpu.dot_dimension_numbers<[1], [0], [0], [1], [0, 0, 1, 1], [], []>} : vector<256x4xf32>, vector<4x8xf32>, vector<256x8xf32> -> vector<256x8xf32>
    %50 = arith.addf %44, %49 : vector<256x8xf32>
    %c2_38 = arith.constant 2 : index
    %c1_39 = arith.constant 1 : index
    %c0_40 = arith.constant 0 : index
    %51 = vector.load %arg7[%c2_38, %c1_39, %c0_40] : memref<18x18x4xf32, #tpu.memory_space<vmem>>, vector<16x16x4xf32>
    %52 = vector.shape_cast %51 : vector<16x16x4xf32> to vector<256x4xf32>
    %53 = vector.extract_strided_slice %7 {offsets = [7, 0, 0], sizes = [1, 4, 8], strides = [1, 1, 1]} : vector<9x4x8xf32> to vector<1x4x8xf32>
    %54 = vector.shape_cast %53 : vector<1x4x8xf32> to vector<4x8xf32>
    %cst_41 = arith.constant dense<0.000000e+00> : vector<256x8xf32>
    %55 = tpu.matmul %52, %54, %cst_41 {dimension_numbers = #tpu.dot_dimension_numbers<[1], [0], [0], [1], [0, 0, 1, 1], [], []>} : vector<256x4xf32>, vector<4x8xf32>, vector<256x8xf32> -> vector<256x8xf32>
    %56 = arith.addf %50, %55 : vector<256x8xf32>
    %c2_42 = arith.constant 2 : index
    %c2_43 = arith.constant 2 : index
    %c0_44 = arith.constant 0 : index
    %57 = vector.load %arg7[%c2_42, %c2_43, %c0_44] : memref<18x18x4xf32, #tpu.memory_space<vmem>>, vector<16x16x4xf32>
    %58 = vector.shape_cast %57 : vector<16x16x4xf32> to vector<256x4xf32>
    %59 = vector.extract_strided_slice %7 {offsets = [8, 0, 0], sizes = [1, 4, 8], strides = [1, 1, 1]} : vector<9x4x8xf32> to vector<1x4x8xf32>
    %60 = vector.shape_cast %59 : vector<1x4x8xf32> to vector<4x8xf32>
    %cst_45 = arith.constant dense<0.000000e+00> : vector<256x8xf32>
    %61 = tpu.matmul %58, %60, %cst_45 {dimension_numbers = #tpu.dot_dimension_numbers<[1], [0], [0], [1], [0, 0, 1, 1], [], []>} : vector<256x4xf32>, vector<4x8xf32>, vector<256x8xf32> -> vector<256x8xf32>
    %62 = arith.addf %56, %61 : vector<256x8xf32>
    %c0_46 = arith.constant 0 : index
    %c0_47 = arith.constant 0 : index
    %63 = vector.load %arg3[%c0_46, %c0_47] : memref<1x8xf32, #tpu.memory_space<vmem>>, vector<1x8xf32>
    %64 = vector.broadcast %63 : vector<1x8xf32> to vector<256x8xf32>
    %65 = arith.addf %62, %64 : vector<256x8xf32>
    %cst_48 = arith.constant 0.000000e+00 : f32
    %cst_49 = arith.constant 6.000000e+00 : f32
    %66 = vector.broadcast %cst_48 : f32 to vector<256x8xf32>
    %67 = arith.maximumf %66, %65 : vector<256x8xf32>
    %68 = vector.broadcast %cst_49 : f32 to vector<256x8xf32>
    %69 = arith.minimumf %68, %67 : vector<256x8xf32>
    %cst_50 = arith.constant 0.000000e+00 : f32
    %70 = vector.broadcast %cst_50 : f32 to vector<18x18x8xf32>
    %c0_51 = arith.constant 0 : index
    %c0_52 = arith.constant 0 : index
    %c0_53 = arith.constant 0 : index
    %71 = vector.load %arg8[%c0_51, %c0_52, %c0_53] : memref<18x18x8xf32, #tpu.memory_space<vmem>>, vector<18x18x8xf32>
    tpu.vector_store %arg8[%c0_51, %c0_52, %c0_53], %70 {strides = array<i32>} : memref<18x18x8xf32, #tpu.memory_space<vmem>>, vector<18x18x8xf32>,
    %72 = vector.shape_cast %69 : vector<256x8xf32> to vector<16x16x8xf32>
    %c1_54 = arith.constant 1 : index
    %c1_55 = arith.constant 1 : index
    %c0_56 = arith.constant 0 : index
    %73 = vector.load %arg8[%c1_54, %c1_55, %c0_56] : memref<18x18x8xf32, #tpu.memory_space<vmem>>, vector<16x16x8xf32>
    tpu.vector_store %arg8[%c1_54, %c1_55, %c0_56], %72 {strides = array<i32>} : memref<18x18x8xf32, #tpu.memory_space<vmem>>, vector<16x16x8xf32>,
    %c0_57 = arith.constant 0 : index
    %c0_58 = arith.constant 0 : index
    %c0_59 = arith.constant 0 : index
    %74 = vector.load %arg4[%c0_57, %c0_58, %c0_59] : memref<9x8x8xf32, #tpu.memory_space<vmem>>, vector<9x8x8xf32>
    %cst_60 = arith.constant 0.000000e+00 : f32
    %75 = vector.broadcast %cst_60 : f32 to vector<256x8xf32>
    %c0_61 = arith.constant 0 : index
    %c0_62 = arith.constant 0 : index
    %c0_63 = arith.constant 0 : index
    %76 = vector.load %arg8[%c0_61, %c0_62, %c0_63] : memref<18x18x8xf32, #tpu.memory_space<vmem>>, vector<16x16x8xf32>
    %77 = vector.shape_cast %76 : vector<16x16x8xf32> to vector<256x8xf32>
    %78 = vector.extract_strided_slice %74 {offsets = [0, 0, 0], sizes = [1, 8, 8], strides = [1, 1, 1]} : vector<9x8x8xf32> to vector<1x8x8xf32>
    %79 = vector.shape_cast %78 : vector<1x8x8xf32> to vector<8x8xf32>
    %cst_64 = arith.constant dense<0.000000e+00> : vector<256x8xf32>
    %80 = tpu.matmul %77, %79, %cst_64 {dimension_numbers = #tpu.dot_dimension_numbers<[1], [0], [0], [1], [0, 0, 1, 1], [], []>} : vector<256x8xf32>, vector<8x8xf32>, vector<256x8xf32> -> vector<256x8xf32>
    %81 = arith.addf %75, %80 : vector<256x8xf32>
    %c0_65 = arith.constant 0 : index
    %c1_66 = arith.constant 1 : index
    %c0_67 = arith.constant 0 : index
    %82 = vector.load %arg8[%c0_65, %c1_66, %c0_67] : memref<18x18x8xf32, #tpu.memory_space<vmem>>, vector<16x16x8xf32>
    %83 = vector.shape_cast %82 : vector<16x16x8xf32> to vector<256x8xf32>
    %84 = vector.extract_strided_slice %74 {offsets = [1, 0, 0], sizes = [1, 8, 8], strides = [1, 1, 1]} : vector<9x8x8xf32> to vector<1x8x8xf32>
    %85 = vector.shape_cast %84 : vector<1x8x8xf32> to vector<8x8xf32>
    %cst_68 = arith.constant dense<0.000000e+00> : vector<256x8xf32>
    %86 = tpu.matmul %83, %85, %cst_68 {dimension_numbers = #tpu.dot_dimension_numbers<[1], [0], [0], [1], [0, 0, 1, 1], [], []>} : vector<256x8xf32>, vector<8x8xf32>, vector<256x8xf32> -> vector<256x8xf32>
    %87 = arith.addf %81, %86 : vector<256x8xf32>
    %c0_69 = arith.constant 0 : index
    %c2_70 = arith.constant 2 : index
    %c0_71 = arith.constant 0 : index
    %88 = vector.load %arg8[%c0_69, %c2_70, %c0_71] : memref<18x18x8xf32, #tpu.memory_space<vmem>>, vector<16x16x8xf32>
    %89 = vector.shape_cast %88 : vector<16x16x8xf32> to vector<256x8xf32>
    %90 = vector.extract_strided_slice %74 {offsets = [2, 0, 0], sizes = [1, 8, 8], strides = [1, 1, 1]} : vector<9x8x8xf32> to vector<1x8x8xf32>
    %91 = vector.shape_cast %90 : vector<1x8x8xf32> to vector<8x8xf32>
    %cst_72 = arith.constant dense<0.000000e+00> : vector<256x8xf32>
    %92 = tpu.matmul %89, %91, %cst_72 {dimension_numbers = #tpu.dot_dimension_numbers<[1], [0], [0], [1], [0, 0, 1, 1], [], []>} : vector<256x8xf32>, vector<8x8xf32>, vector<256x8xf32> -> vector<256x8xf32>
    %93 = arith.addf %87, %92 : vector<256x8xf32>
    %c1_73 = arith.constant 1 : index
    %c0_74 = arith.constant 0 : index
    %c0_75 = arith.constant 0 : index
    %94 = vector.load %arg8[%c1_73, %c0_74, %c0_75] : memref<18x18x8xf32, #tpu.memory_space<vmem>>, vector<16x16x8xf32>
    %95 = vector.shape_cast %94 : vector<16x16x8xf32> to vector<256x8xf32>
    %96 = vector.extract_strided_slice %74 {offsets = [3, 0, 0], sizes = [1, 8, 8], strides = [1, 1, 1]} : vector<9x8x8xf32> to vector<1x8x8xf32>
    %97 = vector.shape_cast %96 : vector<1x8x8xf32> to vector<8x8xf32>
    %cst_76 = arith.constant dense<0.000000e+00> : vector<256x8xf32>
    %98 = tpu.matmul %95, %97, %cst_76 {dimension_numbers = #tpu.dot_dimension_numbers<[1], [0], [0], [1], [0, 0, 1, 1], [], []>} : vector<256x8xf32>, vector<8x8xf32>, vector<256x8xf32> -> vector<256x8xf32>
    %99 = arith.addf %93, %98 : vector<256x8xf32>
    %c1_77 = arith.constant 1 : index
    %c1_78 = arith.constant 1 : index
    %c0_79 = arith.constant 0 : index
    %100 = vector.load %arg8[%c1_77, %c1_78, %c0_79] : memref<18x18x8xf32, #tpu.memory_space<vmem>>, vector<16x16x8xf32>
    %101 = vector.shape_cast %100 : vector<16x16x8xf32> to vector<256x8xf32>
    %102 = vector.extract_strided_slice %74 {offsets = [4, 0, 0], sizes = [1, 8, 8], strides = [1, 1, 1]} : vector<9x8x8xf32> to vector<1x8x8xf32>
    %103 = vector.shape_cast %102 : vector<1x8x8xf32> to vector<8x8xf32>
    %cst_80 = arith.constant dense<0.000000e+00> : vector<256x8xf32>
    %104 = tpu.matmul %101, %103, %cst_80 {dimension_numbers = #tpu.dot_dimension_numbers<[1], [0], [0], [1], [0, 0, 1, 1], [], []>} : vector<256x8xf32>, vector<8x8xf32>, vector<256x8xf32> -> vector<256x8xf32>
    %105 = arith.addf %99, %104 : vector<256x8xf32>
    %c1_81 = arith.constant 1 : index
    %c2_82 = arith.constant 2 : index
    %c0_83 = arith.constant 0 : index
    %106 = vector.load %arg8[%c1_81, %c2_82, %c0_83] : memref<18x18x8xf32, #tpu.memory_space<vmem>>, vector<16x16x8xf32>
    %107 = vector.shape_cast %106 : vector<16x16x8xf32> to vector<256x8xf32>
    %108 = vector.extract_strided_slice %74 {offsets = [5, 0, 0], sizes = [1, 8, 8], strides = [1, 1, 1]} : vector<9x8x8xf32> to vector<1x8x8xf32>
    %109 = vector.shape_cast %108 : vector<1x8x8xf32> to vector<8x8xf32>
    %cst_84 = arith.constant dense<0.000000e+00> : vector<256x8xf32>
    %110 = tpu.matmul %107, %109, %cst_84 {dimension_numbers = #tpu.dot_dimension_numbers<[1], [0], [0], [1], [0, 0, 1, 1], [], []>} : vector<256x8xf32>, vector<8x8xf32>, vector<256x8xf32> -> vector<256x8xf32>
    %111 = arith.addf %105, %110 : vector<256x8xf32>
    %c2_85 = arith.constant 2 : index
    %c0_86 = arith.constant 0 : index
    %c0_87 = arith.constant 0 : index
    %112 = vector.load %arg8[%c2_85, %c0_86, %c0_87] : memref<18x18x8xf32, #tpu.memory_space<vmem>>, vector<16x16x8xf32>
    %113 = vector.shape_cast %112 : vector<16x16x8xf32> to vector<256x8xf32>
    %114 = vector.extract_strided_slice %74 {offsets = [6, 0, 0], sizes = [1, 8, 8], strides = [1, 1, 1]} : vector<9x8x8xf32> to vector<1x8x8xf32>
    %115 = vector.shape_cast %114 : vector<1x8x8xf32> to vector<8x8xf32>
    %cst_88 = arith.constant dense<0.000000e+00> : vector<256x8xf32>
    %116 = tpu.matmul %113, %115, %cst_88 {dimension_numbers = #tpu.dot_dimension_numbers<[1], [0], [0], [1], [0, 0, 1, 1], [], []>} : vector<256x8xf32>, vector<8x8xf32>, vector<256x8xf32> -> vector<256x8xf32>
    %117 = arith.addf %111, %116 : vector<256x8xf32>
    %c2_89 = arith.constant 2 : index
    %c1_90 = arith.constant 1 : index
    %c0_91 = arith.constant 0 : index
    %118 = vector.load %arg8[%c2_89, %c1_90, %c0_91] : memref<18x18x8xf32, #tpu.memory_space<vmem>>, vector<16x16x8xf32>
    %119 = vector.shape_cast %118 : vector<16x16x8xf32> to vector<256x8xf32>
    %120 = vector.extract_strided_slice %74 {offsets = [7, 0, 0], sizes = [1, 8, 8], strides = [1, 1, 1]} : vector<9x8x8xf32> to vector<1x8x8xf32>
    %121 = vector.shape_cast %120 : vector<1x8x8xf32> to vector<8x8xf32>
    %cst_92 = arith.constant dense<0.000000e+00> : vector<256x8xf32>
    %122 = tpu.matmul %119, %121, %cst_92 {dimension_numbers = #tpu.dot_dimension_numbers<[1], [0], [0], [1], [0, 0, 1, 1], [], []>} : vector<256x8xf32>, vector<8x8xf32>, vector<256x8xf32> -> vector<256x8xf32>
    %123 = arith.addf %117, %122 : vector<256x8xf32>
    %c2_93 = arith.constant 2 : index
    %c2_94 = arith.constant 2 : index
    %c0_95 = arith.constant 0 : index
    %124 = vector.load %arg8[%c2_93, %c2_94, %c0_95] : memref<18x18x8xf32, #tpu.memory_space<vmem>>, vector<16x16x8xf32>
    %125 = vector.shape_cast %124 : vector<16x16x8xf32> to vector<256x8xf32>
    %126 = vector.extract_strided_slice %74 {offsets = [8, 0, 0], sizes = [1, 8, 8], strides = [1, 1, 1]} : vector<9x8x8xf32> to vector<1x8x8xf32>
    %127 = vector.shape_cast %126 : vector<1x8x8xf32> to vector<8x8xf32>
    %cst_96 = arith.constant dense<0.000000e+00> : vector<256x8xf32>
    %128 = tpu.matmul %125, %127, %cst_96 {dimension_numbers = #tpu.dot_dimension_numbers<[1], [0], [0], [1], [0, 0, 1, 1], [], []>} : vector<256x8xf32>, vector<8x8xf32>, vector<256x8xf32> -> vector<256x8xf32>
    %129 = arith.addf %123, %128 : vector<256x8xf32>
    %c0_97 = arith.constant 0 : index
    %c0_98 = arith.constant 0 : index
    %130 = vector.load %arg5[%c0_97, %c0_98] : memref<1x8xf32, #tpu.memory_space<vmem>>, vector<1x8xf32>
    %131 = vector.broadcast %130 : vector<1x8xf32> to vector<256x8xf32>
    %132 = arith.addf %129, %131 : vector<256x8xf32>
    %cst_99 = arith.constant 0.000000e+00 : f32
    %cst_100 = arith.constant 6.000000e+00 : f32
    %133 = vector.broadcast %cst_99 : f32 to vector<256x8xf32>
    %134 = arith.maximumf %133, %132 : vector<256x8xf32>
    %135 = vector.broadcast %cst_100 : f32 to vector<256x8xf32>
    %136 = arith.minimumf %135, %134 : vector<256x8xf32>
    %137 = tpu.transpose %136, [1, 0] : vector<256x8xf32> -> vector<8x256xf32>
    %c0_101 = arith.constant 0 : index
    %c0_102 = arith.constant 0 : index
    %c0_103 = arith.constant 0 : index
    %138 = vector.load %arg6[%c0_101, %c0_102, %c0_103] : memref<1x8x256xf32, #tpu.memory_space<vmem>>, vector<1x8x256xf32>
    %139 = vector.shape_cast %138 : vector<1x8x256xf32> to vector<8x256xf32>
    %140 = vector.shape_cast %137 : vector<8x256xf32> to vector<1x8x256xf32>
    tpu.vector_store %arg6[%c0_101, %c0_102, %c0_103], %140 {strides = array<i32>} : memref<1x8x256xf32, #tpu.memory_space<vmem>>, vector<1x8x256xf32>,
    return
  }
  func.func @transform_0(%arg0: i32) -> (i32, i32, i32) {
    %c0_i32 = arith.constant 0 : i32
    %c0_i32_0 = arith.constant 0 : i32
    %c0_i32_1 = arith.constant 0 : i32
    return %arg0, %c0_i32, %c0_i32_0 : i32, i32, i32
  }
  func.func @transform_1(%arg0: i32) -> (i32, i32, i32) {
    %c0_i32 = arith.constant 0 : i32
    %c0_i32_0 = arith.constant 0 : i32
    %c0_i32_1 = arith.constant 0 : i32
    %c0_i32_2 = arith.constant 0 : i32
    return %c0_i32, %c0_i32_0, %c0_i32_1 : i32, i32, i32
  }
  func.func @transform_2(%arg0: i32) -> (i32, i32) {
    %c0_i32 = arith.constant 0 : i32
    %c0_i32_0 = arith.constant 0 : i32
    %c0_i32_1 = arith.constant 0 : i32
    return %c0_i32, %c0_i32_0 : i32, i32
  }
  func.func @transform_3(%arg0: i32) -> (i32, i32, i32) {
    %c0_i32 = arith.constant 0 : i32
    %c0_i32_0 = arith.constant 0 : i32
    %c0_i32_1 = arith.constant 0 : i32
    %c0_i32_2 = arith.constant 0 : i32
    return %c0_i32, %c0_i32_0, %c0_i32_1 : i32, i32, i32
  }
  func.func @transform_4(%arg0: i32) -> (i32, i32) {
    %c0_i32 = arith.constant 0 : i32
    %c0_i32_0 = arith.constant 0 : i32
    %c0_i32_1 = arith.constant 0 : i32
    return %c0_i32, %c0_i32_0 : i32, i32
  }
  func.func @transform_5(%arg0: i32) -> (i32, i32, i32) {
    %c0_i32 = arith.constant 0 : i32
    %c0_i32_0 = arith.constant 0 : i32
    %c0_i32_1 = arith.constant 0 : i32
    return %arg0, %c0_i32, %c0_i32_0 : i32, i32, i32
  }
}

</mosaic_0001>

<llo_original>
// kernel: double_conv.1
$region0: #{double_conv.1}
  #allocation0 [shape = 'u32[]', space=smem, size = 0x4, offset = 0x4, fixed_abs, tag = 'smem constant byte address 0x4 - core index']
  #allocation1 [shape = 'u32[144,128]{1,0:T(1,128)}', space=vmem, size = 0x12000, scoped, tag = 'internal scratch']
  #allocation2 [shape = 'f32[18,18,4]{2,1,0:T(8,128)}', space=vmem, size = 0x36000, scoped, tag = 'scratch operand']
  #allocation3 [shape = 'f32[18,18,8]{2,1,0:T(8,128)}', space=vmem, size = 0x36000, scoped, tag = 'scratch operand']
  %s0 = inlined_call_operand.vmem [shape: f32[2,4,256], index: 0, kind: input, shape index: {}]
  %s1 = inlined_call_operand.vmem [shape: f32[9,4,8], index: 1, kind: input, shape index: {}]
  %s2 = inlined_call_operand.vmem [shape: f32[1,8], index: 2, kind: input, shape index: {}]
  %s3 = inlined_call_operand.vmem [shape: f32[9,8,8], index: 3, kind: input, shape index: {}]
  %s4 = inlined_call_operand.vmem [shape: f32[1,8], index: 4, kind: input, shape index: {}]
  %s5 = inlined_call_operand.vmem [shape: f32[2,8,256], index: 5, kind: output, shape index: {}]
  %s6 = sld [smem:[#allocation0]]
  $region53: #{double_conv.1} parent=0
    _
  %s8 = ssub.s32 1, %s6
  %s9 = scalar_select 0, %s8, %s6
  loop: start=0, step=1, limit=4
  $region2: #{double_conv.1} parent=0 // loop_pre_header
    _
  $region3: #{double_conv.1} parent=0 // loop_header
    %s11 = sphi 0, %s15
    %p12 = scmp.ge.s32.totalorder %s11, 4
    %s21 = sphi 0, %s23
    %s24 = sphi 0, %s21
    %s25 = sphi 0, %s24
    %s41 = sphi 0, %s25
    %s45 = sphi 0, %s45
    %s47 = sphi 0, %s45
    %s48 = sphi 0, %s47
    %s62 = sphi 0, %s48
    %s66 = sphi 0, %s66
    %s68 = sphi 0, %s66
    %s69 = sphi 0, %s68
    %s83 = sphi 0, %s69
    %s87 = sphi 0, %s87
    %s89 = sphi 0, %s87
    %s90 = sphi 0, %s89
    %s104 = sphi 0, %s90
    %s108 = sphi 0, %s108
    %s110 = sphi 0, %s108
    %s111 = sphi 0, %s110
    %s125 = sphi 0, %s111
    %s131 = sphi 0, %s133
    %s134 = sphi 0, %s131
    %s135 = sphi 0, %s134
    %s151 = sphi 0, %s135
  $region4: #{double_conv.1} parent=0 // loop_header_branch
    %14 = sbr.rel (%p12) target = $region8
  $region5: #{double_conv.1} parent=0 // loop_body
    %s16 = ssub.s32 %s11, 1
    %s17 = ssub.s32 %s11, 2
    %s18 = sadd.s32 %s11, 1
    %s19 = ssub.s32 %s11, %s18
    %p20 = scmp.eq.s32.totalorder %s19, 0
    %s22 = sadd.s32 %s21, 1
    %s23 = scalar_select %p20, %s21, %s22
    %p26 = pneg %p20
    %p27 = scmp.eq.s32.totalorder %s11, 1
    %p28 = por %p26, %p27
    %p29 = scmp.ne.s32.totalorder %s21, %s24
    %p30 = scmp.eq.s32.totalorder %s11, 0
    %p31 = por %p29, %p30
    %p32 = scmp.ne.s32.totalorder %s21, %s24
    %p33 = scmp.eq.s32.totalorder %s16, 1
    %p34 = por %p32, %p33
    %p35 = scmp.ne.s32.totalorder %s24, %s25
    %p36 = scmp.eq.s32.totalorder %s16, 0
    %p37 = por %p35, %p36
    %p38 = scmp.ne.s32.totalorder %s24, %s25
    %p39 = scmp.eq.s32.totalorder %s17, 1
    %p40 = por %p38, %p39
    %p42 = scmp.ne.s32.totalorder %s25, %s41
    %p43 = scmp.eq.s32.totalorder %s17, 0
    %p44 = por %p42, %p43
    %s46 = sadd.s32 %s45, 1
    %p49 = scmp.eq.s32.totalorder %s11, 1
    %p50 = scmp.ne.s32.totalorder %s45, %s47
    %p51 = scmp.eq.s32.totalorder %s11, 0
    %p52 = por %p50, %p51
    %p53 = scmp.ne.s32.totalorder %s45, %s47
    %p54 = scmp.eq.s32.totalorder %s16, 1
    %p55 = por %p53, %p54
    %p56 = scmp.ne.s32.totalorder %s47, %s48
    %p57 = scmp.eq.s32.totalorder %s16, 0
    %p58 = por %p56, %p57
    %p59 = scmp.ne.s32.totalorder %s47, %s48
    %p60 = scmp.eq.s32.totalorder %s17, 1
    %p61 = por %p59, %p60
    %p63 = scmp.ne.s32.totalorder %s48, %s62
    %p64 = scmp.eq.s32.totalorder %s17, 0
    %p65 = por %p63, %p64
    %s67 = sadd.s32 %s66, 1
    %p70 = scmp.eq.s32.totalorder %s11, 1
    %p71 = scmp.ne.s32.totalorder %s66, %s68
    %p72 = scmp.eq.s32.totalorder %s11, 0
    %p73 = por %p71, %p72
    %p74 = scmp.ne.s32.totalorder %s66, %s68
    %p75 = scmp.eq.s32.totalorder %s16, 1
    %p76 = por %p74, %p75
    %p77 = scmp.ne.s32.totalorder %s68, %s69
    %p78 = scmp.eq.s32.totalorder %s16, 0
    %p79 = por %p77, %p78
    %p80 = scmp.ne.s32.totalorder %s68, %s69
    %p81 = scmp.eq.s32.totalorder %s17, 1
    %p82 = por %p80, %p81
    %p84 = scmp.ne.s32.totalorder %s69, %s83
    %p85 = scmp.eq.s32.totalorder %s17, 0
    %p86 = por %p84, %p85
    %s88 = sadd.s32 %s87, 1
    %p91 = scmp.eq.s32.totalorder %s11, 1
    %p92 = scmp.ne.s32.totalorder %s87, %s89
    %p93 = scmp.eq.s32.totalorder %s11, 0
    %p94 = por %p92, %p93
    %p95 = scmp.ne.s32.totalorder %s87, %s89
    %p96 = scmp.eq.s32.totalorder %s16, 1
    %p97 = por %p95, %p96
    %p98 = scmp.ne.s32.totalorder %s89, %s90
    %p99 = scmp.eq.s32.totalorder %s16, 0
    %p100 = por %p98, %p99
    %p101 = scmp.ne.s32.totalorder %s89, %s90
    %p102 = scmp.eq.s32.totalorder %s17, 1
    %p103 = por %p101, %p102
    %p105 = scmp.ne.s32.totalorder %s90, %s104
    %p106 = scmp.eq.s32.totalorder %s17, 0
    %p107 = por %p105, %p106
    %s109 = sadd.s32 %s108, 1
    %p112 = scmp.eq.s32.totalorder %s11, 1
    %p113 = scmp.ne.s32.totalorder %s108, %s110
    %p114 = scmp.eq.s32.totalorder %s11, 0
    %p115 = por %p113, %p114
    %p116 = scmp.ne.s32.totalorder %s108, %s110
    %p117 = scmp.eq.s32.totalorder %s16, 1
    %p118 = por %p116, %p117
    %p119 = scmp.ne.s32.totalorder %s110, %s111
    %p120 = scmp.eq.s32.totalorder %s16, 0
    %p121 = por %p119, %p120
    %p122 = scmp.ne.s32.totalorder %s110, %s111
    %p123 = scmp.eq.s32.totalorder %s17, 1
    %p124 = por %p122, %p123
    %p126 = scmp.ne.s32.totalorder %s111, %s125
    %p127 = scmp.eq.s32.totalorder %s17, 0
    %p128 = por %p126, %p127
    %s129 = ssub.s32 %s11, %s18
    %p130 = scmp.eq.s32.totalorder %s129, 0
    %s132 = sadd.s32 %s131, 1
    %s133 = scalar_select %p130, %s131, %s132
    %p136 = pneg %p130
    %p137 = scmp.eq.s32.totalorder %s11, 1
    %p138 = por %p136, %p137
    %p139 = scmp.ne.s32.totalorder %s131, %s134
    %p140 = scmp.eq.s32.totalorder %s11, 0
    %p141 = por %p139, %p140
    %p142 = scmp.ne.s32.totalorder %s131, %s134
    %p143 = scmp.eq.s32.totalorder %s16, 1
    %p144 = por %p142, %p143
    %p145 = scmp.ne.s32.totalorder %s134, %s135
    %p146 = scmp.eq.s32.totalorder %s16, 0
    %p147 = por %p145, %p146
    %p148 = scmp.ne.s32.totalorder %s134, %s135
    %p149 = scmp.eq.s32.totalorder %s17, 1
    %p150 = por %p148, %p149
    %p152 = scmp.ne.s32.totalorder %s135, %s151
    %p153 = scmp.eq.s32.totalorder %s17, 0
    %p154 = por %p152, %p153
    %p155 = scmp.le.s32.totalorder 1, %s11
    %p156 = scmp.lt.s32.totalorder %s11, 3
    %p157 = pnand %p155, %p156
    %p158 = pneg %p157
    // Predicated region
    $region9: #{double_conv.1} parent=5 // pred_check
      _
    $region10: #{double_conv.1} parent=5 // pred_check_branch
      %160 = sbr.rel (%p157) target = $region12
    $region11: #{double_conv.1} parent=5 // pred_region
      %s161 = ssub.s32 %s11, 1
      // Predicated region
      $region13: #{double_conv.1} parent=11 // pred_check
        %p162 = pneg %p58
      $region14: #{double_conv.1} parent=11 // pred_check_branch
        %164 = sbr.rel (%p162) target = $region16
      $region15: #{double_conv.1} parent=11 // pred_region
        _
      $region16: #{double_conv.1} parent=11 // pred_fallthru
        _
      // Predicated region
      $region17: #{double_conv.1} parent=11 // pred_check
        %p165 = pneg %p79
      $region18: #{double_conv.1} parent=11 // pred_check_branch
        %167 = sbr.rel (%p165) target = $region20
      $region19: #{double_conv.1} parent=11 // pred_region
        _
      $region20: #{double_conv.1} parent=11 // pred_fallthru
        _
      // Predicated region
      $region21: #{double_conv.1} parent=11 // pred_check
        %p168 = pneg %p100
      $region22: #{double_conv.1} parent=11 // pred_check_branch
        %170 = sbr.rel (%p168) target = $region24
      $region23: #{double_conv.1} parent=11 // pred_region
        _
      $region24: #{double_conv.1} parent=11 // pred_fallthru
        _
      // Predicated region
      $region25: #{double_conv.1} parent=11 // pred_check
        %p171 = pneg %p121
      $region26: #{double_conv.1} parent=11 // pred_check_branch
        %173 = sbr.rel (%p171) target = $region28
      $region27: #{double_conv.1} parent=11 // pred_region
        _
      $region28: #{double_conv.1} parent=11 // pred_fallthru
        _
    $region12: #{double_conv.1} parent=5 // pred_fallthru
      _
    %p174 = scmp.lt.s32.totalorder %s11, 2
    // Predicated region
    $region29: #{double_conv.1} parent=5 // pred_check
      %p175 = pneg %p174
    $region30: #{double_conv.1} parent=5 // pred_check_branch
      %177 = sbr.rel (%p175) target = $region32
    $region31: #{double_conv.1} parent=5 // pred_region
      // Predicated region
      $region33: #{double_conv.1} parent=31 // pred_check
        %p178 = pneg %p31
      $region34: #{double_conv.1} parent=31 // pred_check_branch
        %180 = sbr.rel (%p178) target = $region36
      $region35: #{double_conv.1} parent=31 // pred_region
        %p181 = scmp.lt.s32.totalorder %s11, 1
        %s182 = scalar_select %p181, %s11, 1
        %s183 = smul.addr %s182, 2
        %s184 = smul.addr %s183, 4
        %s185 = scalar_lea.vmem %s0, %s184
      $region36: #{double_conv.1} parent=31 // pred_fallthru
        _
    $region32: #{double_conv.1} parent=5 // pred_fallthru
      _
    %p186 = scmp.le.s32.totalorder 1, %s11
    %p187 = scmp.lt.s32.totalorder %s11, 3
    %p188 = pnand %p186, %p187
    %p189 = pneg %p188
    // Predicated region
    $region37: #{double_conv.1} parent=5 // pred_check
      _
    $region38: #{double_conv.1} parent=5 // pred_check_branch
      %191 = sbr.rel (%p188) target = $region40
    $region39: #{double_conv.1} parent=5 // pred_region
      %s192 = ssub.s32 %s11, 1
      %p193 = scmp.lt.s32.totalorder %s16, 1
      %s194 = scalar_select %p193, %s16, 1
      %s195 = smul.addr %s194, 2
      %s196 = smul.addr %s195, 4
      %s197 = scalar_lea.vmem %s0, %s196
      %p198 = pneg %p37
      %p199 = pneg %p34
      %p200 = pneg %p58
      %p201 = pneg %p55
      %p202 = pneg %p79
      %p203 = pneg %p76
      %p204 = pneg %p100
      %p205 = pneg %p97
      %p206 = pneg %p121
      %p207 = pneg %p118
      %p208 = pneg %p147
      %p209 = pneg %p144
      %p210 = scmp.lt.s32.totalorder %s16, 1
      %s211 = scalar_select %p210, %s16, 1
      %s212 = smul.addr %s211, 2
      %s213 = smul.addr %s212, 8
      %s214 = scalar_lea.vmem %s5, %s213
      %p215 = scmp.lt.s32.totalorder %s16, 1
      %s216 = scalar_select %p215, %s16, 1
      %s217 = smul.addr %s216, 2
      %s218 = smul.addr %s217, 4
      %s219 = scalar_lea.vmem %s0, %s218
      %p220 = scmp.lt.s32.totalorder %s16, 1
      %s221 = scalar_select %p220, %s16, 1
      %s222 = smul.addr %s221, 2
      %s223 = smul.addr %s222, 8
      %s224 = scalar_lea.vmem %s5, %s223
      %vm225 = vcmask 31744
      %226 = vst.msk [vmem:[#allocation2] sm:$0xff] %vm225, 0.0
      %227 = vst.msk [vmem:[#allocation2 + $0x8] sm:$0xff] %vm225, 0.0
      %vm228 = vcmask 25600
      %229 = vst.msk [vmem:[#allocation2 + $0x10] sm:$0x3] %vm228, 0.0
      %230 = vst.msk [vmem:[#allocation2 + $0x18] sm:$0xff] %vm225, 0.0
      %231 = vst.msk [vmem:[#allocation2 + $0x20] sm:$0xff] %vm225, 0.0
      %232 = vst.msk [vmem:[#allocation2 + $0x28] sm:$0x3] %vm228, 0.0
      %233 = vst.msk [vmem:[#allocation2 + $0x30] sm:$0xff] %vm225, 0.0
      %234 = vst.msk [vmem:[#allocation2 + $0x38] sm:$0xff] %vm225, 0.0
      %235 = vst.msk [vmem:[#allocation2 + $0x40] sm:$0x3] %vm228, 0.0
      %236 = vst.msk [vmem:[#allocation2 + $0x48] sm:$0xff] %vm225, 0.0
      %237 = vst.msk [vmem:[#allocation2 + $0x50] sm:$0xff] %vm225, 0.0
      %238 = vst.msk [vmem:[#allocation2 + $0x58] sm:$0x3] %vm228, 0.0
      %239 = vst.msk [vmem:[#allocation2 + $0x60] sm:$0xff] %vm225, 0.0
      %240 = vst.msk [vmem:[#allocation2 + $0x68] sm:$0xff] %vm225, 0.0
      %241 = vst.msk [vmem:[#allocation2 + $0x70] sm:$0x3] %vm228, 0.0
      %242 = vst.msk [vmem:[#allocation2 + $0x78] sm:$0xff] %vm225, 0.0
      %243 = vst.msk [vmem:[#allocation2 + $0x80] sm:$0xff] %vm225, 0.0
      %244 = vst.msk [vmem:[#allocation2 + $0x88] sm:$0x3] %vm228, 0.0
      %245 = vst.msk [vmem:[#allocation2 + $0x90] sm:$0xff] %vm225, 0.0
      %246 = vst.msk [vmem:[#allocation2 + $0x98] sm:$0xff] %vm225, 0.0
      %247 = vst.msk [vmem:[#allocation2 + $0xa0] sm:$0x3] %vm228, 0.0
      %248 = vst.msk [vmem:[#allocation2 + $0xa8] sm:$0xff] %vm225, 0.0
      %249 = vst.msk [vmem:[#allocation2 + $0xb0] sm:$0xff] %vm225, 0.0
      %250 = vst.msk [vmem:[#allocation2 + $0xb8] sm:$0x3] %vm228, 0.0
      %251 = vst.msk [vmem:[#allocation2 + $0xc0] sm:$0xff] %vm225, 0.0
      %252 = vst.msk [vmem:[#allocation2 + $0xc8] sm:$0xff] %vm225, 0.0
      %253 = vst.msk [vmem:[#allocation2 + $0xd0] sm:$0x3] %vm228, 0.0
      %254 = vst.msk [vmem:[#allocation2 + $0xd8] sm:$0xff] %vm225, 0.0
      %255 = vst.msk [vmem:[#allocation2 + $0xe0] sm:$0xff] %vm225, 0.0
      %256 = vst.msk [vmem:[#allocation2 + $0xe8] sm:$0x3] %vm228, 0.0
      %257 = vst.msk [vmem:[#allocation2 + $0xf0] sm:$0xff] %vm225, 0.0
      %258 = vst.msk [vmem:[#allocation2 + $0xf8] sm:$0xff] %vm225, 0.0
      %259 = vst.msk [vmem:[#allocation2 + $0x100] sm:$0x3] %vm228, 0.0
      %260 = vst.msk [vmem:[#allocation2 + $0x108] sm:$0xff] %vm225, 0.0
      %261 = vst.msk [vmem:[#allocation2 + $0x110] sm:$0xff] %vm225, 0.0
      %262 = vst.msk [vmem:[#allocation2 + $0x118] sm:$0x3] %vm228, 0.0
      %263 = vst.msk [vmem:[#allocation2 + $0x120] sm:$0xff] %vm225, 0.0
      %264 = vst.msk [vmem:[#allocation2 + $0x128] sm:$0xff] %vm225, 0.0
      %265 = vst.msk [vmem:[#allocation2 + $0x130] sm:$0x3] %vm228, 0.0
      %266 = vst.msk [vmem:[#allocation2 + $0x138] sm:$0xff] %vm225, 0.0
      %267 = vst.msk [vmem:[#allocation2 + $0x140] sm:$0xff] %vm225, 0.0
      %268 = vst.msk [vmem:[#allocation2 + $0x148] sm:$0x3] %vm228, 0.0
      %269 = vst.msk [vmem:[#allocation2 + $0x150] sm:$0xff] %vm225, 0.0
      %270 = vst.msk [vmem:[#allocation2 + $0x158] sm:$0xff] %vm225, 0.0
      %271 = vst.msk [vmem:[#allocation2 + $0x160] sm:$0x3] %vm228, 0.0
      %272 = vst.msk [vmem:[#allocation2 + $0x168] sm:$0xff] %vm225, 0.0
      %273 = vst.msk [vmem:[#allocation2 + $0x170] sm:$0xff] %vm225, 0.0
      %274 = vst.msk [vmem:[#allocation2 + $0x178] sm:$0x3] %vm228, 0.0
      %275 = vst.msk [vmem:[#allocation2 + $0x180] sm:$0xff] %vm225, 0.0
      %276 = vst.msk [vmem:[#allocation2 + $0x188] sm:$0xff] %vm225, 0.0
      %277 = vst.msk [vmem:[#allocation2 + $0x190] sm:$0x3] %vm228, 0.0
      %278 = vst.msk [vmem:[#allocation2 + $0x198] sm:$0xff] %vm225, 0.0
      %279 = vst.msk [vmem:[#allocation2 + $0x1a0] sm:$0xff] %vm225, 0.0
      %280 = vst.msk [vmem:[#allocation2 + $0x1a8] sm:$0x3] %vm228, 0.0
      %v281 = vld [vmem:[%s219] sm:$0xff]
      %v283 = vcombine.high %v281, %v281
      %285 = vxpose.xlu0.b32.start [1/16] %v281, 128
      %286 = vxpose.xlu0.b32.cont [2/16] 0.0, 128
      %287 = vxpose.xlu0.b32.cont [3/16] 0.0, 128
      %288 = vxpose.xlu0.b32.cont [4/16] 0.0, 128
      %289 = vxpose.xlu0.b32.cont [5/16] 0.0, 128
      %290 = vxpose.xlu0.b32.cont [6/16] 0.0, 128
      %291 = vxpose.xlu0.b32.cont [7/16] 0.0, 128
      %292 = vxpose.xlu0.b32.cont [8/16] 0.0, 128
      %293 = vxpose.xlu0.b32.cont [9/16] 0.0, 128
      %294 = vxpose.xlu0.b32.cont [10/16] 0.0, 128
      %295 = vxpose.xlu0.b32.cont [11/16] 0.0, 128
      %296 = vxpose.xlu0.b32.cont [12/16] 0.0, 128
      %297 = vxpose.xlu0.b32.cont [13/16] 0.0, 128
      %298 = vxpose.xlu0.b32.cont [14/16] 0.0, 128
      %299 = vxpose.xlu0.b32.cont [15/16] 0.0, 128
      %300 = vxpose.xlu0.b32.end [16/16] 0.0, 128
      %v301 = vpop.trf.xlu0
      %v302 = vpop.trf.xlu0
      %v303 = vpop.trf.xlu0
      %v304 = vpop.trf.xlu0
      %v305 = vpop.trf.xlu0
      %v306 = vpop.trf.xlu0
      %v307 = vpop.trf.xlu0
      %v308 = vpop.trf.xlu0
      %v309 = vpop.trf.xlu0
      %v310 = vpop.trf.xlu0
      %v311 = vpop.trf.xlu0
      %v312 = vpop.trf.xlu0
      %v313 = vpop.trf.xlu0
      %v314 = vpop.trf.xlu0
      %v315 = vpop.trf.xlu0
      %v316 = vpop.trf.xlu0
      %317 = vxpose.xlu0.b32.start [1/16] %v283, 128
      %318 = vxpose.xlu0.b32.cont [2/16] 0.0, 128
      %319 = vxpose.xlu0.b32.cont [3/16] 0.0, 128
      %320 = vxpose.xlu0.b32.cont [4/16] 0.0, 128
      %321 = vxpose.xlu0.b32.cont [5/16] 0.0, 128
      %322 = vxpose.xlu0.b32.cont [6/16] 0.0, 128
      %323 = vxpose.xlu0.b32.cont [7/16] 0.0, 128
      %324 = vxpose.xlu0.b32.cont [8/16] 0.0, 128
      %325 = vxpose.xlu0.b32.cont [9/16] 0.0, 128
      %326 = vxpose.xlu0.b32.cont [10/16] 0.0, 128
      %327 = vxpose.xlu0.b32.cont [11/16] 0.0, 128
      %328 = vxpose.xlu0.b32.cont [12/16] 0.0, 128
      %329 = vxpose.xlu0.b32.cont [13/16] 0.0, 128
      %330 = vxpose.xlu0.b32.cont [14/16] 0.0, 128
      %331 = vxpose.xlu0.b32.cont [15/16] 0.0, 128
      %332 = vxpose.xlu0.b32.end [16/16] 0.0, 128
      %v333 = vpop.trf.xlu0
      %v334 = vpop.trf.xlu0
      %v335 = vpop.trf.xlu0
      %v336 = vpop.trf.xlu0
      %v337 = vpop.trf.xlu0
      %v338 = vpop.trf.xlu0
      %v339 = vpop.trf.xlu0
      %v340 = vpop.trf.xlu0
      %v341 = vpop.trf.xlu0
      %v342 = vpop.trf.xlu0
      %v343 = vpop.trf.xlu0
      %v344 = vpop.trf.xlu0
      %v345 = vpop.trf.xlu0
      %v346 = vpop.trf.xlu0
      %v347 = vpop.trf.xlu0
      %v348 = vpop.trf.xlu0
      %s349 = scalar_lea.vmem [#allocation2], 24
      %350 = vst.msk [vmem:[%s349 + $0x1] sm:$0xff] %vm225, %v301
      %351 = vst.msk [vmem:[%s349 + $0x9] sm:$0xff] %vm225, %v302
      %352 = vst.msk [vmem:[%s349 + $0x19] sm:$0xff] %vm225, %v303
      %353 = vst.msk [vmem:[%s349 + $0x21] sm:$0xff] %vm225, %v304
      %354 = vst.msk [vmem:[%s349 + $0x31] sm:$0xff] %vm225, %v305
      %355 = vst.msk [vmem:[%s349 + $0x39] sm:$0xff] %vm225, %v306
      %356 = vst.msk [vmem:[%s349 + $0x49] sm:$0xff] %vm225, %v307
      %357 = vst.msk [vmem:[%s349 + $0x51] sm:$0xff] %vm225, %v308
      %358 = vst.msk [vmem:[%s349 + $0x61] sm:$0xff] %vm225, %v309
      %359 = vst.msk [vmem:[%s349 + $0x69] sm:$0xff] %vm225, %v310
      %360 = vst.msk [vmem:[%s349 + $0x79] sm:$0xff] %vm225, %v311
      %361 = vst.msk [vmem:[%s349 + $0x81] sm:$0xff] %vm225, %v312
      %362 = vst.msk [vmem:[%s349 + $0x91] sm:$0xff] %vm225, %v313
      %363 = vst.msk [vmem:[%s349 + $0x99] sm:$0xff] %vm225, %v314
      %364 = vst.msk [vmem:[%s349 + $0xa9] sm:$0xff] %vm225, %v315
      %365 = vst.msk [vmem:[%s349 + $0xb1] sm:$0xff] %vm225, %v316
      %366 = vst.msk [vmem:[%s349 + $0xc1] sm:$0xff] %vm225, %v333
      %367 = vst.msk [vmem:[%s349 + $0xc9] sm:$0xff] %vm225, %v334
      %368 = vst.msk [vmem:[%s349 + $0xd9] sm:$0xff] %vm225, %v335
      %369 = vst.msk [vmem:[%s349 + $0xe1] sm:$0xff] %vm225, %v336
      %370 = vst.msk [vmem:[%s349 + $0xf1] sm:$0xff] %vm225, %v337
      %371 = vst.msk [vmem:[%s349 + $0xf9] sm:$0xff] %vm225, %v338
      %372 = vst.msk [vmem:[%s349 + $0x109] sm:$0xff] %vm225, %v339
      %373 = vst.msk [vmem:[%s349 + $0x111] sm:$0xff] %vm225, %v340
      %374 = vst.msk [vmem:[%s349 + $0x121] sm:$0xff] %vm225, %v341
      %375 = vst.msk [vmem:[%s349 + $0x129] sm:$0xff] %vm225, %v342
      %376 = vst.msk [vmem:[%s349 + $0x139] sm:$0xff] %vm225, %v343
      %377 = vst.msk [vmem:[%s349 + $0x141] sm:$0xff] %vm225, %v344
      %378 = vst.msk [vmem:[%s349 + $0x151] sm:$0xff] %vm225, %v345
      %379 = vst.msk [vmem:[%s349 + $0x159] sm:$0xff] %vm225, %v346
      %380 = vst.msk [vmem:[%s349 + $0x169] sm:$0xff] %vm225, %v347
      %381 = vst.msk [vmem:[%s349 + $0x171] sm:$0xff] %vm225, %v348
      %v382 = vld [vmem:[%s1] sm:$0xf]
      %v383 = vld [vmem:[%s1 + $0x4] sm:$0xf]
      %v384 = vld [vmem:[%s1 + $0x8] sm:$0xf]
      %v385 = vld [vmem:[%s1 + $0xc] sm:$0xf]
      %v386 = vld [vmem:[%s1 + $0x10] sm:$0xf]
      %v387 = vld [vmem:[%s1 + $0x14] sm:$0xf]
      %v388 = vld [vmem:[%s1 + $0x18] sm:$0xf]
      %v389 = vld [vmem:[%s1 + $0x1c] sm:$0xf]
      %v390 = vld [vmem:[%s1 + $0x20] sm:$0xf]
      %v391 = vld [vmem:[#allocation2] sm:$0xff]
      %v392 = vld [vmem:[#allocation2 + $0x8] sm:$0xff]
      %v393 = vld [vmem:[#allocation2 + $0x18] sm:$0xff]
      %v394 = vld [vmem:[#allocation2 + $0x20] sm:$0xff]
      %v395 = vld [vmem:[#allocation2 + $0x30] sm:$0xff]
      %v396 = vld [vmem:[#allocation2 + $0x38] sm:$0xff]
      %v397 = vld [vmem:[#allocation2 + $0x48] sm:$0xff]
      %v398 = vld [vmem:[#allocation2 + $0x50] sm:$0xff]
      %v399 = vld [vmem:[#allocation2 + $0x60] sm:$0xff]
      %v400 = vld [vmem:[#allocation2 + $0x68] sm:$0xff]
      %v401 = vld [vmem:[#allocation2 + $0x78] sm:$0xff]
      %v402 = vld [vmem:[#allocation2 + $0x80] sm:$0xff]
      %v403 = vld [vmem:[#allocation2 + $0x90] sm:$0xff]
      %v404 = vld [vmem:[#allocation2 + $0x98] sm:$0xff]
      %v405 = vld [vmem:[#allocation2 + $0xa8] sm:$0xff]
      %v406 = vld [vmem:[#allocation2 + $0xb0] sm:$0xff]
      %v407 = vld [vmem:[#allocation2 + $0xc0] sm:$0xff]
      %v408 = vld [vmem:[#allocation2 + $0xc8] sm:$0xff]
      %v409 = vld [vmem:[#allocation2 + $0xd8] sm:$0xff]
      %v410 = vld [vmem:[#allocation2 + $0xe0] sm:$0xff]
      %v411 = vld [vmem:[#allocation2 + $0xf0] sm:$0xff]
      %v412 = vld [vmem:[#allocation2 + $0xf8] sm:$0xff]
      %v413 = vld [vmem:[#allocation2 + $0x108] sm:$0xff]
      %v414 = vld [vmem:[#allocation2 + $0x110] sm:$0xff]
      %v415 = vld [vmem:[#allocation2 + $0x120] sm:$0xff]
      %v416 = vld [vmem:[#allocation2 + $0x128] sm:$0xff]
      %v417 = vld [vmem:[#allocation2 + $0x138] sm:$0xff]
      %v418 = vld [vmem:[#allocation2 + $0x140] sm:$0xff]
      %v419 = vld [vmem:[#allocation2 + $0x150] sm:$0xff]
      %v420 = vld [vmem:[#allocation2 + $0x158] sm:$0xff]
      %v421 = vld [vmem:[#allocation2 + $0x168] sm:$0xff]
      %v422 = vld [vmem:[#allocation2 + $0x170] sm:$0xff]
      %v423 = vld [vmem:[#allocation2 + $0x1] sm:$0xff]
      %v424 = vld [vmem:[#allocation2 + $0x9] sm:$0xff]
      %v425 = vld [vmem:[#allocation2 + $0x19] sm:$0xff]
      %v426 = vld [vmem:[#allocation2 + $0x21] sm:$0xff]
      %v427 = vld [vmem:[#allocation2 + $0x31] sm:$0xff]
      %v428 = vld [vmem:[#allocation2 + $0x39] sm:$0xff]
      %v429 = vld [vmem:[#allocation2 + $0x49] sm:$0xff]
      %v430 = vld [vmem:[#allocation2 + $0x51] sm:$0xff]
      %v431 = vld [vmem:[#allocation2 + $0x61] sm:$0xff]
      %v432 = vld [vmem:[#allocation2 + $0x69] sm:$0xff]
      %v433 = vld [vmem:[#allocation2 + $0x79] sm:$0xff]
      %v434 = vld [vmem:[#allocation2 + $0x81] sm:$0xff]
      %v435 = vld [vmem:[#allocation2 + $0x91] sm:$0xff]
      %v436 = vld [vmem:[#allocation2 + $0x99] sm:$0xff]
      %v437 = vld [vmem:[#allocation2 + $0xa9] sm:$0xff]
      %v438 = vld [vmem:[#allocation2 + $0xb1] sm:$0xff]
      %v439 = vld [vmem:[#allocation2 + $0xc1] sm:$0xff]
      %v440 = vld [vmem:[#allocation2 + $0xc9] sm:$0xff]
      %v441 = vld [vmem:[#allocation2 + $0xd9] sm:$0xff]
      %v442 = vld [vmem:[#allocation2 + $0xe1] sm:$0xff]
      %v443 = vld [vmem:[#allocation2 + $0xf1] sm:$0xff]
      %v444 = vld [vmem:[#allocation2 + $0xf9] sm:$0xff]
      %v445 = vld [vmem:[#allocation2 + $0x109] sm:$0xff]
      %v446 = vld [vmem:[#allocation2 + $0x111] sm:$0xff]
      %v447 = vld [vmem:[#allocation2 + $0x121] sm:$0xff]
      %v448 = vld [vmem:[#allocation2 + $0x129] sm:$0xff]
      %v449 = vld [vmem:[#allocation2 + $0x139] sm:$0xff]
      %v450 = vld [vmem:[#allocation2 + $0x141] sm:$0xff]
      %v451 = vld [vmem:[#allocation2 + $0x151] sm:$0xff]
      %v452 = vld [vmem:[#allocation2 + $0x159] sm:$0xff]
      %v453 = vld [vmem:[#allocation2 + $0x169] sm:$0xff]
      %v454 = vld [vmem:[#allocation2 + $0x171] sm:$0xff]
      %v456 = vsel %vm225, %v423, 0
      %v459 = vsel %vm225, %v424, 0
      %v462 = vsel %vm225, %v425, 0
      %v465 = vsel %vm225, %v426, 0
      %v468 = vsel %vm225, %v427, 0
      %v471 = vsel %vm225, %v428, 0
      %v474 = vsel %vm225, %v429, 0
      %v477 = vsel %vm225, %v430, 0
      %v480 = vsel %vm225, %v431, 0
      %v483 = vsel %vm225, %v432, 0
      %v486 = vsel %vm225, %v433, 0
      %v489 = vsel %vm225, %v434, 0
      %v492 = vsel %vm225, %v435, 0
      %v495 = vsel %vm225, %v436, 0
      %v498 = vsel %vm225, %v437, 0
      %v501 = vsel %vm225, %v438, 0
      %v504 = vsel %vm225, %v439, 0
      %v507 = vsel %vm225, %v440, 0
      %v510 = vsel %vm225, %v441, 0
      %v513 = vsel %vm225, %v442, 0
      %v516 = vsel %vm225, %v443, 0
      %v519 = vsel %vm225, %v444, 0
      %v522 = vsel %vm225, %v445, 0
      %v525 = vsel %vm225, %v446, 0
      %v528 = vsel %vm225, %v447, 0
      %v531 = vsel %vm225, %v448, 0
      %v534 = vsel %vm225, %v449, 0
      %v537 = vsel %vm225, %v450, 0
      %v540 = vsel %vm225, %v451, 0
      %v543 = vsel %vm225, %v452, 0
      %v546 = vsel %vm225, %v453, 0
      %v549 = vsel %vm225, %v454, 0
      %vm551 = vcmask 1043456
      %v553 = vsel %vm551, %v383, 0
      %555 = vmatprep.subr.mxu0 0.0
      %556 = vmatpush1.msra.mxu0 %v553
      %557 = vmatprep.subr.mxu0 0.0
      %558 = vmatpush1.msra.mxu0 0.0
      %559 = vmatprep.subr.mxu0 0.0
      %560 = vmatpush1.msra.mxu0 0.0
      %561 = vmatprep.subr.mxu0 0.0
      %562 = vmatpush1.msra.mxu0 0.0
      %563 = vmatprep.subr.mxu0 0.0
      %564 = vmatpush1.msra.mxu0 0.0
      %565 = vmatprep.subr.mxu0 0.0
      %566 = vmatpush1.msra.mxu0 0.0
      %567 = vmatprep.subr.mxu0 0.0
      %568 = vmatpush1.msra.mxu0 0.0
      %569 = vmatprep.subr.mxu0 0.0
      %570 = vmatpush1.msra.mxu0 0.0
      %571 = vmatprep.subr.mxu0 0.0
      %572 = vmatpush1.msra.mxu0 0.0
      %573 = vmatprep.subr.mxu0 0.0
      %574 = vmatpush1.msra.mxu0 0.0
      %575 = vmatprep.subr.mxu0 0.0
      %576 = vmatpush1.msra.mxu0 0.0
      %577 = vmatprep.subr.mxu0 0.0
      %578 = vmatpush1.msra.mxu0 0.0
      %579 = vmatprep.subr.mxu0 0.0
      %580 = vmatpush1.msra.mxu0 0.0
      %581 = vmatprep.subr.mxu0 0.0
      %582 = vmatpush1.msra.mxu0 0.0
      %583 = vmatprep.subr.mxu0 0.0
      %584 = vmatpush1.msra.mxu0 0.0
      %585 = vmatprep.subr.mxu0 0.0
      %586 = vmatpush1.msra.mxu0 0.0
      %587 = vmatprep.subr.mxu0 0.0
      %588 = vmatpush1.msra.mxu0 0.0
      %589 = vmatprep.subr.mxu0 0.0
      %590 = vmatpush1.msra.mxu0 0.0
      %591 = vmatprep.subr.mxu0 0.0
      %592 = vmatpush1.msra.mxu0 0.0
      %593 = vmatprep.subr.mxu0 0.0
      %594 = vmatpush1.msra.mxu0 0.0
      %595 = vmatprep.subr.mxu0 0.0
      %596 = vmatpush1.msra.mxu0 0.0
      %597 = vmatprep.subr.mxu0 0.0
      %598 = vmatpush1.msra.mxu0 0.0
      %599 = vmatprep.subr.mxu0 0.0
      %600 = vmatpush1.msra.mxu0 0.0
      %601 = vmatprep.subr.mxu0 0.0
      %602 = vmatpush1.msra.mxu0 0.0
      %603 = vmatprep.subr.mxu0 0.0
      %604 = vmatpush1.msra.mxu0 0.0
      %605 = vmatprep.subr.mxu0 0.0
      %606 = vmatpush1.msra.mxu0 0.0
      %607 = vmatprep.subr.mxu0 0.0
      %608 = vmatpush1.msra.mxu0 0.0
      %609 = vmatprep.subr.mxu0 0.0
      %610 = vmatpush1.msra.mxu0 0.0
      %611 = vmatprep.subr.mxu0 0.0
      %612 = vmatpush1.msra.mxu0 0.0
      %613 = vmatprep.subr.mxu0 0.0
      %614 = vmatpush1.msra.mxu0 0.0
      %615 = vmatprep.subr.mxu0 0.0
      %616 = vmatpush1.msra.mxu0 0.0
      %617 = vmatprep.subr.mxu0 0.0
      %618 = vmatpush1.msra.mxu0 0.0
      %619 = vmatprep.mubr.f32.mxu0 0.0
      %620 = vmatmul.mubr.f32.gmra.mrb[0].mxu0 %v456
      %v621 = vpop.f32.mrb[0].mxu0
      %v622 = vadd.f32 0.0, %v621
      %v623 = vpop.f32.mrb[0].mxu0
      %624 = vmatprep.mubr.f32.mxu0 0.0
      %625 = vmatmul.mubr.f32.gmra.mrb[0].mxu0 %v459
      %v626 = vpop.f32.mrb[0].mxu0
      %v627 = vadd.f32 0.0, %v626
      %v628 = vpop.f32.mrb[0].mxu0
      %629 = vmatprep.mubr.f32.mxu0 0.0
      %630 = vmatmul.mubr.f32.gmra.mrb[0].mxu0 %v462
      %v631 = vpop.f32.mrb[0].mxu0
      %v632 = vadd.f32 0.0, %v631
      %v633 = vpop.f32.mrb[0].mxu0
      %634 = vmatprep.mubr.f32.mxu0 0.0
      %635 = vmatmul.mubr.f32.gmra.mrb[0].mxu0 %v465
      %v636 = vpop.f32.mrb[0].mxu0
      %v637 = vadd.f32 0.0, %v636
      %v638 = vpop.f32.mrb[0].mxu0
      %639 = vmatprep.mubr.f32.mxu0 0.0
      %640 = vmatmul.mubr.f32.gmra.mrb[0].mxu0 %v468
      %v641 = vpop.f32.mrb[0].mxu0
      %v642 = vadd.f32 0.0, %v641
      %v643 = vpop.f32.mrb[0].mxu0
      %644 = vmatprep.mubr.f32.mxu0 0.0
      %645 = vmatmul.mubr.f32.gmra.mrb[0].mxu0 %v471
      %v646 = vpop.f32.mrb[0].mxu0
      %v647 = vadd.f32 0.0, %v646
      %v648 = vpop.f32.mrb[0].mxu0
      %649 = vmatprep.mubr.f32.mxu0 0.0
      %650 = vmatmul.mubr.f32.gmra.mrb[0].mxu0 %v474
      %v651 = vpop.f32.mrb[0].mxu0
      %v652 = vadd.f32 0.0, %v651
      %v653 = vpop.f32.mrb[0].mxu0
      %654 = vmatprep.mubr.f32.mxu0 0.0
      %655 = vmatmul.mubr.f32.gmra.mrb[0].mxu0 %v477
      %v656 = vpop.f32.mrb[0].mxu0
      %v657 = vadd.f32 0.0, %v656
      %v658 = vpop.f32.mrb[0].mxu0
      %659 = vmatprep.mubr.f32.mxu0 0.0
      %660 = vmatmul.mubr.f32.gmra.mrb[0].mxu0 %v480
      %v661 = vpop.f32.mrb[0].mxu0
      %v662 = vadd.f32 0.0, %v661
      %v663 = vpop.f32.mrb[0].mxu0
      %664 = vmatprep.mubr.f32.mxu0 0.0
      %665 = vmatmul.mubr.f32.gmra.mrb[0].mxu0 %v483
      %v666 = vpop.f32.mrb[0].mxu0
      %v667 = vadd.f32 0.0, %v666
      %v668 = vpop.f32.mrb[0].mxu0
      %669 = vmatprep.mubr.f32.mxu0 0.0
      %670 = vmatmul.mubr.f32.gmra.mrb[0].mxu0 %v486
      %v671 = vpop.f32.mrb[0].mxu0
      %v672 = vadd.f32 0.0, %v671
      %v673 = vpop.f32.mrb[0].mxu0
      %674 = vmatprep.mubr.f32.mxu0 0.0
      %675 = vmatmul.mubr.f32.gmra.mrb[0].mxu0 %v489
      %v676 = vpop.f32.mrb[0].mxu0
      %v677 = vadd.f32 0.0, %v676
      %v678 = vpop.f32.mrb[0].mxu0
      %679 = vmatprep.mubr.f32.mxu0 0.0
      %680 = vmatmul.mubr.f32.gmra.mrb[0].mxu0 %v492
      %v681 = vpop.f32.mrb[0].mxu0
      %v682 = vadd.f32 0.0, %v681
      %v683 = vpop.f32.mrb[0].mxu0
      %684 = vmatprep.mubr.f32.mxu0 0.0
      %685 = vmatmul.mubr.f32.gmra.mrb[0].mxu0 %v495
      %v686 = vpop.f32.mrb[0].mxu0
      %v687 = vadd.f32 0.0, %v686
      %v688 = vpop.f32.mrb[0].mxu0
      %689 = vmatprep.mubr.f32.mxu0 0.0
      %690 = vmatmul.mubr.f32.gmra.mrb[0].mxu0 %v498
      %v691 = vpop.f32.mrb[0].mxu0
      %v692 = vadd.f32 0.0, %v691
      %v693 = vpop.f32.mrb[0].mxu0
      %694 = vmatprep.mubr.f32.mxu0 0.0
      %695 = vmatmul.mubr.f32.gmra.mrb[0].mxu0 %v501
      %v696 = vpop.f32.mrb[0].mxu0
      %v697 = vadd.f32 0.0, %v696
      %v698 = vpop.f32.mrb[0].mxu0
      %699 = vmatprep.mubr.f32.mxu0 0.0
      %700 = vmatmul.mubr.f32.gmra.mrb[0].mxu0 %v504
      %v701 = vpop.f32.mrb[0].mxu0
      %v702 = vadd.f32 0.0, %v701
      %v703 = vpop.f32.mrb[0].mxu0
      %704 = vmatprep.mubr.f32.mxu0 0.0
      %705 = vmatmul.mubr.f32.gmra.mrb[0].mxu0 %v507
      %v706 = vpop.f32.mrb[0].mxu0
      %v707 = vadd.f32 0.0, %v706
      %v708 = vpop.f32.mrb[0].mxu0
      %709 = vmatprep.mubr.f32.mxu0 0.0
      %710 = vmatmul.mubr.f32.gmra.mrb[0].mxu0 %v510
      %v711 = vpop.f32.mrb[0].mxu0
      %v712 = vadd.f32 0.0, %v711
      %v713 = vpop.f32.mrb[0].mxu0
      %714 = vmatprep.mubr.f32.mxu0 0.0
      %715 = vmatmul.mubr.f32.gmra.mrb[0].mxu0 %v513
      %v716 = vpop.f32.mrb[0].mxu0
      %v717 = vadd.f32 0.0, %v716
      %v718 = vpop.f32.mrb[0].mxu0
      %719 = vmatprep.mubr.f32.mxu0 0.0
      %720 = vmatmul.mubr.f32.gmra.mrb[0].mxu0 %v516
      %v721 = vpop.f32.mrb[0].mxu0
      %v722 = vadd.f32 0.0, %v721
      %v723 = vpop.f32.mrb[0].mxu0
      %724 = vmatprep.mubr.f32.mxu0 0.0
      %725 = vmatmul.mubr.f32.gmra.mrb[0].mxu0 %v519
      %v726 = vpop.f32.mrb[0].mxu0
      %v727 = vadd.f32 0.0, %v726
      %v728 = vpop.f32.mrb[0].mxu0
      %729 = vmatprep.mubr.f32.mxu0 0.0
      %730 = vmatmul.mubr.f32.gmra.mrb[0].mxu0 %v522
      %v731 = vpop.f32.mrb[0].mxu0
      %v732 = vadd.f32 0.0, %v731
      %v733 = vpop.f32.mrb[0].mxu0
      %734 = vmatprep.mubr.f32.mxu0 0.0
      %735 = vmatmul.mubr.f32.gmra.mrb[0].mxu0 %v525
      %v736 = vpop.f32.mrb[0].mxu0
      %v737 = vadd.f32 0.0, %v736
      %v738 = vpop.f32.mrb[0].mxu0
      %739 = vmatprep.mubr.f32.mxu0 0.0
      %740 = vmatmul.mubr.f32.gmra.mrb[0].mxu0 %v528
      %v741 = vpop.f32.mrb[0].mxu0
      %v742 = vadd.f32 0.0, %v741
      %v743 = vpop.f32.mrb[0].mxu0
      %744 = vmatprep.mubr.f32.mxu0 0.0
      %745 = vmatmul.mubr.f32.gmra.mrb[0].mxu0 %v531
      %v746 = vpop.f32.mrb[0].mxu0
      %v747 = vadd.f32 0.0, %v746
      %v748 = vpop.f32.mrb[0].mxu0
      %749 = vmatprep.mubr.f32.mxu0 0.0
      %750 = vmatmul.mubr.f32.gmra.mrb[0].mxu0 %v534
      %v751 = vpop.f32.mrb[0].mxu0
      %v752 = vadd.f32 0.0, %v751
      %v753 = vpop.f32.mrb[0].mxu0
      %754 = vmatprep.mubr.f32.mxu0 0.0
      %755 = vmatmul.mubr.f32.gmra.mrb[0].mxu0 %v537
      %v756 = vpop.f32.mrb[0].mxu0
      %v757 = vadd.f32 0.0, %v756
      %v758 = vpop.f32.mrb[0].mxu0
      %759 = vmatprep.mubr.f32.mxu0 0.0
      %760 = vmatmul.mubr.f32.gmra.mrb[0].mxu0 %v540
      %v761 = vpop.f32.mrb[0].mxu0
      %v762 = vadd.f32 0.0, %v761
      %v763 = vpop.f32.mrb[0].mxu0
      %764 = vmatprep.mubr.f32.mxu0 0.0
      %765 = vmatmul.mubr.f32.gmra.mrb[0].mxu0 %v543
      %v766 = vpop.f32.mrb[0].mxu0
      %v767 = vadd.f32 0.0, %v766
      %v768 = vpop.f32.mrb[0].mxu0
      %769 = vmatprep.mubr.f32.mxu0 0.0
      %770 = vmatmul.mubr.f32.gmra.mrb[0].mxu0 %v546
      %v771 = vpop.f32.mrb[0].mxu0
      %v772 = vadd.f32 0.0, %v771
      %v773 = vpop.f32.mrb[0].mxu0
      %774 = vmatprep.mubr.f32.mxu0 0.0
      %775 = vmatmul.mubr.f32.gmra.mrb[0].mxu0 %v549
      %v776 = vpop.f32.mrb[0].mxu0
      %v777 = vadd.f32 0.0, %v776
      %v778 = vpop.f32.mrb[0].mxu0
      %779 = vdwg.mxu0
      %v781 = vsel %vm225, %v391, 0
      %v784 = vsel %vm225, %v392, 0
      %v787 = vsel %vm225, %v393, 0
      %v790 = vsel %vm225, %v394, 0
      %v793 = vsel %vm225, %v395, 0
      %v796 = vsel %vm225, %v396, 0
      %v799 = vsel %vm225, %v397, 0
      %v802 = vsel %vm225, %v398, 0
      %v805 = vsel %vm225, %v399, 0
      %v808 = vsel %vm225, %v400, 0
      %v811 = vsel %vm225, %v401, 0
      %v814 = vsel %vm225, %v402, 0
      %v817 = vsel %vm225, %v403, 0
      %v820 = vsel %vm225, %v404, 0
      %v823 = vsel %vm225, %v405, 0
      %v826 = vsel %vm225, %v406, 0
      %v829 = vsel %vm225, %v407, 0
      %v832 = vsel %vm225, %v408, 0
      %v835 = vsel %vm225, %v409, 0
      %v838 = vsel %vm225, %v410, 0
      %v841 = vsel %vm225, %v411, 0
      %v844 = vsel %vm225, %v412, 0
      %v847 = vsel %vm225, %v413, 0
      %v850 = vsel %vm225, %v414, 0
      %v853 = vsel %vm225, %v415, 0
      %v856 = vsel %vm225, %v416, 0
      %v859 = vsel %vm225, %v417, 0
      %v862 = vsel %vm225, %v418, 0
      %v865 = vsel %vm225, %v419, 0
      %v868 = vsel %vm225, %v420, 0
      %v871 = vsel %vm225, %v421, 0
      %v874 = vsel %vm225, %v422, 0
      %v877 = vsel %vm551, %v382, 0
      %879 = vmatprep.subr.mxu0 0.0
      %880 = vmatpush1.msra.mxu0 %v877
      %881 = vmatprep.subr.mxu0 0.0
      %882 = vmatpush1.msra.mxu0 0.0
      %883 = vmatprep.subr.mxu0 0.0
      %884 = vmatpush1.msra.mxu0 0.0
      %885 = vmatprep.subr.mxu0 0.0
      %886 = vmatpush1.msra.mxu0 0.0
      %887 = vmatprep.subr.mxu0 0.0
      %888 = vmatpush1.msra.mxu0 0.0
      %889 = vmatprep.subr.mxu0 0.0
      %890 = vmatpush1.msra.mxu0 0.0
      %891 = vmatprep.subr.mxu0 0.0
      %892 = vmatpush1.msra.mxu0 0.0
      %893 = vmatprep.subr.mxu0 0.0
      %894 = vmatpush1.msra.mxu0 0.0
      %895 = vmatprep.subr.mxu0 0.0
      %896 = vmatpush1.msra.mxu0 0.0
      %897 = vmatprep.subr.mxu0 0.0
      %898 = vmatpush1.msra.mxu0 0.0
      %899 = vmatprep.subr.mxu0 0.0
      %900 = vmatpush1.msra.mxu0 0.0
      %901 = vmatprep.subr.mxu0 0.0
      %902 = vmatpush1.msra.mxu0 0.0
      %903 = vmatprep.subr.mxu0 0.0
      %904 = vmatpush1.msra.mxu0 0.0
      %905 = vmatprep.subr.mxu0 0.0
      %906 = vmatpush1.msra.mxu0 0.0
      %907 = vmatprep.subr.mxu0 0.0
      %908 = vmatpush1.msra.mxu0 0.0
      %909 = vmatprep.subr.mxu0 0.0
      %910 = vmatpush1.msra.mxu0 0.0
      %911 = vmatprep.subr.mxu0 0.0
      %912 = vmatpush1.msra.mxu0 0.0
      %913 = vmatprep.subr.mxu0 0.0
      %914 = vmatpush1.msra.mxu0 0.0
      %915 = vmatprep.subr.mxu0 0.0
      %916 = vmatpush1.msra.mxu0 0.0
      %917 = vmatprep.subr.mxu0 0.0
      %918 = vmatpush1.msra.mxu0 0.0
      %919 = vmatprep.subr.mxu0 0.0
      %920 = vmatpush1.msra.mxu0 0.0
      %921 = vmatprep.subr.mxu0 0.0
      %922 = vmatpush1.msra.mxu0 0.0
      %923 = vmatprep.subr.mxu0 0.0
      %924 = vmatpush1.msra.mxu0 0.0
      %925 = vmatprep.subr.mxu0 0.0
      %926 = vmatpush1.msra.mxu0 0.0
      %927 = vmatprep.subr.mxu0 0.0
      %928 = vmatpush1.msra.mxu0 0.0
      %929 = vmatprep.subr.mxu0 0.0
      %930 = vmatpush1.msra.mxu0 0.0
      %931 = vmatprep.subr.mxu0 0.0
      %932 = vmatpush1.msra.mxu0 0.0
      %933 = vmatprep.subr.mxu0 0.0
      %934 = vmatpush1.msra.mxu0 0.0
      %935 = vmatprep.subr.mxu0 0.0
      %936 = vmatpush1.msra.mxu0 0.0
      %937 = vmatprep.subr.mxu0 0.0
      %938 = vmatpush1.msra.mxu0 0.0
      %939 = vmatprep.subr.mxu0 0.0
      %940 = vmatpush1.msra.mxu0 0.0
      %941 = vmatprep.subr.mxu0 0.0
      %942 = vmatpush1.msra.mxu0 0.0
      %943 = vmatprep.mubr.f32.mxu0 0.0
      %944 = vmatmul.mubr.f32.gmra.mrb[0].mxu0 %v781
      %v945 = vpop.f32.mrb[0].mxu0
      %v946 = vadd.f32 %v622, %v945
      %v947 = vpop.f32.mrb[0].mxu0
      %948 = vmatprep.mubr.f32.mxu0 0.0
      %949 = vmatmul.mubr.f32.gmra.mrb[0].mxu0 %v784
      %v950 = vpop.f32.mrb[0].mxu0
      %v951 = vadd.f32 %v627, %v950
      %v952 = vpop.f32.mrb[0].mxu0
      %953 = vmatprep.mubr.f32.mxu0 0.0
      %954 = vmatmul.mubr.f32.gmra.mrb[0].mxu0 %v787
      %v955 = vpop.f32.mrb[0].mxu0
      %v956 = vadd.f32 %v632, %v955
      %v957 = vpop.f32.mrb[0].mxu0
      %958 = vmatprep.mubr.f32.mxu0 0.0
      %959 = vmatmul.mubr.f32.gmra.mrb[0].mxu0 %v790
      %v960 = vpop.f32.mrb[0].mxu0
      %v961 = vadd.f32 %v637, %v960
      %v962 = vpop.f32.mrb[0].mxu0
      %963 = vmatprep.mubr.f32.mxu0 0.0
      %964 = vmatmul.mubr.f32.gmra.mrb[0].mxu0 %v793
      %v965 = vpop.f32.mrb[0].mxu0
      %v966 = vadd.f32 %v642, %v965
      %v967 = vpop.f32.mrb[0].mxu0
      %968 = vmatprep.mubr.f32.mxu0 0.0
      %969 = vmatmul.mubr.f32.gmra.mrb[0].mxu0 %v796
      %v970 = vpop.f32.mrb[0].mxu0
      %v971 = vadd.f32 %v647, %v970
      %v972 = vpop.f32.mrb[0].mxu0
      %973 = vmatprep.mubr.f32.mxu0 0.0
      %974 = vmatmul.mubr.f32.gmra.mrb[0].mxu0 %v799
      %v975 = vpop.f32.mrb[0].mxu0
      %v976 = vadd.f32 %v652, %v975
      %v977 = vpop.f32.mrb[0].mxu0
      %978 = vmatprep.mubr.f32.mxu0 0.0
      %979 = vmatmul.mubr.f32.gmra.mrb[0].mxu0 %v802
      %v980 = vpop.f32.mrb[0].mxu0
      %v981 = vadd.f32 %v657, %v980
      %v982 = vpop.f32.mrb[0].mxu0
      %983 = vmatprep.mubr.f32.mxu0 0.0
      %984 = vmatmul.mubr.f32.gmra.mrb[0].mxu0 %v805
      %v985 = vpop.f32.mrb[0].mxu0
      %v986 = vadd.f32 %v662, %v985
      %v987 = vpop.f32.mrb[0].mxu0
      %988 = vmatprep.mubr.f32.mxu0 0.0
      %989 = vmatmul.mubr.f32.gmra.mrb[0].mxu0 %v808
      %v990 = vpop.f32.mrb[0].mxu0
      %v991 = vadd.f32 %v667, %v990
      %v992 = vpop.f32.mrb[0].mxu0
      %993 = vmatprep.mubr.f32.mxu0 0.0
      %994 = vmatmul.mubr.f32.gmra.mrb[0].mxu0 %v811
      %v995 = vpop.f32.mrb[0].mxu0
      %v996 = vadd.f32 %v672, %v995
      %v997 = vpop.f32.mrb[0].mxu0
      %998 = vmatprep.mubr.f32.mxu0 0.0
      %999 = vmatmul.mubr.f32.gmra.mrb[0].mxu0 %v814
      %v1000 = vpop.f32.mrb[0].mxu0
      %v1001 = vadd.f32 %v677, %v1000
      %v1002 = vpop.f32.mrb[0].mxu0
      %1003 = vmatprep.mubr.f32.mxu0 0.0
      %1004 = vmatmul.mubr.f32.gmra.mrb[0].mxu0 %v817
      %v1005 = vpop.f32.mrb[0].mxu0
      %v1006 = vadd.f32 %v682, %v1005
      %v1007 = vpop.f32.mrb[0].mxu0
      %1008 = vmatprep.mubr.f32.mxu0 0.0
      %1009 = vmatmul.mubr.f32.gmra.mrb[0].mxu0 %v820
      %v1010 = vpop.f32.mrb[0].mxu0
      %v1011 = vadd.f32 %v687, %v1010
      %v1012 = vpop.f32.mrb[0].mxu0
      %1013 = vmatprep.mubr.f32.mxu0 0.0
      %1014 = vmatmul.mubr.f32.gmra.mrb[0].mxu0 %v823
      %v1015 = vpop.f32.mrb[0].mxu0
      %v1016 = vadd.f32 %v692, %v1015
      %v1017 = vpop.f32.mrb[0].mxu0
      %1018 = vmatprep.mubr.f32.mxu0 0.0
      %1019 = vmatmul.mubr.f32.gmra.mrb[0].mxu0 %v826
      %v1020 = vpop.f32.mrb[0].mxu0
      %v1021 = vadd.f32 %v697, %v1020
      %v1022 = vpop.f32.mrb[0].mxu0
      %1023 = vmatprep.mubr.f32.mxu0 0.0
      %1024 = vmatmul.mubr.f32.gmra.mrb[0].mxu0 %v829
      %v1025 = vpop.f32.mrb[0].mxu0
      %v1026 = vadd.f32 %v702, %v1025
      %v1027 = vpop.f32.mrb[0].mxu0
      %1028 = vmatprep.mubr.f32.mxu0 0.0
      %1029 = vmatmul.mubr.f32.gmra.mrb[0].mxu0 %v832
      %v1030 = vpop.f32.mrb[0].mxu0
      %v1031 = vadd.f32 %v707, %v1030
      %v1032 = vpop.f32.mrb[0].mxu0
      %1033 = vmatprep.mubr.f32.mxu0 0.0
      %1034 = vmatmul.mubr.f32.gmra.mrb[0].mxu0 %v835
      %v1035 = vpop.f32.mrb[0].mxu0
      %v1036 = vadd.f32 %v712, %v1035
      %v1037 = vpop.f32.mrb[0].mxu0
      %1038 = vmatprep.mubr.f32.mxu0 0.0
      %1039 = vmatmul.mubr.f32.gmra.mrb[0].mxu0 %v838
      %v1040 = vpop.f32.mrb[0].mxu0
      %v1041 = vadd.f32 %v717, %v1040
      %v1042 = vpop.f32.mrb[0].mxu0
      %1043 = vmatprep.mubr.f32.mxu0 0.0
      %1044 = vmatmul.mubr.f32.gmra.mrb[0].mxu0 %v841
      %v1045 = vpop.f32.mrb[0].mxu0
      %v1046 = vadd.f32 %v722, %v1045
      %v1047 = vpop.f32.mrb[0].mxu0
      %1048 = vmatprep.mubr.f32.mxu0 0.0
      %1049 = vmatmul.mubr.f32.gmra.mrb[0].mxu0 %v844
      %v1050 = vpop.f32.mrb[0].mxu0
      %v1051 = vadd.f32 %v727, %v1050
      %v1052 = vpop.f32.mrb[0].mxu0
      %1053 = vmatprep.mubr.f32.mxu0 0.0
      %1054 = vmatmul.mubr.f32.gmra.mrb[0].mxu0 %v847
      %v1055 = vpop.f32.mrb[0].mxu0
      %v1056 = vadd.f32 %v732, %v1055
      %v1057 = vpop.f32.mrb[0].mxu0
      %1058 = vmatprep.mubr.f32.mxu0 0.0
      %1059 = vmatmul.mubr.f32.gmra.mrb[0].mxu0 %v850
      %v1060 = vpop.f32.mrb[0].mxu0
      %v1061 = vadd.f32 %v737, %v1060
      %v1062 = vpop.f32.mrb[0].mxu0
      %1063 = vmatprep.mubr.f32.mxu0 0.0
      %1064 = vmatmul.mubr.f32.gmra.mrb[0].mxu0 %v853
      %v1065 = vpop.f32.mrb[0].mxu0
      %v1066 = vadd.f32 %v742, %v1065
      %v1067 = vpop.f32.mrb[0].mxu0
      %1068 = vmatprep.mubr.f32.mxu0 0.0
      %1069 = vmatmul.mubr.f32.gmra.mrb[0].mxu0 %v856
      %v1070 = vpop.f32.mrb[0].mxu0
      %v1071 = vadd.f32 %v747, %v1070
      %v1072 = vpop.f32.mrb[0].mxu0
      %1073 = vmatprep.mubr.f32.mxu0 0.0
      %1074 = vmatmul.mubr.f32.gmra.mrb[0].mxu0 %v859
      %v1075 = vpop.f32.mrb[0].mxu0
      %v1076 = vadd.f32 %v752, %v1075
      %v1077 = vpop.f32.mrb[0].mxu0
      %1078 = vmatprep.mubr.f32.mxu0 0.0
      %1079 = vmatmul.mubr.f32.gmra.mrb[0].mxu0 %v862
      %v1080 = vpop.f32.mrb[0].mxu0
      %v1081 = vadd.f32 %v757, %v1080
      %v1082 = vpop.f32.mrb[0].mxu0
      %1083 = vmatprep.mubr.f32.mxu0 0.0
      %1084 = vmatmul.mubr.f32.gmra.mrb[0].mxu0 %v865
      %v1085 = vpop.f32.mrb[0].mxu0
      %v1086 = vadd.f32 %v762, %v1085
      %v1087 = vpop.f32.mrb[0].mxu0
      %1088 = vmatprep.mubr.f32.mxu0 0.0
      %1089 = vmatmul.mubr.f32.gmra.mrb[0].mxu0 %v868
      %v1090 = vpop.f32.mrb[0].mxu0
      %v1091 = vadd.f32 %v767, %v1090
      %v1092 = vpop.f32.mrb[0].mxu0
      %1093 = vmatprep.mubr.f32.mxu0 0.0
      %1094 = vmatmul.mubr.f32.gmra.mrb[0].mxu0 %v871
      %v1095 = vpop.f32.mrb[0].mxu0
      %v1096 = vadd.f32 %v772, %v1095
      %v1097 = vpop.f32.mrb[0].mxu0
      %1098 = vmatprep.mubr.f32.mxu0 0.0
      %1099 = vmatmul.mubr.f32.gmra.mrb[0].mxu0 %v874
      %v1100 = vpop.f32.mrb[0].mxu0
      %v1101 = vadd.f32 %v777, %v1100
      %v1102 = vpop.f32.mrb[0].mxu0
      %1103 = vdwg.mxu0
      %v1104 = vld [vmem:[#allocation2 + $0x2] sm:$0xff]
      %v1105 = vld [vmem:[#allocation2 + $0xa] sm:$0xff]
      %v1106 = vld [vmem:[#allocation2 + $0x1a] sm:$0xff]
      %v1107 = vld [vmem:[#allocation2 + $0x22] sm:$0xff]
      %v1108 = vld [vmem:[#allocation2 + $0x32] sm:$0xff]
      %v1109 = vld [vmem:[#allocation2 + $0x3a] sm:$0xff]
      %v1110 = vld [vmem:[#allocation2 + $0x4a] sm:$0xff]
      %v1111 = vld [vmem:[#allocation2 + $0x52] sm:$0xff]
      %v1112 = vld [vmem:[#allocation2 + $0x62] sm:$0xff]
      %v1113 = vld [vmem:[#allocation2 + $0x6a] sm:$0xff]
      %v1114 = vld [vmem:[#allocation2 + $0x7a] sm:$0xff]
      %v1115 = vld [vmem:[#allocation2 + $0x82] sm:$0xff]
      %v1116 = vld [vmem:[#allocation2 + $0x92] sm:$0xff]
      %v1117 = vld [vmem:[#allocation2 + $0x9a] sm:$0xff]
      %v1118 = vld [vmem:[#allocation2 + $0xaa] sm:$0xff]
      %v1119 = vld [vmem:[#allocation2 + $0xb2] sm:$0xff]
      %v1120 = vld [vmem:[#allocation2 + $0xc2] sm:$0xff]
      %v1121 = vld [vmem:[#allocation2 + $0xca] sm:$0xff]
      %v1122 = vld [vmem:[#allocation2 + $0xda] sm:$0xff]
      %v1123 = vld [vmem:[#allocation2 + $0xe2] sm:$0xff]
      %v1124 = vld [vmem:[#allocation2 + $0xf2] sm:$0xff]
      %v1125 = vld [vmem:[#allocation2 + $0xfa] sm:$0xff]
      %v1126 = vld [vmem:[#allocation2 + $0x10a] sm:$0xff]
      %v1127 = vld [vmem:[#allocation2 + $0x112] sm:$0xff]
      %v1128 = vld [vmem:[#allocation2 + $0x122] sm:$0xff]
      %v1129 = vld [vmem:[#allocation2 + $0x12a] sm:$0xff]
      %v1130 = vld [vmem:[#allocation2 + $0x13a] sm:$0xff]
      %v1131 = vld [vmem:[#allocation2 + $0x142] sm:$0xff]
      %v1132 = vld [vmem:[#allocation2 + $0x152] sm:$0xff]
      %v1133 = vld [vmem:[#allocation2 + $0x15a] sm:$0xff]
      %v1134 = vld [vmem:[#allocation2 + $0x16a] sm:$0xff]
      %v1135 = vld [vmem:[#allocation2 + $0x172] sm:$0xff]
      %v1137 = vsel %vm225, %v1104, 0
      %v1140 = vsel %vm225, %v1105, 0
      %v1143 = vsel %vm225, %v1106, 0
      %v1146 = vsel %vm225, %v1107, 0
      %v1149 = vsel %vm225, %v1108, 0
      %v1152 = vsel %vm225, %v1109, 0
      %v1155 = vsel %vm225, %v1110, 0
      %v1158 = vsel %vm225, %v1111, 0
      %v1161 = vsel %vm225, %v1112, 0
      %v1164 = vsel %vm225, %v1113, 0
      %v1167 = vsel %vm225, %v1114, 0
      %v1170 = vsel %vm225, %v1115, 0
      %v1173 = vsel %vm225, %v1116, 0
      %v1176 = vsel %vm225, %v1117, 0
      %v1179 = vsel %vm225, %v1118, 0
      %v1182 = vsel %vm225, %v1119, 0
      %v1185 = vsel %vm225, %v1120, 0
      %v1188 = vsel %vm225, %v1121, 0
      %v1191 = vsel %vm225, %v1122, 0
      %v1194 = vsel %vm225, %v1123, 0
      %v1197 = vsel %vm225, %v1124, 0
      %v1200 = vsel %vm225, %v1125, 0
      %v1203 = vsel %vm225, %v1126, 0
      %v1206 = vsel %vm225, %v1127, 0
      %v1209 = vsel %vm225, %v1128, 0
      %v1212 = vsel %vm225, %v1129, 0
      %v1215 = vsel %vm225, %v1130, 0
      %v1218 = vsel %vm225, %v1131, 0
      %v1221 = vsel %vm225, %v1132, 0
      %v1224 = vsel %vm225, %v1133, 0
      %v1227 = vsel %vm225, %v1134, 0
      %v1230 = vsel %vm225, %v1135, 0
      %v1233 = vsel %vm551, %v384, 0
      %1235 = vmatprep.subr.mxu0 0.0
      %1236 = vmatpush1.msra.mxu0 %v1233
      %1237 = vmatprep.subr.mxu0 0.0
      %1238 = vmatpush1.msra.mxu0 0.0
      %1239 = vmatprep.subr.mxu0 0.0
      %1240 = vmatpush1.msra.mxu0 0.0
      %1241 = vmatprep.subr.mxu0 0.0
      %1242 = vmatpush1.msra.mxu0 0.0
      %1243 = vmatprep.subr.mxu0 0.0
      %1244 = vmatpush1.msra.mxu0 0.0
      %1245 = vmatprep.subr.mxu0 0.0
      %1246 = vmatpush1.msra.mxu0 0.0
      %1247 = vmatprep.subr.mxu0 0.0
      %1248 = vmatpush1.msra.mxu0 0.0
      %1249 = vmatprep.subr.mxu0 0.0
      %1250 = vmatpush1.msra.mxu0 0.0
      %1251 = vmatprep.subr.mxu0 0.0
      %1252 = vmatpush1.msra.mxu0 0.0
      %1253 = vmatprep.subr.mxu0 0.0
      %1254 = vmatpush1.msra.mxu0 0.0
      %1255 = vmatprep.subr.mxu0 0.0
      %1256 = vmatpush1.msra.mxu0 0.0
      %1257 = vmatprep.subr.mxu0 0.0
      %1258 = vmatpush1.msra.mxu0 0.0
      %1259 = vmatprep.subr.mxu0 0.0
      %1260 = vmatpush1.msra.mxu0 0.0
      %1261 = vmatprep.subr.mxu0 0.0
      %1262 = vmatpush1.msra.mxu0 0.0
      %1263 = vmatprep.subr.mxu0 0.0
      %1264 = vmatpush1.msra.mxu0 0.0
      %1265 = vmatprep.subr.mxu0 0.0
      %1266 = vmatpush1.msra.mxu0 0.0
      %1267 = vmatprep.subr.mxu0 0.0
      %1268 = vmatpush1.msra.mxu0 0.0
      %1269 = vmatprep.subr.mxu0 0.0
      %1270 = vmatpush1.msra.mxu0 0.0
      %1271 = vmatprep.subr.mxu0 0.0
      %1272 = vmatpush1.msra.mxu0 0.0
      %1273 = vmatprep.subr.mxu0 0.0
      %1274 = vmatpush1.msra.mxu0 0.0
      %1275 = vmatprep.subr.mxu0 0.0
      %1276 = vmatpush1.msra.mxu0 0.0
      %1277 = vmatprep.subr.mxu0 0.0
      %1278 = vmatpush1.msra.mxu0 0.0
      %1279 = vmatprep.subr.mxu0 0.0
      %1280 = vmatpush1.msra.mxu0 0.0
      %1281 = vmatprep.subr.mxu0 0.0
      %1282 = vmatpush1.msra.mxu0 0.0
      %1283 = vmatprep.subr.mxu0 0.0
      %1284 = vmatpush1.msra.mxu0 0.0
      %1285 = vmatprep.subr.mxu0 0.0
      %1286 = vmatpush1.msra.mxu0 0.0
      %1287 = vmatprep.subr.mxu0 0.0
      %1288 = vmatpush1.msra.mxu0 0.0
      %1289 = vmatprep.subr.mxu0 0.0
      %1290 = vmatpush1.msra.mxu0 0.0
      %1291 = vmatprep.subr.mxu0 0.0
      %1292 = vmatpush1.msra.mxu0 0.0
      %1293 = vmatprep.subr.mxu0 0.0
      %1294 = vmatpush1.msra.mxu0 0.0
      %1295 = vmatprep.subr.mxu0 0.0
      %1296 = vmatpush1.msra.mxu0 0.0
      %1297 = vmatprep.subr.mxu0 0.0
      %1298 = vmatpush1.msra.mxu0 0.0
      %1299 = vmatprep.mubr.f32.mxu0 0.0
      %1300 = vmatmul.mubr.f32.gmra.mrb[0].mxu0 %v1137
      %v1301 = vpop.f32.mrb[0].mxu0
      %v1302 = vadd.f32 0.0, %v1301
      %v1303 = vpop.f32.mrb[0].mxu0
      %1304 = vmatprep.mubr.f32.mxu0 0.0
      %1305 = vmatmul.mubr.f32.gmra.mrb[0].mxu0 %v1140
      %v1306 = vpop.f32.mrb[0].mxu0
      %v1307 = vadd.f32 0.0, %v1306
      %v1308 = vpop.f32.mrb[0].mxu0
      %1309 = vmatprep.mubr.f32.mxu0 0.0
      %1310 = vmatmul.mubr.f32.gmra.mrb[0].mxu0 %v1143
      %v1311 = vpop.f32.mrb[0].mxu0
      %v1312 = vadd.f32 0.0, %v1311
      %v1313 = vpop.f32.mrb[0].mxu0
      %1314 = vmatprep.mubr.f32.mxu0 0.0
      %1315 = vmatmul.mubr.f32.gmra.mrb[0].mxu0 %v1146
      %v1316 = vpop.f32.mrb[0].mxu0
      %v1317 = vadd.f32 0.0, %v1316
      %v1318 = vpop.f32.mrb[0].mxu0
      %1319 = vmatprep.mubr.f32.mxu0 0.0
      %1320 = vmatmul.mubr.f32.gmra.mrb[0].mxu0 %v1149
      %v1321 = vpop.f32.mrb[0].mxu0
      %v1322 = vadd.f32 0.0, %v1321
      %v1323 = vpop.f32.mrb[0].mxu0
      %1324 = vmatprep.mubr.f32.mxu0 0.0
      %1325 = vmatmul.mubr.f32.gmra.mrb[0].mxu0 %v1152
      %v1326 = vpop.f32.mrb[0].mxu0
      %v1327 = vadd.f32 0.0, %v1326
      %v1328 = vpop.f32.mrb[0].mxu0
      %1329 = vmatprep.mubr.f32.mxu0 0.0
      %1330 = vmatmul.mubr.f32.gmra.mrb[0].mxu0 %v1155
      %v1331 = vpop.f32.mrb[0].mxu0
      %v1332 = vadd.f32 0.0, %v1331
      %v1333 = vpop.f32.mrb[0].mxu0
      %1334 = vmatprep.mubr.f32.mxu0 0.0
      %1335 = vmatmul.mubr.f32.gmra.mrb[0].mxu0 %v1158
      %v1336 = vpop.f32.mrb[0].mxu0
      %v1337 = vadd.f32 0.0, %v1336
      %v1338 = vpop.f32.mrb[0].mxu0
      %1339 = vmatprep.mubr.f32.mxu0 0.0
      %1340 = vmatmul.mubr.f32.gmra.mrb[0].mxu0 %v1161
      %v1341 = vpop.f32.mrb[0].mxu0
      %v1342 = vadd.f32 0.0, %v1341
      %v1343 = vpop.f32.mrb[0].mxu0
      %1344 = vmatprep.mubr.f32.mxu0 0.0
      %1345 = vmatmul.mubr.f32.gmra.mrb[0].mxu0 %v1164
      %v1346 = vpop.f32.mrb[0].mxu0
      %v1347 = vadd.f32 0.0, %v1346
      %v1348 = vpop.f32.mrb[0].mxu0
      %1349 = vmatprep.mubr.f32.mxu0 0.0
      %1350 = vmatmul.mubr.f32.gmra.mrb[0].mxu0 %v1167
      %v1351 = vpop.f32.mrb[0].mxu0
      %v1352 = vadd.f32 0.0, %v1351
      %v1353 = vpop.f32.mrb[0].mxu0
      %1354 = vmatprep.mubr.f32.mxu0 0.0
      %1355 = vmatmul.mubr.f32.gmra.mrb[0].mxu0 %v1170
      %v1356 = vpop.f32.mrb[0].mxu0
      %v1357 = vadd.f32 0.0, %v1356
      %v1358 = vpop.f32.mrb[0].mxu0
      %1359 = vmatprep.mubr.f32.mxu0 0.0
      %1360 = vmatmul.mubr.f32.gmra.mrb[0].mxu0 %v1173
      %v1361 = vpop.f32.mrb[0].mxu0
      %v1362 = vadd.f32 0.0, %v1361
      %v1363 = vpop.f32.mrb[0].mxu0
      %1364 = vmatprep.mubr.f32.mxu0 0.0
      %1365 = vmatmul.mubr.f32.gmra.mrb[0].mxu0 %v1176
      %v1366 = vpop.f32.mrb[0].mxu0
      %v1367 = vadd.f32 0.0, %v1366
      %v1368 = vpop.f32.mrb[0].mxu0
      %1369 = vmatprep.mubr.f32.mxu0 0.0
      %1370 = vmatmul.mubr.f32.gmra.mrb[0].mxu0 %v1179
      %v1371 = vpop.f32.mrb[0].mxu0
      %v1372 = vadd.f32 0.0, %v1371
      %v1373 = vpop.f32.mrb[0].mxu0
      %1374 = vmatprep.mubr.f32.mxu0 0.0
      %1375 = vmatmul.mubr.f32.gmra.mrb[0].mxu0 %v1182
      %v1376 = vpop.f32.mrb[0].mxu0
      %v1377 = vadd.f32 0.0, %v1376
      %v1378 = vpop.f32.mrb[0].mxu0
      %1379 = vmatprep.mubr.f32.mxu0 0.0
      %1380 = vmatmul.mubr.f32.gmra.mrb[0].mxu0 %v1185
      %v1381 = vpop.f32.mrb[0].mxu0
      %v1382 = vadd.f32 0.0, %v1381
      %v1383 = vpop.f32.mrb[0].mxu0
      %1384 = vmatprep.mubr.f32.mxu0 0.0
      %1385 = vmatmul.mubr.f32.gmra.mrb[0].mxu0 %v1188
      %v1386 = vpop.f32.mrb[0].mxu0
      %v1387 = vadd.f32 0.0, %v1386
      %v1388 = vpop.f32.mrb[0].mxu0
      %1389 = vmatprep.mubr.f32.mxu0 0.0
      %1390 = vmatmul.mubr.f32.gmra.mrb[0].mxu0 %v1191
      %v1391 = vpop.f32.mrb[0].mxu0
      %v1392 = vadd.f32 0.0, %v1391
      %v1393 = vpop.f32.mrb[0].mxu0
      %1394 = vmatprep.mubr.f32.mxu0 0.0
      %1395 = vmatmul.mubr.f32.gmra.mrb[0].mxu0 %v1194
      %v1396 = vpop.f32.mrb[0].mxu0
      %v1397 = vadd.f32 0.0, %v1396
      %v1398 = vpop.f32.mrb[0].mxu0
      %1399 = vmatprep.mubr.f32.mxu0 0.0
      %1400 = vmatmul.mubr.f32.gmra.mrb[0].mxu0 %v1197
      %v1401 = vpop.f32.mrb[0].mxu0
      %v1402 = vadd.f32 0.0, %v1401
      %v1403 = vpop.f32.mrb[0].mxu0
      %1404 = vmatprep.mubr.f32.mxu0 0.0
      %1405 = vmatmul.mubr.f32.gmra.mrb[0].mxu0 %v1200
      %v1406 = vpop.f32.mrb[0].mxu0
      %v1407 = vadd.f32 0.0, %v1406
      %v1408 = vpop.f32.mrb[0].mxu0
      %1409 = vmatprep.mubr.f32.mxu0 0.0
      %1410 = vmatmul.mubr.f32.gmra.mrb[0].mxu0 %v1203
      %v1411 = vpop.f32.mrb[0].mxu0
      %v1412 = vadd.f32 0.0, %v1411
      %v1413 = vpop.f32.mrb[0].mxu0
      %1414 = vmatprep.mubr.f32.mxu0 0.0
      %1415 = vmatmul.mubr.f32.gmra.mrb[0].mxu0 %v1206
      %v1416 = vpop.f32.mrb[0].mxu0
      %v1417 = vadd.f32 0.0, %v1416
      %v1418 = vpop.f32.mrb[0].mxu0
      %1419 = vmatprep.mubr.f32.mxu0 0.0
      %1420 = vmatmul.mubr.f32.gmra.mrb[0].mxu0 %v1209
      %v1421 = vpop.f32.mrb[0].mxu0
      %v1422 = vadd.f32 0.0, %v1421
      %v1423 = vpop.f32.mrb[0].mxu0
      %1424 = vmatprep.mubr.f32.mxu0 0.0
      %1425 = vmatmul.mubr.f32.gmra.mrb[0].mxu0 %v1212
      %v1426 = vpop.f32.mrb[0].mxu0
      %v1427 = vadd.f32 0.0, %v1426
      %v1428 = vpop.f32.mrb[0].mxu0
      %1429 = vmatprep.mubr.f32.mxu0 0.0
      %1430 = vmatmul.mubr.f32.gmra.mrb[0].mxu0 %v1215
      %v1431 = vpop.f32.mrb[0].mxu0
      %v1432 = vadd.f32 0.0, %v1431
      %v1433 = vpop.f32.mrb[0].mxu0
      %1434 = vmatprep.mubr.f32.mxu0 0.0
      %1435 = vmatmul.mubr.f32.gmra.mrb[0].mxu0 %v1218
      %v1436 = vpop.f32.mrb[0].mxu0
      %v1437 = vadd.f32 0.0, %v1436
      %v1438 = vpop.f32.mrb[0].mxu0
      %1439 = vmatprep.mubr.f32.mxu0 0.0
      %1440 = vmatmul.mubr.f32.gmra.mrb[0].mxu0 %v1221
      %v1441 = vpop.f32.mrb[0].mxu0
      %v1442 = vadd.f32 0.0, %v1441
      %v1443 = vpop.f32.mrb[0].mxu0
      %1444 = vmatprep.mubr.f32.mxu0 0.0
      %1445 = vmatmul.mubr.f32.gmra.mrb[0].mxu0 %v1224
      %v1446 = vpop.f32.mrb[0].mxu0
      %v1447 = vadd.f32 0.0, %v1446
      %v1448 = vpop.f32.mrb[0].mxu0
      %1449 = vmatprep.mubr.f32.mxu0 0.0
      %1450 = vmatmul.mubr.f32.gmra.mrb[0].mxu0 %v1227
      %v1451 = vpop.f32.mrb[0].mxu0
      %v1452 = vadd.f32 0.0, %v1451
      %v1453 = vpop.f32.mrb[0].mxu0
      %1454 = vmatprep.mubr.f32.mxu0 0.0
      %1455 = vmatmul.mubr.f32.gmra.mrb[0].mxu0 %v1230
      %v1456 = vpop.f32.mrb[0].mxu0
      %v1457 = vadd.f32 0.0, %v1456
      %v1458 = vpop.f32.mrb[0].mxu0
      %1459 = vdwg.mxu0
      %v1460 = vadd.f32 %v946, %v1302
      %v1461 = vadd.f32 %v951, %v1307
      %v1462 = vadd.f32 %v956, %v1312
      %v1463 = vadd.f32 %v961, %v1317
      %v1464 = vadd.f32 %v966, %v1322
      %v1465 = vadd.f32 %v971, %v1327
      %v1466 = vadd.f32 %v976, %v1332
      %v1467 = vadd.f32 %v981, %v1337
      %v1468 = vadd.f32 %v986, %v1342
      %v1469 = vadd.f32 %v991, %v1347
      %v1470 = vadd.f32 %v996, %v1352
      %v1471 = vadd.f32 %v1001, %v1357
      %v1472 = vadd.f32 %v1006, %v1362
      %v1473 = vadd.f32 %v1011, %v1367
      %v1474 = vadd.f32 %v1016, %v1372
      %v1475 = vadd.f32 %v1021, %v1377
      %v1476 = vadd.f32 %v1026, %v1382
      %v1477 = vadd.f32 %v1031, %v1387
      %v1478 = vadd.f32 %v1036, %v1392
      %v1479 = vadd.f32 %v1041, %v1397
      %v1480 = vadd.f32 %v1046, %v1402
      %v1481 = vadd.f32 %v1051, %v1407
      %v1482 = vadd.f32 %v1056, %v1412
      %v1483 = vadd.f32 %v1061, %v1417
      %v1484 = vadd.f32 %v1066, %v1422
      %v1485 = vadd.f32 %v1071, %v1427
      %v1486 = vadd.f32 %v1076, %v1432
      %v1487 = vadd.f32 %v1081, %v1437
      %v1488 = vadd.f32 %v1086, %v1442
      %v1489 = vadd.f32 %v1091, %v1447
      %v1490 = vadd.f32 %v1096, %v1452
      %v1491 = vadd.f32 %v1101, %v1457
      %v1492 = vld [vmem:[%s349] sm:$0xff]
      %v1493 = vld [vmem:[%s349 + $0x8] sm:$0xff]
      %v1494 = vld [vmem:[%s349 + $0x18] sm:$0xff]
      %v1495 = vld [vmem:[%s349 + $0x20] sm:$0xff]
      %v1496 = vld [vmem:[%s349 + $0x30] sm:$0xff]
      %v1497 = vld [vmem:[%s349 + $0x38] sm:$0xff]
      %v1498 = vld [vmem:[%s349 + $0x48] sm:$0xff]
      %v1499 = vld [vmem:[%s349 + $0x50] sm:$0xff]
      %v1500 = vld [vmem:[%s349 + $0x60] sm:$0xff]
      %v1501 = vld [vmem:[%s349 + $0x68] sm:$0xff]
      %v1502 = vld [vmem:[%s349 + $0x78] sm:$0xff]
      %v1503 = vld [vmem:[%s349 + $0x80] sm:$0xff]
      %v1504 = vld [vmem:[%s349 + $0x90] sm:$0xff]
      %v1505 = vld [vmem:[%s349 + $0x98] sm:$0xff]
      %v1506 = vld [vmem:[%s349 + $0xa8] sm:$0xff]
      %v1507 = vld [vmem:[%s349 + $0xb0] sm:$0xff]
      %v1508 = vld [vmem:[%s349 + $0xc0] sm:$0xff]
      %v1509 = vld [vmem:[%s349 + $0xc8] sm:$0xff]
      %v1510 = vld [vmem:[%s349 + $0xd8] sm:$0xff]
      %v1511 = vld [vmem:[%s349 + $0xe0] sm:$0xff]
      %v1512 = vld [vmem:[%s349 + $0xf0] sm:$0xff]
      %v1513 = vld [vmem:[%s349 + $0xf8] sm:$0xff]
      %v1514 = vld [vmem:[%s349 + $0x108] sm:$0xff]
      %v1515 = vld [vmem:[%s349 + $0x110] sm:$0xff]
      %v1516 = vld [vmem:[%s349 + $0x120] sm:$0xff]
      %v1517 = vld [vmem:[%s349 + $0x128] sm:$0xff]
      %v1518 = vld [vmem:[%s349 + $0x138] sm:$0xff]
      %v1519 = vld [vmem:[%s349 + $0x140] sm:$0xff]
      %v1520 = vld [vmem:[%s349 + $0x150] sm:$0xff]
      %v1521 = vld [vmem:[%s349 + $0x158] sm:$0xff]
      %v1522 = vld [vmem:[%s349 + $0x168] sm:$0xff]
      %v1523 = vld [vmem:[%s349 + $0x170] sm:$0xff]
      %v1525 = vsel %vm225, %v1492, 0
      %v1528 = vsel %vm225, %v1493, 0
      %v1531 = vsel %vm225, %v1494, 0
      %v1534 = vsel %vm225, %v1495, 0
      %v1537 = vsel %vm225, %v1496, 0
      %v1540 = vsel %vm225, %v1497, 0
      %v1543 = vsel %vm225, %v1498, 0
      %v1546 = vsel %vm225, %v1499, 0
      %v1549 = vsel %vm225, %v1500, 0
      %v1552 = vsel %vm225, %v1501, 0
      %v1555 = vsel %vm225, %v1502, 0
      %v1558 = vsel %vm225, %v1503, 0
      %v1561 = vsel %vm225, %v1504, 0
      %v1564 = vsel %vm225, %v1505, 0
      %v1567 = vsel %vm225, %v1506, 0
      %v1570 = vsel %vm225, %v1507, 0
      %v1573 = vsel %vm225, %v1508, 0
      %v1576 = vsel %vm225, %v1509, 0
      %v1579 = vsel %vm225, %v1510, 0
      %v1582 = vsel %vm225, %v1511, 0
      %v1585 = vsel %vm225, %v1512, 0
      %v1588 = vsel %vm225, %v1513, 0
      %v1591 = vsel %vm225, %v1514, 0
      %v1594 = vsel %vm225, %v1515, 0
      %v1597 = vsel %vm225, %v1516, 0
      %v1600 = vsel %vm225, %v1517, 0
      %v1603 = vsel %vm225, %v1518, 0
      %v1606 = vsel %vm225, %v1519, 0
      %v1609 = vsel %vm225, %v1520, 0
      %v1612 = vsel %vm225, %v1521, 0
      %v1615 = vsel %vm225, %v1522, 0
      %v1618 = vsel %vm225, %v1523, 0
      %v1621 = vsel %vm551, %v385, 0
      %1623 = vmatprep.subr.mxu0 0.0
      %1624 = vmatpush1.msra.mxu0 %v1621
      %1625 = vmatprep.subr.mxu0 0.0
      %1626 = vmatpush1.msra.mxu0 0.0
      %1627 = vmatprep.subr.mxu0 0.0
      %1628 = vmatpush1.msra.mxu0 0.0
      %1629 = vmatprep.subr.mxu0 0.0
      %1630 = vmatpush1.msra.mxu0 0.0
      %1631 = vmatprep.subr.mxu0 0.0
      %1632 = vmatpush1.msra.mxu0 0.0
      %1633 = vmatprep.subr.mxu0 0.0
      %1634 = vmatpush1.msra.mxu0 0.0
      %1635 = vmatprep.subr.mxu0 0.0
      %1636 = vmatpush1.msra.mxu0 0.0
      %1637 = vmatprep.subr.mxu0 0.0
      %1638 = vmatpush1.msra.mxu0 0.0
      %1639 = vmatprep.subr.mxu0 0.0
      %1640 = vmatpush1.msra.mxu0 0.0
      %1641 = vmatprep.subr.mxu0 0.0
      %1642 = vmatpush1.msra.mxu0 0.0
      %1643 = vmatprep.subr.mxu0 0.0
      %1644 = vmatpush1.msra.mxu0 0.0
      %1645 = vmatprep.subr.mxu0 0.0
      %1646 = vmatpush1.msra.mxu0 0.0
      %1647 = vmatprep.subr.mxu0 0.0
      %1648 = vmatpush1.msra.mxu0 0.0
      %1649 = vmatprep.subr.mxu0 0.0
      %1650 = vmatpush1.msra.mxu0 0.0
      %1651 = vmatprep.subr.mxu0 0.0
      %1652 = vmatpush1.msra.mxu0 0.0
      %1653 = vmatprep.subr.mxu0 0.0
      %1654 = vmatpush1.msra.mxu0 0.0
      %1655 = vmatprep.subr.mxu0 0.0
      %1656 = vmatpush1.msra.mxu0 0.0
      %1657 = vmatprep.subr.mxu0 0.0
      %1658 = vmatpush1.msra.mxu0 0.0
      %1659 = vmatprep.subr.mxu0 0.0
      %1660 = vmatpush1.msra.mxu0 0.0
      %1661 = vmatprep.subr.mxu0 0.0
      %1662 = vmatpush1.msra.mxu0 0.0
      %1663 = vmatprep.subr.mxu0 0.0
      %1664 = vmatpush1.msra.mxu0 0.0
      %1665 = vmatprep.subr.mxu0 0.0
      %1666 = vmatpush1.msra.mxu0 0.0
      %1667 = vmatprep.subr.mxu0 0.0
      %1668 = vmatpush1.msra.mxu0 0.0
      %1669 = vmatprep.subr.mxu0 0.0
      %1670 = vmatpush1.msra.mxu0 0.0
      %1671 = vmatprep.subr.mxu0 0.0
      %1672 = vmatpush1.msra.mxu0 0.0
      %1673 = vmatprep.subr.mxu0 0.0
      %1674 = vmatpush1.msra.mxu0 0.0
      %1675 = vmatprep.subr.mxu0 0.0
      %1676 = vmatpush1.msra.mxu0 0.0
      %1677 = vmatprep.subr.mxu0 0.0
      %1678 = vmatpush1.msra.mxu0 0.0
      %1679 = vmatprep.subr.mxu0 0.0
      %1680 = vmatpush1.msra.mxu0 0.0
      %1681 = vmatprep.subr.mxu0 0.0
      %1682 = vmatpush1.msra.mxu0 0.0
      %1683 = vmatprep.subr.mxu0 0.0
      %1684 = vmatpush1.msra.mxu0 0.0
      %1685 = vmatprep.subr.mxu0 0.0
      %1686 = vmatpush1.msra.mxu0 0.0
      %1687 = vmatprep.mubr.f32.mxu0 0.0
      %1688 = vmatmul.mubr.f32.gmra.mrb[0].mxu0 %v1525
      %v1689 = vpop.f32.mrb[0].mxu0
      %v1690 = vadd.f32 0.0, %v1689
      %v1691 = vpop.f32.mrb[0].mxu0
      %1692 = vmatprep.mubr.f32.mxu0 0.0
      %1693 = vmatmul.mubr.f32.gmra.mrb[0].mxu0 %v1528
      %v1694 = vpop.f32.mrb[0].mxu0
      %v1695 = vadd.f32 0.0, %v1694
      %v1696 = vpop.f32.mrb[0].mxu0
      %1697 = vmatprep.mubr.f32.mxu0 0.0
      %1698 = vmatmul.mubr.f32.gmra.mrb[0].mxu0 %v1531
      %v1699 = vpop.f32.mrb[0].mxu0
      %v1700 = vadd.f32 0.0, %v1699
      %v1701 = vpop.f32.mrb[0].mxu0
      %1702 = vmatprep.mubr.f32.mxu0 0.0
      %1703 = vmatmul.mubr.f32.gmra.mrb[0].mxu0 %v1534
      %v1704 = vpop.f32.mrb[0].mxu0
      %v1705 = vadd.f32 0.0, %v1704
      %v1706 = vpop.f32.mrb[0].mxu0
      %1707 = vmatprep.mubr.f32.mxu0 0.0
      %1708 = vmatmul.mubr.f32.gmra.mrb[0].mxu0 %v1537
      %v1709 = vpop.f32.mrb[0].mxu0
      %v1710 = vadd.f32 0.0, %v1709
      %v1711 = vpop.f32.mrb[0].mxu0
      %1712 = vmatprep.mubr.f32.mxu0 0.0
      %1713 = vmatmul.mubr.f32.gmra.mrb[0].mxu0 %v1540
      %v1714 = vpop.f32.mrb[0].mxu0
      %v1715 = vadd.f32 0.0, %v1714
      %v1716 = vpop.f32.mrb[0].mxu0
      %1717 = vmatprep.mubr.f32.mxu0 0.0
      %1718 = vmatmul.mubr.f32.gmra.mrb[0].mxu0 %v1543
      %v1719 = vpop.f32.mrb[0].mxu0
      %v1720 = vadd.f32 0.0, %v1719
      %v1721 = vpop.f32.mrb[0].mxu0
      %1722 = vmatprep.mubr.f32.mxu0 0.0
      %1723 = vmatmul.mubr.f32.gmra.mrb[0].mxu0 %v1546
      %v1724 = vpop.f32.mrb[0].mxu0
      %v1725 = vadd.f32 0.0, %v1724
      %v1726 = vpop.f32.mrb[0].mxu0
      %1727 = vmatprep.mubr.f32.mxu0 0.0
      %1728 = vmatmul.mubr.f32.gmra.mrb[0].mxu0 %v1549
      %v1729 = vpop.f32.mrb[0].mxu0
      %v1730 = vadd.f32 0.0, %v1729
      %v1731 = vpop.f32.mrb[0].mxu0
      %1732 = vmatprep.mubr.f32.mxu0 0.0
      %1733 = vmatmul.mubr.f32.gmra.mrb[0].mxu0 %v1552
      %v1734 = vpop.f32.mrb[0].mxu0
      %v1735 = vadd.f32 0.0, %v1734
      %v1736 = vpop.f32.mrb[0].mxu0
      %1737 = vmatprep.mubr.f32.mxu0 0.0
      %1738 = vmatmul.mubr.f32.gmra.mrb[0].mxu0 %v1555
      %v1739 = vpop.f32.mrb[0].mxu0
      %v1740 = vadd.f32 0.0, %v1739
      %v1741 = vpop.f32.mrb[0].mxu0
      %1742 = vmatprep.mubr.f32.mxu0 0.0
      %1743 = vmatmul.mubr.f32.gmra.mrb[0].mxu0 %v1558
      %v1744 = vpop.f32.mrb[0].mxu0
      %v1745 = vadd.f32 0.0, %v1744
      %v1746 = vpop.f32.mrb[0].mxu0
      %1747 = vmatprep.mubr.f32.mxu0 0.0
      %1748 = vmatmul.mubr.f32.gmra.mrb[0].mxu0 %v1561
      %v1749 = vpop.f32.mrb[0].mxu0
      %v1750 = vadd.f32 0.0, %v1749
      %v1751 = vpop.f32.mrb[0].mxu0
      %1752 = vmatprep.mubr.f32.mxu0 0.0
      %1753 = vmatmul.mubr.f32.gmra.mrb[0].mxu0 %v1564
      %v1754 = vpop.f32.mrb[0].mxu0
      %v1755 = vadd.f32 0.0, %v1754
      %v1756 = vpop.f32.mrb[0].mxu0
      %1757 = vmatprep.mubr.f32.mxu0 0.0
      %1758 = vmatmul.mubr.f32.gmra.mrb[0].mxu0 %v1567
      %v1759 = vpop.f32.mrb[0].mxu0
      %v1760 = vadd.f32 0.0, %v1759
      %v1761 = vpop.f32.mrb[0].mxu0
      %1762 = vmatprep.mubr.f32.mxu0 0.0
      %1763 = vmatmul.mubr.f32.gmra.mrb[0].mxu0 %v1570
      %v1764 = vpop.f32.mrb[0].mxu0
      %v1765 = vadd.f32 0.0, %v1764
      %v1766 = vpop.f32.mrb[0].mxu0
      %1767 = vmatprep.mubr.f32.mxu0 0.0
      %1768 = vmatmul.mubr.f32.gmra.mrb[0].mxu0 %v1573
      %v1769 = vpop.f32.mrb[0].mxu0
      %v1770 = vadd.f32 0.0, %v1769
      %v1771 = vpop.f32.mrb[0].mxu0
      %1772 = vmatprep.mubr.f32.mxu0 0.0
      %1773 = vmatmul.mubr.f32.gmra.mrb[0].mxu0 %v1576
      %v1774 = vpop.f32.mrb[0].mxu0
      %v1775 = vadd.f32 0.0, %v1774
      %v1776 = vpop.f32.mrb[0].mxu0
      %1777 = vmatprep.mubr.f32.mxu0 0.0
      %1778 = vmatmul.mubr.f32.gmra.mrb[0].mxu0 %v1579
      %v1779 = vpop.f32.mrb[0].mxu0
      %v1780 = vadd.f32 0.0, %v1779
      %v1781 = vpop.f32.mrb[0].mxu0
      %1782 = vmatprep.mubr.f32.mxu0 0.0
      %1783 = vmatmul.mubr.f32.gmra.mrb[0].mxu0 %v1582
      %v1784 = vpop.f32.mrb[0].mxu0
      %v1785 = vadd.f32 0.0, %v1784
      %v1786 = vpop.f32.mrb[0].mxu0
      %1787 = vmatprep.mubr.f32.mxu0 0.0
      %1788 = vmatmul.mubr.f32.gmra.mrb[0].mxu0 %v1585
      %v1789 = vpop.f32.mrb[0].mxu0
      %v1790 = vadd.f32 0.0, %v1789
      %v1791 = vpop.f32.mrb[0].mxu0
      %1792 = vmatprep.mubr.f32.mxu0 0.0
      %1793 = vmatmul.mubr.f32.gmra.mrb[0].mxu0 %v1588
      %v1794 = vpop.f32.mrb[0].mxu0
      %v1795 = vadd.f32 0.0, %v1794
      %v1796 = vpop.f32.mrb[0].mxu0
      %1797 = vmatprep.mubr.f32.mxu0 0.0
      %1798 = vmatmul.mubr.f32.gmra.mrb[0].mxu0 %v1591
      %v1799 = vpop.f32.mrb[0].mxu0
      %v1800 = vadd.f32 0.0, %v1799
      %v1801 = vpop.f32.mrb[0].mxu0
      %1802 = vmatprep.mubr.f32.mxu0 0.0
      %1803 = vmatmul.mubr.f32.gmra.mrb[0].mxu0 %v1594
      %v1804 = vpop.f32.mrb[0].mxu0
      %v1805 = vadd.f32 0.0, %v1804
      %v1806 = vpop.f32.mrb[0].mxu0
      %1807 = vmatprep.mubr.f32.mxu0 0.0
      %1808 = vmatmul.mubr.f32.gmra.mrb[0].mxu0 %v1597
      %v1809 = vpop.f32.mrb[0].mxu0
      %v1810 = vadd.f32 0.0, %v1809
      %v1811 = vpop.f32.mrb[0].mxu0
      %1812 = vmatprep.mubr.f32.mxu0 0.0
      %1813 = vmatmul.mubr.f32.gmra.mrb[0].mxu0 %v1600
      %v1814 = vpop.f32.mrb[0].mxu0
      %v1815 = vadd.f32 0.0, %v1814
      %v1816 = vpop.f32.mrb[0].mxu0
      %1817 = vmatprep.mubr.f32.mxu0 0.0
      %1818 = vmatmul.mubr.f32.gmra.mrb[0].mxu0 %v1603
      %v1819 = vpop.f32.mrb[0].mxu0
      %v1820 = vadd.f32 0.0, %v1819
      %v1821 = vpop.f32.mrb[0].mxu0
      %1822 = vmatprep.mubr.f32.mxu0 0.0
      %1823 = vmatmul.mubr.f32.gmra.mrb[0].mxu0 %v1606
      %v1824 = vpop.f32.mrb[0].mxu0
      %v1825 = vadd.f32 0.0, %v1824
      %v1826 = vpop.f32.mrb[0].mxu0
      %1827 = vmatprep.mubr.f32.mxu0 0.0
      %1828 = vmatmul.mubr.f32.gmra.mrb[0].mxu0 %v1609
      %v1829 = vpop.f32.mrb[0].mxu0
      %v1830 = vadd.f32 0.0, %v1829
      %v1831 = vpop.f32.mrb[0].mxu0
      %1832 = vmatprep.mubr.f32.mxu0 0.0
      %1833 = vmatmul.mubr.f32.gmra.mrb[0].mxu0 %v1612
      %v1834 = vpop.f32.mrb[0].mxu0
      %v1835 = vadd.f32 0.0, %v1834
      %v1836 = vpop.f32.mrb[0].mxu0
      %1837 = vmatprep.mubr.f32.mxu0 0.0
      %1838 = vmatmul.mubr.f32.gmra.mrb[0].mxu0 %v1615
      %v1839 = vpop.f32.mrb[0].mxu0
      %v1840 = vadd.f32 0.0, %v1839
      %v1841 = vpop.f32.mrb[0].mxu0
      %1842 = vmatprep.mubr.f32.mxu0 0.0
      %1843 = vmatmul.mubr.f32.gmra.mrb[0].mxu0 %v1618
      %v1844 = vpop.f32.mrb[0].mxu0
      %v1845 = vadd.f32 0.0, %v1844
      %v1846 = vpop.f32.mrb[0].mxu0
      %1847 = vdwg.mxu0
      %v1848 = vadd.f32 %v1460, %v1690
      %v1849 = vadd.f32 %v1461, %v1695
      %v1850 = vadd.f32 %v1462, %v1700
      %v1851 = vadd.f32 %v1463, %v1705
      %v1852 = vadd.f32 %v1464, %v1710
      %v1853 = vadd.f32 %v1465, %v1715
      %v1854 = vadd.f32 %v1466, %v1720
      %v1855 = vadd.f32 %v1467, %v1725
      %v1856 = vadd.f32 %v1468, %v1730
      %v1857 = vadd.f32 %v1469, %v1735
      %v1858 = vadd.f32 %v1470, %v1740
      %v1859 = vadd.f32 %v1471, %v1745
      %v1860 = vadd.f32 %v1472, %v1750
      %v1861 = vadd.f32 %v1473, %v1755
      %v1862 = vadd.f32 %v1474, %v1760
      %v1863 = vadd.f32 %v1475, %v1765
      %v1864 = vadd.f32 %v1476, %v1770
      %v1865 = vadd.f32 %v1477, %v1775
      %v1866 = vadd.f32 %v1478, %v1780
      %v1867 = vadd.f32 %v1479, %v1785
      %v1868 = vadd.f32 %v1480, %v1790
      %v1869 = vadd.f32 %v1481, %v1795
      %v1870 = vadd.f32 %v1482, %v1800
      %v1871 = vadd.f32 %v1483, %v1805
      %v1872 = vadd.f32 %v1484, %v1810
      %v1873 = vadd.f32 %v1485, %v1815
      %v1874 = vadd.f32 %v1486, %v1820
      %v1875 = vadd.f32 %v1487, %v1825
      %v1876 = vadd.f32 %v1488, %v1830
      %v1877 = vadd.f32 %v1489, %v1835
      %v1878 = vadd.f32 %v1490, %v1840
      %v1879 = vadd.f32 %v1491, %v1845
      %v1880 = vld [vmem:[%s349 + $0x1] sm:$0xff]
      %v1881 = vld [vmem:[%s349 + $0x9] sm:$0xff]
      %v1882 = vld [vmem:[%s349 + $0x19] sm:$0xff]
      %v1883 = vld [vmem:[%s349 + $0x21] sm:$0xff]
      %v1884 = vld [vmem:[%s349 + $0x31] sm:$0xff]
      %v1885 = vld [vmem:[%s349 + $0x39] sm:$0xff]
      %v1886 = vld [vmem:[%s349 + $0x49] sm:$0xff]
      %v1887 = vld [vmem:[%s349 + $0x51] sm:$0xff]
      %v1888 = vld [vmem:[%s349 + $0x61] sm:$0xff]
      %v1889 = vld [vmem:[%s349 + $0x69] sm:$0xff]
      %v1890 = vld [vmem:[%s349 + $0x79] sm:$0xff]
      %v1891 = vld [vmem:[%s349 + $0x81] sm:$0xff]
      %v1892 = vld [vmem:[%s349 + $0x91] sm:$0xff]
      %v1893 = vld [vmem:[%s349 + $0x99] sm:$0xff]
      %v1894 = vld [vmem:[%s349 + $0xa9] sm:$0xff]
      %v1895 = vld [vmem:[%s349 + $0xb1] sm:$0xff]
      %v1896 = vld [vmem:[%s349 + $0xc1] sm:$0xff]
      %v1897 = vld [vmem:[%s349 + $0xc9] sm:$0xff]
      %v1898 = vld [vmem:[%s349 + $0xd9] sm:$0xff]
      %v1899 = vld [vmem:[%s349 + $0xe1] sm:$0xff]
      %v1900 = vld [vmem:[%s349 + $0xf1] sm:$0xff]
      %v1901 = vld [vmem:[%s349 + $0xf9] sm:$0xff]
      %v1902 = vld [vmem:[%s349 + $0x109] sm:$0xff]
      %v1903 = vld [vmem:[%s349 + $0x111] sm:$0xff]
      %v1904 = vld [vmem:[%s349 + $0x121] sm:$0xff]
      %v1905 = vld [vmem:[%s349 + $0x129] sm:$0xff]
      %v1906 = vld [vmem:[%s349 + $0x139] sm:$0xff]
      %v1907 = vld [vmem:[%s349 + $0x141] sm:$0xff]
      %v1908 = vld [vmem:[%s349 + $0x151] sm:$0xff]
      %v1909 = vld [vmem:[%s349 + $0x159] sm:$0xff]
      %v1910 = vld [vmem:[%s349 + $0x169] sm:$0xff]
      %v1911 = vld [vmem:[%s349 + $0x171] sm:$0xff]
      %v1913 = vsel %vm225, %v1880, 0
      %v1916 = vsel %vm225, %v1881, 0
      %v1919 = vsel %vm225, %v1882, 0
      %v1922 = vsel %vm225, %v1883, 0
      %v1925 = vsel %vm225, %v1884, 0
      %v1928 = vsel %vm225, %v1885, 0
      %v1931 = vsel %vm225, %v1886, 0
      %v1934 = vsel %vm225, %v1887, 0
      %v1937 = vsel %vm225, %v1888, 0
      %v1940 = vsel %vm225, %v1889, 0
      %v1943 = vsel %vm225, %v1890, 0
      %v1946 = vsel %vm225, %v1891, 0
      %v1949 = vsel %vm225, %v1892, 0
      %v1952 = vsel %vm225, %v1893, 0
      %v1955 = vsel %vm225, %v1894, 0
      %v1958 = vsel %vm225, %v1895, 0
      %v1961 = vsel %vm225, %v1896, 0
      %v1964 = vsel %vm225, %v1897, 0
      %v1967 = vsel %vm225, %v1898, 0
      %v1970 = vsel %vm225, %v1899, 0
      %v1973 = vsel %vm225, %v1900, 0
      %v1976 = vsel %vm225, %v1901, 0
      %v1979 = vsel %vm225, %v1902, 0
      %v1982 = vsel %vm225, %v1903, 0
      %v1985 = vsel %vm225, %v1904, 0
      %v1988 = vsel %vm225, %v1905, 0
      %v1991 = vsel %vm225, %v1906, 0
      %v1994 = vsel %vm225, %v1907, 0
      %v1997 = vsel %vm225, %v1908, 0
      %v2000 = vsel %vm225, %v1909, 0
      %v2003 = vsel %vm225, %v1910, 0
      %v2006 = vsel %vm225, %v1911, 0
      %v2009 = vsel %vm551, %v386, 0
      %2011 = vmatprep.subr.mxu0 0.0
      %2012 = vmatpush1.msra.mxu0 %v2009
      %2013 = vmatprep.subr.mxu0 0.0
      %2014 = vmatpush1.msra.mxu0 0.0
      %2015 = vmatprep.subr.mxu0 0.0
      %2016 = vmatpush1.msra.mxu0 0.0
      %2017 = vmatprep.subr.mxu0 0.0
      %2018 = vmatpush1.msra.mxu0 0.0
      %2019 = vmatprep.subr.mxu0 0.0
      %2020 = vmatpush1.msra.mxu0 0.0
      %2021 = vmatprep.subr.mxu0 0.0
      %2022 = vmatpush1.msra.mxu0 0.0
      %2023 = vmatprep.subr.mxu0 0.0
      %2024 = vmatpush1.msra.mxu0 0.0
      %2025 = vmatprep.subr.mxu0 0.0
      %2026 = vmatpush1.msra.mxu0 0.0
      %2027 = vmatprep.subr.mxu0 0.0
      %2028 = vmatpush1.msra.mxu0 0.0
      %2029 = vmatprep.subr.mxu0 0.0
      %2030 = vmatpush1.msra.mxu0 0.0
      %2031 = vmatprep.subr.mxu0 0.0
      %2032 = vmatpush1.msra.mxu0 0.0
      %2033 = vmatprep.subr.mxu0 0.0
      %2034 = vmatpush1.msra.mxu0 0.0
      %2035 = vmatprep.subr.mxu0 0.0
      %2036 = vmatpush1.msra.mxu0 0.0
      %2037 = vmatprep.subr.mxu0 0.0
      %2038 = vmatpush1.msra.mxu0 0.0
      %2039 = vmatprep.subr.mxu0 0.0
      %2040 = vmatpush1.msra.mxu0 0.0
      %2041 = vmatprep.subr.mxu0 0.0
      %2042 = vmatpush1.msra.mxu0 0.0
      %2043 = vmatprep.subr.mxu0 0.0
      %2044 = vmatpush1.msra.mxu0 0.0
      %2045 = vmatprep.subr.mxu0 0.0
      %2046 = vmatpush1.msra.mxu0 0.0
      %2047 = vmatprep.subr.mxu0 0.0
      %2048 = vmatpush1.msra.mxu0 0.0
      %2049 = vmatprep.subr.mxu0 0.0
      %2050 = vmatpush1.msra.mxu0 0.0
      %2051 = vmatprep.subr.mxu0 0.0
      %2052 = vmatpush1.msra.mxu0 0.0
      %2053 = vmatprep.subr.mxu0 0.0
      %2054 = vmatpush1.msra.mxu0 0.0
      %2055 = vmatprep.subr.mxu0 0.0
      %2056 = vmatpush1.msra.mxu0 0.0
      %2057 = vmatprep.subr.mxu0 0.0
      %2058 = vmatpush1.msra.mxu0 0.0
      %2059 = vmatprep.subr.mxu0 0.0
      %2060 = vmatpush1.msra.mxu0 0.0
      %2061 = vmatprep.subr.mxu0 0.0
      %2062 = vmatpush1.msra.mxu0 0.0
      %2063 = vmatprep.subr.mxu0 0.0
      %2064 = vmatpush1.msra.mxu0 0.0
      %2065 = vmatprep.subr.mxu0 0.0
      %2066 = vmatpush1.msra.mxu0 0.0
      %2067 = vmatprep.subr.mxu0 0.0
      %2068 = vmatpush1.msra.mxu0 0.0
      %2069 = vmatprep.subr.mxu0 0.0
      %2070 = vmatpush1.msra.mxu0 0.0
      %2071 = vmatprep.subr.mxu0 0.0
      %2072 = vmatpush1.msra.mxu0 0.0
      %2073 = vmatprep.subr.mxu0 0.0
      %2074 = vmatpush1.msra.mxu0 0.0
      %2075 = vmatprep.mubr.f32.mxu0 0.0
      %2076 = vmatmul.mubr.f32.gmra.mrb[0].mxu0 %v1913
      %v2077 = vpop.f32.mrb[0].mxu0
      %v2078 = vadd.f32 0.0, %v2077
      %v2079 = vpop.f32.mrb[0].mxu0
      %2080 = vmatprep.mubr.f32.mxu0 0.0
      %2081 = vmatmul.mubr.f32.gmra.mrb[0].mxu0 %v1916
      %v2082 = vpop.f32.mrb[0].mxu0
      %v2083 = vadd.f32 0.0, %v2082
      %v2084 = vpop.f32.mrb[0].mxu0
      %2085 = vmatprep.mubr.f32.mxu0 0.0
      %2086 = vmatmul.mubr.f32.gmra.mrb[0].mxu0 %v1919
      %v2087 = vpop.f32.mrb[0].mxu0
      %v2088 = vadd.f32 0.0, %v2087
      %v2089 = vpop.f32.mrb[0].mxu0
      %2090 = vmatprep.mubr.f32.mxu0 0.0
      %2091 = vmatmul.mubr.f32.gmra.mrb[0].mxu0 %v1922
      %v2092 = vpop.f32.mrb[0].mxu0
      %v2093 = vadd.f32 0.0, %v2092
      %v2094 = vpop.f32.mrb[0].mxu0
      %2095 = vmatprep.mubr.f32.mxu0 0.0
      %2096 = vmatmul.mubr.f32.gmra.mrb[0].mxu0 %v1925
      %v2097 = vpop.f32.mrb[0].mxu0
      %v2098 = vadd.f32 0.0, %v2097
      %v2099 = vpop.f32.mrb[0].mxu0
      %2100 = vmatprep.mubr.f32.mxu0 0.0
      %2101 = vmatmul.mubr.f32.gmra.mrb[0].mxu0 %v1928
      %v2102 = vpop.f32.mrb[0].mxu0
      %v2103 = vadd.f32 0.0, %v2102
      %v2104 = vpop.f32.mrb[0].mxu0
      %2105 = vmatprep.mubr.f32.mxu0 0.0
      %2106 = vmatmul.mubr.f32.gmra.mrb[0].mxu0 %v1931
      %v2107 = vpop.f32.mrb[0].mxu0
      %v2108 = vadd.f32 0.0, %v2107
      %v2109 = vpop.f32.mrb[0].mxu0
      %2110 = vmatprep.mubr.f32.mxu0 0.0
      %2111 = vmatmul.mubr.f32.gmra.mrb[0].mxu0 %v1934
      %v2112 = vpop.f32.mrb[0].mxu0
      %v2113 = vadd.f32 0.0, %v2112
      %v2114 = vpop.f32.mrb[0].mxu0
      %2115 = vmatprep.mubr.f32.mxu0 0.0
      %2116 = vmatmul.mubr.f32.gmra.mrb[0].mxu0 %v1937
      %v2117 = vpop.f32.mrb[0].mxu0
      %v2118 = vadd.f32 0.0, %v2117
      %v2119 = vpop.f32.mrb[0].mxu0
      %2120 = vmatprep.mubr.f32.mxu0 0.0
      %2121 = vmatmul.mubr.f32.gmra.mrb[0].mxu0 %v1940
      %v2122 = vpop.f32.mrb[0].mxu0
      %v2123 = vadd.f32 0.0, %v2122
      %v2124 = vpop.f32.mrb[0].mxu0
      %2125 = vmatprep.mubr.f32.mxu0 0.0
      %2126 = vmatmul.mubr.f32.gmra.mrb[0].mxu0 %v1943
      %v2127 = vpop.f32.mrb[0].mxu0
      %v2128 = vadd.f32 0.0, %v2127
      %v2129 = vpop.f32.mrb[0].mxu0
      %2130 = vmatprep.mubr.f32.mxu0 0.0
      %2131 = vmatmul.mubr.f32.gmra.mrb[0].mxu0 %v1946
      %v2132 = vpop.f32.mrb[0].mxu0
      %v2133 = vadd.f32 0.0, %v2132
      %v2134 = vpop.f32.mrb[0].mxu0
      %2135 = vmatprep.mubr.f32.mxu0 0.0
      %2136 = vmatmul.mubr.f32.gmra.mrb[0].mxu0 %v1949
      %v2137 = vpop.f32.mrb[0].mxu0
      %v2138 = vadd.f32 0.0, %v2137
      %v2139 = vpop.f32.mrb[0].mxu0
      %2140 = vmatprep.mubr.f32.mxu0 0.0
      %2141 = vmatmul.mubr.f32.gmra.mrb[0].mxu0 %v1952
      %v2142 = vpop.f32.mrb[0].mxu0
      %v2143 = vadd.f32 0.0, %v2142
      %v2144 = vpop.f32.mrb[0].mxu0
      %2145 = vmatprep.mubr.f32.mxu0 0.0
      %2146 = vmatmul.mubr.f32.gmra.mrb[0].mxu0 %v1955
      %v2147 = vpop.f32.mrb[0].mxu0
      %v2148 = vadd.f32 0.0, %v2147
      %v2149 = vpop.f32.mrb[0].mxu0
      %2150 = vmatprep.mubr.f32.mxu0 0.0
      %2151 = vmatmul.mubr.f32.gmra.mrb[0].mxu0 %v1958
      %v2152 = vpop.f32.mrb[0].mxu0
      %v2153 = vadd.f32 0.0, %v2152
      %v2154 = vpop.f32.mrb[0].mxu0
      %2155 = vmatprep.mubr.f32.mxu0 0.0
      %2156 = vmatmul.mubr.f32.gmra.mrb[0].mxu0 %v1961
      %v2157 = vpop.f32.mrb[0].mxu0
      %v2158 = vadd.f32 0.0, %v2157
      %v2159 = vpop.f32.mrb[0].mxu0
      %2160 = vmatprep.mubr.f32.mxu0 0.0
      %2161 = vmatmul.mubr.f32.gmra.mrb[0].mxu0 %v1964
      %v2162 = vpop.f32.mrb[0].mxu0
      %v2163 = vadd.f32 0.0, %v2162
      %v2164 = vpop.f32.mrb[0].mxu0
      %2165 = vmatprep.mubr.f32.mxu0 0.0
      %2166 = vmatmul.mubr.f32.gmra.mrb[0].mxu0 %v1967
      %v2167 = vpop.f32.mrb[0].mxu0
      %v2168 = vadd.f32 0.0, %v2167
      %v2169 = vpop.f32.mrb[0].mxu0
      %2170 = vmatprep.mubr.f32.mxu0 0.0
      %2171 = vmatmul.mubr.f32.gmra.mrb[0].mxu0 %v1970
      %v2172 = vpop.f32.mrb[0].mxu0
      %v2173 = vadd.f32 0.0, %v2172
      %v2174 = vpop.f32.mrb[0].mxu0
      %2175 = vmatprep.mubr.f32.mxu0 0.0
      %2176 = vmatmul.mubr.f32.gmra.mrb[0].mxu0 %v1973
      %v2177 = vpop.f32.mrb[0].mxu0
      %v2178 = vadd.f32 0.0, %v2177
      %v2179 = vpop.f32.mrb[0].mxu0
      %2180 = vmatprep.mubr.f32.mxu0 0.0
      %2181 = vmatmul.mubr.f32.gmra.mrb[0].mxu0 %v1976
      %v2182 = vpop.f32.mrb[0].mxu0
      %v2183 = vadd.f32 0.0, %v2182
      %v2184 = vpop.f32.mrb[0].mxu0
      %2185 = vmatprep.mubr.f32.mxu0 0.0
      %2186 = vmatmul.mubr.f32.gmra.mrb[0].mxu0 %v1979
      %v2187 = vpop.f32.mrb[0].mxu0
      %v2188 = vadd.f32 0.0, %v2187
      %v2189 = vpop.f32.mrb[0].mxu0
      %2190 = vmatprep.mubr.f32.mxu0 0.0
      %2191 = vmatmul.mubr.f32.gmra.mrb[0].mxu0 %v1982
      %v2192 = vpop.f32.mrb[0].mxu0
      %v2193 = vadd.f32 0.0, %v2192
      %v2194 = vpop.f32.mrb[0].mxu0
      %2195 = vmatprep.mubr.f32.mxu0 0.0
      %2196 = vmatmul.mubr.f32.gmra.mrb[0].mxu0 %v1985
      %v2197 = vpop.f32.mrb[0].mxu0
      %v2198 = vadd.f32 0.0, %v2197
      %v2199 = vpop.f32.mrb[0].mxu0
      %2200 = vmatprep.mubr.f32.mxu0 0.0
      %2201 = vmatmul.mubr.f32.gmra.mrb[0].mxu0 %v1988
      %v2202 = vpop.f32.mrb[0].mxu0
      %v2203 = vadd.f32 0.0, %v2202
      %v2204 = vpop.f32.mrb[0].mxu0
      %2205 = vmatprep.mubr.f32.mxu0 0.0
      %2206 = vmatmul.mubr.f32.gmra.mrb[0].mxu0 %v1991
      %v2207 = vpop.f32.mrb[0].mxu0
      %v2208 = vadd.f32 0.0, %v2207
      %v2209 = vpop.f32.mrb[0].mxu0
      %2210 = vmatprep.mubr.f32.mxu0 0.0
      %2211 = vmatmul.mubr.f32.gmra.mrb[0].mxu0 %v1994
      %v2212 = vpop.f32.mrb[0].mxu0
      %v2213 = vadd.f32 0.0, %v2212
      %v2214 = vpop.f32.mrb[0].mxu0
      %2215 = vmatprep.mubr.f32.mxu0 0.0
      %2216 = vmatmul.mubr.f32.gmra.mrb[0].mxu0 %v1997
      %v2217 = vpop.f32.mrb[0].mxu0
      %v2218 = vadd.f32 0.0, %v2217
      %v2219 = vpop.f32.mrb[0].mxu0
      %2220 = vmatprep.mubr.f32.mxu0 0.0
      %2221 = vmatmul.mubr.f32.gmra.mrb[0].mxu0 %v2000
      %v2222 = vpop.f32.mrb[0].mxu0
      %v2223 = vadd.f32 0.0, %v2222
      %v2224 = vpop.f32.mrb[0].mxu0
      %2225 = vmatprep.mubr.f32.mxu0 0.0
      %2226 = vmatmul.mubr.f32.gmra.mrb[0].mxu0 %v2003
      %v2227 = vpop.f32.mrb[0].mxu0
      %v2228 = vadd.f32 0.0, %v2227
      %v2229 = vpop.f32.mrb[0].mxu0
      %2230 = vmatprep.mubr.f32.mxu0 0.0
      %2231 = vmatmul.mubr.f32.gmra.mrb[0].mxu0 %v2006
      %v2232 = vpop.f32.mrb[0].mxu0
      %v2233 = vadd.f32 0.0, %v2232
      %v2234 = vpop.f32.mrb[0].mxu0
      %2235 = vdwg.mxu0
      %v2236 = vadd.f32 %v1848, %v2078
      %v2237 = vadd.f32 %v1849, %v2083
      %v2238 = vadd.f32 %v1850, %v2088
      %v2239 = vadd.f32 %v1851, %v2093
      %v2240 = vadd.f32 %v1852, %v2098
      %v2241 = vadd.f32 %v1853, %v2103
      %v2242 = vadd.f32 %v1854, %v2108
      %v2243 = vadd.f32 %v1855, %v2113
      %v2244 = vadd.f32 %v1856, %v2118
      %v2245 = vadd.f32 %v1857, %v2123
      %v2246 = vadd.f32 %v1858, %v2128
      %v2247 = vadd.f32 %v1859, %v2133
      %v2248 = vadd.f32 %v1860, %v2138
      %v2249 = vadd.f32 %v1861, %v2143
      %v2250 = vadd.f32 %v1862, %v2148
      %v2251 = vadd.f32 %v1863, %v2153
      %v2252 = vadd.f32 %v1864, %v2158
      %v2253 = vadd.f32 %v1865, %v2163
      %v2254 = vadd.f32 %v1866, %v2168
      %v2255 = vadd.f32 %v1867, %v2173
      %v2256 = vadd.f32 %v1868, %v2178
      %v2257 = vadd.f32 %v1869, %v2183
      %v2258 = vadd.f32 %v1870, %v2188
      %v2259 = vadd.f32 %v1871, %v2193
      %v2260 = vadd.f32 %v1872, %v2198
      %v2261 = vadd.f32 %v1873, %v2203
      %v2262 = vadd.f32 %v1874, %v2208
      %v2263 = vadd.f32 %v1875, %v2213
      %v2264 = vadd.f32 %v1876, %v2218
      %v2265 = vadd.f32 %v1877, %v2223
      %v2266 = vadd.f32 %v1878, %v2228
      %v2267 = vadd.f32 %v1879, %v2233
      %v2268 = vld [vmem:[%s349 + $0x2] sm:$0xff]
      %v2269 = vld [vmem:[%s349 + $0xa] sm:$0xff]
      %v2270 = vld [vmem:[%s349 + $0x1a] sm:$0xff]
      %v2271 = vld [vmem:[%s349 + $0x22] sm:$0xff]
      %v2272 = vld [vmem:[%s349 + $0x32] sm:$0xff]
      %v2273 = vld [vmem:[%s349 + $0x3a] sm:$0xff]
      %v2274 = vld [vmem:[%s349 + $0x4a] sm:$0xff]
      %v2275 = vld [vmem:[%s349 + $0x52] sm:$0xff]
      %v2276 = vld [vmem:[%s349 + $0x62] sm:$0xff]
      %v2277 = vld [vmem:[%s349 + $0x6a] sm:$0xff]
      %v2278 = vld [vmem:[%s349 + $0x7a] sm:$0xff]
      %v2279 = vld [vmem:[%s349 + $0x82] sm:$0xff]
      %v2280 = vld [vmem:[%s349 + $0x92] sm:$0xff]
      %v2281 = vld [vmem:[%s349 + $0x9a] sm:$0xff]
      %v2282 = vld [vmem:[%s349 + $0xaa] sm:$0xff]
      %v2283 = vld [vmem:[%s349 + $0xb2] sm:$0xff]
      %v2284 = vld [vmem:[%s349 + $0xc2] sm:$0xff]
      %v2285 = vld [vmem:[%s349 + $0xca] sm:$0xff]
      %v2286 = vld [vmem:[%s349 + $0xda] sm:$0xff]
      %v2287 = vld [vmem:[%s349 + $0xe2] sm:$0xff]
      %v2288 = vld [vmem:[%s349 + $0xf2] sm:$0xff]
      %v2289 = vld [vmem:[%s349 + $0xfa] sm:$0xff]
      %v2290 = vld [vmem:[%s349 + $0x10a] sm:$0xff]
      %v2291 = vld [vmem:[%s349 + $0x112] sm:$0xff]
      %v2292 = vld [vmem:[%s349 + $0x122] sm:$0xff]
      %v2293 = vld [vmem:[%s349 + $0x12a] sm:$0xff]
      %v2294 = vld [vmem:[%s349 + $0x13a] sm:$0xff]
      %v2295 = vld [vmem:[%s349 + $0x142] sm:$0xff]
      %v2296 = vld [vmem:[%s349 + $0x152] sm:$0xff]
      %v2297 = vld [vmem:[%s349 + $0x15a] sm:$0xff]
      %v2298 = vld [vmem:[%s349 + $0x16a] sm:$0xff]
      %v2299 = vld [vmem:[%s349 + $0x172] sm:$0xff]
      %v2301 = vsel %vm225, %v2268, 0
      %v2304 = vsel %vm225, %v2269, 0
      %v2307 = vsel %vm225, %v2270, 0
      %v2310 = vsel %vm225, %v2271, 0
      %v2313 = vsel %vm225, %v2272, 0
      %v2316 = vsel %vm225, %v2273, 0
      %v2319 = vsel %vm225, %v2274, 0
      %v2322 = vsel %vm225, %v2275, 0
      %v2325 = vsel %vm225, %v2276, 0
      %v2328 = vsel %vm225, %v2277, 0
      %v2331 = vsel %vm225, %v2278, 0
      %v2334 = vsel %vm225, %v2279, 0
      %v2337 = vsel %vm225, %v2280, 0
      %v2340 = vsel %vm225, %v2281, 0
      %v2343 = vsel %vm225, %v2282, 0
      %v2346 = vsel %vm225, %v2283, 0
      %v2349 = vsel %vm225, %v2284, 0
      %v2352 = vsel %vm225, %v2285, 0
      %v2355 = vsel %vm225, %v2286, 0
      %v2358 = vsel %vm225, %v2287, 0
      %v2361 = vsel %vm225, %v2288, 0
      %v2364 = vsel %vm225, %v2289, 0
      %v2367 = vsel %vm225, %v2290, 0
      %v2370 = vsel %vm225, %v2291, 0
      %v2373 = vsel %vm225, %v2292, 0
      %v2376 = vsel %vm225, %v2293, 0
      %v2379 = vsel %vm225, %v2294, 0
      %v2382 = vsel %vm225, %v2295, 0
      %v2385 = vsel %vm225, %v2296, 0
      %v2388 = vsel %vm225, %v2297, 0
      %v2391 = vsel %vm225, %v2298, 0
      %v2394 = vsel %vm225, %v2299, 0
      %v2397 = vsel %vm551, %v387, 0
      %2399 = vmatprep.subr.mxu0 0.0
      %2400 = vmatpush1.msra.mxu0 %v2397
      %2401 = vmatprep.subr.mxu0 0.0
      %2402 = vmatpush1.msra.mxu0 0.0
      %2403 = vmatprep.subr.mxu0 0.0
      %2404 = vmatpush1.msra.mxu0 0.0
      %2405 = vmatprep.subr.mxu0 0.0
      %2406 = vmatpush1.msra.mxu0 0.0
      %2407 = vmatprep.subr.mxu0 0.0
      %2408 = vmatpush1.msra.mxu0 0.0
      %2409 = vmatprep.subr.mxu0 0.0
      %2410 = vmatpush1.msra.mxu0 0.0
      %2411 = vmatprep.subr.mxu0 0.0
      %2412 = vmatpush1.msra.mxu0 0.0
      %2413 = vmatprep.subr.mxu0 0.0
      %2414 = vmatpush1.msra.mxu0 0.0
      %2415 = vmatprep.subr.mxu0 0.0
      %2416 = vmatpush1.msra.mxu0 0.0
      %2417 = vmatprep.subr.mxu0 0.0
      %2418 = vmatpush1.msra.mxu0 0.0
      %2419 = vmatprep.subr.mxu0 0.0
      %2420 = vmatpush1.msra.mxu0 0.0
      %2421 = vmatprep.subr.mxu0 0.0
      %2422 = vmatpush1.msra.mxu0 0.0
      %2423 = vmatprep.subr.mxu0 0.0
      %2424 = vmatpush1.msra.mxu0 0.0
      %2425 = vmatprep.subr.mxu0 0.0
      %2426 = vmatpush1.msra.mxu0 0.0
      %2427 = vmatprep.subr.mxu0 0.0
      %2428 = vmatpush1.msra.mxu0 0.0
      %2429 = vmatprep.subr.mxu0 0.0
      %2430 = vmatpush1.msra.mxu0 0.0
      %2431 = vmatprep.subr.mxu0 0.0
      %2432 = vmatpush1.msra.mxu0 0.0
      %2433 = vmatprep.subr.mxu0 0.0
      %2434 = vmatpush1.msra.mxu0 0.0
      %2435 = vmatprep.subr.mxu0 0.0
      %2436 = vmatpush1.msra.mxu0 0.0
      %2437 = vmatprep.subr.mxu0 0.0
      %2438 = vmatpush1.msra.mxu0 0.0
      %2439 = vmatprep.subr.mxu0 0.0
      %2440 = vmatpush1.msra.mxu0 0.0
      %2441 = vmatprep.subr.mxu0 0.0
      %2442 = vmatpush1.msra.mxu0 0.0
      %2443 = vmatprep.subr.mxu0 0.0
      %2444 = vmatpush1.msra.mxu0 0.0
      %2445 = vmatprep.subr.mxu0 0.0
      %2446 = vmatpush1.msra.mxu0 0.0
      %2447 = vmatprep.subr.mxu0 0.0
      %2448 = vmatpush1.msra.mxu0 0.0
      %2449 = vmatprep.subr.mxu0 0.0
      %2450 = vmatpush1.msra.mxu0 0.0
      %2451 = vmatprep.subr.mxu0 0.0
      %2452 = vmatpush1.msra.mxu0 0.0
      %2453 = vmatprep.subr.mxu0 0.0
      %2454 = vmatpush1.msra.mxu0 0.0
      %2455 = vmatprep.subr.mxu0 0.0
      %2456 = vmatpush1.msra.mxu0 0.0
      %2457 = vmatprep.subr.mxu0 0.0
      %2458 = vmatpush1.msra.mxu0 0.0
      %2459 = vmatprep.subr.mxu0 0.0
      %2460 = vmatpush1.msra.mxu0 0.0
      %2461 = vmatprep.subr.mxu0 0.0
      %2462 = vmatpush1.msra.mxu0 0.0
      %2463 = vmatprep.mubr.f32.mxu0 0.0
      %2464 = vmatmul.mubr.f32.gmra.mrb[0].mxu0 %v2301
      %v2465 = vpop.f32.mrb[0].mxu0
      %v2466 = vadd.f32 0.0, %v2465
      %v2467 = vpop.f32.mrb[0].mxu0
      %2468 = vmatprep.mubr.f32.mxu0 0.0
      %2469 = vmatmul.mubr.f32.gmra.mrb[0].mxu0 %v2304
      %v2470 = vpop.f32.mrb[0].mxu0
      %v2471 = vadd.f32 0.0, %v2470
      %v2472 = vpop.f32.mrb[0].mxu0
      %2473 = vmatprep.mubr.f32.mxu0 0.0
      %2474 = vmatmul.mubr.f32.gmra.mrb[0].mxu0 %v2307
      %v2475 = vpop.f32.mrb[0].mxu0
      %v2476 = vadd.f32 0.0, %v2475
      %v2477 = vpop.f32.mrb[0].mxu0
      %2478 = vmatprep.mubr.f32.mxu0 0.0
      %2479 = vmatmul.mubr.f32.gmra.mrb[0].mxu0 %v2310
      %v2480 = vpop.f32.mrb[0].mxu0
      %v2481 = vadd.f32 0.0, %v2480
      %v2482 = vpop.f32.mrb[0].mxu0
      %2483 = vmatprep.mubr.f32.mxu0 0.0
      %2484 = vmatmul.mubr.f32.gmra.mrb[0].mxu0 %v2313
      %v2485 = vpop.f32.mrb[0].mxu0
      %v2486 = vadd.f32 0.0, %v2485
      %v2487 = vpop.f32.mrb[0].mxu0
      %2488 = vmatprep.mubr.f32.mxu0 0.0
      %2489 = vmatmul.mubr.f32.gmra.mrb[0].mxu0 %v2316
      %v2490 = vpop.f32.mrb[0].mxu0
      %v2491 = vadd.f32 0.0, %v2490
      %v2492 = vpop.f32.mrb[0].mxu0
      %2493 = vmatprep.mubr.f32.mxu0 0.0
      %2494 = vmatmul.mubr.f32.gmra.mrb[0].mxu0 %v2319
      %v2495 = vpop.f32.mrb[0].mxu0
      %v2496 = vadd.f32 0.0, %v2495
      %v2497 = vpop.f32.mrb[0].mxu0
      %2498 = vmatprep.mubr.f32.mxu0 0.0
      %2499 = vmatmul.mubr.f32.gmra.mrb[0].mxu0 %v2322
      %v2500 = vpop.f32.mrb[0].mxu0
      %v2501 = vadd.f32 0.0, %v2500
      %v2502 = vpop.f32.mrb[0].mxu0
      %2503 = vmatprep.mubr.f32.mxu0 0.0
      %2504 = vmatmul.mubr.f32.gmra.mrb[0].mxu0 %v2325
      %v2505 = vpop.f32.mrb[0].mxu0
      %v2506 = vadd.f32 0.0, %v2505
      %v2507 = vpop.f32.mrb[0].mxu0
      %2508 = vmatprep.mubr.f32.mxu0 0.0
      %2509 = vmatmul.mubr.f32.gmra.mrb[0].mxu0 %v2328
      %v2510 = vpop.f32.mrb[0].mxu0
      %v2511 = vadd.f32 0.0, %v2510
      %v2512 = vpop.f32.mrb[0].mxu0
      %2513 = vmatprep.mubr.f32.mxu0 0.0
      %2514 = vmatmul.mubr.f32.gmra.mrb[0].mxu0 %v2331
      %v2515 = vpop.f32.mrb[0].mxu0
      %v2516 = vadd.f32 0.0, %v2515
      %v2517 = vpop.f32.mrb[0].mxu0
      %2518 = vmatprep.mubr.f32.mxu0 0.0
      %2519 = vmatmul.mubr.f32.gmra.mrb[0].mxu0 %v2334
      %v2520 = vpop.f32.mrb[0].mxu0
      %v2521 = vadd.f32 0.0, %v2520
      %v2522 = vpop.f32.mrb[0].mxu0
      %2523 = vmatprep.mubr.f32.mxu0 0.0
      %2524 = vmatmul.mubr.f32.gmra.mrb[0].mxu0 %v2337
      %v2525 = vpop.f32.mrb[0].mxu0
      %v2526 = vadd.f32 0.0, %v2525
      %v2527 = vpop.f32.mrb[0].mxu0
      %2528 = vmatprep.mubr.f32.mxu0 0.0
      %2529 = vmatmul.mubr.f32.gmra.mrb[0].mxu0 %v2340
      %v2530 = vpop.f32.mrb[0].mxu0
      %v2531 = vadd.f32 0.0, %v2530
      %v2532 = vpop.f32.mrb[0].mxu0
      %2533 = vmatprep.mubr.f32.mxu0 0.0
      %2534 = vmatmul.mubr.f32.gmra.mrb[0].mxu0 %v2343
      %v2535 = vpop.f32.mrb[0].mxu0
      %v2536 = vadd.f32 0.0, %v2535
      %v2537 = vpop.f32.mrb[0].mxu0
      %2538 = vmatprep.mubr.f32.mxu0 0.0
      %2539 = vmatmul.mubr.f32.gmra.mrb[0].mxu0 %v2346
      %v2540 = vpop.f32.mrb[0].mxu0
      %v2541 = vadd.f32 0.0, %v2540
      %v2542 = vpop.f32.mrb[0].mxu0
      %2543 = vmatprep.mubr.f32.mxu0 0.0
      %2544 = vmatmul.mubr.f32.gmra.mrb[0].mxu0 %v2349
      %v2545 = vpop.f32.mrb[0].mxu0
      %v2546 = vadd.f32 0.0, %v2545
      %v2547 = vpop.f32.mrb[0].mxu0
      %2548 = vmatprep.mubr.f32.mxu0 0.0
      %2549 = vmatmul.mubr.f32.gmra.mrb[0].mxu0 %v2352
      %v2550 = vpop.f32.mrb[0].mxu0
      %v2551 = vadd.f32 0.0, %v2550
      %v2552 = vpop.f32.mrb[0].mxu0
      %2553 = vmatprep.mubr.f32.mxu0 0.0
      %2554 = vmatmul.mubr.f32.gmra.mrb[0].mxu0 %v2355
      %v2555 = vpop.f32.mrb[0].mxu0
      %v2556 = vadd.f32 0.0, %v2555
      %v2557 = vpop.f32.mrb[0].mxu0
      %2558 = vmatprep.mubr.f32.mxu0 0.0
      %2559 = vmatmul.mubr.f32.gmra.mrb[0].mxu0 %v2358
      %v2560 = vpop.f32.mrb[0].mxu0
      %v2561 = vadd.f32 0.0, %v2560
      %v2562 = vpop.f32.mrb[0].mxu0
      %2563 = vmatprep.mubr.f32.mxu0 0.0
      %2564 = vmatmul.mubr.f32.gmra.mrb[0].mxu0 %v2361
      %v2565 = vpop.f32.mrb[0].mxu0
      %v2566 = vadd.f32 0.0, %v2565
      %v2567 = vpop.f32.mrb[0].mxu0
      %2568 = vmatprep.mubr.f32.mxu0 0.0
      %2569 = vmatmul.mubr.f32.gmra.mrb[0].mxu0 %v2364
      %v2570 = vpop.f32.mrb[0].mxu0
      %v2571 = vadd.f32 0.0, %v2570
      %v2572 = vpop.f32.mrb[0].mxu0
      %2573 = vmatprep.mubr.f32.mxu0 0.0
      %2574 = vmatmul.mubr.f32.gmra.mrb[0].mxu0 %v2367
      %v2575 = vpop.f32.mrb[0].mxu0
      %v2576 = vadd.f32 0.0, %v2575
      %v2577 = vpop.f32.mrb[0].mxu0
      %2578 = vmatprep.mubr.f32.mxu0 0.0
      %2579 = vmatmul.mubr.f32.gmra.mrb[0].mxu0 %v2370
      %v2580 = vpop.f32.mrb[0].mxu0
      %v2581 = vadd.f32 0.0, %v2580
      %v2582 = vpop.f32.mrb[0].mxu0
      %2583 = vmatprep.mubr.f32.mxu0 0.0
      %2584 = vmatmul.mubr.f32.gmra.mrb[0].mxu0 %v2373
      %v2585 = vpop.f32.mrb[0].mxu0
      %v2586 = vadd.f32 0.0, %v2585
      %v2587 = vpop.f32.mrb[0].mxu0
      %2588 = vmatprep.mubr.f32.mxu0 0.0
      %2589 = vmatmul.mubr.f32.gmra.mrb[0].mxu0 %v2376
      %v2590 = vpop.f32.mrb[0].mxu0
      %v2591 = vadd.f32 0.0, %v2590
      %v2592 = vpop.f32.mrb[0].mxu0
      %2593 = vmatprep.mubr.f32.mxu0 0.0
      %2594 = vmatmul.mubr.f32.gmra.mrb[0].mxu0 %v2379
      %v2595 = vpop.f32.mrb[0].mxu0
      %v2596 = vadd.f32 0.0, %v2595
      %v2597 = vpop.f32.mrb[0].mxu0
      %2598 = vmatprep.mubr.f32.mxu0 0.0
      %2599 = vmatmul.mubr.f32.gmra.mrb[0].mxu0 %v2382
      %v2600 = vpop.f32.mrb[0].mxu0
      %v2601 = vadd.f32 0.0, %v2600
      %v2602 = vpop.f32.mrb[0].mxu0
      %2603 = vmatprep.mubr.f32.mxu0 0.0
      %2604 = vmatmul.mubr.f32.gmra.mrb[0].mxu0 %v2385
      %v2605 = vpop.f32.mrb[0].mxu0
      %v2606 = vadd.f32 0.0, %v2605
      %v2607 = vpop.f32.mrb[0].mxu0
      %2608 = vmatprep.mubr.f32.mxu0 0.0
      %2609 = vmatmul.mubr.f32.gmra.mrb[0].mxu0 %v2388
      %v2610 = vpop.f32.mrb[0].mxu0
      %v2611 = vadd.f32 0.0, %v2610
      %v2612 = vpop.f32.mrb[0].mxu0
      %2613 = vmatprep.mubr.f32.mxu0 0.0
      %2614 = vmatmul.mubr.f32.gmra.mrb[0].mxu0 %v2391
      %v2615 = vpop.f32.mrb[0].mxu0
      %v2616 = vadd.f32 0.0, %v2615
      %v2617 = vpop.f32.mrb[0].mxu0
      %2618 = vmatprep.mubr.f32.mxu0 0.0
      %2619 = vmatmul.mubr.f32.gmra.mrb[0].mxu0 %v2394
      %v2620 = vpop.f32.mrb[0].mxu0
      %v2621 = vadd.f32 0.0, %v2620
      %v2622 = vpop.f32.mrb[0].mxu0
      %2623 = vdwg.mxu0
      %v2624 = vadd.f32 %v2236, %v2466
      %v2625 = vadd.f32 %v2237, %v2471
      %v2626 = vadd.f32 %v2238, %v2476
      %v2627 = vadd.f32 %v2239, %v2481
      %v2628 = vadd.f32 %v2240, %v2486
      %v2629 = vadd.f32 %v2241, %v2491
      %v2630 = vadd.f32 %v2242, %v2496
      %v2631 = vadd.f32 %v2243, %v2501
      %v2632 = vadd.f32 %v2244, %v2506
      %v2633 = vadd.f32 %v2245, %v2511
      %v2634 = vadd.f32 %v2246, %v2516
      %v2635 = vadd.f32 %v2247, %v2521
      %v2636 = vadd.f32 %v2248, %v2526
      %v2637 = vadd.f32 %v2249, %v2531
      %v2638 = vadd.f32 %v2250, %v2536
      %v2639 = vadd.f32 %v2251, %v2541
      %v2640 = vadd.f32 %v2252, %v2546
      %v2641 = vadd.f32 %v2253, %v2551
      %v2642 = vadd.f32 %v2254, %v2556
      %v2643 = vadd.f32 %v2255, %v2561
      %v2644 = vadd.f32 %v2256, %v2566
      %v2645 = vadd.f32 %v2257, %v2571
      %v2646 = vadd.f32 %v2258, %v2576
      %v2647 = vadd.f32 %v2259, %v2581
      %v2648 = vadd.f32 %v2260, %v2586
      %v2649 = vadd.f32 %v2261, %v2591
      %v2650 = vadd.f32 %v2262, %v2596
      %v2651 = vadd.f32 %v2263, %v2601
      %v2652 = vadd.f32 %v2264, %v2606
      %v2653 = vadd.f32 %v2265, %v2611
      %v2654 = vadd.f32 %v2266, %v2616
      %v2655 = vadd.f32 %v2267, %v2621
      %s2656 = scalar_lea.vmem [#allocation2], 48
      %v2657 = vld [vmem:[%s2656] sm:$0xff]
      %v2658 = vld [vmem:[%s2656 + $0x8] sm:$0xff]
      %v2659 = vld [vmem:[%s2656 + $0x18] sm:$0xff]
      %v2660 = vld [vmem:[%s2656 + $0x20] sm:$0xff]
      %v2661 = vld [vmem:[%s2656 + $0x30] sm:$0xff]
      %v2662 = vld [vmem:[%s2656 + $0x38] sm:$0xff]
      %v2663 = vld [vmem:[%s2656 + $0x48] sm:$0xff]
      %v2664 = vld [vmem:[%s2656 + $0x50] sm:$0xff]
      %v2665 = vld [vmem:[%s2656 + $0x60] sm:$0xff]
      %v2666 = vld [vmem:[%s2656 + $0x68] sm:$0xff]
      %v2667 = vld [vmem:[%s2656 + $0x78] sm:$0xff]
      %v2668 = vld [vmem:[%s2656 + $0x80] sm:$0xff]
      %v2669 = vld [vmem:[%s2656 + $0x90] sm:$0xff]
      %v2670 = vld [vmem:[%s2656 + $0x98] sm:$0xff]
      %v2671 = vld [vmem:[%s2656 + $0xa8] sm:$0xff]
      %v2672 = vld [vmem:[%s2656 + $0xb0] sm:$0xff]
      %v2673 = vld [vmem:[%s2656 + $0xc0] sm:$0xff]
      %v2674 = vld [vmem:[%s2656 + $0xc8] sm:$0xff]
      %v2675 = vld [vmem:[%s2656 + $0xd8] sm:$0xff]
      %v2676 = vld [vmem:[%s2656 + $0xe0] sm:$0xff]
      %v2677 = vld [vmem:[%s2656 + $0xf0] sm:$0xff]
      %v2678 = vld [vmem:[%s2656 + $0xf8] sm:$0xff]
      %v2679 = vld [vmem:[%s2656 + $0x108] sm:$0xff]
      %v2680 = vld [vmem:[%s2656 + $0x110] sm:$0xff]
      %v2681 = vld [vmem:[%s2656 + $0x120] sm:$0xff]
      %v2682 = vld [vmem:[%s2656 + $0x128] sm:$0xff]
      %v2683 = vld [vmem:[%s2656 + $0x138] sm:$0xff]
      %v2684 = vld [vmem:[%s2656 + $0x140] sm:$0xff]
      %v2685 = vld [vmem:[%s2656 + $0x150] sm:$0xff]
      %v2686 = vld [vmem:[%s2656 + $0x158] sm:$0xff]
      %v2687 = vld [vmem:[%s2656 + $0x168] sm:$0xff]
      %v2688 = vld [vmem:[%s2656 + $0x170] sm:$0xff]
      %v2690 = vsel %vm225, %v2657, 0
      %v2693 = vsel %vm225, %v2658, 0
      %v2696 = vsel %vm225, %v2659, 0
      %v2699 = vsel %vm225, %v2660, 0
      %v2702 = vsel %vm225, %v2661, 0
      %v2705 = vsel %vm225, %v2662, 0
      %v2708 = vsel %vm225, %v2663, 0
      %v2711 = vsel %vm225, %v2664, 0
      %v2714 = vsel %vm225, %v2665, 0
      %v2717 = vsel %vm225, %v2666, 0
      %v2720 = vsel %vm225, %v2667, 0
      %v2723 = vsel %vm225, %v2668, 0
      %v2726 = vsel %vm225, %v2669, 0
      %v2729 = vsel %vm225, %v2670, 0
      %v2732 = vsel %vm225, %v2671, 0
      %v2735 = vsel %vm225, %v2672, 0
      %v2738 = vsel %vm225, %v2673, 0
      %v2741 = vsel %vm225, %v2674, 0
      %v2744 = vsel %vm225, %v2675, 0
      %v2747 = vsel %vm225, %v2676, 0
      %v2750 = vsel %vm225, %v2677, 0
      %v2753 = vsel %vm225, %v2678, 0
      %v2756 = vsel %vm225, %v2679, 0
      %v2759 = vsel %vm225, %v2680, 0
      %v2762 = vsel %vm225, %v2681, 0
      %v2765 = vsel %vm225, %v2682, 0
      %v2768 = vsel %vm225, %v2683, 0
      %v2771 = vsel %vm225, %v2684, 0
      %v2774 = vsel %vm225, %v2685, 0
      %v2777 = vsel %vm225, %v2686, 0
      %v2780 = vsel %vm225, %v2687, 0
      %v2783 = vsel %vm225, %v2688, 0
      %v2786 = vsel %vm551, %v388, 0
      %2788 = vmatprep.subr.mxu0 0.0
      %2789 = vmatpush1.msra.mxu0 %v2786
      %2790 = vmatprep.subr.mxu0 0.0
      %2791 = vmatpush1.msra.mxu0 0.0
      %2792 = vmatprep.subr.mxu0 0.0
      %2793 = vmatpush1.msra.mxu0 0.0
      %2794 = vmatprep.subr.mxu0 0.0
      %2795 = vmatpush1.msra.mxu0 0.0
      %2796 = vmatprep.subr.mxu0 0.0
      %2797 = vmatpush1.msra.mxu0 0.0
      %2798 = vmatprep.subr.mxu0 0.0
      %2799 = vmatpush1.msra.mxu0 0.0
      %2800 = vmatprep.subr.mxu0 0.0
      %2801 = vmatpush1.msra.mxu0 0.0
      %2802 = vmatprep.subr.mxu0 0.0
      %2803 = vmatpush1.msra.mxu0 0.0
      %2804 = vmatprep.subr.mxu0 0.0
      %2805 = vmatpush1.msra.mxu0 0.0
      %2806 = vmatprep.subr.mxu0 0.0
      %2807 = vmatpush1.msra.mxu0 0.0
      %2808 = vmatprep.subr.mxu0 0.0
      %2809 = vmatpush1.msra.mxu0 0.0
      %2810 = vmatprep.subr.mxu0 0.0
      %2811 = vmatpush1.msra.mxu0 0.0
      %2812 = vmatprep.subr.mxu0 0.0
      %2813 = vmatpush1.msra.mxu0 0.0
      %2814 = vmatprep.subr.mxu0 0.0
      %2815 = vmatpush1.msra.mxu0 0.0
      %2816 = vmatprep.subr.mxu0 0.0
      %2817 = vmatpush1.msra.mxu0 0.0
      %2818 = vmatprep.subr.mxu0 0.0
      %2819 = vmatpush1.msra.mxu0 0.0
      %2820 = vmatprep.subr.mxu0 0.0
      %2821 = vmatpush1.msra.mxu0 0.0
      %2822 = vmatprep.subr.mxu0 0.0
      %2823 = vmatpush1.msra.mxu0 0.0
      %2824 = vmatprep.subr.mxu0 0.0
      %2825 = vmatpush1.msra.mxu0 0.0
      %2826 = vmatprep.subr.mxu0 0.0
      %2827 = vmatpush1.msra.mxu0 0.0
      %2828 = vmatprep.subr.mxu0 0.0
      %2829 = vmatpush1.msra.mxu0 0.0
      %2830 = vmatprep.subr.mxu0 0.0
      %2831 = vmatpush1.msra.mxu0 0.0
      %2832 = vmatprep.subr.mxu0 0.0
      %2833 = vmatpush1.msra.mxu0 0.0
      %2834 = vmatprep.subr.mxu0 0.0
      %2835 = vmatpush1.msra.mxu0 0.0
      %2836 = vmatprep.subr.mxu0 0.0
      %2837 = vmatpush1.msra.mxu0 0.0
      %2838 = vmatprep.subr.mxu0 0.0
      %2839 = vmatpush1.msra.mxu0 0.0
      %2840 = vmatprep.subr.mxu0 0.0
      %2841 = vmatpush1.msra.mxu0 0.0
      %2842 = vmatprep.subr.mxu0 0.0
      %2843 = vmatpush1.msra.mxu0 0.0
      %2844 = vmatprep.subr.mxu0 0.0
      %2845 = vmatpush1.msra.mxu0 0.0
      %2846 = vmatprep.subr.mxu0 0.0
      %2847 = vmatpush1.msra.mxu0 0.0
      %2848 = vmatprep.subr.mxu0 0.0
      %2849 = vmatpush1.msra.mxu0 0.0
      %2850 = vmatprep.subr.mxu0 0.0
      %2851 = vmatpush1.msra.mxu0 0.0
      %2852 = vmatprep.mubr.f32.mxu0 0.0
      %2853 = vmatmul.mubr.f32.gmra.mrb[0].mxu0 %v2690
      %v2854 = vpop.f32.mrb[0].mxu0
      %v2855 = vadd.f32 0.0, %v2854
      %v2856 = vpop.f32.mrb[0].mxu0
      %2857 = vmatprep.mubr.f32.mxu0 0.0
      %2858 = vmatmul.mubr.f32.gmra.mrb[0].mxu0 %v2693
      %v2859 = vpop.f32.mrb[0].mxu0
      %v2860 = vadd.f32 0.0, %v2859
      %v2861 = vpop.f32.mrb[0].mxu0
      %2862 = vmatprep.mubr.f32.mxu0 0.0
      %2863 = vmatmul.mubr.f32.gmra.mrb[0].mxu0 %v2696
      %v2864 = vpop.f32.mrb[0].mxu0
      %v2865 = vadd.f32 0.0, %v2864
      %v2866 = vpop.f32.mrb[0].mxu0
      %2867 = vmatprep.mubr.f32.mxu0 0.0
      %2868 = vmatmul.mubr.f32.gmra.mrb[0].mxu0 %v2699
      %v2869 = vpop.f32.mrb[0].mxu0
      %v2870 = vadd.f32 0.0, %v2869
      %v2871 = vpop.f32.mrb[0].mxu0
      %2872 = vmatprep.mubr.f32.mxu0 0.0
      %2873 = vmatmul.mubr.f32.gmra.mrb[0].mxu0 %v2702
      %v2874 = vpop.f32.mrb[0].mxu0
      %v2875 = vadd.f32 0.0, %v2874
      %v2876 = vpop.f32.mrb[0].mxu0
      %2877 = vmatprep.mubr.f32.mxu0 0.0
      %2878 = vmatmul.mubr.f32.gmra.mrb[0].mxu0 %v2705
      %v2879 = vpop.f32.mrb[0].mxu0
      %v2880 = vadd.f32 0.0, %v2879
      %v2881 = vpop.f32.mrb[0].mxu0
      %2882 = vmatprep.mubr.f32.mxu0 0.0
      %2883 = vmatmul.mubr.f32.gmra.mrb[0].mxu0 %v2708
      %v2884 = vpop.f32.mrb[0].mxu0
      %v2885 = vadd.f32 0.0, %v2884
      %v2886 = vpop.f32.mrb[0].mxu0
      %2887 = vmatprep.mubr.f32.mxu0 0.0
      %2888 = vmatmul.mubr.f32.gmra.mrb[0].mxu0 %v2711
      %v2889 = vpop.f32.mrb[0].mxu0
      %v2890 = vadd.f32 0.0, %v2889
      %v2891 = vpop.f32.mrb[0].mxu0
      %2892 = vmatprep.mubr.f32.mxu0 0.0
      %2893 = vmatmul.mubr.f32.gmra.mrb[0].mxu0 %v2714
      %v2894 = vpop.f32.mrb[0].mxu0
      %v2895 = vadd.f32 0.0, %v2894
      %v2896 = vpop.f32.mrb[0].mxu0
      %2897 = vmatprep.mubr.f32.mxu0 0.0
      %2898 = vmatmul.mubr.f32.gmra.mrb[0].mxu0 %v2717
      %v2899 = vpop.f32.mrb[0].mxu0
      %v2900 = vadd.f32 0.0, %v2899
      %v2901 = vpop.f32.mrb[0].mxu0
      %2902 = vmatprep.mubr.f32.mxu0 0.0
      %2903 = vmatmul.mubr.f32.gmra.mrb[0].mxu0 %v2720
      %v2904 = vpop.f32.mrb[0].mxu0
      %v2905 = vadd.f32 0.0, %v2904
      %v2906 = vpop.f32.mrb[0].mxu0
      %2907 = vmatprep.mubr.f32.mxu0 0.0
      %2908 = vmatmul.mubr.f32.gmra.mrb[0].mxu0 %v2723
      %v2909 = vpop.f32.mrb[0].mxu0
      %v2910 = vadd.f32 0.0, %v2909
      %v2911 = vpop.f32.mrb[0].mxu0
      %2912 = vmatprep.mubr.f32.mxu0 0.0
      %2913 = vmatmul.mubr.f32.gmra.mrb[0].mxu0 %v2726
      %v2914 = vpop.f32.mrb[0].mxu0
      %v2915 = vadd.f32 0.0, %v2914
      %v2916 = vpop.f32.mrb[0].mxu0
      %2917 = vmatprep.mubr.f32.mxu0 0.0
      %2918 = vmatmul.mubr.f32.gmra.mrb[0].mxu0 %v2729
      %v2919 = vpop.f32.mrb[0].mxu0
      %v2920 = vadd.f32 0.0, %v2919
      %v2921 = vpop.f32.mrb[0].mxu0
      %2922 = vmatprep.mubr.f32.mxu0 0.0
      %2923 = vmatmul.mubr.f32.gmra.mrb[0].mxu0 %v2732
      %v2924 = vpop.f32.mrb[0].mxu0
      %v2925 = vadd.f32 0.0, %v2924
      %v2926 = vpop.f32.mrb[0].mxu0
      %2927 = vmatprep.mubr.f32.mxu0 0.0
      %2928 = vmatmul.mubr.f32.gmra.mrb[0].mxu0 %v2735
      %v2929 = vpop.f32.mrb[0].mxu0
      %v2930 = vadd.f32 0.0, %v2929
      %v2931 = vpop.f32.mrb[0].mxu0
      %2932 = vmatprep.mubr.f32.mxu0 0.0
      %2933 = vmatmul.mubr.f32.gmra.mrb[0].mxu0 %v2738
      %v2934 = vpop.f32.mrb[0].mxu0
      %v2935 = vadd.f32 0.0, %v2934
      %v2936 = vpop.f32.mrb[0].mxu0
      %2937 = vmatprep.mubr.f32.mxu0 0.0
      %2938 = vmatmul.mubr.f32.gmra.mrb[0].mxu0 %v2741
      %v2939 = vpop.f32.mrb[0].mxu0
      %v2940 = vadd.f32 0.0, %v2939
      %v2941 = vpop.f32.mrb[0].mxu0
      %2942 = vmatprep.mubr.f32.mxu0 0.0
      %2943 = vmatmul.mubr.f32.gmra.mrb[0].mxu0 %v2744
      %v2944 = vpop.f32.mrb[0].mxu0
      %v2945 = vadd.f32 0.0, %v2944
      %v2946 = vpop.f32.mrb[0].mxu0
      %2947 = vmatprep.mubr.f32.mxu0 0.0
      %2948 = vmatmul.mubr.f32.gmra.mrb[0].mxu0 %v2747
      %v2949 = vpop.f32.mrb[0].mxu0
      %v2950 = vadd.f32 0.0, %v2949
      %v2951 = vpop.f32.mrb[0].mxu0
      %2952 = vmatprep.mubr.f32.mxu0 0.0
      %2953 = vmatmul.mubr.f32.gmra.mrb[0].mxu0 %v2750
      %v2954 = vpop.f32.mrb[0].mxu0
      %v2955 = vadd.f32 0.0, %v2954
      %v2956 = vpop.f32.mrb[0].mxu0
      %2957 = vmatprep.mubr.f32.mxu0 0.0
      %2958 = vmatmul.mubr.f32.gmra.mrb[0].mxu0 %v2753
      %v2959 = vpop.f32.mrb[0].mxu0
      %v2960 = vadd.f32 0.0, %v2959
      %v2961 = vpop.f32.mrb[0].mxu0
      %2962 = vmatprep.mubr.f32.mxu0 0.0
      %2963 = vmatmul.mubr.f32.gmra.mrb[0].mxu0 %v2756
      %v2964 = vpop.f32.mrb[0].mxu0
      %v2965 = vadd.f32 0.0, %v2964
      %v2966 = vpop.f32.mrb[0].mxu0
      %2967 = vmatprep.mubr.f32.mxu0 0.0
      %2968 = vmatmul.mubr.f32.gmra.mrb[0].mxu0 %v2759
      %v2969 = vpop.f32.mrb[0].mxu0
      %v2970 = vadd.f32 0.0, %v2969
      %v2971 = vpop.f32.mrb[0].mxu0
      %2972 = vmatprep.mubr.f32.mxu0 0.0
      %2973 = vmatmul.mubr.f32.gmra.mrb[0].mxu0 %v2762
      %v2974 = vpop.f32.mrb[0].mxu0
      %v2975 = vadd.f32 0.0, %v2974
      %v2976 = vpop.f32.mrb[0].mxu0
      %2977 = vmatprep.mubr.f32.mxu0 0.0
      %2978 = vmatmul.mubr.f32.gmra.mrb[0].mxu0 %v2765
      %v2979 = vpop.f32.mrb[0].mxu0
      %v2980 = vadd.f32 0.0, %v2979
      %v2981 = vpop.f32.mrb[0].mxu0
      %2982 = vmatprep.mubr.f32.mxu0 0.0
      %2983 = vmatmul.mubr.f32.gmra.mrb[0].mxu0 %v2768
      %v2984 = vpop.f32.mrb[0].mxu0
      %v2985 = vadd.f32 0.0, %v2984
      %v2986 = vpop.f32.mrb[0].mxu0
      %2987 = vmatprep.mubr.f32.mxu0 0.0
      %2988 = vmatmul.mubr.f32.gmra.mrb[0].mxu0 %v2771
      %v2989 = vpop.f32.mrb[0].mxu0
      %v2990 = vadd.f32 0.0, %v2989
      %v2991 = vpop.f32.mrb[0].mxu0
      %2992 = vmatprep.mubr.f32.mxu0 0.0
      %2993 = vmatmul.mubr.f32.gmra.mrb[0].mxu0 %v2774
      %v2994 = vpop.f32.mrb[0].mxu0
      %v2995 = vadd.f32 0.0, %v2994
      %v2996 = vpop.f32.mrb[0].mxu0
      %2997 = vmatprep.mubr.f32.mxu0 0.0
      %2998 = vmatmul.mubr.f32.gmra.mrb[0].mxu0 %v2777
      %v2999 = vpop.f32.mrb[0].mxu0
      %v3000 = vadd.f32 0.0, %v2999
      %v3001 = vpop.f32.mrb[0].mxu0
      %3002 = vmatprep.mubr.f32.mxu0 0.0
      %3003 = vmatmul.mubr.f32.gmra.mrb[0].mxu0 %v2780
      %v3004 = vpop.f32.mrb[0].mxu0
      %v3005 = vadd.f32 0.0, %v3004
      %v3006 = vpop.f32.mrb[0].mxu0
      %3007 = vmatprep.mubr.f32.mxu0 0.0
      %3008 = vmatmul.mubr.f32.gmra.mrb[0].mxu0 %v2783
      %v3009 = vpop.f32.mrb[0].mxu0
      %v3010 = vadd.f32 0.0, %v3009
      %v3011 = vpop.f32.mrb[0].mxu0
      %3012 = vdwg.mxu0
      %v3013 = vadd.f32 %v2624, %v2855
      %v3014 = vadd.f32 %v2625, %v2860
      %v3015 = vadd.f32 %v2626, %v2865
      %v3016 = vadd.f32 %v2627, %v2870
      %v3017 = vadd.f32 %v2628, %v2875
      %v3018 = vadd.f32 %v2629, %v2880
      %v3019 = vadd.f32 %v2630, %v2885
      %v3020 = vadd.f32 %v2631, %v2890
      %v3021 = vadd.f32 %v2632, %v2895
      %v3022 = vadd.f32 %v2633, %v2900
      %v3023 = vadd.f32 %v2634, %v2905
      %v3024 = vadd.f32 %v2635, %v2910
      %v3025 = vadd.f32 %v2636, %v2915
      %v3026 = vadd.f32 %v2637, %v2920
      %v3027 = vadd.f32 %v2638, %v2925
      %v3028 = vadd.f32 %v2639, %v2930
      %v3029 = vadd.f32 %v2640, %v2935
      %v3030 = vadd.f32 %v2641, %v2940
      %v3031 = vadd.f32 %v2642, %v2945
      %v3032 = vadd.f32 %v2643, %v2950
      %v3033 = vadd.f32 %v2644, %v2955
      %v3034 = vadd.f32 %v2645, %v2960
      %v3035 = vadd.f32 %v2646, %v2965
      %v3036 = vadd.f32 %v2647, %v2970
      %v3037 = vadd.f32 %v2648, %v2975
      %v3038 = vadd.f32 %v2649, %v2980
      %v3039 = vadd.f32 %v2650, %v2985
      %v3040 = vadd.f32 %v2651, %v2990
      %v3041 = vadd.f32 %v2652, %v2995
      %v3042 = vadd.f32 %v2653, %v3000
      %v3043 = vadd.f32 %v2654, %v3005
      %v3044 = vadd.f32 %v2655, %v3010
      %v3045 = vld [vmem:[%s2656 + $0x1] sm:$0xff]
      %v3046 = vld [vmem:[%s2656 + $0x9] sm:$0xff]
      %v3047 = vld [vmem:[%s2656 + $0x19] sm:$0xff]
      %v3048 = vld [vmem:[%s2656 + $0x21] sm:$0xff]
      %v3049 = vld [vmem:[%s2656 + $0x31] sm:$0xff]
      %v3050 = vld [vmem:[%s2656 + $0x39] sm:$0xff]
      %v3051 = vld [vmem:[%s2656 + $0x49] sm:$0xff]
      %v3052 = vld [vmem:[%s2656 + $0x51] sm:$0xff]
      %v3053 = vld [vmem:[%s2656 + $0x61] sm:$0xff]
      %v3054 = vld [vmem:[%s2656 + $0x69] sm:$0xff]
      %v3055 = vld [vmem:[%s2656 + $0x79] sm:$0xff]
      %v3056 = vld [vmem:[%s2656 + $0x81] sm:$0xff]
      %v3057 = vld [vmem:[%s2656 + $0x91] sm:$0xff]
      %v3058 = vld [vmem:[%s2656 + $0x99] sm:$0xff]
      %v3059 = vld [vmem:[%s2656 + $0xa9] sm:$0xff]
      %v3060 = vld [vmem:[%s2656 + $0xb1] sm:$0xff]
      %v3061 = vld [vmem:[%s2656 + $0xc1] sm:$0xff]
      %v3062 = vld [vmem:[%s2656 + $0xc9] sm:$0xff]
      %v3063 = vld [vmem:[%s2656 + $0xd9] sm:$0xff]
      %v3064 = vld [vmem:[%s2656 + $0xe1] sm:$0xff]
      %v3065 = vld [vmem:[%s2656 + $0xf1] sm:$0xff]
      %v3066 = vld [vmem:[%s2656 + $0xf9] sm:$0xff]
      %v3067 = vld [vmem:[%s2656 + $0x109] sm:$0xff]
      %v3068 = vld [vmem:[%s2656 + $0x111] sm:$0xff]
      %v3069 = vld [vmem:[%s2656 + $0x121] sm:$0xff]
      %v3070 = vld [vmem:[%s2656 + $0x129] sm:$0xff]
      %v3071 = vld [vmem:[%s2656 + $0x139] sm:$0xff]
      %v3072 = vld [vmem:[%s2656 + $0x141] sm:$0xff]
      %v3073 = vld [vmem:[%s2656 + $0x151] sm:$0xff]
      %v3074 = vld [vmem:[%s2656 + $0x159] sm:$0xff]
      %v3075 = vld [vmem:[%s2656 + $0x169] sm:$0xff]
      %v3076 = vld [vmem:[%s2656 + $0x171] sm:$0xff]
      %v3078 = vsel %vm225, %v3045, 0
      %v3081 = vsel %vm225, %v3046, 0
      %v3084 = vsel %vm225, %v3047, 0
      %v3087 = vsel %vm225, %v3048, 0
      %v3090 = vsel %vm225, %v3049, 0
      %v3093 = vsel %vm225, %v3050, 0
      %v3096 = vsel %vm225, %v3051, 0
      %v3099 = vsel %vm225, %v3052, 0
      %v3102 = vsel %vm225, %v3053, 0
      %v3105 = vsel %vm225, %v3054, 0
      %v3108 = vsel %vm225, %v3055, 0
      %v3111 = vsel %vm225, %v3056, 0
      %v3114 = vsel %vm225, %v3057, 0
      %v3117 = vsel %vm225, %v3058, 0
      %v3120 = vsel %vm225, %v3059, 0
      %v3123 = vsel %vm225, %v3060, 0
      %v3126 = vsel %vm225, %v3061, 0
      %v3129 = vsel %vm225, %v3062, 0
      %v3132 = vsel %vm225, %v3063, 0
      %v3135 = vsel %vm225, %v3064, 0
      %v3138 = vsel %vm225, %v3065, 0
      %v3141 = vsel %vm225, %v3066, 0
      %v3144 = vsel %vm225, %v3067, 0
      %v3147 = vsel %vm225, %v3068, 0
      %v3150 = vsel %vm225, %v3069, 0
      %v3153 = vsel %vm225, %v3070, 0
      %v3156 = vsel %vm225, %v3071, 0
      %v3159 = vsel %vm225, %v3072, 0
      %v3162 = vsel %vm225, %v3073, 0
      %v3165 = vsel %vm225, %v3074, 0
      %v3168 = vsel %vm225, %v3075, 0
      %v3171 = vsel %vm225, %v3076, 0
      %v3174 = vsel %vm551, %v389, 0
      %3176 = vmatprep.subr.mxu0 0.0
      %3177 = vmatpush1.msra.mxu0 %v3174
      %3178 = vmatprep.subr.mxu0 0.0
      %3179 = vmatpush1.msra.mxu0 0.0
      %3180 = vmatprep.subr.mxu0 0.0
      %3181 = vmatpush1.msra.mxu0 0.0
      %3182 = vmatprep.subr.mxu0 0.0
      %3183 = vmatpush1.msra.mxu0 0.0
      %3184 = vmatprep.subr.mxu0 0.0
      %3185 = vmatpush1.msra.mxu0 0.0
      %3186 = vmatprep.subr.mxu0 0.0
      %3187 = vmatpush1.msra.mxu0 0.0
      %3188 = vmatprep.subr.mxu0 0.0
      %3189 = vmatpush1.msra.mxu0 0.0
      %3190 = vmatprep.subr.mxu0 0.0
      %3191 = vmatpush1.msra.mxu0 0.0
      %3192 = vmatprep.subr.mxu0 0.0
      %3193 = vmatpush1.msra.mxu0 0.0
      %3194 = vmatprep.subr.mxu0 0.0
      %3195 = vmatpush1.msra.mxu0 0.0
      %3196 = vmatprep.subr.mxu0 0.0
      %3197 = vmatpush1.msra.mxu0 0.0
      %3198 = vmatprep.subr.mxu0 0.0
      %3199 = vmatpush1.msra.mxu0 0.0
      %3200 = vmatprep.subr.mxu0 0.0
      %3201 = vmatpush1.msra.mxu0 0.0
      %3202 = vmatprep.subr.mxu0 0.0
      %3203 = vmatpush1.msra.mxu0 0.0
      %3204 = vmatprep.subr.mxu0 0.0
      %3205 = vmatpush1.msra.mxu0 0.0
      %3206 = vmatprep.subr.mxu0 0.0
      %3207 = vmatpush1.msra.mxu0 0.0
      %3208 = vmatprep.subr.mxu0 0.0
      %3209 = vmatpush1.msra.mxu0 0.0
      %3210 = vmatprep.subr.mxu0 0.0
      %3211 = vmatpush1.msra.mxu0 0.0
      %3212 = vmatprep.subr.mxu0 0.0
      %3213 = vmatpush1.msra.mxu0 0.0
      %3214 = vmatprep.subr.mxu0 0.0
      %3215 = vmatpush1.msra.mxu0 0.0
      %3216 = vmatprep.subr.mxu0 0.0
      %3217 = vmatpush1.msra.mxu0 0.0
      %3218 = vmatprep.subr.mxu0 0.0
      %3219 = vmatpush1.msra.mxu0 0.0
      %3220 = vmatprep.subr.mxu0 0.0
      %3221 = vmatpush1.msra.mxu0 0.0
      %3222 = vmatprep.subr.mxu0 0.0
      %3223 = vmatpush1.msra.mxu0 0.0
      %3224 = vmatprep.subr.mxu0 0.0
      %3225 = vmatpush1.msra.mxu0 0.0
      %3226 = vmatprep.subr.mxu0 0.0
      %3227 = vmatpush1.msra.mxu0 0.0
      %3228 = vmatprep.subr.mxu0 0.0
      %3229 = vmatpush1.msra.mxu0 0.0
      %3230 = vmatprep.subr.mxu0 0.0
      %3231 = vmatpush1.msra.mxu0 0.0
      %3232 = vmatprep.subr.mxu0 0.0
      %3233 = vmatpush1.msra.mxu0 0.0
      %3234 = vmatprep.subr.mxu0 0.0
      %3235 = vmatpush1.msra.mxu0 0.0
      %3236 = vmatprep.subr.mxu0 0.0
      %3237 = vmatpush1.msra.mxu0 0.0
      %3238 = vmatprep.subr.mxu0 0.0
      %3239 = vmatpush1.msra.mxu0 0.0
      %3240 = vmatprep.mubr.f32.mxu0 0.0
      %3241 = vmatmul.mubr.f32.gmra.mrb[0].mxu0 %v3078
      %v3242 = vpop.f32.mrb[0].mxu0
      %v3243 = vadd.f32 0.0, %v3242
      %v3244 = vpop.f32.mrb[0].mxu0
      %3245 = vmatprep.mubr.f32.mxu0 0.0
      %3246 = vmatmul.mubr.f32.gmra.mrb[0].mxu0 %v3081
      %v3247 = vpop.f32.mrb[0].mxu0
      %v3248 = vadd.f32 0.0, %v3247
      %v3249 = vpop.f32.mrb[0].mxu0
      %3250 = vmatprep.mubr.f32.mxu0 0.0
      %3251 = vmatmul.mubr.f32.gmra.mrb[0].mxu0 %v3084
      %v3252 = vpop.f32.mrb[0].mxu0
      %v3253 = vadd.f32 0.0, %v3252
      %v3254 = vpop.f32.mrb[0].mxu0
      %3255 = vmatprep.mubr.f32.mxu0 0.0
      %3256 = vmatmul.mubr.f32.gmra.mrb[0].mxu0 %v3087
      %v3257 = vpop.f32.mrb[0].mxu0
      %v3258 = vadd.f32 0.0, %v3257
      %v3259 = vpop.f32.mrb[0].mxu0
      %3260 = vmatprep.mubr.f32.mxu0 0.0
      %3261 = vmatmul.mubr.f32.gmra.mrb[0].mxu0 %v3090
      %v3262 = vpop.f32.mrb[0].mxu0
      %v3263 = vadd.f32 0.0, %v3262
      %v3264 = vpop.f32.mrb[0].mxu0
      %3265 = vmatprep.mubr.f32.mxu0 0.0
      %3266 = vmatmul.mubr.f32.gmra.mrb[0].mxu0 %v3093
      %v3267 = vpop.f32.mrb[0].mxu0
      %v3268 = vadd.f32 0.0, %v3267
      %v3269 = vpop.f32.mrb[0].mxu0
      %3270 = vmatprep.mubr.f32.mxu0 0.0
      %3271 = vmatmul.mubr.f32.gmra.mrb[0].mxu0 %v3096
      %v3272 = vpop.f32.mrb[0].mxu0
      %v3273 = vadd.f32 0.0, %v3272
      %v3274 = vpop.f32.mrb[0].mxu0
      %3275 = vmatprep.mubr.f32.mxu0 0.0
      %3276 = vmatmul.mubr.f32.gmra.mrb[0].mxu0 %v3099
      %v3277 = vpop.f32.mrb[0].mxu0
      %v3278 = vadd.f32 0.0, %v3277
      %v3279 = vpop.f32.mrb[0].mxu0
      %3280 = vmatprep.mubr.f32.mxu0 0.0
      %3281 = vmatmul.mubr.f32.gmra.mrb[0].mxu0 %v3102
      %v3282 = vpop.f32.mrb[0].mxu0
      %v3283 = vadd.f32 0.0, %v3282
      %v3284 = vpop.f32.mrb[0].mxu0
      %3285 = vmatprep.mubr.f32.mxu0 0.0
      %3286 = vmatmul.mubr.f32.gmra.mrb[0].mxu0 %v3105
      %v3287 = vpop.f32.mrb[0].mxu0
      %v3288 = vadd.f32 0.0, %v3287
      %v3289 = vpop.f32.mrb[0].mxu0
      %3290 = vmatprep.mubr.f32.mxu0 0.0
      %3291 = vmatmul.mubr.f32.gmra.mrb[0].mxu0 %v3108
      %v3292 = vpop.f32.mrb[0].mxu0
      %v3293 = vadd.f32 0.0, %v3292
      %v3294 = vpop.f32.mrb[0].mxu0
      %3295 = vmatprep.mubr.f32.mxu0 0.0
      %3296 = vmatmul.mubr.f32.gmra.mrb[0].mxu0 %v3111
      %v3297 = vpop.f32.mrb[0].mxu0
      %v3298 = vadd.f32 0.0, %v3297
      %v3299 = vpop.f32.mrb[0].mxu0
      %3300 = vmatprep.mubr.f32.mxu0 0.0
      %3301 = vmatmul.mubr.f32.gmra.mrb[0].mxu0 %v3114
      %v3302 = vpop.f32.mrb[0].mxu0
      %v3303 = vadd.f32 0.0, %v3302
      %v3304 = vpop.f32.mrb[0].mxu0
      %3305 = vmatprep.mubr.f32.mxu0 0.0
      %3306 = vmatmul.mubr.f32.gmra.mrb[0].mxu0 %v3117
      %v3307 = vpop.f32.mrb[0].mxu0
      %v3308 = vadd.f32 0.0, %v3307
      %v3309 = vpop.f32.mrb[0].mxu0
      %3310 = vmatprep.mubr.f32.mxu0 0.0
      %3311 = vmatmul.mubr.f32.gmra.mrb[0].mxu0 %v3120
      %v3312 = vpop.f32.mrb[0].mxu0
      %v3313 = vadd.f32 0.0, %v3312
      %v3314 = vpop.f32.mrb[0].mxu0
      %3315 = vmatprep.mubr.f32.mxu0 0.0
      %3316 = vmatmul.mubr.f32.gmra.mrb[0].mxu0 %v3123
      %v3317 = vpop.f32.mrb[0].mxu0
      %v3318 = vadd.f32 0.0, %v3317
      %v3319 = vpop.f32.mrb[0].mxu0
      %3320 = vmatprep.mubr.f32.mxu0 0.0
      %3321 = vmatmul.mubr.f32.gmra.mrb[0].mxu0 %v3126
      %v3322 = vpop.f32.mrb[0].mxu0
      %v3323 = vadd.f32 0.0, %v3322
      %v3324 = vpop.f32.mrb[0].mxu0
      %3325 = vmatprep.mubr.f32.mxu0 0.0
      %3326 = vmatmul.mubr.f32.gmra.mrb[0].mxu0 %v3129
      %v3327 = vpop.f32.mrb[0].mxu0
      %v3328 = vadd.f32 0.0, %v3327
      %v3329 = vpop.f32.mrb[0].mxu0
      %3330 = vmatprep.mubr.f32.mxu0 0.0
      %3331 = vmatmul.mubr.f32.gmra.mrb[0].mxu0 %v3132
      %v3332 = vpop.f32.mrb[0].mxu0
      %v3333 = vadd.f32 0.0, %v3332
      %v3334 = vpop.f32.mrb[0].mxu0
      %3335 = vmatprep.mubr.f32.mxu0 0.0
      %3336 = vmatmul.mubr.f32.gmra.mrb[0].mxu0 %v3135
      %v3337 = vpop.f32.mrb[0].mxu0
      %v3338 = vadd.f32 0.0, %v3337
      %v3339 = vpop.f32.mrb[0].mxu0
      %3340 = vmatprep.mubr.f32.mxu0 0.0
      %3341 = vmatmul.mubr.f32.gmra.mrb[0].mxu0 %v3138
      %v3342 = vpop.f32.mrb[0].mxu0
      %v3343 = vadd.f32 0.0, %v3342
      %v3344 = vpop.f32.mrb[0].mxu0
      %3345 = vmatprep.mubr.f32.mxu0 0.0
      %3346 = vmatmul.mubr.f32.gmra.mrb[0].mxu0 %v3141
      %v3347 = vpop.f32.mrb[0].mxu0
      %v3348 = vadd.f32 0.0, %v3347
      %v3349 = vpop.f32.mrb[0].mxu0
      %3350 = vmatprep.mubr.f32.mxu0 0.0
      %3351 = vmatmul.mubr.f32.gmra.mrb[0].mxu0 %v3144
      %v3352 = vpop.f32.mrb[0].mxu0
      %v3353 = vadd.f32 0.0, %v3352
      %v3354 = vpop.f32.mrb[0].mxu0
      %3355 = vmatprep.mubr.f32.mxu0 0.0
      %3356 = vmatmul.mubr.f32.gmra.mrb[0].mxu0 %v3147
      %v3357 = vpop.f32.mrb[0].mxu0
      %v3358 = vadd.f32 0.0, %v3357
      %v3359 = vpop.f32.mrb[0].mxu0
      %3360 = vmatprep.mubr.f32.mxu0 0.0
      %3361 = vmatmul.mubr.f32.gmra.mrb[0].mxu0 %v3150
      %v3362 = vpop.f32.mrb[0].mxu0
      %v3363 = vadd.f32 0.0, %v3362
      %v3364 = vpop.f32.mrb[0].mxu0
      %3365 = vmatprep.mubr.f32.mxu0 0.0
      %3366 = vmatmul.mubr.f32.gmra.mrb[0].mxu0 %v3153
      %v3367 = vpop.f32.mrb[0].mxu0
      %v3368 = vadd.f32 0.0, %v3367
      %v3369 = vpop.f32.mrb[0].mxu0
      %3370 = vmatprep.mubr.f32.mxu0 0.0
      %3371 = vmatmul.mubr.f32.gmra.mrb[0].mxu0 %v3156
      %v3372 = vpop.f32.mrb[0].mxu0
      %v3373 = vadd.f32 0.0, %v3372
      %v3374 = vpop.f32.mrb[0].mxu0
      %3375 = vmatprep.mubr.f32.mxu0 0.0
      %3376 = vmatmul.mubr.f32.gmra.mrb[0].mxu0 %v3159
      %v3377 = vpop.f32.mrb[0].mxu0
      %v3378 = vadd.f32 0.0, %v3377
      %v3379 = vpop.f32.mrb[0].mxu0
      %3380 = vmatprep.mubr.f32.mxu0 0.0
      %3381 = vmatmul.mubr.f32.gmra.mrb[0].mxu0 %v3162
      %v3382 = vpop.f32.mrb[0].mxu0
      %v3383 = vadd.f32 0.0, %v3382
      %v3384 = vpop.f32.mrb[0].mxu0
      %3385 = vmatprep.mubr.f32.mxu0 0.0
      %3386 = vmatmul.mubr.f32.gmra.mrb[0].mxu0 %v3165
      %v3387 = vpop.f32.mrb[0].mxu0
      %v3388 = vadd.f32 0.0, %v3387
      %v3389 = vpop.f32.mrb[0].mxu0
      %3390 = vmatprep.mubr.f32.mxu0 0.0
      %3391 = vmatmul.mubr.f32.gmra.mrb[0].mxu0 %v3168
      %v3392 = vpop.f32.mrb[0].mxu0
      %v3393 = vadd.f32 0.0, %v3392
      %v3394 = vpop.f32.mrb[0].mxu0
      %3395 = vmatprep.mubr.f32.mxu0 0.0
      %3396 = vmatmul.mubr.f32.gmra.mrb[0].mxu0 %v3171
      %v3397 = vpop.f32.mrb[0].mxu0
      %v3398 = vadd.f32 0.0, %v3397
      %v3399 = vpop.f32.mrb[0].mxu0
      %3400 = vdwg.mxu0
      %v3401 = vadd.f32 %v3013, %v3243
      %v3402 = vadd.f32 %v3014, %v3248
      %v3403 = vadd.f32 %v3015, %v3253
      %v3404 = vadd.f32 %v3016, %v3258
      %v3405 = vadd.f32 %v3017, %v3263
      %v3406 = vadd.f32 %v3018, %v3268
      %v3407 = vadd.f32 %v3019, %v3273
      %v3408 = vadd.f32 %v3020, %v3278
      %v3409 = vadd.f32 %v3021, %v3283
      %v3410 = vadd.f32 %v3022, %v3288
      %v3411 = vadd.f32 %v3023, %v3293
      %v3412 = vadd.f32 %v3024, %v3298
      %v3413 = vadd.f32 %v3025, %v3303
      %v3414 = vadd.f32 %v3026, %v3308
      %v3415 = vadd.f32 %v3027, %v3313
      %v3416 = vadd.f32 %v3028, %v3318
      %v3417 = vadd.f32 %v3029, %v3323
      %v3418 = vadd.f32 %v3030, %v3328
      %v3419 = vadd.f32 %v3031, %v3333
      %v3420 = vadd.f32 %v3032, %v3338
      %v3421 = vadd.f32 %v3033, %v3343
      %v3422 = vadd.f32 %v3034, %v3348
      %v3423 = vadd.f32 %v3035, %v3353
      %v3424 = vadd.f32 %v3036, %v3358
      %v3425 = vadd.f32 %v3037, %v3363
      %v3426 = vadd.f32 %v3038, %v3368
      %v3427 = vadd.f32 %v3039, %v3373
      %v3428 = vadd.f32 %v3040, %v3378
      %v3429 = vadd.f32 %v3041, %v3383
      %v3430 = vadd.f32 %v3042, %v3388
      %v3431 = vadd.f32 %v3043, %v3393
      %v3432 = vadd.f32 %v3044, %v3398
      %v3433 = vld [vmem:[%s2656 + $0x2] sm:$0xff]
      %v3434 = vld [vmem:[%s2656 + $0xa] sm:$0xff]
      %v3435 = vld [vmem:[%s2656 + $0x1a] sm:$0xff]
      %v3436 = vld [vmem:[%s2656 + $0x22] sm:$0xff]
      %v3437 = vld [vmem:[%s2656 + $0x32] sm:$0xff]
      %v3438 = vld [vmem:[%s2656 + $0x3a] sm:$0xff]
      %v3439 = vld [vmem:[%s2656 + $0x4a] sm:$0xff]
      %v3440 = vld [vmem:[%s2656 + $0x52] sm:$0xff]
      %v3441 = vld [vmem:[%s2656 + $0x62] sm:$0xff]
      %v3442 = vld [vmem:[%s2656 + $0x6a] sm:$0xff]
      %v3443 = vld [vmem:[%s2656 + $0x7a] sm:$0xff]
      %v3444 = vld [vmem:[%s2656 + $0x82] sm:$0xff]
      %v3445 = vld [vmem:[%s2656 + $0x92] sm:$0xff]
      %v3446 = vld [vmem:[%s2656 + $0x9a] sm:$0xff]
      %v3447 = vld [vmem:[%s2656 + $0xaa] sm:$0xff]
      %v3448 = vld [vmem:[%s2656 + $0xb2] sm:$0xff]
      %v3449 = vld [vmem:[%s2656 + $0xc2] sm:$0xff]
      %v3450 = vld [vmem:[%s2656 + $0xca] sm:$0xff]
      %v3451 = vld [vmem:[%s2656 + $0xda] sm:$0xff]
      %v3452 = vld [vmem:[%s2656 + $0xe2] sm:$0xff]
      %v3453 = vld [vmem:[%s2656 + $0xf2] sm:$0xff]
      %v3454 = vld [vmem:[%s2656 + $0xfa] sm:$0xff]
      %v3455 = vld [vmem:[%s2656 + $0x10a] sm:$0xff]
      %v3456 = vld [vmem:[%s2656 + $0x112] sm:$0xff]
      %v3457 = vld [vmem:[%s2656 + $0x122] sm:$0xff]
      %v3458 = vld [vmem:[%s2656 + $0x12a] sm:$0xff]
      %v3459 = vld [vmem:[%s2656 + $0x13a] sm:$0xff]
      %v3460 = vld [vmem:[%s2656 + $0x142] sm:$0xff]
      %v3461 = vld [vmem:[%s2656 + $0x152] sm:$0xff]
      %v3462 = vld [vmem:[%s2656 + $0x15a] sm:$0xff]
      %v3463 = vld [vmem:[%s2656 + $0x16a] sm:$0xff]
      %v3464 = vld [vmem:[%s2656 + $0x172] sm:$0xff]
      %v3466 = vsel %vm225, %v3433, 0
      %v3469 = vsel %vm225, %v3434, 0
      %v3472 = vsel %vm225, %v3435, 0
      %v3475 = vsel %vm225, %v3436, 0
      %v3478 = vsel %vm225, %v3437, 0
      %v3481 = vsel %vm225, %v3438, 0
      %v3484 = vsel %vm225, %v3439, 0
      %v3487 = vsel %vm225, %v3440, 0
      %v3490 = vsel %vm225, %v3441, 0
      %v3493 = vsel %vm225, %v3442, 0
      %v3496 = vsel %vm225, %v3443, 0
      %v3499 = vsel %vm225, %v3444, 0
      %v3502 = vsel %vm225, %v3445, 0
      %v3505 = vsel %vm225, %v3446, 0
      %v3508 = vsel %vm225, %v3447, 0
      %v3511 = vsel %vm225, %v3448, 0
      %v3514 = vsel %vm225, %v3449, 0
      %v3517 = vsel %vm225, %v3450, 0
      %v3520 = vsel %vm225, %v3451, 0
      %v3523 = vsel %vm225, %v3452, 0
      %v3526 = vsel %vm225, %v3453, 0
      %v3529 = vsel %vm225, %v3454, 0
      %v3532 = vsel %vm225, %v3455, 0
      %v3535 = vsel %vm225, %v3456, 0
      %v3538 = vsel %vm225, %v3457, 0
      %v3541 = vsel %vm225, %v3458, 0
      %v3544 = vsel %vm225, %v3459, 0
      %v3547 = vsel %vm225, %v3460, 0
      %v3550 = vsel %vm225, %v3461, 0
      %v3553 = vsel %vm225, %v3462, 0
      %v3556 = vsel %vm225, %v3463, 0
      %v3559 = vsel %vm225, %v3464, 0
      %v3562 = vsel %vm551, %v390, 0
      %3564 = vmatprep.subr.mxu0 0.0
      %3565 = vmatpush1.msra.mxu0 %v3562
      %3566 = vmatprep.subr.mxu0 0.0
      %3567 = vmatpush1.msra.mxu0 0.0
      %3568 = vmatprep.subr.mxu0 0.0
      %3569 = vmatpush1.msra.mxu0 0.0
      %3570 = vmatprep.subr.mxu0 0.0
      %3571 = vmatpush1.msra.mxu0 0.0
      %3572 = vmatprep.subr.mxu0 0.0
      %3573 = vmatpush1.msra.mxu0 0.0
      %3574 = vmatprep.subr.mxu0 0.0
      %3575 = vmatpush1.msra.mxu0 0.0
      %3576 = vmatprep.subr.mxu0 0.0
      %3577 = vmatpush1.msra.mxu0 0.0
      %3578 = vmatprep.subr.mxu0 0.0
      %3579 = vmatpush1.msra.mxu0 0.0
      %3580 = vmatprep.subr.mxu0 0.0
      %3581 = vmatpush1.msra.mxu0 0.0
      %3582 = vmatprep.subr.mxu0 0.0
      %3583 = vmatpush1.msra.mxu0 0.0
      %3584 = vmatprep.subr.mxu0 0.0
      %3585 = vmatpush1.msra.mxu0 0.0
      %3586 = vmatprep.subr.mxu0 0.0
      %3587 = vmatpush1.msra.mxu0 0.0
      %3588 = vmatprep.subr.mxu0 0.0
      %3589 = vmatpush1.msra.mxu0 0.0
      %3590 = vmatprep.subr.mxu0 0.0
      %3591 = vmatpush1.msra.mxu0 0.0
      %3592 = vmatprep.subr.mxu0 0.0
      %3593 = vmatpush1.msra.mxu0 0.0
      %3594 = vmatprep.subr.mxu0 0.0
      %3595 = vmatpush1.msra.mxu0 0.0
      %3596 = vmatprep.subr.mxu0 0.0
      %3597 = vmatpush1.msra.mxu0 0.0
      %3598 = vmatprep.subr.mxu0 0.0
      %3599 = vmatpush1.msra.mxu0 0.0
      %3600 = vmatprep.subr.mxu0 0.0
      %3601 = vmatpush1.msra.mxu0 0.0
      %3602 = vmatprep.subr.mxu0 0.0
      %3603 = vmatpush1.msra.mxu0 0.0
      %3604 = vmatprep.subr.mxu0 0.0
      %3605 = vmatpush1.msra.mxu0 0.0
      %3606 = vmatprep.subr.mxu0 0.0
      %3607 = vmatpush1.msra.mxu0 0.0
      %3608 = vmatprep.subr.mxu0 0.0
      %3609 = vmatpush1.msra.mxu0 0.0
      %3610 = vmatprep.subr.mxu0 0.0
      %3611 = vmatpush1.msra.mxu0 0.0
      %3612 = vmatprep.subr.mxu0 0.0
      %3613 = vmatpush1.msra.mxu0 0.0
      %3614 = vmatprep.subr.mxu0 0.0
      %3615 = vmatpush1.msra.mxu0 0.0
      %3616 = vmatprep.subr.mxu0 0.0
      %3617 = vmatpush1.msra.mxu0 0.0
      %3618 = vmatprep.subr.mxu0 0.0
      %3619 = vmatpush1.msra.mxu0 0.0
      %3620 = vmatprep.subr.mxu0 0.0
      %3621 = vmatpush1.msra.mxu0 0.0
      %3622 = vmatprep.subr.mxu0 0.0
      %3623 = vmatpush1.msra.mxu0 0.0
      %3624 = vmatprep.subr.mxu0 0.0
      %3625 = vmatpush1.msra.mxu0 0.0
      %3626 = vmatprep.subr.mxu0 0.0
      %3627 = vmatpush1.msra.mxu0 0.0
      %3628 = vmatprep.mubr.f32.mxu0 0.0
      %3629 = vmatmul.mubr.f32.gmra.mrb[0].mxu0 %v3466
      %v3630 = vpop.f32.mrb[0].mxu0
      %v3631 = vadd.f32 0.0, %v3630
      %v3632 = vpop.f32.mrb[0].mxu0
      %3633 = vmatprep.mubr.f32.mxu0 0.0
      %3634 = vmatmul.mubr.f32.gmra.mrb[0].mxu0 %v3469
      %v3635 = vpop.f32.mrb[0].mxu0
      %v3636 = vadd.f32 0.0, %v3635
      %v3637 = vpop.f32.mrb[0].mxu0
      %3638 = vmatprep.mubr.f32.mxu0 0.0
      %3639 = vmatmul.mubr.f32.gmra.mrb[0].mxu0 %v3472
      %v3640 = vpop.f32.mrb[0].mxu0
      %v3641 = vadd.f32 0.0, %v3640
      %v3642 = vpop.f32.mrb[0].mxu0
      %3643 = vmatprep.mubr.f32.mxu0 0.0
      %3644 = vmatmul.mubr.f32.gmra.mrb[0].mxu0 %v3475
      %v3645 = vpop.f32.mrb[0].mxu0
      %v3646 = vadd.f32 0.0, %v3645
      %v3647 = vpop.f32.mrb[0].mxu0
      %3648 = vmatprep.mubr.f32.mxu0 0.0
      %3649 = vmatmul.mubr.f32.gmra.mrb[0].mxu0 %v3478
      %v3650 = vpop.f32.mrb[0].mxu0
      %v3651 = vadd.f32 0.0, %v3650
      %v3652 = vpop.f32.mrb[0].mxu0
      %3653 = vmatprep.mubr.f32.mxu0 0.0
      %3654 = vmatmul.mubr.f32.gmra.mrb[0].mxu0 %v3481
      %v3655 = vpop.f32.mrb[0].mxu0
      %v3656 = vadd.f32 0.0, %v3655
      %v3657 = vpop.f32.mrb[0].mxu0
      %3658 = vmatprep.mubr.f32.mxu0 0.0
      %3659 = vmatmul.mubr.f32.gmra.mrb[0].mxu0 %v3484
      %v3660 = vpop.f32.mrb[0].mxu0
      %v3661 = vadd.f32 0.0, %v3660
      %v3662 = vpop.f32.mrb[0].mxu0
      %3663 = vmatprep.mubr.f32.mxu0 0.0
      %3664 = vmatmul.mubr.f32.gmra.mrb[0].mxu0 %v3487
      %v3665 = vpop.f32.mrb[0].mxu0
      %v3666 = vadd.f32 0.0, %v3665
      %v3667 = vpop.f32.mrb[0].mxu0
      %3668 = vmatprep.mubr.f32.mxu0 0.0
      %3669 = vmatmul.mubr.f32.gmra.mrb[0].mxu0 %v3490
      %v3670 = vpop.f32.mrb[0].mxu0
      %v3671 = vadd.f32 0.0, %v3670
      %v3672 = vpop.f32.mrb[0].mxu0
      %3673 = vmatprep.mubr.f32.mxu0 0.0
      %3674 = vmatmul.mubr.f32.gmra.mrb[0].mxu0 %v3493
      %v3675 = vpop.f32.mrb[0].mxu0
      %v3676 = vadd.f32 0.0, %v3675
      %v3677 = vpop.f32.mrb[0].mxu0
      %3678 = vmatprep.mubr.f32.mxu0 0.0
      %3679 = vmatmul.mubr.f32.gmra.mrb[0].mxu0 %v3496
      %v3680 = vpop.f32.mrb[0].mxu0
      %v3681 = vadd.f32 0.0, %v3680
      %v3682 = vpop.f32.mrb[0].mxu0
      %3683 = vmatprep.mubr.f32.mxu0 0.0
      %3684 = vmatmul.mubr.f32.gmra.mrb[0].mxu0 %v3499
      %v3685 = vpop.f32.mrb[0].mxu0
      %v3686 = vadd.f32 0.0, %v3685
      %v3687 = vpop.f32.mrb[0].mxu0
      %3688 = vmatprep.mubr.f32.mxu0 0.0
      %3689 = vmatmul.mubr.f32.gmra.mrb[0].mxu0 %v3502
      %v3690 = vpop.f32.mrb[0].mxu0
      %v3691 = vadd.f32 0.0, %v3690
      %v3692 = vpop.f32.mrb[0].mxu0
      %3693 = vmatprep.mubr.f32.mxu0 0.0
      %3694 = vmatmul.mubr.f32.gmra.mrb[0].mxu0 %v3505
      %v3695 = vpop.f32.mrb[0].mxu0
      %v3696 = vadd.f32 0.0, %v3695
      %v3697 = vpop.f32.mrb[0].mxu0
      %3698 = vmatprep.mubr.f32.mxu0 0.0
      %3699 = vmatmul.mubr.f32.gmra.mrb[0].mxu0 %v3508
      %v3700 = vpop.f32.mrb[0].mxu0
      %v3701 = vadd.f32 0.0, %v3700
      %v3702 = vpop.f32.mrb[0].mxu0
      %3703 = vmatprep.mubr.f32.mxu0 0.0
      %3704 = vmatmul.mubr.f32.gmra.mrb[0].mxu0 %v3511
      %v3705 = vpop.f32.mrb[0].mxu0
      %v3706 = vadd.f32 0.0, %v3705
      %v3707 = vpop.f32.mrb[0].mxu0
      %3708 = vmatprep.mubr.f32.mxu0 0.0
      %3709 = vmatmul.mubr.f32.gmra.mrb[0].mxu0 %v3514
      %v3710 = vpop.f32.mrb[0].mxu0
      %v3711 = vadd.f32 0.0, %v3710
      %v3712 = vpop.f32.mrb[0].mxu0
      %3713 = vmatprep.mubr.f32.mxu0 0.0
      %3714 = vmatmul.mubr.f32.gmra.mrb[0].mxu0 %v3517
      %v3715 = vpop.f32.mrb[0].mxu0
      %v3716 = vadd.f32 0.0, %v3715
      %v3717 = vpop.f32.mrb[0].mxu0
      %3718 = vmatprep.mubr.f32.mxu0 0.0
      %3719 = vmatmul.mubr.f32.gmra.mrb[0].mxu0 %v3520
      %v3720 = vpop.f32.mrb[0].mxu0
      %v3721 = vadd.f32 0.0, %v3720
      %v3722 = vpop.f32.mrb[0].mxu0
      %3723 = vmatprep.mubr.f32.mxu0 0.0
      %3724 = vmatmul.mubr.f32.gmra.mrb[0].mxu0 %v3523
      %v3725 = vpop.f32.mrb[0].mxu0
      %v3726 = vadd.f32 0.0, %v3725
      %v3727 = vpop.f32.mrb[0].mxu0
      %3728 = vmatprep.mubr.f32.mxu0 0.0
      %3729 = vmatmul.mubr.f32.gmra.mrb[0].mxu0 %v3526
      %v3730 = vpop.f32.mrb[0].mxu0
      %v3731 = vadd.f32 0.0, %v3730
      %v3732 = vpop.f32.mrb[0].mxu0
      %3733 = vmatprep.mubr.f32.mxu0 0.0
      %3734 = vmatmul.mubr.f32.gmra.mrb[0].mxu0 %v3529
      %v3735 = vpop.f32.mrb[0].mxu0
      %v3736 = vadd.f32 0.0, %v3735
      %v3737 = vpop.f32.mrb[0].mxu0
      %3738 = vmatprep.mubr.f32.mxu0 0.0
      %3739 = vmatmul.mubr.f32.gmra.mrb[0].mxu0 %v3532
      %v3740 = vpop.f32.mrb[0].mxu0
      %v3741 = vadd.f32 0.0, %v3740
      %v3742 = vpop.f32.mrb[0].mxu0
      %3743 = vmatprep.mubr.f32.mxu0 0.0
      %3744 = vmatmul.mubr.f32.gmra.mrb[0].mxu0 %v3535
      %v3745 = vpop.f32.mrb[0].mxu0
      %v3746 = vadd.f32 0.0, %v3745
      %v3747 = vpop.f32.mrb[0].mxu0
      %3748 = vmatprep.mubr.f32.mxu0 0.0
      %3749 = vmatmul.mubr.f32.gmra.mrb[0].mxu0 %v3538
      %v3750 = vpop.f32.mrb[0].mxu0
      %v3751 = vadd.f32 0.0, %v3750
      %v3752 = vpop.f32.mrb[0].mxu0
      %3753 = vmatprep.mubr.f32.mxu0 0.0
      %3754 = vmatmul.mubr.f32.gmra.mrb[0].mxu0 %v3541
      %v3755 = vpop.f32.mrb[0].mxu0
      %v3756 = vadd.f32 0.0, %v3755
      %v3757 = vpop.f32.mrb[0].mxu0
      %3758 = vmatprep.mubr.f32.mxu0 0.0
      %3759 = vmatmul.mubr.f32.gmra.mrb[0].mxu0 %v3544
      %v3760 = vpop.f32.mrb[0].mxu0
      %v3761 = vadd.f32 0.0, %v3760
      %v3762 = vpop.f32.mrb[0].mxu0
      %3763 = vmatprep.mubr.f32.mxu0 0.0
      %3764 = vmatmul.mubr.f32.gmra.mrb[0].mxu0 %v3547
      %v3765 = vpop.f32.mrb[0].mxu0
      %v3766 = vadd.f32 0.0, %v3765
      %v3767 = vpop.f32.mrb[0].mxu0
      %3768 = vmatprep.mubr.f32.mxu0 0.0
      %3769 = vmatmul.mubr.f32.gmra.mrb[0].mxu0 %v3550
      %v3770 = vpop.f32.mrb[0].mxu0
      %v3771 = vadd.f32 0.0, %v3770
      %v3772 = vpop.f32.mrb[0].mxu0
      %3773 = vmatprep.mubr.f32.mxu0 0.0
      %3774 = vmatmul.mubr.f32.gmra.mrb[0].mxu0 %v3553
      %v3775 = vpop.f32.mrb[0].mxu0
      %v3776 = vadd.f32 0.0, %v3775
      %v3777 = vpop.f32.mrb[0].mxu0
      %3778 = vmatprep.mubr.f32.mxu0 0.0
      %3779 = vmatmul.mubr.f32.gmra.mrb[0].mxu0 %v3556
      %v3780 = vpop.f32.mrb[0].mxu0
      %v3781 = vadd.f32 0.0, %v3780
      %v3782 = vpop.f32.mrb[0].mxu0
      %3783 = vmatprep.mubr.f32.mxu0 0.0
      %3784 = vmatmul.mubr.f32.gmra.mrb[0].mxu0 %v3559
      %v3785 = vpop.f32.mrb[0].mxu0
      %v3786 = vadd.f32 0.0, %v3785
      %v3787 = vpop.f32.mrb[0].mxu0
      %3788 = vdwg.mxu0
      %v3789 = vadd.f32 %v3401, %v3631
      %v3790 = vadd.f32 %v3402, %v3636
      %v3791 = vadd.f32 %v3403, %v3641
      %v3792 = vadd.f32 %v3404, %v3646
      %v3793 = vadd.f32 %v3405, %v3651
      %v3794 = vadd.f32 %v3406, %v3656
      %v3795 = vadd.f32 %v3407, %v3661
      %v3796 = vadd.f32 %v3408, %v3666
      %v3797 = vadd.f32 %v3409, %v3671
      %v3798 = vadd.f32 %v3410, %v3676
      %v3799 = vadd.f32 %v3411, %v3681
      %v3800 = vadd.f32 %v3412, %v3686
      %v3801 = vadd.f32 %v3413, %v3691
      %v3802 = vadd.f32 %v3414, %v3696
      %v3803 = vadd.f32 %v3415, %v3701
      %v3804 = vadd.f32 %v3416, %v3706
      %v3805 = vadd.f32 %v3417, %v3711
      %v3806 = vadd.f32 %v3418, %v3716
      %v3807 = vadd.f32 %v3419, %v3721
      %v3808 = vadd.f32 %v3420, %v3726
      %v3809 = vadd.f32 %v3421, %v3731
      %v3810 = vadd.f32 %v3422, %v3736
      %v3811 = vadd.f32 %v3423, %v3741
      %v3812 = vadd.f32 %v3424, %v3746
      %v3813 = vadd.f32 %v3425, %v3751
      %v3814 = vadd.f32 %v3426, %v3756
      %v3815 = vadd.f32 %v3427, %v3761
      %v3816 = vadd.f32 %v3428, %v3766
      %v3817 = vadd.f32 %v3429, %v3771
      %v3818 = vadd.f32 %v3430, %v3776
      %v3819 = vadd.f32 %v3431, %v3781
      %v3820 = vadd.f32 %v3432, %v3786
      %v3821 = vld [vmem:[%s2] sm:$0x1]
      %v3823 = vlaneseq
      %v3824 = vshrl.u32 %v3823, 7
      %v3825 = vsub.s32 0, %v3824
      %v3826 = vrot.slane %v3821, %v3825
      %v3828 = vadd.f32 %v3789, %v3826
      %v3829 = vadd.f32 %v3790, %v3826
      %v3830 = vadd.f32 %v3791, %v3826
      %v3831 = vadd.f32 %v3792, %v3826
      %v3832 = vadd.f32 %v3793, %v3826
      %v3833 = vadd.f32 %v3794, %v3826
      %v3834 = vadd.f32 %v3795, %v3826
      %v3835 = vadd.f32 %v3796, %v3826
      %v3836 = vadd.f32 %v3797, %v3826
      %v3837 = vadd.f32 %v3798, %v3826
      %v3838 = vadd.f32 %v3799, %v3826
      %v3839 = vadd.f32 %v3800, %v3826
      %v3840 = vadd.f32 %v3801, %v3826
      %v3841 = vadd.f32 %v3802, %v3826
      %v3842 = vadd.f32 %v3803, %v3826
      %v3843 = vadd.f32 %v3804, %v3826
      %v3844 = vadd.f32 %v3805, %v3826
      %v3845 = vadd.f32 %v3806, %v3826
      %v3846 = vadd.f32 %v3807, %v3826
      %v3847 = vadd.f32 %v3808, %v3826
      %v3848 = vadd.f32 %v3809, %v3826
      %v3849 = vadd.f32 %v3810, %v3826
      %v3850 = vadd.f32 %v3811, %v3826
      %v3851 = vadd.f32 %v3812, %v3826
      %v3852 = vadd.f32 %v3813, %v3826
      %v3853 = vadd.f32 %v3814, %v3826
      %v3854 = vadd.f32 %v3815, %v3826
      %v3855 = vadd.f32 %v3816, %v3826
      %v3856 = vadd.f32 %v3817, %v3826
      %v3857 = vadd.f32 %v3818, %v3826
      %v3858 = vadd.f32 %v3819, %v3826
      %v3859 = vadd.f32 %v3820, %v3826
      %v3860 = vmax.f32 %v3828, 0.0
      %v3861 = vmax.f32 %v3829, 0.0
      %v3862 = vmax.f32 %v3830, 0.0
      %v3863 = vmax.f32 %v3831, 0.0
      %v3864 = vmax.f32 %v3832, 0.0
      %v3865 = vmax.f32 %v3833, 0.0
      %v3866 = vmax.f32 %v3834, 0.0
      %v3867 = vmax.f32 %v3835, 0.0
      %v3868 = vmax.f32 %v3836, 0.0
      %v3869 = vmax.f32 %v3837, 0.0
      %v3870 = vmax.f32 %v3838, 0.0
      %v3871 = vmax.f32 %v3839, 0.0
      %v3872 = vmax.f32 %v3840, 0.0
      %v3873 = vmax.f32 %v3841, 0.0
      %v3874 = vmax.f32 %v3842, 0.0
      %v3875 = vmax.f32 %v3843, 0.0
      %v3876 = vmax.f32 %v3844, 0.0
      %v3877 = vmax.f32 %v3845, 0.0
      %v3878 = vmax.f32 %v3846, 0.0
      %v3879 = vmax.f32 %v3847, 0.0
      %v3880 = vmax.f32 %v3848, 0.0
      %v3881 = vmax.f32 %v3849, 0.0
      %v3882 = vmax.f32 %v3850, 0.0
      %v3883 = vmax.f32 %v3851, 0.0
      %v3884 = vmax.f32 %v3852, 0.0
      %v3885 = vmax.f32 %v3853, 0.0
      %v3886 = vmax.f32 %v3854, 0.0
      %v3887 = vmax.f32 %v3855, 0.0
      %v3888 = vmax.f32 %v3856, 0.0
      %v3889 = vmax.f32 %v3857, 0.0
      %v3890 = vmax.f32 %v3858, 0.0
      %v3891 = vmax.f32 %v3859, 0.0
      %v3892 = vmin.f32 %v3860, 6.0
      %v3893 = vmin.f32 %v3861, 6.0
      %v3894 = vmin.f32 %v3862, 6.0
      %v3895 = vmin.f32 %v3863, 6.0
      %v3896 = vmin.f32 %v3864, 6.0
      %v3897 = vmin.f32 %v3865, 6.0
      %v3898 = vmin.f32 %v3866, 6.0
      %v3899 = vmin.f32 %v3867, 6.0
      %v3900 = vmin.f32 %v3868, 6.0
      %v3901 = vmin.f32 %v3869, 6.0
      %v3902 = vmin.f32 %v3870, 6.0
      %v3903 = vmin.f32 %v3871, 6.0
      %v3904 = vmin.f32 %v3872, 6.0
      %v3905 = vmin.f32 %v3873, 6.0
      %v3906 = vmin.f32 %v3874, 6.0
      %v3907 = vmin.f32 %v3875, 6.0
      %v3908 = vmin.f32 %v3876, 6.0
      %v3909 = vmin.f32 %v3877, 6.0
      %v3910 = vmin.f32 %v3878, 6.0
      %v3911 = vmin.f32 %v3879, 6.0
      %v3912 = vmin.f32 %v3880, 6.0
      %v3913 = vmin.f32 %v3881, 6.0
      %v3914 = vmin.f32 %v3882, 6.0
      %v3915 = vmin.f32 %v3883, 6.0
      %v3916 = vmin.f32 %v3884, 6.0
      %v3917 = vmin.f32 %v3885, 6.0
      %v3918 = vmin.f32 %v3886, 6.0
      %v3919 = vmin.f32 %v3887, 6.0
      %v3920 = vmin.f32 %v3888, 6.0
      %v3921 = vmin.f32 %v3889, 6.0
      %v3922 = vmin.f32 %v3890, 6.0
      %v3923 = vmin.f32 %v3891, 6.0
      %vm3924 = vcmask 64512
      %3925 = vst.msk [vmem:[#allocation3] sm:$0xff] %vm3924, 0.0
      %3926 = vst.msk [vmem:[#allocation3 + $0x8] sm:$0xff] %vm3924, 0.0
      %vm3927 = vcmask 58368
      %3928 = vst.msk [vmem:[#allocation3 + $0x10] sm:$0x3] %vm3927, 0.0
      %3929 = vst.msk [vmem:[#allocation3 + $0x18] sm:$0xff] %vm3924, 0.0
      %3930 = vst.msk [vmem:[#allocation3 + $0x20] sm:$0xff] %vm3924, 0.0
      %3931 = vst.msk [vmem:[#allocation3 + $0x28] sm:$0x3] %vm3927, 0.0
      %3932 = vst.msk [vmem:[#allocation3 + $0x30] sm:$0xff] %vm3924, 0.0
      %3933 = vst.msk [vmem:[#allocation3 + $0x38] sm:$0xff] %vm3924, 0.0
      %3934 = vst.msk [vmem:[#allocation3 + $0x40] sm:$0x3] %vm3927, 0.0
      %3935 = vst.msk [vmem:[#allocation3 + $0x48] sm:$0xff] %vm3924, 0.0
      %3936 = vst.msk [vmem:[#allocation3 + $0x50] sm:$0xff] %vm3924, 0.0
      %3937 = vst.msk [vmem:[#allocation3 + $0x58] sm:$0x3] %vm3927, 0.0
      %3938 = vst.msk [vmem:[#allocation3 + $0x60] sm:$0xff] %vm3924, 0.0
      %3939 = vst.msk [vmem:[#allocation3 + $0x68] sm:$0xff] %vm3924, 0.0
      %3940 = vst.msk [vmem:[#allocation3 + $0x70] sm:$0x3] %vm3927, 0.0
      %3941 = vst.msk [vmem:[#allocation3 + $0x78] sm:$0xff] %vm3924, 0.0
      %3942 = vst.msk [vmem:[#allocation3 + $0x80] sm:$0xff] %vm3924, 0.0
      %3943 = vst.msk [vmem:[#allocation3 + $0x88] sm:$0x3] %vm3927, 0.0
      %3944 = vst.msk [vmem:[#allocation3 + $0x90] sm:$0xff] %vm3924, 0.0
      %3945 = vst.msk [vmem:[#allocation3 + $0x98] sm:$0xff] %vm3924, 0.0
      %3946 = vst.msk [vmem:[#allocation3 + $0xa0] sm:$0x3] %vm3927, 0.0
      %3947 = vst.msk [vmem:[#allocation3 + $0xa8] sm:$0xff] %vm3924, 0.0
      %3948 = vst.msk [vmem:[#allocation3 + $0xb0] sm:$0xff] %vm3924, 0.0
      %3949 = vst.msk [vmem:[#allocation3 + $0xb8] sm:$0x3] %vm3927, 0.0
      %3950 = vst.msk [vmem:[#allocation3 + $0xc0] sm:$0xff] %vm3924, 0.0
      %3951 = vst.msk [vmem:[#allocation3 + $0xc8] sm:$0xff] %vm3924, 0.0
      %3952 = vst.msk [vmem:[#allocation3 + $0xd0] sm:$0x3] %vm3927, 0.0
      %3953 = vst.msk [vmem:[#allocation3 + $0xd8] sm:$0xff] %vm3924, 0.0
      %3954 = vst.msk [vmem:[#allocation3 + $0xe0] sm:$0xff] %vm3924, 0.0
      %3955 = vst.msk [vmem:[#allocation3 + $0xe8] sm:$0x3] %vm3927, 0.0
      %3956 = vst.msk [vmem:[#allocation3 + $0xf0] sm:$0xff] %vm3924, 0.0
      %3957 = vst.msk [vmem:[#allocation3 + $0xf8] sm:$0xff] %vm3924, 0.0
      %3958 = vst.msk [vmem:[#allocation3 + $0x100] sm:$0x3] %vm3927, 0.0
      %3959 = vst.msk [vmem:[#allocation3 + $0x108] sm:$0xff] %vm3924, 0.0
      %3960 = vst.msk [vmem:[#allocation3 + $0x110] sm:$0xff] %vm3924, 0.0
      %3961 = vst.msk [vmem:[#allocation3 + $0x118] sm:$0x3] %vm3927, 0.0
      %3962 = vst.msk [vmem:[#allocation3 + $0x120] sm:$0xff] %vm3924, 0.0
      %3963 = vst.msk [vmem:[#allocation3 + $0x128] sm:$0xff] %vm3924, 0.0
      %3964 = vst.msk [vmem:[#allocation3 + $0x130] sm:$0x3] %vm3927, 0.0
      %3965 = vst.msk [vmem:[#allocation3 + $0x138] sm:$0xff] %vm3924, 0.0
      %3966 = vst.msk [vmem:[#allocation3 + $0x140] sm:$0xff] %vm3924, 0.0
      %3967 = vst.msk [vmem:[#allocation3 + $0x148] sm:$0x3] %vm3927, 0.0
      %3968 = vst.msk [vmem:[#allocation3 + $0x150] sm:$0xff] %vm3924, 0.0
      %3969 = vst.msk [vmem:[#allocation3 + $0x158] sm:$0xff] %vm3924, 0.0
      %3970 = vst.msk [vmem:[#allocation3 + $0x160] sm:$0x3] %vm3927, 0.0
      %3971 = vst.msk [vmem:[#allocation3 + $0x168] sm:$0xff] %vm3924, 0.0
      %3972 = vst.msk [vmem:[#allocation3 + $0x170] sm:$0xff] %vm3924, 0.0
      %3973 = vst.msk [vmem:[#allocation3 + $0x178] sm:$0x3] %vm3927, 0.0
      %3974 = vst.msk [vmem:[#allocation3 + $0x180] sm:$0xff] %vm3924, 0.0
      %3975 = vst.msk [vmem:[#allocation3 + $0x188] sm:$0xff] %vm3924, 0.0
      %3976 = vst.msk [vmem:[#allocation3 + $0x190] sm:$0x3] %vm3927, 0.0
      %3977 = vst.msk [vmem:[#allocation3 + $0x198] sm:$0xff] %vm3924, 0.0
      %3978 = vst.msk [vmem:[#allocation3 + $0x1a0] sm:$0xff] %vm3924, 0.0
      %3979 = vst.msk [vmem:[#allocation3 + $0x1a8] sm:$0x3] %vm3927, 0.0
      %s3980 = scalar_lea.vmem [#allocation3], 24
      %3981 = vst.msk [vmem:[%s3980 + $0x1] sm:$0xff] %vm3924, %v3892
      %3982 = vst.msk [vmem:[%s3980 + $0x9] sm:$0xff] %vm3924, %v3893
      %3983 = vst.msk [vmem:[%s3980 + $0x19] sm:$0xff] %vm3924, %v3894
      %3984 = vst.msk [vmem:[%s3980 + $0x21] sm:$0xff] %vm3924, %v3895
      %3985 = vst.msk [vmem:[%s3980 + $0x31] sm:$0xff] %vm3924, %v3896
      %3986 = vst.msk [vmem:[%s3980 + $0x39] sm:$0xff] %vm3924, %v3897
      %3987 = vst.msk [vmem:[%s3980 + $0x49] sm:$0xff] %vm3924, %v3898
      %3988 = vst.msk [vmem:[%s3980 + $0x51] sm:$0xff] %vm3924, %v3899
      %3989 = vst.msk [vmem:[%s3980 + $0x61] sm:$0xff] %vm3924, %v3900
      %3990 = vst.msk [vmem:[%s3980 + $0x69] sm:$0xff] %vm3924, %v3901
      %3991 = vst.msk [vmem:[%s3980 + $0x79] sm:$0xff] %vm3924, %v3902
      %3992 = vst.msk [vmem:[%s3980 + $0x81] sm:$0xff] %vm3924, %v3903
      %3993 = vst.msk [vmem:[%s3980 + $0x91] sm:$0xff] %vm3924, %v3904
      %3994 = vst.msk [vmem:[%s3980 + $0x99] sm:$0xff] %vm3924, %v3905
      %3995 = vst.msk [vmem:[%s3980 + $0xa9] sm:$0xff] %vm3924, %v3906
      %3996 = vst.msk [vmem:[%s3980 + $0xb1] sm:$0xff] %vm3924, %v3907
      %3997 = vst.msk [vmem:[%s3980 + $0xc1] sm:$0xff] %vm3924, %v3908
      %3998 = vst.msk [vmem:[%s3980 + $0xc9] sm:$0xff] %vm3924, %v3909
      %3999 = vst.msk [vmem:[%s3980 + $0xd9] sm:$0xff] %vm3924, %v3910
      %4000 = vst.msk [vmem:[%s3980 + $0xe1] sm:$0xff] %vm3924, %v3911
      %4001 = vst.msk [vmem:[%s3980 + $0xf1] sm:$0xff] %vm3924, %v3912
      %4002 = vst.msk [vmem:[%s3980 + $0xf9] sm:$0xff] %vm3924, %v3913
      %4003 = vst.msk [vmem:[%s3980 + $0x109] sm:$0xff] %vm3924, %v3914
      %4004 = vst.msk [vmem:[%s3980 + $0x111] sm:$0xff] %vm3924, %v3915
      %4005 = vst.msk [vmem:[%s3980 + $0x121] sm:$0xff] %vm3924, %v3916
      %4006 = vst.msk [vmem:[%s3980 + $0x129] sm:$0xff] %vm3924, %v3917
      %4007 = vst.msk [vmem:[%s3980 + $0x139] sm:$0xff] %vm3924, %v3918
      %4008 = vst.msk [vmem:[%s3980 + $0x141] sm:$0xff] %vm3924, %v3919
      %4009 = vst.msk [vmem:[%s3980 + $0x151] sm:$0xff] %vm3924, %v3920
      %4010 = vst.msk [vmem:[%s3980 + $0x159] sm:$0xff] %vm3924, %v3921
      %4011 = vst.msk [vmem:[%s3980 + $0x169] sm:$0xff] %vm3924, %v3922
      %4012 = vst.msk [vmem:[%s3980 + $0x171] sm:$0xff] %vm3924, %v3923
      %v4013 = vld [vmem:[%s3] sm:$0xff]
      %v4014 = vld [vmem:[%s3 + $0x8] sm:$0xff]
      %v4015 = vld [vmem:[%s3 + $0x10] sm:$0xff]
      %v4016 = vld [vmem:[%s3 + $0x18] sm:$0xff]
      %v4017 = vld [vmem:[%s3 + $0x20] sm:$0xff]
      %v4018 = vld [vmem:[%s3 + $0x28] sm:$0xff]
      %v4019 = vld [vmem:[%s3 + $0x30] sm:$0xff]
      %v4020 = vld [vmem:[%s3 + $0x38] sm:$0xff]
      %v4021 = vld [vmem:[%s3 + $0x40] sm:$0xff]
      %v4022 = vld [vmem:[#allocation3] sm:$0xff]
      %v4023 = vld [vmem:[#allocation3 + $0x8] sm:$0xff]
      %v4024 = vld [vmem:[#allocation3 + $0x18] sm:$0xff]
      %v4025 = vld [vmem:[#allocation3 + $0x20] sm:$0xff]
      %v4026 = vld [vmem:[#allocation3 + $0x30] sm:$0xff]
      %v4027 = vld [vmem:[#allocation3 + $0x38] sm:$0xff]
      %v4028 = vld [vmem:[#allocation3 + $0x48] sm:$0xff]
      %v4029 = vld [vmem:[#allocation3 + $0x50] sm:$0xff]
      %v4030 = vld [vmem:[#allocation3 + $0x60] sm:$0xff]
      %v4031 = vld [vmem:[#allocation3 + $0x68] sm:$0xff]
      %v4032 = vld [vmem:[#allocation3 + $0x78] sm:$0xff]
      %v4033 = vld [vmem:[#allocation3 + $0x80] sm:$0xff]
      %v4034 = vld [vmem:[#allocation3 + $0x90] sm:$0xff]
      %v4035 = vld [vmem:[#allocation3 + $0x98] sm:$0xff]
      %v4036 = vld [vmem:[#allocation3 + $0xa8] sm:$0xff]
      %v4037 = vld [vmem:[#allocation3 + $0xb0] sm:$0xff]
      %v4038 = vld [vmem:[#allocation3 + $0xc0] sm:$0xff]
      %v4039 = vld [vmem:[#allocation3 + $0xc8] sm:$0xff]
      %v4040 = vld [vmem:[#allocation3 + $0xd8] sm:$0xff]
      %v4041 = vld [vmem:[#allocation3 + $0xe0] sm:$0xff]
      %v4042 = vld [vmem:[#allocation3 + $0xf0] sm:$0xff]
      %v4043 = vld [vmem:[#allocation3 + $0xf8] sm:$0xff]
      %v4044 = vld [vmem:[#allocation3 + $0x108] sm:$0xff]
      %v4045 = vld [vmem:[#allocation3 + $0x110] sm:$0xff]
      %v4046 = vld [vmem:[#allocation3 + $0x120] sm:$0xff]
      %v4047 = vld [vmem:[#allocation3 + $0x128] sm:$0xff]
      %v4048 = vld [vmem:[#allocation3 + $0x138] sm:$0xff]
      %v4049 = vld [vmem:[#allocation3 + $0x140] sm:$0xff]
      %v4050 = vld [vmem:[#allocation3 + $0x150] sm:$0xff]
      %v4051 = vld [vmem:[#allocation3 + $0x158] sm:$0xff]
      %v4052 = vld [vmem:[#allocation3 + $0x168] sm:$0xff]
      %v4053 = vld [vmem:[#allocation3 + $0x170] sm:$0xff]
      %v4054 = vld [vmem:[#allocation3 + $0x1] sm:$0xff]
      %v4055 = vld [vmem:[#allocation3 + $0x9] sm:$0xff]
      %v4056 = vld [vmem:[#allocation3 + $0x19] sm:$0xff]
      %v4057 = vld [vmem:[#allocation3 + $0x21] sm:$0xff]
      %v4058 = vld [vmem:[#allocation3 + $0x31] sm:$0xff]
      %v4059 = vld [vmem:[#allocation3 + $0x39] sm:$0xff]
      %v4060 = vld [vmem:[#allocation3 + $0x49] sm:$0xff]
      %v4061 = vld [vmem:[#allocation3 + $0x51] sm:$0xff]
      %v4062 = vld [vmem:[#allocation3 + $0x61] sm:$0xff]
      %v4063 = vld [vmem:[#allocation3 + $0x69] sm:$0xff]
      %v4064 = vld [vmem:[#allocation3 + $0x79] sm:$0xff]
      %v4065 = vld [vmem:[#allocation3 + $0x81] sm:$0xff]
      %v4066 = vld [vmem:[#allocation3 + $0x91] sm:$0xff]
      %v4067 = vld [vmem:[#allocation3 + $0x99] sm:$0xff]
      %v4068 = vld [vmem:[#allocation3 + $0xa9] sm:$0xff]
      %v4069 = vld [vmem:[#allocation3 + $0xb1] sm:$0xff]
      %v4070 = vld [vmem:[#allocation3 + $0xc1] sm:$0xff]
      %v4071 = vld [vmem:[#allocation3 + $0xc9] sm:$0xff]
      %v4072 = vld [vmem:[#allocation3 + $0xd9] sm:$0xff]
      %v4073 = vld [vmem:[#allocation3 + $0xe1] sm:$0xff]
      %v4074 = vld [vmem:[#allocation3 + $0xf1] sm:$0xff]
      %v4075 = vld [vmem:[#allocation3 + $0xf9] sm:$0xff]
      %v4076 = vld [vmem:[#allocation3 + $0x109] sm:$0xff]
      %v4077 = vld [vmem:[#allocation3 + $0x111] sm:$0xff]
      %v4078 = vld [vmem:[#allocation3 + $0x121] sm:$0xff]
      %v4079 = vld [vmem:[#allocation3 + $0x129] sm:$0xff]
      %v4080 = vld [vmem:[#allocation3 + $0x139] sm:$0xff]
      %v4081 = vld [vmem:[#allocation3 + $0x141] sm:$0xff]
      %v4082 = vld [vmem:[#allocation3 + $0x151] sm:$0xff]
      %v4083 = vld [vmem:[#allocation3 + $0x159] sm:$0xff]
      %v4084 = vld [vmem:[#allocation3 + $0x169] sm:$0xff]
      %v4085 = vld [vmem:[#allocation3 + $0x171] sm:$0xff]
      %v4087 = vsel %vm3924, %v4054, 0
      %v4090 = vsel %vm3924, %v4055, 0
      %v4093 = vsel %vm3924, %v4056, 0
      %v4096 = vsel %vm3924, %v4057, 0
      %v4099 = vsel %vm3924, %v4058, 0
      %v4102 = vsel %vm3924, %v4059, 0
      %v4105 = vsel %vm3924, %v4060, 0
      %v4108 = vsel %vm3924, %v4061, 0
      %v4111 = vsel %vm3924, %v4062, 0
      %v4114 = vsel %vm3924, %v4063, 0
      %v4117 = vsel %vm3924, %v4064, 0
      %v4120 = vsel %vm3924, %v4065, 0
      %v4123 = vsel %vm3924, %v4066, 0
      %v4126 = vsel %vm3924, %v4067, 0
      %v4129 = vsel %vm3924, %v4068, 0
      %v4132 = vsel %vm3924, %v4069, 0
      %v4135 = vsel %vm3924, %v4070, 0
      %v4138 = vsel %vm3924, %v4071, 0
      %v4141 = vsel %vm3924, %v4072, 0
      %v4144 = vsel %vm3924, %v4073, 0
      %v4147 = vsel %vm3924, %v4074, 0
      %v4150 = vsel %vm3924, %v4075, 0
      %v4153 = vsel %vm3924, %v4076, 0
      %v4156 = vsel %vm3924, %v4077, 0
      %v4159 = vsel %vm3924, %v4078, 0
      %v4162 = vsel %vm3924, %v4079, 0
      %v4165 = vsel %vm3924, %v4080, 0
      %v4168 = vsel %vm3924, %v4081, 0
      %v4171 = vsel %vm3924, %v4082, 0
      %v4174 = vsel %vm3924, %v4083, 0
      %v4177 = vsel %vm3924, %v4084, 0
      %v4180 = vsel %vm3924, %v4085, 0
      %4182 = vmatprep.subr.mxu0 0.0
      %4183 = vmatpush1.msra.mxu0 %v4014
      %4184 = vmatprep.subr.mxu0 0.0
      %4185 = vmatpush1.msra.mxu0 0.0
      %4186 = vmatprep.subr.mxu0 0.0
      %4187 = vmatpush1.msra.mxu0 0.0
      %4188 = vmatprep.subr.mxu0 0.0
      %4189 = vmatpush1.msra.mxu0 0.0
      %4190 = vmatprep.subr.mxu0 0.0
      %4191 = vmatpush1.msra.mxu0 0.0
      %4192 = vmatprep.subr.mxu0 0.0
      %4193 = vmatpush1.msra.mxu0 0.0
      %4194 = vmatprep.subr.mxu0 0.0
      %4195 = vmatpush1.msra.mxu0 0.0
      %4196 = vmatprep.subr.mxu0 0.0
      %4197 = vmatpush1.msra.mxu0 0.0
      %4198 = vmatprep.subr.mxu0 0.0
      %4199 = vmatpush1.msra.mxu0 0.0
      %4200 = vmatprep.subr.mxu0 0.0
      %4201 = vmatpush1.msra.mxu0 0.0
      %4202 = vmatprep.subr.mxu0 0.0
      %4203 = vmatpush1.msra.mxu0 0.0
      %4204 = vmatprep.subr.mxu0 0.0
      %4205 = vmatpush1.msra.mxu0 0.0
      %4206 = vmatprep.subr.mxu0 0.0
      %4207 = vmatpush1.msra.mxu0 0.0
      %4208 = vmatprep.subr.mxu0 0.0
      %4209 = vmatpush1.msra.mxu0 0.0
      %4210 = vmatprep.subr.mxu0 0.0
      %4211 = vmatpush1.msra.mxu0 0.0
      %4212 = vmatprep.subr.mxu0 0.0
      %4213 = vmatpush1.msra.mxu0 0.0
      %4214 = vmatprep.subr.mxu0 0.0
      %4215 = vmatpush1.msra.mxu0 0.0
      %4216 = vmatprep.subr.mxu0 0.0
      %4217 = vmatpush1.msra.mxu0 0.0
      %4218 = vmatprep.subr.mxu0 0.0
      %4219 = vmatpush1.msra.mxu0 0.0
      %4220 = vmatprep.subr.mxu0 0.0
      %4221 = vmatpush1.msra.mxu0 0.0
      %4222 = vmatprep.subr.mxu0 0.0
      %4223 = vmatpush1.msra.mxu0 0.0
      %4224 = vmatprep.subr.mxu0 0.0
      %4225 = vmatpush1.msra.mxu0 0.0
      %4226 = vmatprep.subr.mxu0 0.0
      %4227 = vmatpush1.msra.mxu0 0.0
      %4228 = vmatprep.subr.mxu0 0.0
      %4229 = vmatpush1.msra.mxu0 0.0
      %4230 = vmatprep.subr.mxu0 0.0
      %4231 = vmatpush1.msra.mxu0 0.0
      %4232 = vmatprep.subr.mxu0 0.0
      %4233 = vmatpush1.msra.mxu0 0.0
      %4234 = vmatprep.subr.mxu0 0.0
      %4235 = vmatpush1.msra.mxu0 0.0
      %4236 = vmatprep.subr.mxu0 0.0
      %4237 = vmatpush1.msra.mxu0 0.0
      %4238 = vmatprep.subr.mxu0 0.0
      %4239 = vmatpush1.msra.mxu0 0.0
      %4240 = vmatprep.subr.mxu0 0.0
      %4241 = vmatpush1.msra.mxu0 0.0
      %4242 = vmatprep.subr.mxu0 0.0
      %4243 = vmatpush1.msra.mxu0 0.0
      %4244 = vmatprep.subr.mxu0 0.0
      %4245 = vmatpush1.msra.mxu0 0.0
      %4246 = vmatprep.mubr.f32.mxu0 0.0
      %4247 = vmatmul.mubr.f32.gmra.mrb[0].mxu0 %v4087
      %v4248 = vpop.f32.mrb[0].mxu0
      %v4249 = vadd.f32 0.0, %v4248
      %v4250 = vpop.f32.mrb[0].mxu0
      %4251 = vmatprep.mubr.f32.mxu0 0.0
      %4252 = vmatmul.mubr.f32.gmra.mrb[0].mxu0 %v4090
      %v4253 = vpop.f32.mrb[0].mxu0
      %v4254 = vadd.f32 0.0, %v4253
      %v4255 = vpop.f32.mrb[0].mxu0
      %4256 = vmatprep.mubr.f32.mxu0 0.0
      %4257 = vmatmul.mubr.f32.gmra.mrb[0].mxu0 %v4093
      %v4258 = vpop.f32.mrb[0].mxu0
      %v4259 = vadd.f32 0.0, %v4258
      %v4260 = vpop.f32.mrb[0].mxu0
      %4261 = vmatprep.mubr.f32.mxu0 0.0
      %4262 = vmatmul.mubr.f32.gmra.mrb[0].mxu0 %v4096
      %v4263 = vpop.f32.mrb[0].mxu0
      %v4264 = vadd.f32 0.0, %v4263
      %v4265 = vpop.f32.mrb[0].mxu0
      %4266 = vmatprep.mubr.f32.mxu0 0.0
      %4267 = vmatmul.mubr.f32.gmra.mrb[0].mxu0 %v4099
      %v4268 = vpop.f32.mrb[0].mxu0
      %v4269 = vadd.f32 0.0, %v4268
      %v4270 = vpop.f32.mrb[0].mxu0
      %4271 = vmatprep.mubr.f32.mxu0 0.0
      %4272 = vmatmul.mubr.f32.gmra.mrb[0].mxu0 %v4102
      %v4273 = vpop.f32.mrb[0].mxu0
      %v4274 = vadd.f32 0.0, %v4273
      %v4275 = vpop.f32.mrb[0].mxu0
      %4276 = vmatprep.mubr.f32.mxu0 0.0
      %4277 = vmatmul.mubr.f32.gmra.mrb[0].mxu0 %v4105
      %v4278 = vpop.f32.mrb[0].mxu0
      %v4279 = vadd.f32 0.0, %v4278
      %v4280 = vpop.f32.mrb[0].mxu0
      %4281 = vmatprep.mubr.f32.mxu0 0.0
      %4282 = vmatmul.mubr.f32.gmra.mrb[0].mxu0 %v4108
      %v4283 = vpop.f32.mrb[0].mxu0
      %v4284 = vadd.f32 0.0, %v4283
      %v4285 = vpop.f32.mrb[0].mxu0
      %4286 = vmatprep.mubr.f32.mxu0 0.0
      %4287 = vmatmul.mubr.f32.gmra.mrb[0].mxu0 %v4111
      %v4288 = vpop.f32.mrb[0].mxu0
      %v4289 = vadd.f32 0.0, %v4288
      %v4290 = vpop.f32.mrb[0].mxu0
      %4291 = vmatprep.mubr.f32.mxu0 0.0
      %4292 = vmatmul.mubr.f32.gmra.mrb[0].mxu0 %v4114
      %v4293 = vpop.f32.mrb[0].mxu0
      %v4294 = vadd.f32 0.0, %v4293
      %v4295 = vpop.f32.mrb[0].mxu0
      %4296 = vmatprep.mubr.f32.mxu0 0.0
      %4297 = vmatmul.mubr.f32.gmra.mrb[0].mxu0 %v4117
      %v4298 = vpop.f32.mrb[0].mxu0
      %v4299 = vadd.f32 0.0, %v4298
      %v4300 = vpop.f32.mrb[0].mxu0
      %4301 = vmatprep.mubr.f32.mxu0 0.0
      %4302 = vmatmul.mubr.f32.gmra.mrb[0].mxu0 %v4120
      %v4303 = vpop.f32.mrb[0].mxu0
      %v4304 = vadd.f32 0.0, %v4303
      %v4305 = vpop.f32.mrb[0].mxu0
      %4306 = vmatprep.mubr.f32.mxu0 0.0
      %4307 = vmatmul.mubr.f32.gmra.mrb[0].mxu0 %v4123
      %v4308 = vpop.f32.mrb[0].mxu0
      %v4309 = vadd.f32 0.0, %v4308
      %v4310 = vpop.f32.mrb[0].mxu0
      %4311 = vmatprep.mubr.f32.mxu0 0.0
      %4312 = vmatmul.mubr.f32.gmra.mrb[0].mxu0 %v4126
      %v4313 = vpop.f32.mrb[0].mxu0
      %v4314 = vadd.f32 0.0, %v4313
      %v4315 = vpop.f32.mrb[0].mxu0
      %4316 = vmatprep.mubr.f32.mxu0 0.0
      %4317 = vmatmul.mubr.f32.gmra.mrb[0].mxu0 %v4129
      %v4318 = vpop.f32.mrb[0].mxu0
      %v4319 = vadd.f32 0.0, %v4318
      %v4320 = vpop.f32.mrb[0].mxu0
      %4321 = vmatprep.mubr.f32.mxu0 0.0
      %4322 = vmatmul.mubr.f32.gmra.mrb[0].mxu0 %v4132
      %v4323 = vpop.f32.mrb[0].mxu0
      %v4324 = vadd.f32 0.0, %v4323
      %v4325 = vpop.f32.mrb[0].mxu0
      %4326 = vmatprep.mubr.f32.mxu0 0.0
      %4327 = vmatmul.mubr.f32.gmra.mrb[0].mxu0 %v4135
      %v4328 = vpop.f32.mrb[0].mxu0
      %v4329 = vadd.f32 0.0, %v4328
      %v4330 = vpop.f32.mrb[0].mxu0
      %4331 = vmatprep.mubr.f32.mxu0 0.0
      %4332 = vmatmul.mubr.f32.gmra.mrb[0].mxu0 %v4138
      %v4333 = vpop.f32.mrb[0].mxu0
      %v4334 = vadd.f32 0.0, %v4333
      %v4335 = vpop.f32.mrb[0].mxu0
      %4336 = vmatprep.mubr.f32.mxu0 0.0
      %4337 = vmatmul.mubr.f32.gmra.mrb[0].mxu0 %v4141
      %v4338 = vpop.f32.mrb[0].mxu0
      %v4339 = vadd.f32 0.0, %v4338
      %v4340 = vpop.f32.mrb[0].mxu0
      %4341 = vmatprep.mubr.f32.mxu0 0.0
      %4342 = vmatmul.mubr.f32.gmra.mrb[0].mxu0 %v4144
      %v4343 = vpop.f32.mrb[0].mxu0
      %v4344 = vadd.f32 0.0, %v4343
      %v4345 = vpop.f32.mrb[0].mxu0
      %4346 = vmatprep.mubr.f32.mxu0 0.0
      %4347 = vmatmul.mubr.f32.gmra.mrb[0].mxu0 %v4147
      %v4348 = vpop.f32.mrb[0].mxu0
      %v4349 = vadd.f32 0.0, %v4348
      %v4350 = vpop.f32.mrb[0].mxu0
      %4351 = vmatprep.mubr.f32.mxu0 0.0
      %4352 = vmatmul.mubr.f32.gmra.mrb[0].mxu0 %v4150
      %v4353 = vpop.f32.mrb[0].mxu0
      %v4354 = vadd.f32 0.0, %v4353
      %v4355 = vpop.f32.mrb[0].mxu0
      %4356 = vmatprep.mubr.f32.mxu0 0.0
      %4357 = vmatmul.mubr.f32.gmra.mrb[0].mxu0 %v4153
      %v4358 = vpop.f32.mrb[0].mxu0
      %v4359 = vadd.f32 0.0, %v4358
      %v4360 = vpop.f32.mrb[0].mxu0
      %4361 = vmatprep.mubr.f32.mxu0 0.0
      %4362 = vmatmul.mubr.f32.gmra.mrb[0].mxu0 %v4156
      %v4363 = vpop.f32.mrb[0].mxu0
      %v4364 = vadd.f32 0.0, %v4363
      %v4365 = vpop.f32.mrb[0].mxu0
      %4366 = vmatprep.mubr.f32.mxu0 0.0
      %4367 = vmatmul.mubr.f32.gmra.mrb[0].mxu0 %v4159
      %v4368 = vpop.f32.mrb[0].mxu0
      %v4369 = vadd.f32 0.0, %v4368
      %v4370 = vpop.f32.mrb[0].mxu0
      %4371 = vmatprep.mubr.f32.mxu0 0.0
      %4372 = vmatmul.mubr.f32.gmra.mrb[0].mxu0 %v4162
      %v4373 = vpop.f32.mrb[0].mxu0
      %v4374 = vadd.f32 0.0, %v4373
      %v4375 = vpop.f32.mrb[0].mxu0
      %4376 = vmatprep.mubr.f32.mxu0 0.0
      %4377 = vmatmul.mubr.f32.gmra.mrb[0].mxu0 %v4165
      %v4378 = vpop.f32.mrb[0].mxu0
      %v4379 = vadd.f32 0.0, %v4378
      %v4380 = vpop.f32.mrb[0].mxu0
      %4381 = vmatprep.mubr.f32.mxu0 0.0
      %4382 = vmatmul.mubr.f32.gmra.mrb[0].mxu0 %v4168
      %v4383 = vpop.f32.mrb[0].mxu0
      %v4384 = vadd.f32 0.0, %v4383
      %v4385 = vpop.f32.mrb[0].mxu0
      %4386 = vmatprep.mubr.f32.mxu0 0.0
      %4387 = vmatmul.mubr.f32.gmra.mrb[0].mxu0 %v4171
      %v4388 = vpop.f32.mrb[0].mxu0
      %v4389 = vadd.f32 0.0, %v4388
      %v4390 = vpop.f32.mrb[0].mxu0
      %4391 = vmatprep.mubr.f32.mxu0 0.0
      %4392 = vmatmul.mubr.f32.gmra.mrb[0].mxu0 %v4174
      %v4393 = vpop.f32.mrb[0].mxu0
      %v4394 = vadd.f32 0.0, %v4393
      %v4395 = vpop.f32.mrb[0].mxu0
      %4396 = vmatprep.mubr.f32.mxu0 0.0
      %4397 = vmatmul.mubr.f32.gmra.mrb[0].mxu0 %v4177
      %v4398 = vpop.f32.mrb[0].mxu0
      %v4399 = vadd.f32 0.0, %v4398
      %v4400 = vpop.f32.mrb[0].mxu0
      %4401 = vmatprep.mubr.f32.mxu0 0.0
      %4402 = vmatmul.mubr.f32.gmra.mrb[0].mxu0 %v4180
      %v4403 = vpop.f32.mrb[0].mxu0
      %v4404 = vadd.f32 0.0, %v4403
      %v4405 = vpop.f32.mrb[0].mxu0
      %4406 = vdwg.mxu0
      %v4408 = vsel %vm3924, %v4022, 0
      %v4411 = vsel %vm3924, %v4023, 0
      %v4414 = vsel %vm3924, %v4024, 0
      %v4417 = vsel %vm3924, %v4025, 0
      %v4420 = vsel %vm3924, %v4026, 0
      %v4423 = vsel %vm3924, %v4027, 0
      %v4426 = vsel %vm3924, %v4028, 0
      %v4429 = vsel %vm3924, %v4029, 0
      %v4432 = vsel %vm3924, %v4030, 0
      %v4435 = vsel %vm3924, %v4031, 0
      %v4438 = vsel %vm3924, %v4032, 0
      %v4441 = vsel %vm3924, %v4033, 0
      %v4444 = vsel %vm3924, %v4034, 0
      %v4447 = vsel %vm3924, %v4035, 0
      %v4450 = vsel %vm3924, %v4036, 0
      %v4453 = vsel %vm3924, %v4037, 0
      %v4456 = vsel %vm3924, %v4038, 0
      %v4459 = vsel %vm3924, %v4039, 0
      %v4462 = vsel %vm3924, %v4040, 0
      %v4465 = vsel %vm3924, %v4041, 0
      %v4468 = vsel %vm3924, %v4042, 0
      %v4471 = vsel %vm3924, %v4043, 0
      %v4474 = vsel %vm3924, %v4044, 0
      %v4477 = vsel %vm3924, %v4045, 0
      %v4480 = vsel %vm3924, %v4046, 0
      %v4483 = vsel %vm3924, %v4047, 0
      %v4486 = vsel %vm3924, %v4048, 0
      %v4489 = vsel %vm3924, %v4049, 0
      %v4492 = vsel %vm3924, %v4050, 0
      %v4495 = vsel %vm3924, %v4051, 0
      %v4498 = vsel %vm3924, %v4052, 0
      %v4501 = vsel %vm3924, %v4053, 0
      %4503 = vmatprep.subr.mxu0 0.0
      %4504 = vmatpush1.msra.mxu0 %v4013
      %4505 = vmatprep.subr.mxu0 0.0
      %4506 = vmatpush1.msra.mxu0 0.0
      %4507 = vmatprep.subr.mxu0 0.0
      %4508 = vmatpush1.msra.mxu0 0.0
      %4509 = vmatprep.subr.mxu0 0.0
      %4510 = vmatpush1.msra.mxu0 0.0
      %4511 = vmatprep.subr.mxu0 0.0
      %4512 = vmatpush1.msra.mxu0 0.0
      %4513 = vmatprep.subr.mxu0 0.0
      %4514 = vmatpush1.msra.mxu0 0.0
      %4515 = vmatprep.subr.mxu0 0.0
      %4516 = vmatpush1.msra.mxu0 0.0
      %4517 = vmatprep.subr.mxu0 0.0
      %4518 = vmatpush1.msra.mxu0 0.0
      %4519 = vmatprep.subr.mxu0 0.0
      %4520 = vmatpush1.msra.mxu0 0.0
      %4521 = vmatprep.subr.mxu0 0.0
      %4522 = vmatpush1.msra.mxu0 0.0
      %4523 = vmatprep.subr.mxu0 0.0
      %4524 = vmatpush1.msra.mxu0 0.0
      %4525 = vmatprep.subr.mxu0 0.0
      %4526 = vmatpush1.msra.mxu0 0.0
      %4527 = vmatprep.subr.mxu0 0.0
      %4528 = vmatpush1.msra.mxu0 0.0
      %4529 = vmatprep.subr.mxu0 0.0
      %4530 = vmatpush1.msra.mxu0 0.0
      %4531 = vmatprep.subr.mxu0 0.0
      %4532 = vmatpush1.msra.mxu0 0.0
      %4533 = vmatprep.subr.mxu0 0.0
      %4534 = vmatpush1.msra.mxu0 0.0
      %4535 = vmatprep.subr.mxu0 0.0
      %4536 = vmatpush1.msra.mxu0 0.0
      %4537 = vmatprep.subr.mxu0 0.0
      %4538 = vmatpush1.msra.mxu0 0.0
      %4539 = vmatprep.subr.mxu0 0.0
      %4540 = vmatpush1.msra.mxu0 0.0
      %4541 = vmatprep.subr.mxu0 0.0
      %4542 = vmatpush1.msra.mxu0 0.0
      %4543 = vmatprep.subr.mxu0 0.0
      %4544 = vmatpush1.msra.mxu0 0.0
      %4545 = vmatprep.subr.mxu0 0.0
      %4546 = vmatpush1.msra.mxu0 0.0
      %4547 = vmatprep.subr.mxu0 0.0
      %4548 = vmatpush1.msra.mxu0 0.0
      %4549 = vmatprep.subr.mxu0 0.0
      %4550 = vmatpush1.msra.mxu0 0.0
      %4551 = vmatprep.subr.mxu0 0.0
      %4552 = vmatpush1.msra.mxu0 0.0
      %4553 = vmatprep.subr.mxu0 0.0
      %4554 = vmatpush1.msra.mxu0 0.0
      %4555 = vmatprep.subr.mxu0 0.0
      %4556 = vmatpush1.msra.mxu0 0.0
      %4557 = vmatprep.subr.mxu0 0.0
      %4558 = vmatpush1.msra.mxu0 0.0
      %4559 = vmatprep.subr.mxu0 0.0
      %4560 = vmatpush1.msra.mxu0 0.0
      %4561 = vmatprep.subr.mxu0 0.0
      %4562 = vmatpush1.msra.mxu0 0.0
      %4563 = vmatprep.subr.mxu0 0.0
      %4564 = vmatpush1.msra.mxu0 0.0
      %4565 = vmatprep.subr.mxu0 0.0
      %4566 = vmatpush1.msra.mxu0 0.0
      %4567 = vmatprep.mubr.f32.mxu0 0.0
      %4568 = vmatmul.mubr.f32.gmra.mrb[0].mxu0 %v4408
      %v4569 = vpop.f32.mrb[0].mxu0
      %v4570 = vadd.f32 %v4249, %v4569
      %v4571 = vpop.f32.mrb[0].mxu0
      %4572 = vmatprep.mubr.f32.mxu0 0.0
      %4573 = vmatmul.mubr.f32.gmra.mrb[0].mxu0 %v4411
      %v4574 = vpop.f32.mrb[0].mxu0
      %v4575 = vadd.f32 %v4254, %v4574
      %v4576 = vpop.f32.mrb[0].mxu0
      %4577 = vmatprep.mubr.f32.mxu0 0.0
      %4578 = vmatmul.mubr.f32.gmra.mrb[0].mxu0 %v4414
      %v4579 = vpop.f32.mrb[0].mxu0
      %v4580 = vadd.f32 %v4259, %v4579
      %v4581 = vpop.f32.mrb[0].mxu0
      %4582 = vmatprep.mubr.f32.mxu0 0.0
      %4583 = vmatmul.mubr.f32.gmra.mrb[0].mxu0 %v4417
      %v4584 = vpop.f32.mrb[0].mxu0
      %v4585 = vadd.f32 %v4264, %v4584
      %v4586 = vpop.f32.mrb[0].mxu0
      %4587 = vmatprep.mubr.f32.mxu0 0.0
      %4588 = vmatmul.mubr.f32.gmra.mrb[0].mxu0 %v4420
      %v4589 = vpop.f32.mrb[0].mxu0
      %v4590 = vadd.f32 %v4269, %v4589
      %v4591 = vpop.f32.mrb[0].mxu0
      %4592 = vmatprep.mubr.f32.mxu0 0.0
      %4593 = vmatmul.mubr.f32.gmra.mrb[0].mxu0 %v4423
      %v4594 = vpop.f32.mrb[0].mxu0
      %v4595 = vadd.f32 %v4274, %v4594
      %v4596 = vpop.f32.mrb[0].mxu0
      %4597 = vmatprep.mubr.f32.mxu0 0.0
      %4598 = vmatmul.mubr.f32.gmra.mrb[0].mxu0 %v4426
      %v4599 = vpop.f32.mrb[0].mxu0
      %v4600 = vadd.f32 %v4279, %v4599
      %v4601 = vpop.f32.mrb[0].mxu0
      %4602 = vmatprep.mubr.f32.mxu0 0.0
      %4603 = vmatmul.mubr.f32.gmra.mrb[0].mxu0 %v4429
      %v4604 = vpop.f32.mrb[0].mxu0
      %v4605 = vadd.f32 %v4284, %v4604
      %v4606 = vpop.f32.mrb[0].mxu0
      %4607 = vmatprep.mubr.f32.mxu0 0.0
      %4608 = vmatmul.mubr.f32.gmra.mrb[0].mxu0 %v4432
      %v4609 = vpop.f32.mrb[0].mxu0
      %v4610 = vadd.f32 %v4289, %v4609
      %v4611 = vpop.f32.mrb[0].mxu0
      %4612 = vmatprep.mubr.f32.mxu0 0.0
      %4613 = vmatmul.mubr.f32.gmra.mrb[0].mxu0 %v4435
      %v4614 = vpop.f32.mrb[0].mxu0
      %v4615 = vadd.f32 %v4294, %v4614
      %v4616 = vpop.f32.mrb[0].mxu0
      %4617 = vmatprep.mubr.f32.mxu0 0.0
      %4618 = vmatmul.mubr.f32.gmra.mrb[0].mxu0 %v4438
      %v4619 = vpop.f32.mrb[0].mxu0
      %v4620 = vadd.f32 %v4299, %v4619
      %v4621 = vpop.f32.mrb[0].mxu0
      %4622 = vmatprep.mubr.f32.mxu0 0.0
      %4623 = vmatmul.mubr.f32.gmra.mrb[0].mxu0 %v4441
      %v4624 = vpop.f32.mrb[0].mxu0
      %v4625 = vadd.f32 %v4304, %v4624
      %v4626 = vpop.f32.mrb[0].mxu0
      %4627 = vmatprep.mubr.f32.mxu0 0.0
      %4628 = vmatmul.mubr.f32.gmra.mrb[0].mxu0 %v4444
      %v4629 = vpop.f32.mrb[0].mxu0
      %v4630 = vadd.f32 %v4309, %v4629
      %v4631 = vpop.f32.mrb[0].mxu0
      %4632 = vmatprep.mubr.f32.mxu0 0.0
      %4633 = vmatmul.mubr.f32.gmra.mrb[0].mxu0 %v4447
      %v4634 = vpop.f32.mrb[0].mxu0
      %v4635 = vadd.f32 %v4314, %v4634
      %v4636 = vpop.f32.mrb[0].mxu0
      %4637 = vmatprep.mubr.f32.mxu0 0.0
      %4638 = vmatmul.mubr.f32.gmra.mrb[0].mxu0 %v4450
      %v4639 = vpop.f32.mrb[0].mxu0
      %v4640 = vadd.f32 %v4319, %v4639
      %v4641 = vpop.f32.mrb[0].mxu0
      %4642 = vmatprep.mubr.f32.mxu0 0.0
      %4643 = vmatmul.mubr.f32.gmra.mrb[0].mxu0 %v4453
      %v4644 = vpop.f32.mrb[0].mxu0
      %v4645 = vadd.f32 %v4324, %v4644
      %v4646 = vpop.f32.mrb[0].mxu0
      %4647 = vmatprep.mubr.f32.mxu0 0.0
      %4648 = vmatmul.mubr.f32.gmra.mrb[0].mxu0 %v4456
      %v4649 = vpop.f32.mrb[0].mxu0
      %v4650 = vadd.f32 %v4329, %v4649
      %v4651 = vpop.f32.mrb[0].mxu0
      %4652 = vmatprep.mubr.f32.mxu0 0.0
      %4653 = vmatmul.mubr.f32.gmra.mrb[0].mxu0 %v4459
      %v4654 = vpop.f32.mrb[0].mxu0
      %v4655 = vadd.f32 %v4334, %v4654
      %v4656 = vpop.f32.mrb[0].mxu0
      %4657 = vmatprep.mubr.f32.mxu0 0.0
      %4658 = vmatmul.mubr.f32.gmra.mrb[0].mxu0 %v4462
      %v4659 = vpop.f32.mrb[0].mxu0
      %v4660 = vadd.f32 %v4339, %v4659
      %v4661 = vpop.f32.mrb[0].mxu0
      %4662 = vmatprep.mubr.f32.mxu0 0.0
      %4663 = vmatmul.mubr.f32.gmra.mrb[0].mxu0 %v4465
      %v4664 = vpop.f32.mrb[0].mxu0
      %v4665 = vadd.f32 %v4344, %v4664
      %v4666 = vpop.f32.mrb[0].mxu0
      %4667 = vmatprep.mubr.f32.mxu0 0.0
      %4668 = vmatmul.mubr.f32.gmra.mrb[0].mxu0 %v4468
      %v4669 = vpop.f32.mrb[0].mxu0
      %v4670 = vadd.f32 %v4349, %v4669
      %v4671 = vpop.f32.mrb[0].mxu0
      %4672 = vmatprep.mubr.f32.mxu0 0.0
      %4673 = vmatmul.mubr.f32.gmra.mrb[0].mxu0 %v4471
      %v4674 = vpop.f32.mrb[0].mxu0
      %v4675 = vadd.f32 %v4354, %v4674
      %v4676 = vpop.f32.mrb[0].mxu0
      %4677 = vmatprep.mubr.f32.mxu0 0.0
      %4678 = vmatmul.mubr.f32.gmra.mrb[0].mxu0 %v4474
      %v4679 = vpop.f32.mrb[0].mxu0
      %v4680 = vadd.f32 %v4359, %v4679
      %v4681 = vpop.f32.mrb[0].mxu0
      %4682 = vmatprep.mubr.f32.mxu0 0.0
      %4683 = vmatmul.mubr.f32.gmra.mrb[0].mxu0 %v4477
      %v4684 = vpop.f32.mrb[0].mxu0
      %v4685 = vadd.f32 %v4364, %v4684
      %v4686 = vpop.f32.mrb[0].mxu0
      %4687 = vmatprep.mubr.f32.mxu0 0.0
      %4688 = vmatmul.mubr.f32.gmra.mrb[0].mxu0 %v4480
      %v4689 = vpop.f32.mrb[0].mxu0
      %v4690 = vadd.f32 %v4369, %v4689
      %v4691 = vpop.f32.mrb[0].mxu0
      %4692 = vmatprep.mubr.f32.mxu0 0.0
      %4693 = vmatmul.mubr.f32.gmra.mrb[0].mxu0 %v4483
      %v4694 = vpop.f32.mrb[0].mxu0
      %v4695 = vadd.f32 %v4374, %v4694
      %v4696 = vpop.f32.mrb[0].mxu0
      %4697 = vmatprep.mubr.f32.mxu0 0.0
      %4698 = vmatmul.mubr.f32.gmra.mrb[0].mxu0 %v4486
      %v4699 = vpop.f32.mrb[0].mxu0
      %v4700 = vadd.f32 %v4379, %v4699
      %v4701 = vpop.f32.mrb[0].mxu0
      %4702 = vmatprep.mubr.f32.mxu0 0.0
      %4703 = vmatmul.mubr.f32.gmra.mrb[0].mxu0 %v4489
      %v4704 = vpop.f32.mrb[0].mxu0
      %v4705 = vadd.f32 %v4384, %v4704
      %v4706 = vpop.f32.mrb[0].mxu0
      %4707 = vmatprep.mubr.f32.mxu0 0.0
      %4708 = vmatmul.mubr.f32.gmra.mrb[0].mxu0 %v4492
      %v4709 = vpop.f32.mrb[0].mxu0
      %v4710 = vadd.f32 %v4389, %v4709
      %v4711 = vpop.f32.mrb[0].mxu0
      %4712 = vmatprep.mubr.f32.mxu0 0.0
      %4713 = vmatmul.mubr.f32.gmra.mrb[0].mxu0 %v4495
      %v4714 = vpop.f32.mrb[0].mxu0
      %v4715 = vadd.f32 %v4394, %v4714
      %v4716 = vpop.f32.mrb[0].mxu0
      %4717 = vmatprep.mubr.f32.mxu0 0.0
      %4718 = vmatmul.mubr.f32.gmra.mrb[0].mxu0 %v4498
      %v4719 = vpop.f32.mrb[0].mxu0
      %v4720 = vadd.f32 %v4399, %v4719
      %v4721 = vpop.f32.mrb[0].mxu0
      %4722 = vmatprep.mubr.f32.mxu0 0.0
      %4723 = vmatmul.mubr.f32.gmra.mrb[0].mxu0 %v4501
      %v4724 = vpop.f32.mrb[0].mxu0
      %v4725 = vadd.f32 %v4404, %v4724
      %v4726 = vpop.f32.mrb[0].mxu0
      %4727 = vdwg.mxu0
      %v4728 = vld [vmem:[#allocation3 + $0x2] sm:$0xff]
      %v4729 = vld [vmem:[#allocation3 + $0xa] sm:$0xff]
      %v4730 = vld [vmem:[#allocation3 + $0x1a] sm:$0xff]
      %v4731 = vld [vmem:[#allocation3 + $0x22] sm:$0xff]
      %v4732 = vld [vmem:[#allocation3 + $0x32] sm:$0xff]
      %v4733 = vld [vmem:[#allocation3 + $0x3a] sm:$0xff]
      %v4734 = vld [vmem:[#allocation3 + $0x4a] sm:$0xff]
      %v4735 = vld [vmem:[#allocation3 + $0x52] sm:$0xff]
      %v4736 = vld [vmem:[#allocation3 + $0x62] sm:$0xff]
      %v4737 = vld [vmem:[#allocation3 + $0x6a] sm:$0xff]
      %v4738 = vld [vmem:[#allocation3 + $0x7a] sm:$0xff]
      %v4739 = vld [vmem:[#allocation3 + $0x82] sm:$0xff]
      %v4740 = vld [vmem:[#allocation3 + $0x92] sm:$0xff]
      %v4741 = vld [vmem:[#allocation3 + $0x9a] sm:$0xff]
      %v4742 = vld [vmem:[#allocation3 + $0xaa] sm:$0xff]
      %v4743 = vld [vmem:[#allocation3 + $0xb2] sm:$0xff]
      %v4744 = vld [vmem:[#allocation3 + $0xc2] sm:$0xff]
      %v4745 = vld [vmem:[#allocation3 + $0xca] sm:$0xff]
      %v4746 = vld [vmem:[#allocation3 + $0xda] sm:$0xff]
      %v4747 = vld [vmem:[#allocation3 + $0xe2] sm:$0xff]
      %v4748 = vld [vmem:[#allocation3 + $0xf2] sm:$0xff]
      %v4749 = vld [vmem:[#allocation3 + $0xfa] sm:$0xff]
      %v4750 = vld [vmem:[#allocation3 + $0x10a] sm:$0xff]
      %v4751 = vld [vmem:[#allocation3 + $0x112] sm:$0xff]
      %v4752 = vld [vmem:[#allocation3 + $0x122] sm:$0xff]
      %v4753 = vld [vmem:[#allocation3 + $0x12a] sm:$0xff]
      %v4754 = vld [vmem:[#allocation3 + $0x13a] sm:$0xff]
      %v4755 = vld [vmem:[#allocation3 + $0x142] sm:$0xff]
      %v4756 = vld [vmem:[#allocation3 + $0x152] sm:$0xff]
      %v4757 = vld [vmem:[#allocation3 + $0x15a] sm:$0xff]
      %v4758 = vld [vmem:[#allocation3 + $0x16a] sm:$0xff]
      %v4759 = vld [vmem:[#allocation3 + $0x172] sm:$0xff]
      %v4761 = vsel %vm3924, %v4728, 0
      %v4764 = vsel %vm3924, %v4729, 0
      %v4767 = vsel %vm3924, %v4730, 0
      %v4770 = vsel %vm3924, %v4731, 0
      %v4773 = vsel %vm3924, %v4732, 0
      %v4776 = vsel %vm3924, %v4733, 0
      %v4779 = vsel %vm3924, %v4734, 0
      %v4782 = vsel %vm3924, %v4735, 0
      %v4785 = vsel %vm3924, %v4736, 0
      %v4788 = vsel %vm3924, %v4737, 0
      %v4791 = vsel %vm3924, %v4738, 0
      %v4794 = vsel %vm3924, %v4739, 0
      %v4797 = vsel %vm3924, %v4740, 0
      %v4800 = vsel %vm3924, %v4741, 0
      %v4803 = vsel %vm3924, %v4742, 0
      %v4806 = vsel %vm3924, %v4743, 0
      %v4809 = vsel %vm3924, %v4744, 0
      %v4812 = vsel %vm3924, %v4745, 0
      %v4815 = vsel %vm3924, %v4746, 0
      %v4818 = vsel %vm3924, %v4747, 0
      %v4821 = vsel %vm3924, %v4748, 0
      %v4824 = vsel %vm3924, %v4749, 0
      %v4827 = vsel %vm3924, %v4750, 0
      %v4830 = vsel %vm3924, %v4751, 0
      %v4833 = vsel %vm3924, %v4752, 0
      %v4836 = vsel %vm3924, %v4753, 0
      %v4839 = vsel %vm3924, %v4754, 0
      %v4842 = vsel %vm3924, %v4755, 0
      %v4845 = vsel %vm3924, %v4756, 0
      %v4848 = vsel %vm3924, %v4757, 0
      %v4851 = vsel %vm3924, %v4758, 0
      %v4854 = vsel %vm3924, %v4759, 0
      %4856 = vmatprep.subr.mxu0 0.0
      %4857 = vmatpush1.msra.mxu0 %v4015
      %4858 = vmatprep.subr.mxu0 0.0
      %4859 = vmatpush1.msra.mxu0 0.0
      %4860 = vmatprep.subr.mxu0 0.0
      %4861 = vmatpush1.msra.mxu0 0.0
      %4862 = vmatprep.subr.mxu0 0.0
      %4863 = vmatpush1.msra.mxu0 0.0
      %4864 = vmatprep.subr.mxu0 0.0
      %4865 = vmatpush1.msra.mxu0 0.0
      %4866 = vmatprep.subr.mxu0 0.0
      %4867 = vmatpush1.msra.mxu0 0.0
      %4868 = vmatprep.subr.mxu0 0.0
      %4869 = vmatpush1.msra.mxu0 0.0
      %4870 = vmatprep.subr.mxu0 0.0
      %4871 = vmatpush1.msra.mxu0 0.0
      %4872 = vmatprep.subr.mxu0 0.0
      %4873 = vmatpush1.msra.mxu0 0.0
      %4874 = vmatprep.subr.mxu0 0.0
      %4875 = vmatpush1.msra.mxu0 0.0
      %4876 = vmatprep.subr.mxu0 0.0
      %4877 = vmatpush1.msra.mxu0 0.0
      %4878 = vmatprep.subr.mxu0 0.0
      %4879 = vmatpush1.msra.mxu0 0.0
      %4880 = vmatprep.subr.mxu0 0.0
      %4881 = vmatpush1.msra.mxu0 0.0
      %4882 = vmatprep.subr.mxu0 0.0
      %4883 = vmatpush1.msra.mxu0 0.0
      %4884 = vmatprep.subr.mxu0 0.0
      %4885 = vmatpush1.msra.mxu0 0.0
      %4886 = vmatprep.subr.mxu0 0.0
      %4887 = vmatpush1.msra.mxu0 0.0
      %4888 = vmatprep.subr.mxu0 0.0
      %4889 = vmatpush1.msra.mxu0 0.0
      %4890 = vmatprep.subr.mxu0 0.0
      %4891 = vmatpush1.msra.mxu0 0.0
      %4892 = vmatprep.subr.mxu0 0.0
      %4893 = vmatpush1.msra.mxu0 0.0
      %4894 = vmatprep.subr.mxu0 0.0
      %4895 = vmatpush1.msra.mxu0 0.0
      %4896 = vmatprep.subr.mxu0 0.0
      %4897 = vmatpush1.msra.mxu0 0.0
      %4898 = vmatprep.subr.mxu0 0.0
      %4899 = vmatpush1.msra.mxu0 0.0
      %4900 = vmatprep.subr.mxu0 0.0
      %4901 = vmatpush1.msra.mxu0 0.0
      %4902 = vmatprep.subr.mxu0 0.0
      %4903 = vmatpush1.msra.mxu0 0.0
      %4904 = vmatprep.subr.mxu0 0.0
      %4905 = vmatpush1.msra.mxu0 0.0
      %4906 = vmatprep.subr.mxu0 0.0
      %4907 = vmatpush1.msra.mxu0 0.0
      %4908 = vmatprep.subr.mxu0 0.0
      %4909 = vmatpush1.msra.mxu0 0.0
      %4910 = vmatprep.subr.mxu0 0.0
      %4911 = vmatpush1.msra.mxu0 0.0
      %4912 = vmatprep.subr.mxu0 0.0
      %4913 = vmatpush1.msra.mxu0 0.0
      %4914 = vmatprep.subr.mxu0 0.0
      %4915 = vmatpush1.msra.mxu0 0.0
      %4916 = vmatprep.subr.mxu0 0.0
      %4917 = vmatpush1.msra.mxu0 0.0
      %4918 = vmatprep.subr.mxu0 0.0
      %4919 = vmatpush1.msra.mxu0 0.0
      %4920 = vmatprep.mubr.f32.mxu0 0.0
      %4921 = vmatmul.mubr.f32.gmra.mrb[0].mxu0 %v4761
      %v4922 = vpop.f32.mrb[0].mxu0
      %v4923 = vadd.f32 0.0, %v4922
      %v4924 = vpop.f32.mrb[0].mxu0
      %4925 = vmatprep.mubr.f32.mxu0 0.0
      %4926 = vmatmul.mubr.f32.gmra.mrb[0].mxu0 %v4764
      %v4927 = vpop.f32.mrb[0].mxu0
      %v4928 = vadd.f32 0.0, %v4927
      %v4929 = vpop.f32.mrb[0].mxu0
      %4930 = vmatprep.mubr.f32.mxu0 0.0
      %4931 = vmatmul.mubr.f32.gmra.mrb[0].mxu0 %v4767
      %v4932 = vpop.f32.mrb[0].mxu0
      %v4933 = vadd.f32 0.0, %v4932
      %v4934 = vpop.f32.mrb[0].mxu0
      %4935 = vmatprep.mubr.f32.mxu0 0.0
      %4936 = vmatmul.mubr.f32.gmra.mrb[0].mxu0 %v4770
      %v4937 = vpop.f32.mrb[0].mxu0
      %v4938 = vadd.f32 0.0, %v4937
      %v4939 = vpop.f32.mrb[0].mxu0
      %4940 = vmatprep.mubr.f32.mxu0 0.0
      %4941 = vmatmul.mubr.f32.gmra.mrb[0].mxu0 %v4773
      %v4942 = vpop.f32.mrb[0].mxu0
      %v4943 = vadd.f32 0.0, %v4942
      %v4944 = vpop.f32.mrb[0].mxu0
      %4945 = vmatprep.mubr.f32.mxu0 0.0
      %4946 = vmatmul.mubr.f32.gmra.mrb[0].mxu0 %v4776
      %v4947 = vpop.f32.mrb[0].mxu0
      %v4948 = vadd.f32 0.0, %v4947
      %v4949 = vpop.f32.mrb[0].mxu0
      %4950 = vmatprep.mubr.f32.mxu0 0.0
      %4951 = vmatmul.mubr.f32.gmra.mrb[0].mxu0 %v4779
      %v4952 = vpop.f32.mrb[0].mxu0
      %v4953 = vadd.f32 0.0, %v4952
      %v4954 = vpop.f32.mrb[0].mxu0
      %4955 = vmatprep.mubr.f32.mxu0 0.0
      %4956 = vmatmul.mubr.f32.gmra.mrb[0].mxu0 %v4782
      %v4957 = vpop.f32.mrb[0].mxu0
      %v4958 = vadd.f32 0.0, %v4957
      %v4959 = vpop.f32.mrb[0].mxu0
      %4960 = vmatprep.mubr.f32.mxu0 0.0
      %4961 = vmatmul.mubr.f32.gmra.mrb[0].mxu0 %v4785
      %v4962 = vpop.f32.mrb[0].mxu0
      %v4963 = vadd.f32 0.0, %v4962
      %v4964 = vpop.f32.mrb[0].mxu0
      %4965 = vmatprep.mubr.f32.mxu0 0.0
      %4966 = vmatmul.mubr.f32.gmra.mrb[0].mxu0 %v4788
      %v4967 = vpop.f32.mrb[0].mxu0
      %v4968 = vadd.f32 0.0, %v4967
      %v4969 = vpop.f32.mrb[0].mxu0
      %4970 = vmatprep.mubr.f32.mxu0 0.0
      %4971 = vmatmul.mubr.f32.gmra.mrb[0].mxu0 %v4791
      %v4972 = vpop.f32.mrb[0].mxu0
      %v4973 = vadd.f32 0.0, %v4972
      %v4974 = vpop.f32.mrb[0].mxu0
      %4975 = vmatprep.mubr.f32.mxu0 0.0
      %4976 = vmatmul.mubr.f32.gmra.mrb[0].mxu0 %v4794
      %v4977 = vpop.f32.mrb[0].mxu0
      %v4978 = vadd.f32 0.0, %v4977
      %v4979 = vpop.f32.mrb[0].mxu0
      %4980 = vmatprep.mubr.f32.mxu0 0.0
      %4981 = vmatmul.mubr.f32.gmra.mrb[0].mxu0 %v4797
      %v4982 = vpop.f32.mrb[0].mxu0
      %v4983 = vadd.f32 0.0, %v4982
      %v4984 = vpop.f32.mrb[0].mxu0
      %4985 = vmatprep.mubr.f32.mxu0 0.0
      %4986 = vmatmul.mubr.f32.gmra.mrb[0].mxu0 %v4800
      %v4987 = vpop.f32.mrb[0].mxu0
      %v4988 = vadd.f32 0.0, %v4987
      %v4989 = vpop.f32.mrb[0].mxu0
      %4990 = vmatprep.mubr.f32.mxu0 0.0
      %4991 = vmatmul.mubr.f32.gmra.mrb[0].mxu0 %v4803
      %v4992 = vpop.f32.mrb[0].mxu0
      %v4993 = vadd.f32 0.0, %v4992
      %v4994 = vpop.f32.mrb[0].mxu0
      %4995 = vmatprep.mubr.f32.mxu0 0.0
      %4996 = vmatmul.mubr.f32.gmra.mrb[0].mxu0 %v4806
      %v4997 = vpop.f32.mrb[0].mxu0
      %v4998 = vadd.f32 0.0, %v4997
      %v4999 = vpop.f32.mrb[0].mxu0
      %5000 = vmatprep.mubr.f32.mxu0 0.0
      %5001 = vmatmul.mubr.f32.gmra.mrb[0].mxu0 %v4809
      %v5002 = vpop.f32.mrb[0].mxu0
      %v5003 = vadd.f32 0.0, %v5002
      %v5004 = vpop.f32.mrb[0].mxu0
      %5005 = vmatprep.mubr.f32.mxu0 0.0
      %5006 = vmatmul.mubr.f32.gmra.mrb[0].mxu0 %v4812
      %v5007 = vpop.f32.mrb[0].mxu0
      %v5008 = vadd.f32 0.0, %v5007
      %v5009 = vpop.f32.mrb[0].mxu0
      %5010 = vmatprep.mubr.f32.mxu0 0.0
      %5011 = vmatmul.mubr.f32.gmra.mrb[0].mxu0 %v4815
      %v5012 = vpop.f32.mrb[0].mxu0
      %v5013 = vadd.f32 0.0, %v5012
      %v5014 = vpop.f32.mrb[0].mxu0
      %5015 = vmatprep.mubr.f32.mxu0 0.0
      %5016 = vmatmul.mubr.f32.gmra.mrb[0].mxu0 %v4818
      %v5017 = vpop.f32.mrb[0].mxu0
      %v5018 = vadd.f32 0.0, %v5017
      %v5019 = vpop.f32.mrb[0].mxu0
      %5020 = vmatprep.mubr.f32.mxu0 0.0
      %5021 = vmatmul.mubr.f32.gmra.mrb[0].mxu0 %v4821
      %v5022 = vpop.f32.mrb[0].mxu0
      %v5023 = vadd.f32 0.0, %v5022
      %v5024 = vpop.f32.mrb[0].mxu0
      %5025 = vmatprep.mubr.f32.mxu0 0.0
      %5026 = vmatmul.mubr.f32.gmra.mrb[0].mxu0 %v4824
      %v5027 = vpop.f32.mrb[0].mxu0
      %v5028 = vadd.f32 0.0, %v5027
      %v5029 = vpop.f32.mrb[0].mxu0
      %5030 = vmatprep.mubr.f32.mxu0 0.0
      %5031 = vmatmul.mubr.f32.gmra.mrb[0].mxu0 %v4827
      %v5032 = vpop.f32.mrb[0].mxu0
      %v5033 = vadd.f32 0.0, %v5032
      %v5034 = vpop.f32.mrb[0].mxu0
      %5035 = vmatprep.mubr.f32.mxu0 0.0
      %5036 = vmatmul.mubr.f32.gmra.mrb[0].mxu0 %v4830
      %v5037 = vpop.f32.mrb[0].mxu0
      %v5038 = vadd.f32 0.0, %v5037
      %v5039 = vpop.f32.mrb[0].mxu0
      %5040 = vmatprep.mubr.f32.mxu0 0.0
      %5041 = vmatmul.mubr.f32.gmra.mrb[0].mxu0 %v4833
      %v5042 = vpop.f32.mrb[0].mxu0
      %v5043 = vadd.f32 0.0, %v5042
      %v5044 = vpop.f32.mrb[0].mxu0
      %5045 = vmatprep.mubr.f32.mxu0 0.0
      %5046 = vmatmul.mubr.f32.gmra.mrb[0].mxu0 %v4836
      %v5047 = vpop.f32.mrb[0].mxu0
      %v5048 = vadd.f32 0.0, %v5047
      %v5049 = vpop.f32.mrb[0].mxu0
      %5050 = vmatprep.mubr.f32.mxu0 0.0
      %5051 = vmatmul.mubr.f32.gmra.mrb[0].mxu0 %v4839
      %v5052 = vpop.f32.mrb[0].mxu0
      %v5053 = vadd.f32 0.0, %v5052
      %v5054 = vpop.f32.mrb[0].mxu0
      %5055 = vmatprep.mubr.f32.mxu0 0.0
      %5056 = vmatmul.mubr.f32.gmra.mrb[0].mxu0 %v4842
      %v5057 = vpop.f32.mrb[0].mxu0
      %v5058 = vadd.f32 0.0, %v5057
      %v5059 = vpop.f32.mrb[0].mxu0
      %5060 = vmatprep.mubr.f32.mxu0 0.0
      %5061 = vmatmul.mubr.f32.gmra.mrb[0].mxu0 %v4845
      %v5062 = vpop.f32.mrb[0].mxu0
      %v5063 = vadd.f32 0.0, %v5062
      %v5064 = vpop.f32.mrb[0].mxu0
      %5065 = vmatprep.mubr.f32.mxu0 0.0
      %5066 = vmatmul.mubr.f32.gmra.mrb[0].mxu0 %v4848
      %v5067 = vpop.f32.mrb[0].mxu0
      %v5068 = vadd.f32 0.0, %v5067
      %v5069 = vpop.f32.mrb[0].mxu0
      %5070 = vmatprep.mubr.f32.mxu0 0.0
      %5071 = vmatmul.mubr.f32.gmra.mrb[0].mxu0 %v4851
      %v5072 = vpop.f32.mrb[0].mxu0
      %v5073 = vadd.f32 0.0, %v5072
      %v5074 = vpop.f32.mrb[0].mxu0
      %5075 = vmatprep.mubr.f32.mxu0 0.0
      %5076 = vmatmul.mubr.f32.gmra.mrb[0].mxu0 %v4854
      %v5077 = vpop.f32.mrb[0].mxu0
      %v5078 = vadd.f32 0.0, %v5077
      %v5079 = vpop.f32.mrb[0].mxu0
      %5080 = vdwg.mxu0
      %v5081 = vadd.f32 %v4570, %v4923
      %v5082 = vadd.f32 %v4575, %v4928
      %v5083 = vadd.f32 %v4580, %v4933
      %v5084 = vadd.f32 %v4585, %v4938
      %v5085 = vadd.f32 %v4590, %v4943
      %v5086 = vadd.f32 %v4595, %v4948
      %v5087 = vadd.f32 %v4600, %v4953
      %v5088 = vadd.f32 %v4605, %v4958
      %v5089 = vadd.f32 %v4610, %v4963
      %v5090 = vadd.f32 %v4615, %v4968
      %v5091 = vadd.f32 %v4620, %v4973
      %v5092 = vadd.f32 %v4625, %v4978
      %v5093 = vadd.f32 %v4630, %v4983
      %v5094 = vadd.f32 %v4635, %v4988
      %v5095 = vadd.f32 %v4640, %v4993
      %v5096 = vadd.f32 %v4645, %v4998
      %v5097 = vadd.f32 %v4650, %v5003
      %v5098 = vadd.f32 %v4655, %v5008
      %v5099 = vadd.f32 %v4660, %v5013
      %v5100 = vadd.f32 %v4665, %v5018
      %v5101 = vadd.f32 %v4670, %v5023
      %v5102 = vadd.f32 %v4675, %v5028
      %v5103 = vadd.f32 %v4680, %v5033
      %v5104 = vadd.f32 %v4685, %v5038
      %v5105 = vadd.f32 %v4690, %v5043
      %v5106 = vadd.f32 %v4695, %v5048
      %v5107 = vadd.f32 %v4700, %v5053
      %v5108 = vadd.f32 %v4705, %v5058
      %v5109 = vadd.f32 %v4710, %v5063
      %v5110 = vadd.f32 %v4715, %v5068
      %v5111 = vadd.f32 %v4720, %v5073
      %v5112 = vadd.f32 %v4725, %v5078
      %v5113 = vld [vmem:[%s3980] sm:$0xff]
      %v5114 = vld [vmem:[%s3980 + $0x8] sm:$0xff]
      %v5115 = vld [vmem:[%s3980 + $0x18] sm:$0xff]
      %v5116 = vld [vmem:[%s3980 + $0x20] sm:$0xff]
      %v5117 = vld [vmem:[%s3980 + $0x30] sm:$0xff]
      %v5118 = vld [vmem:[%s3980 + $0x38] sm:$0xff]
      %v5119 = vld [vmem:[%s3980 + $0x48] sm:$0xff]
      %v5120 = vld [vmem:[%s3980 + $0x50] sm:$0xff]
      %v5121 = vld [vmem:[%s3980 + $0x60] sm:$0xff]
      %v5122 = vld [vmem:[%s3980 + $0x68] sm:$0xff]
      %v5123 = vld [vmem:[%s3980 + $0x78] sm:$0xff]
      %v5124 = vld [vmem:[%s3980 + $0x80] sm:$0xff]
      %v5125 = vld [vmem:[%s3980 + $0x90] sm:$0xff]
      %v5126 = vld [vmem:[%s3980 + $0x98] sm:$0xff]
      %v5127 = vld [vmem:[%s3980 + $0xa8] sm:$0xff]
      %v5128 = vld [vmem:[%s3980 + $0xb0] sm:$0xff]
      %v5129 = vld [vmem:[%s3980 + $0xc0] sm:$0xff]
      %v5130 = vld [vmem:[%s3980 + $0xc8] sm:$0xff]
      %v5131 = vld [vmem:[%s3980 + $0xd8] sm:$0xff]
      %v5132 = vld [vmem:[%s3980 + $0xe0] sm:$0xff]
      %v5133 = vld [vmem:[%s3980 + $0xf0] sm:$0xff]
      %v5134 = vld [vmem:[%s3980 + $0xf8] sm:$0xff]
      %v5135 = vld [vmem:[%s3980 + $0x108] sm:$0xff]
      %v5136 = vld [vmem:[%s3980 + $0x110] sm:$0xff]
      %v5137 = vld [vmem:[%s3980 + $0x120] sm:$0xff]
      %v5138 = vld [vmem:[%s3980 + $0x128] sm:$0xff]
      %v5139 = vld [vmem:[%s3980 + $0x138] sm:$0xff]
      %v5140 = vld [vmem:[%s3980 + $0x140] sm:$0xff]
      %v5141 = vld [vmem:[%s3980 + $0x150] sm:$0xff]
      %v5142 = vld [vmem:[%s3980 + $0x158] sm:$0xff]
      %v5143 = vld [vmem:[%s3980 + $0x168] sm:$0xff]
      %v5144 = vld [vmem:[%s3980 + $0x170] sm:$0xff]
      %v5146 = vsel %vm3924, %v5113, 0
      %v5149 = vsel %vm3924, %v5114, 0
      %v5152 = vsel %vm3924, %v5115, 0
      %v5155 = vsel %vm3924, %v5116, 0
      %v5158 = vsel %vm3924, %v5117, 0
      %v5161 = vsel %vm3924, %v5118, 0
      %v5164 = vsel %vm3924, %v5119, 0
      %v5167 = vsel %vm3924, %v5120, 0
      %v5170 = vsel %vm3924, %v5121, 0
      %v5173 = vsel %vm3924, %v5122, 0
      %v5176 = vsel %vm3924, %v5123, 0
      %v5179 = vsel %vm3924, %v5124, 0
      %v5182 = vsel %vm3924, %v5125, 0
      %v5185 = vsel %vm3924, %v5126, 0
      %v5188 = vsel %vm3924, %v5127, 0
      %v5191 = vsel %vm3924, %v5128, 0
      %v5194 = vsel %vm3924, %v5129, 0
      %v5197 = vsel %vm3924, %v5130, 0
      %v5200 = vsel %vm3924, %v5131, 0
      %v5203 = vsel %vm3924, %v5132, 0
      %v5206 = vsel %vm3924, %v5133, 0
      %v5209 = vsel %vm3924, %v5134, 0
      %v5212 = vsel %vm3924, %v5135, 0
      %v5215 = vsel %vm3924, %v5136, 0
      %v5218 = vsel %vm3924, %v5137, 0
      %v5221 = vsel %vm3924, %v5138, 0
      %v5224 = vsel %vm3924, %v5139, 0
      %v5227 = vsel %vm3924, %v5140, 0
      %v5230 = vsel %vm3924, %v5141, 0
      %v5233 = vsel %vm3924, %v5142, 0
      %v5236 = vsel %vm3924, %v5143, 0
      %v5239 = vsel %vm3924, %v5144, 0
      %5241 = vmatprep.subr.mxu0 0.0
      %5242 = vmatpush1.msra.mxu0 %v4016
      %5243 = vmatprep.subr.mxu0 0.0
      %5244 = vmatpush1.msra.mxu0 0.0
      %5245 = vmatprep.subr.mxu0 0.0
      %5246 = vmatpush1.msra.mxu0 0.0
      %5247 = vmatprep.subr.mxu0 0.0
      %5248 = vmatpush1.msra.mxu0 0.0
      %5249 = vmatprep.subr.mxu0 0.0
      %5250 = vmatpush1.msra.mxu0 0.0
      %5251 = vmatprep.subr.mxu0 0.0
      %5252 = vmatpush1.msra.mxu0 0.0
      %5253 = vmatprep.subr.mxu0 0.0
      %5254 = vmatpush1.msra.mxu0 0.0
      %5255 = vmatprep.subr.mxu0 0.0
      %5256 = vmatpush1.msra.mxu0 0.0
      %5257 = vmatprep.subr.mxu0 0.0
      %5258 = vmatpush1.msra.mxu0 0.0
      %5259 = vmatprep.subr.mxu0 0.0
      %5260 = vmatpush1.msra.mxu0 0.0
      %5261 = vmatprep.subr.mxu0 0.0
      %5262 = vmatpush1.msra.mxu0 0.0
      %5263 = vmatprep.subr.mxu0 0.0
      %5264 = vmatpush1.msra.mxu0 0.0
      %5265 = vmatprep.subr.mxu0 0.0
      %5266 = vmatpush1.msra.mxu0 0.0
      %5267 = vmatprep.subr.mxu0 0.0
      %5268 = vmatpush1.msra.mxu0 0.0
      %5269 = vmatprep.subr.mxu0 0.0
      %5270 = vmatpush1.msra.mxu0 0.0
      %5271 = vmatprep.subr.mxu0 0.0
      %5272 = vmatpush1.msra.mxu0 0.0
      %5273 = vmatprep.subr.mxu0 0.0
      %5274 = vmatpush1.msra.mxu0 0.0
      %5275 = vmatprep.subr.mxu0 0.0
      %5276 = vmatpush1.msra.mxu0 0.0
      %5277 = vmatprep.subr.mxu0 0.0
      %5278 = vmatpush1.msra.mxu0 0.0
      %5279 = vmatprep.subr.mxu0 0.0
      %5280 = vmatpush1.msra.mxu0 0.0
      %5281 = vmatprep.subr.mxu0 0.0
      %5282 = vmatpush1.msra.mxu0 0.0
      %5283 = vmatprep.subr.mxu0 0.0
      %5284 = vmatpush1.msra.mxu0 0.0
      %5285 = vmatprep.subr.mxu0 0.0
      %5286 = vmatpush1.msra.mxu0 0.0
      %5287 = vmatprep.subr.mxu0 0.0
      %5288 = vmatpush1.msra.mxu0 0.0
      %5289 = vmatprep.subr.mxu0 0.0
      %5290 = vmatpush1.msra.mxu0 0.0
      %5291 = vmatprep.subr.mxu0 0.0
      %5292 = vmatpush1.msra.mxu0 0.0
      %5293 = vmatprep.subr.mxu0 0.0
      %5294 = vmatpush1.msra.mxu0 0.0
      %5295 = vmatprep.subr.mxu0 0.0
      %5296 = vmatpush1.msra.mxu0 0.0
      %5297 = vmatprep.subr.mxu0 0.0
      %5298 = vmatpush1.msra.mxu0 0.0
      %5299 = vmatprep.subr.mxu0 0.0
      %5300 = vmatpush1.msra.mxu0 0.0
      %5301 = vmatprep.subr.mxu0 0.0
      %5302 = vmatpush1.msra.mxu0 0.0
      %5303 = vmatprep.subr.mxu0 0.0
      %5304 = vmatpush1.msra.mxu0 0.0
      %5305 = vmatprep.mubr.f32.mxu0 0.0
      %5306 = vmatmul.mubr.f32.gmra.mrb[0].mxu0 %v5146
      %v5307 = vpop.f32.mrb[0].mxu0
      %v5308 = vadd.f32 0.0, %v5307
      %v5309 = vpop.f32.mrb[0].mxu0
      %5310 = vmatprep.mubr.f32.mxu0 0.0
      %5311 = vmatmul.mubr.f32.gmra.mrb[0].mxu0 %v5149
      %v5312 = vpop.f32.mrb[0].mxu0
      %v5313 = vadd.f32 0.0, %v5312
      %v5314 = vpop.f32.mrb[0].mxu0
      %5315 = vmatprep.mubr.f32.mxu0 0.0
      %5316 = vmatmul.mubr.f32.gmra.mrb[0].mxu0 %v5152
      %v5317 = vpop.f32.mrb[0].mxu0
      %v5318 = vadd.f32 0.0, %v5317
      %v5319 = vpop.f32.mrb[0].mxu0
      %5320 = vmatprep.mubr.f32.mxu0 0.0
      %5321 = vmatmul.mubr.f32.gmra.mrb[0].mxu0 %v5155
      %v5322 = vpop.f32.mrb[0].mxu0
      %v5323 = vadd.f32 0.0, %v5322
      %v5324 = vpop.f32.mrb[0].mxu0
      %5325 = vmatprep.mubr.f32.mxu0 0.0
      %5326 = vmatmul.mubr.f32.gmra.mrb[0].mxu0 %v5158
      %v5327 = vpop.f32.mrb[0].mxu0
      %v5328 = vadd.f32 0.0, %v5327
      %v5329 = vpop.f32.mrb[0].mxu0
      %5330 = vmatprep.mubr.f32.mxu0 0.0
      %5331 = vmatmul.mubr.f32.gmra.mrb[0].mxu0 %v5161
      %v5332 = vpop.f32.mrb[0].mxu0
      %v5333 = vadd.f32 0.0, %v5332
      %v5334 = vpop.f32.mrb[0].mxu0
      %5335 = vmatprep.mubr.f32.mxu0 0.0
      %5336 = vmatmul.mubr.f32.gmra.mrb[0].mxu0 %v5164
      %v5337 = vpop.f32.mrb[0].mxu0
      %v5338 = vadd.f32 0.0, %v5337
      %v5339 = vpop.f32.mrb[0].mxu0
      %5340 = vmatprep.mubr.f32.mxu0 0.0
      %5341 = vmatmul.mubr.f32.gmra.mrb[0].mxu0 %v5167
      %v5342 = vpop.f32.mrb[0].mxu0
      %v5343 = vadd.f32 0.0, %v5342
      %v5344 = vpop.f32.mrb[0].mxu0
      %5345 = vmatprep.mubr.f32.mxu0 0.0
      %5346 = vmatmul.mubr.f32.gmra.mrb[0].mxu0 %v5170
      %v5347 = vpop.f32.mrb[0].mxu0
      %v5348 = vadd.f32 0.0, %v5347
      %v5349 = vpop.f32.mrb[0].mxu0
      %5350 = vmatprep.mubr.f32.mxu0 0.0
      %5351 = vmatmul.mubr.f32.gmra.mrb[0].mxu0 %v5173
      %v5352 = vpop.f32.mrb[0].mxu0
      %v5353 = vadd.f32 0.0, %v5352
      %v5354 = vpop.f32.mrb[0].mxu0
      %5355 = vmatprep.mubr.f32.mxu0 0.0
      %5356 = vmatmul.mubr.f32.gmra.mrb[0].mxu0 %v5176
      %v5357 = vpop.f32.mrb[0].mxu0
      %v5358 = vadd.f32 0.0, %v5357
      %v5359 = vpop.f32.mrb[0].mxu0
      %5360 = vmatprep.mubr.f32.mxu0 0.0
      %5361 = vmatmul.mubr.f32.gmra.mrb[0].mxu0 %v5179
      %v5362 = vpop.f32.mrb[0].mxu0
      %v5363 = vadd.f32 0.0, %v5362
      %v5364 = vpop.f32.mrb[0].mxu0
      %5365 = vmatprep.mubr.f32.mxu0 0.0
      %5366 = vmatmul.mubr.f32.gmra.mrb[0].mxu0 %v5182
      %v5367 = vpop.f32.mrb[0].mxu0
      %v5368 = vadd.f32 0.0, %v5367
      %v5369 = vpop.f32.mrb[0].mxu0
      %5370 = vmatprep.mubr.f32.mxu0 0.0
      %5371 = vmatmul.mubr.f32.gmra.mrb[0].mxu0 %v5185
      %v5372 = vpop.f32.mrb[0].mxu0
      %v5373 = vadd.f32 0.0, %v5372
      %v5374 = vpop.f32.mrb[0].mxu0
      %5375 = vmatprep.mubr.f32.mxu0 0.0
      %5376 = vmatmul.mubr.f32.gmra.mrb[0].mxu0 %v5188
      %v5377 = vpop.f32.mrb[0].mxu0
      %v5378 = vadd.f32 0.0, %v5377
      %v5379 = vpop.f32.mrb[0].mxu0
      %5380 = vmatprep.mubr.f32.mxu0 0.0
      %5381 = vmatmul.mubr.f32.gmra.mrb[0].mxu0 %v5191
      %v5382 = vpop.f32.mrb[0].mxu0
      %v5383 = vadd.f32 0.0, %v5382
      %v5384 = vpop.f32.mrb[0].mxu0
      %5385 = vmatprep.mubr.f32.mxu0 0.0
      %5386 = vmatmul.mubr.f32.gmra.mrb[0].mxu0 %v5194
      %v5387 = vpop.f32.mrb[0].mxu0
      %v5388 = vadd.f32 0.0, %v5387
      %v5389 = vpop.f32.mrb[0].mxu0
      %5390 = vmatprep.mubr.f32.mxu0 0.0
      %5391 = vmatmul.mubr.f32.gmra.mrb[0].mxu0 %v5197
      %v5392 = vpop.f32.mrb[0].mxu0
      %v5393 = vadd.f32 0.0, %v5392
      %v5394 = vpop.f32.mrb[0].mxu0
      %5395 = vmatprep.mubr.f32.mxu0 0.0
      %5396 = vmatmul.mubr.f32.gmra.mrb[0].mxu0 %v5200
      %v5397 = vpop.f32.mrb[0].mxu0
      %v5398 = vadd.f32 0.0, %v5397
      %v5399 = vpop.f32.mrb[0].mxu0
      %5400 = vmatprep.mubr.f32.mxu0 0.0
      %5401 = vmatmul.mubr.f32.gmra.mrb[0].mxu0 %v5203
      %v5402 = vpop.f32.mrb[0].mxu0
      %v5403 = vadd.f32 0.0, %v5402
      %v5404 = vpop.f32.mrb[0].mxu0
      %5405 = vmatprep.mubr.f32.mxu0 0.0
      %5406 = vmatmul.mubr.f32.gmra.mrb[0].mxu0 %v5206
      %v5407 = vpop.f32.mrb[0].mxu0
      %v5408 = vadd.f32 0.0, %v5407
      %v5409 = vpop.f32.mrb[0].mxu0
      %5410 = vmatprep.mubr.f32.mxu0 0.0
      %5411 = vmatmul.mubr.f32.gmra.mrb[0].mxu0 %v5209
      %v5412 = vpop.f32.mrb[0].mxu0
      %v5413 = vadd.f32 0.0, %v5412
      %v5414 = vpop.f32.mrb[0].mxu0
      %5415 = vmatprep.mubr.f32.mxu0 0.0
      %5416 = vmatmul.mubr.f32.gmra.mrb[0].mxu0 %v5212
      %v5417 = vpop.f32.mrb[0].mxu0
      %v5418 = vadd.f32 0.0, %v5417
      %v5419 = vpop.f32.mrb[0].mxu0
      %5420 = vmatprep.mubr.f32.mxu0 0.0
      %5421 = vmatmul.mubr.f32.gmra.mrb[0].mxu0 %v5215
      %v5422 = vpop.f32.mrb[0].mxu0
      %v5423 = vadd.f32 0.0, %v5422
      %v5424 = vpop.f32.mrb[0].mxu0
      %5425 = vmatprep.mubr.f32.mxu0 0.0
      %5426 = vmatmul.mubr.f32.gmra.mrb[0].mxu0 %v5218
      %v5427 = vpop.f32.mrb[0].mxu0
      %v5428 = vadd.f32 0.0, %v5427
      %v5429 = vpop.f32.mrb[0].mxu0
      %5430 = vmatprep.mubr.f32.mxu0 0.0
      %5431 = vmatmul.mubr.f32.gmra.mrb[0].mxu0 %v5221
      %v5432 = vpop.f32.mrb[0].mxu0
      %v5433 = vadd.f32 0.0, %v5432
      %v5434 = vpop.f32.mrb[0].mxu0
      %5435 = vmatprep.mubr.f32.mxu0 0.0
      %5436 = vmatmul.mubr.f32.gmra.mrb[0].mxu0 %v5224
      %v5437 = vpop.f32.mrb[0].mxu0
      %v5438 = vadd.f32 0.0, %v5437
      %v5439 = vpop.f32.mrb[0].mxu0
      %5440 = vmatprep.mubr.f32.mxu0 0.0
      %5441 = vmatmul.mubr.f32.gmra.mrb[0].mxu0 %v5227
      %v5442 = vpop.f32.mrb[0].mxu0
      %v5443 = vadd.f32 0.0, %v5442
      %v5444 = vpop.f32.mrb[0].mxu0
      %5445 = vmatprep.mubr.f32.mxu0 0.0
      %5446 = vmatmul.mubr.f32.gmra.mrb[0].mxu0 %v5230
      %v5447 = vpop.f32.mrb[0].mxu0
      %v5448 = vadd.f32 0.0, %v5447
      %v5449 = vpop.f32.mrb[0].mxu0
      %5450 = vmatprep.mubr.f32.mxu0 0.0
      %5451 = vmatmul.mubr.f32.gmra.mrb[0].mxu0 %v5233
      %v5452 = vpop.f32.mrb[0].mxu0
      %v5453 = vadd.f32 0.0, %v5452
      %v5454 = vpop.f32.mrb[0].mxu0
      %5455 = vmatprep.mubr.f32.mxu0 0.0
      %5456 = vmatmul.mubr.f32.gmra.mrb[0].mxu0 %v5236
      %v5457 = vpop.f32.mrb[0].mxu0
      %v5458 = vadd.f32 0.0, %v5457
      %v5459 = vpop.f32.mrb[0].mxu0
      %5460 = vmatprep.mubr.f32.mxu0 0.0
      %5461 = vmatmul.mubr.f32.gmra.mrb[0].mxu0 %v5239
      %v5462 = vpop.f32.mrb[0].mxu0
      %v5463 = vadd.f32 0.0, %v5462
      %v5464 = vpop.f32.mrb[0].mxu0
      %5465 = vdwg.mxu0
      %v5466 = vadd.f32 %v5081, %v5308
      %v5467 = vadd.f32 %v5082, %v5313
      %v5468 = vadd.f32 %v5083, %v5318
      %v5469 = vadd.f32 %v5084, %v5323
      %v5470 = vadd.f32 %v5085, %v5328
      %v5471 = vadd.f32 %v5086, %v5333
      %v5472 = vadd.f32 %v5087, %v5338
      %v5473 = vadd.f32 %v5088, %v5343
      %v5474 = vadd.f32 %v5089, %v5348
      %v5475 = vadd.f32 %v5090, %v5353
      %v5476 = vadd.f32 %v5091, %v5358
      %v5477 = vadd.f32 %v5092, %v5363
      %v5478 = vadd.f32 %v5093, %v5368
      %v5479 = vadd.f32 %v5094, %v5373
      %v5480 = vadd.f32 %v5095, %v5378
      %v5481 = vadd.f32 %v5096, %v5383
      %v5482 = vadd.f32 %v5097, %v5388
      %v5483 = vadd.f32 %v5098, %v5393
      %v5484 = vadd.f32 %v5099, %v5398
      %v5485 = vadd.f32 %v5100, %v5403
      %v5486 = vadd.f32 %v5101, %v5408
      %v5487 = vadd.f32 %v5102, %v5413
      %v5488 = vadd.f32 %v5103, %v5418
      %v5489 = vadd.f32 %v5104, %v5423
      %v5490 = vadd.f32 %v5105, %v5428
      %v5491 = vadd.f32 %v5106, %v5433
      %v5492 = vadd.f32 %v5107, %v5438
      %v5493 = vadd.f32 %v5108, %v5443
      %v5494 = vadd.f32 %v5109, %v5448
      %v5495 = vadd.f32 %v5110, %v5453
      %v5496 = vadd.f32 %v5111, %v5458
      %v5497 = vadd.f32 %v5112, %v5463
      %v5498 = vld [vmem:[%s3980 + $0x1] sm:$0xff]
      %v5499 = vld [vmem:[%s3980 + $0x9] sm:$0xff]
      %v5500 = vld [vmem:[%s3980 + $0x19] sm:$0xff]
      %v5501 = vld [vmem:[%s3980 + $0x21] sm:$0xff]
      %v5502 = vld [vmem:[%s3980 + $0x31] sm:$0xff]
      %v5503 = vld [vmem:[%s3980 + $0x39] sm:$0xff]
      %v5504 = vld [vmem:[%s3980 + $0x49] sm:$0xff]
      %v5505 = vld [vmem:[%s3980 + $0x51] sm:$0xff]
      %v5506 = vld [vmem:[%s3980 + $0x61] sm:$0xff]
      %v5507 = vld [vmem:[%s3980 + $0x69] sm:$0xff]
      %v5508 = vld [vmem:[%s3980 + $0x79] sm:$0xff]
      %v5509 = vld [vmem:[%s3980 + $0x81] sm:$0xff]
      %v5510 = vld [vmem:[%s3980 + $0x91] sm:$0xff]
      %v5511 = vld [vmem:[%s3980 + $0x99] sm:$0xff]
      %v5512 = vld [vmem:[%s3980 + $0xa9] sm:$0xff]
      %v5513 = vld [vmem:[%s3980 + $0xb1] sm:$0xff]
      %v5514 = vld [vmem:[%s3980 + $0xc1] sm:$0xff]
      %v5515 = vld [vmem:[%s3980 + $0xc9] sm:$0xff]
      %v5516 = vld [vmem:[%s3980 + $0xd9] sm:$0xff]
      %v5517 = vld [vmem:[%s3980 + $0xe1] sm:$0xff]
      %v5518 = vld [vmem:[%s3980 + $0xf1] sm:$0xff]
      %v5519 = vld [vmem:[%s3980 + $0xf9] sm:$0xff]
      %v5520 = vld [vmem:[%s3980 + $0x109] sm:$0xff]
      %v5521 = vld [vmem:[%s3980 + $0x111] sm:$0xff]
      %v5522 = vld [vmem:[%s3980 + $0x121] sm:$0xff]
      %v5523 = vld [vmem:[%s3980 + $0x129] sm:$0xff]
      %v5524 = vld [vmem:[%s3980 + $0x139] sm:$0xff]
      %v5525 = vld [vmem:[%s3980 + $0x141] sm:$0xff]
      %v5526 = vld [vmem:[%s3980 + $0x151] sm:$0xff]
      %v5527 = vld [vmem:[%s3980 + $0x159] sm:$0xff]
      %v5528 = vld [vmem:[%s3980 + $0x169] sm:$0xff]
      %v5529 = vld [vmem:[%s3980 + $0x171] sm:$0xff]
      %v5531 = vsel %vm3924, %v5498, 0
      %v5534 = vsel %vm3924, %v5499, 0
      %v5537 = vsel %vm3924, %v5500, 0
      %v5540 = vsel %vm3924, %v5501, 0
      %v5543 = vsel %vm3924, %v5502, 0
      %v5546 = vsel %vm3924, %v5503, 0
      %v5549 = vsel %vm3924, %v5504, 0
      %v5552 = vsel %vm3924, %v5505, 0
      %v5555 = vsel %vm3924, %v5506, 0
      %v5558 = vsel %vm3924, %v5507, 0
      %v5561 = vsel %vm3924, %v5508, 0
      %v5564 = vsel %vm3924, %v5509, 0
      %v5567 = vsel %vm3924, %v5510, 0
      %v5570 = vsel %vm3924, %v5511, 0
      %v5573 = vsel %vm3924, %v5512, 0
      %v5576 = vsel %vm3924, %v5513, 0
      %v5579 = vsel %vm3924, %v5514, 0
      %v5582 = vsel %vm3924, %v5515, 0
      %v5585 = vsel %vm3924, %v5516, 0
      %v5588 = vsel %vm3924, %v5517, 0
      %v5591 = vsel %vm3924, %v5518, 0
      %v5594 = vsel %vm3924, %v5519, 0
      %v5597 = vsel %vm3924, %v5520, 0
      %v5600 = vsel %vm3924, %v5521, 0
      %v5603 = vsel %vm3924, %v5522, 0
      %v5606 = vsel %vm3924, %v5523, 0
      %v5609 = vsel %vm3924, %v5524, 0
      %v5612 = vsel %vm3924, %v5525, 0
      %v5615 = vsel %vm3924, %v5526, 0
      %v5618 = vsel %vm3924, %v5527, 0
      %v5621 = vsel %vm3924, %v5528, 0
      %v5624 = vsel %vm3924, %v5529, 0
      %5626 = vmatprep.subr.mxu0 0.0
      %5627 = vmatpush1.msra.mxu0 %v4017
      %5628 = vmatprep.subr.mxu0 0.0
      %5629 = vmatpush1.msra.mxu0 0.0
      %5630 = vmatprep.subr.mxu0 0.0
      %5631 = vmatpush1.msra.mxu0 0.0
      %5632 = vmatprep.subr.mxu0 0.0
      %5633 = vmatpush1.msra.mxu0 0.0
      %5634 = vmatprep.subr.mxu0 0.0
      %5635 = vmatpush1.msra.mxu0 0.0
      %5636 = vmatprep.subr.mxu0 0.0
      %5637 = vmatpush1.msra.mxu0 0.0
      %5638 = vmatprep.subr.mxu0 0.0
      %5639 = vmatpush1.msra.mxu0 0.0
      %5640 = vmatprep.subr.mxu0 0.0
      %5641 = vmatpush1.msra.mxu0 0.0
      %5642 = vmatprep.subr.mxu0 0.0
      %5643 = vmatpush1.msra.mxu0 0.0
      %5644 = vmatprep.subr.mxu0 0.0
      %5645 = vmatpush1.msra.mxu0 0.0
      %5646 = vmatprep.subr.mxu0 0.0
      %5647 = vmatpush1.msra.mxu0 0.0
      %5648 = vmatprep.subr.mxu0 0.0
      %5649 = vmatpush1.msra.mxu0 0.0
      %5650 = vmatprep.subr.mxu0 0.0
      %5651 = vmatpush1.msra.mxu0 0.0
      %5652 = vmatprep.subr.mxu0 0.0
      %5653 = vmatpush1.msra.mxu0 0.0
      %5654 = vmatprep.subr.mxu0 0.0
      %5655 = vmatpush1.msra.mxu0 0.0
      %5656 = vmatprep.subr.mxu0 0.0
      %5657 = vmatpush1.msra.mxu0 0.0
      %5658 = vmatprep.subr.mxu0 0.0
      %5659 = vmatpush1.msra.mxu0 0.0
      %5660 = vmatprep.subr.mxu0 0.0
      %5661 = vmatpush1.msra.mxu0 0.0
      %5662 = vmatprep.subr.mxu0 0.0
      %5663 = vmatpush1.msra.mxu0 0.0
      %5664 = vmatprep.subr.mxu0 0.0
      %5665 = vmatpush1.msra.mxu0 0.0
      %5666 = vmatprep.subr.mxu0 0.0
      %5667 = vmatpush1.msra.mxu0 0.0
      %5668 = vmatprep.subr.mxu0 0.0
      %5669 = vmatpush1.msra.mxu0 0.0
      %5670 = vmatprep.subr.mxu0 0.0
      %5671 = vmatpush1.msra.mxu0 0.0
      %5672 = vmatprep.subr.mxu0 0.0
      %5673 = vmatpush1.msra.mxu0 0.0
      %5674 = vmatprep.subr.mxu0 0.0
      %5675 = vmatpush1.msra.mxu0 0.0
      %5676 = vmatprep.subr.mxu0 0.0
      %5677 = vmatpush1.msra.mxu0 0.0
      %5678 = vmatprep.subr.mxu0 0.0
      %5679 = vmatpush1.msra.mxu0 0.0
      %5680 = vmatprep.subr.mxu0 0.0
      %5681 = vmatpush1.msra.mxu0 0.0
      %5682 = vmatprep.subr.mxu0 0.0
      %5683 = vmatpush1.msra.mxu0 0.0
      %5684 = vmatprep.subr.mxu0 0.0
      %5685 = vmatpush1.msra.mxu0 0.0
      %5686 = vmatprep.subr.mxu0 0.0
      %5687 = vmatpush1.msra.mxu0 0.0
      %5688 = vmatprep.subr.mxu0 0.0
      %5689 = vmatpush1.msra.mxu0 0.0
      %5690 = vmatprep.mubr.f32.mxu0 0.0
      %5691 = vmatmul.mubr.f32.gmra.mrb[0].mxu0 %v5531
      %v5692 = vpop.f32.mrb[0].mxu0
      %v5693 = vadd.f32 0.0, %v5692
      %v5694 = vpop.f32.mrb[0].mxu0
      %5695 = vmatprep.mubr.f32.mxu0 0.0
      %5696 = vmatmul.mubr.f32.gmra.mrb[0].mxu0 %v5534
      %v5697 = vpop.f32.mrb[0].mxu0
      %v5698 = vadd.f32 0.0, %v5697
      %v5699 = vpop.f32.mrb[0].mxu0
      %5700 = vmatprep.mubr.f32.mxu0 0.0
      %5701 = vmatmul.mubr.f32.gmra.mrb[0].mxu0 %v5537
      %v5702 = vpop.f32.mrb[0].mxu0
      %v5703 = vadd.f32 0.0, %v5702
      %v5704 = vpop.f32.mrb[0].mxu0
      %5705 = vmatprep.mubr.f32.mxu0 0.0
      %5706 = vmatmul.mubr.f32.gmra.mrb[0].mxu0 %v5540
      %v5707 = vpop.f32.mrb[0].mxu0
      %v5708 = vadd.f32 0.0, %v5707
      %v5709 = vpop.f32.mrb[0].mxu0
      %5710 = vmatprep.mubr.f32.mxu0 0.0
      %5711 = vmatmul.mubr.f32.gmra.mrb[0].mxu0 %v5543
      %v5712 = vpop.f32.mrb[0].mxu0
      %v5713 = vadd.f32 0.0, %v5712
      %v5714 = vpop.f32.mrb[0].mxu0
      %5715 = vmatprep.mubr.f32.mxu0 0.0
      %5716 = vmatmul.mubr.f32.gmra.mrb[0].mxu0 %v5546
      %v5717 = vpop.f32.mrb[0].mxu0
      %v5718 = vadd.f32 0.0, %v5717
      %v5719 = vpop.f32.mrb[0].mxu0
      %5720 = vmatprep.mubr.f32.mxu0 0.0
      %5721 = vmatmul.mubr.f32.gmra.mrb[0].mxu0 %v5549
      %v5722 = vpop.f32.mrb[0].mxu0
      %v5723 = vadd.f32 0.0, %v5722
      %v5724 = vpop.f32.mrb[0].mxu0
      %5725 = vmatprep.mubr.f32.mxu0 0.0
      %5726 = vmatmul.mubr.f32.gmra.mrb[0].mxu0 %v5552
      %v5727 = vpop.f32.mrb[0].mxu0
      %v5728 = vadd.f32 0.0, %v5727
      %v5729 = vpop.f32.mrb[0].mxu0
      %5730 = vmatprep.mubr.f32.mxu0 0.0
      %5731 = vmatmul.mubr.f32.gmra.mrb[0].mxu0 %v5555
      %v5732 = vpop.f32.mrb[0].mxu0
      %v5733 = vadd.f32 0.0, %v5732
      %v5734 = vpop.f32.mrb[0].mxu0
      %5735 = vmatprep.mubr.f32.mxu0 0.0
      %5736 = vmatmul.mubr.f32.gmra.mrb[0].mxu0 %v5558
      %v5737 = vpop.f32.mrb[0].mxu0
      %v5738 = vadd.f32 0.0, %v5737
      %v5739 = vpop.f32.mrb[0].mxu0
      %5740 = vmatprep.mubr.f32.mxu0 0.0
      %5741 = vmatmul.mubr.f32.gmra.mrb[0].mxu0 %v5561
      %v5742 = vpop.f32.mrb[0].mxu0
      %v5743 = vadd.f32 0.0, %v5742
      %v5744 = vpop.f32.mrb[0].mxu0
      %5745 = vmatprep.mubr.f32.mxu0 0.0
      %5746 = vmatmul.mubr.f32.gmra.mrb[0].mxu0 %v5564
      %v5747 = vpop.f32.mrb[0].mxu0
      %v5748 = vadd.f32 0.0, %v5747
      %v5749 = vpop.f32.mrb[0].mxu0
      %5750 = vmatprep.mubr.f32.mxu0 0.0
      %5751 = vmatmul.mubr.f32.gmra.mrb[0].mxu0 %v5567
      %v5752 = vpop.f32.mrb[0].mxu0
      %v5753 = vadd.f32 0.0, %v5752
      %v5754 = vpop.f32.mrb[0].mxu0
      %5755 = vmatprep.mubr.f32.mxu0 0.0
      %5756 = vmatmul.mubr.f32.gmra.mrb[0].mxu0 %v5570
      %v5757 = vpop.f32.mrb[0].mxu0
      %v5758 = vadd.f32 0.0, %v5757
      %v5759 = vpop.f32.mrb[0].mxu0
      %5760 = vmatprep.mubr.f32.mxu0 0.0
      %5761 = vmatmul.mubr.f32.gmra.mrb[0].mxu0 %v5573
      %v5762 = vpop.f32.mrb[0].mxu0
      %v5763 = vadd.f32 0.0, %v5762
      %v5764 = vpop.f32.mrb[0].mxu0
      %5765 = vmatprep.mubr.f32.mxu0 0.0
      %5766 = vmatmul.mubr.f32.gmra.mrb[0].mxu0 %v5576
      %v5767 = vpop.f32.mrb[0].mxu0
      %v5768 = vadd.f32 0.0, %v5767
      %v5769 = vpop.f32.mrb[0].mxu0
      %5770 = vmatprep.mubr.f32.mxu0 0.0
      %5771 = vmatmul.mubr.f32.gmra.mrb[0].mxu0 %v5579
      %v5772 = vpop.f32.mrb[0].mxu0
      %v5773 = vadd.f32 0.0, %v5772
      %v5774 = vpop.f32.mrb[0].mxu0
      %5775 = vmatprep.mubr.f32.mxu0 0.0
      %5776 = vmatmul.mubr.f32.gmra.mrb[0].mxu0 %v5582
      %v5777 = vpop.f32.mrb[0].mxu0
      %v5778 = vadd.f32 0.0, %v5777
      %v5779 = vpop.f32.mrb[0].mxu0
      %5780 = vmatprep.mubr.f32.mxu0 0.0
      %5781 = vmatmul.mubr.f32.gmra.mrb[0].mxu0 %v5585
      %v5782 = vpop.f32.mrb[0].mxu0
      %v5783 = vadd.f32 0.0, %v5782
      %v5784 = vpop.f32.mrb[0].mxu0
      %5785 = vmatprep.mubr.f32.mxu0 0.0
      %5786 = vmatmul.mubr.f32.gmra.mrb[0].mxu0 %v5588
      %v5787 = vpop.f32.mrb[0].mxu0
      %v5788 = vadd.f32 0.0, %v5787
      %v5789 = vpop.f32.mrb[0].mxu0
      %5790 = vmatprep.mubr.f32.mxu0 0.0
      %5791 = vmatmul.mubr.f32.gmra.mrb[0].mxu0 %v5591
      %v5792 = vpop.f32.mrb[0].mxu0
      %v5793 = vadd.f32 0.0, %v5792
      %v5794 = vpop.f32.mrb[0].mxu0
      %5795 = vmatprep.mubr.f32.mxu0 0.0
      %5796 = vmatmul.mubr.f32.gmra.mrb[0].mxu0 %v5594
      %v5797 = vpop.f32.mrb[0].mxu0
      %v5798 = vadd.f32 0.0, %v5797
      %v5799 = vpop.f32.mrb[0].mxu0
      %5800 = vmatprep.mubr.f32.mxu0 0.0
      %5801 = vmatmul.mubr.f32.gmra.mrb[0].mxu0 %v5597
      %v5802 = vpop.f32.mrb[0].mxu0
      %v5803 = vadd.f32 0.0, %v5802
      %v5804 = vpop.f32.mrb[0].mxu0
      %5805 = vmatprep.mubr.f32.mxu0 0.0
      %5806 = vmatmul.mubr.f32.gmra.mrb[0].mxu0 %v5600
      %v5807 = vpop.f32.mrb[0].mxu0
      %v5808 = vadd.f32 0.0, %v5807
      %v5809 = vpop.f32.mrb[0].mxu0
      %5810 = vmatprep.mubr.f32.mxu0 0.0
      %5811 = vmatmul.mubr.f32.gmra.mrb[0].mxu0 %v5603
      %v5812 = vpop.f32.mrb[0].mxu0
      %v5813 = vadd.f32 0.0, %v5812
      %v5814 = vpop.f32.mrb[0].mxu0
      %5815 = vmatprep.mubr.f32.mxu0 0.0
      %5816 = vmatmul.mubr.f32.gmra.mrb[0].mxu0 %v5606
      %v5817 = vpop.f32.mrb[0].mxu0
      %v5818 = vadd.f32 0.0, %v5817
      %v5819 = vpop.f32.mrb[0].mxu0
      %5820 = vmatprep.mubr.f32.mxu0 0.0
      %5821 = vmatmul.mubr.f32.gmra.mrb[0].mxu0 %v5609
      %v5822 = vpop.f32.mrb[0].mxu0
      %v5823 = vadd.f32 0.0, %v5822
      %v5824 = vpop.f32.mrb[0].mxu0
      %5825 = vmatprep.mubr.f32.mxu0 0.0
      %5826 = vmatmul.mubr.f32.gmra.mrb[0].mxu0 %v5612
      %v5827 = vpop.f32.mrb[0].mxu0
      %v5828 = vadd.f32 0.0, %v5827
      %v5829 = vpop.f32.mrb[0].mxu0
      %5830 = vmatprep.mubr.f32.mxu0 0.0
      %5831 = vmatmul.mubr.f32.gmra.mrb[0].mxu0 %v5615
      %v5832 = vpop.f32.mrb[0].mxu0
      %v5833 = vadd.f32 0.0, %v5832
      %v5834 = vpop.f32.mrb[0].mxu0
      %5835 = vmatprep.mubr.f32.mxu0 0.0
      %5836 = vmatmul.mubr.f32.gmra.mrb[0].mxu0 %v5618
      %v5837 = vpop.f32.mrb[0].mxu0
      %v5838 = vadd.f32 0.0, %v5837
      %v5839 = vpop.f32.mrb[0].mxu0
      %5840 = vmatprep.mubr.f32.mxu0 0.0
      %5841 = vmatmul.mubr.f32.gmra.mrb[0].mxu0 %v5621
      %v5842 = vpop.f32.mrb[0].mxu0
      %v5843 = vadd.f32 0.0, %v5842
      %v5844 = vpop.f32.mrb[0].mxu0
      %5845 = vmatprep.mubr.f32.mxu0 0.0
      %5846 = vmatmul.mubr.f32.gmra.mrb[0].mxu0 %v5624
      %v5847 = vpop.f32.mrb[0].mxu0
      %v5848 = vadd.f32 0.0, %v5847
      %v5849 = vpop.f32.mrb[0].mxu0
      %5850 = vdwg.mxu0
      %v5851 = vadd.f32 %v5466, %v5693
      %v5852 = vadd.f32 %v5467, %v5698
      %v5853 = vadd.f32 %v5468, %v5703
      %v5854 = vadd.f32 %v5469, %v5708
      %v5855 = vadd.f32 %v5470, %v5713
      %v5856 = vadd.f32 %v5471, %v5718
      %v5857 = vadd.f32 %v5472, %v5723
      %v5858 = vadd.f32 %v5473, %v5728
      %v5859 = vadd.f32 %v5474, %v5733
      %v5860 = vadd.f32 %v5475, %v5738
      %v5861 = vadd.f32 %v5476, %v5743
      %v5862 = vadd.f32 %v5477, %v5748
      %v5863 = vadd.f32 %v5478, %v5753
      %v5864 = vadd.f32 %v5479, %v5758
      %v5865 = vadd.f32 %v5480, %v5763
      %v5866 = vadd.f32 %v5481, %v5768
      %v5867 = vadd.f32 %v5482, %v5773
      %v5868 = vadd.f32 %v5483, %v5778
      %v5869 = vadd.f32 %v5484, %v5783
      %v5870 = vadd.f32 %v5485, %v5788
      %v5871 = vadd.f32 %v5486, %v5793
      %v5872 = vadd.f32 %v5487, %v5798
      %v5873 = vadd.f32 %v5488, %v5803
      %v5874 = vadd.f32 %v5489, %v5808
      %v5875 = vadd.f32 %v5490, %v5813
      %v5876 = vadd.f32 %v5491, %v5818
      %v5877 = vadd.f32 %v5492, %v5823
      %v5878 = vadd.f32 %v5493, %v5828
      %v5879 = vadd.f32 %v5494, %v5833
      %v5880 = vadd.f32 %v5495, %v5838
      %v5881 = vadd.f32 %v5496, %v5843
      %v5882 = vadd.f32 %v5497, %v5848
      %v5883 = vld [vmem:[%s3980 + $0x2] sm:$0xff]
      %v5884 = vld [vmem:[%s3980 + $0xa] sm:$0xff]
      %v5885 = vld [vmem:[%s3980 + $0x1a] sm:$0xff]
      %v5886 = vld [vmem:[%s3980 + $0x22] sm:$0xff]
      %v5887 = vld [vmem:[%s3980 + $0x32] sm:$0xff]
      %v5888 = vld [vmem:[%s3980 + $0x3a] sm:$0xff]
      %v5889 = vld [vmem:[%s3980 + $0x4a] sm:$0xff]
      %v5890 = vld [vmem:[%s3980 + $0x52] sm:$0xff]
      %v5891 = vld [vmem:[%s3980 + $0x62] sm:$0xff]
      %v5892 = vld [vmem:[%s3980 + $0x6a] sm:$0xff]
      %v5893 = vld [vmem:[%s3980 + $0x7a] sm:$0xff]
      %v5894 = vld [vmem:[%s3980 + $0x82] sm:$0xff]
      %v5895 = vld [vmem:[%s3980 + $0x92] sm:$0xff]
      %v5896 = vld [vmem:[%s3980 + $0x9a] sm:$0xff]
      %v5897 = vld [vmem:[%s3980 + $0xaa] sm:$0xff]
      %v5898 = vld [vmem:[%s3980 + $0xb2] sm:$0xff]
      %v5899 = vld [vmem:[%s3980 + $0xc2] sm:$0xff]
      %v5900 = vld [vmem:[%s3980 + $0xca] sm:$0xff]
      %v5901 = vld [vmem:[%s3980 + $0xda] sm:$0xff]
      %v5902 = vld [vmem:[%s3980 + $0xe2] sm:$0xff]
      %v5903 = vld [vmem:[%s3980 + $0xf2] sm:$0xff]
      %v5904 = vld [vmem:[%s3980 + $0xfa] sm:$0xff]
      %v5905 = vld [vmem:[%s3980 + $0x10a] sm:$0xff]
      %v5906 = vld [vmem:[%s3980 + $0x112] sm:$0xff]
      %v5907 = vld [vmem:[%s3980 + $0x122] sm:$0xff]
      %v5908 = vld [vmem:[%s3980 + $0x12a] sm:$0xff]
      %v5909 = vld [vmem:[%s3980 + $0x13a] sm:$0xff]
      %v5910 = vld [vmem:[%s3980 + $0x142] sm:$0xff]
      %v5911 = vld [vmem:[%s3980 + $0x152] sm:$0xff]
      %v5912 = vld [vmem:[%s3980 + $0x15a] sm:$0xff]
      %v5913 = vld [vmem:[%s3980 + $0x16a] sm:$0xff]
      %v5914 = vld [vmem:[%s3980 + $0x172] sm:$0xff]
      %v5916 = vsel %vm3924, %v5883, 0
      %v5919 = vsel %vm3924, %v5884, 0
      %v5922 = vsel %vm3924, %v5885, 0
      %v5925 = vsel %vm3924, %v5886, 0
      %v5928 = vsel %vm3924, %v5887, 0
      %v5931 = vsel %vm3924, %v5888, 0
      %v5934 = vsel %vm3924, %v5889, 0
      %v5937 = vsel %vm3924, %v5890, 0
      %v5940 = vsel %vm3924, %v5891, 0
      %v5943 = vsel %vm3924, %v5892, 0
      %v5946 = vsel %vm3924, %v5893, 0
      %v5949 = vsel %vm3924, %v5894, 0
      %v5952 = vsel %vm3924, %v5895, 0
      %v5955 = vsel %vm3924, %v5896, 0
      %v5958 = vsel %vm3924, %v5897, 0
      %v5961 = vsel %vm3924, %v5898, 0
      %v5964 = vsel %vm3924, %v5899, 0
      %v5967 = vsel %vm3924, %v5900, 0
      %v5970 = vsel %vm3924, %v5901, 0
      %v5973 = vsel %vm3924, %v5902, 0
      %v5976 = vsel %vm3924, %v5903, 0
      %v5979 = vsel %vm3924, %v5904, 0
      %v5982 = vsel %vm3924, %v5905, 0
      %v5985 = vsel %vm3924, %v5906, 0
      %v5988 = vsel %vm3924, %v5907, 0
      %v5991 = vsel %vm3924, %v5908, 0
      %v5994 = vsel %vm3924, %v5909, 0
      %v5997 = vsel %vm3924, %v5910, 0
      %v6000 = vsel %vm3924, %v5911, 0
      %v6003 = vsel %vm3924, %v5912, 0
      %v6006 = vsel %vm3924, %v5913, 0
      %v6009 = vsel %vm3924, %v5914, 0
      %6011 = vmatprep.subr.mxu0 0.0
      %6012 = vmatpush1.msra.mxu0 %v4018
      %6013 = vmatprep.subr.mxu0 0.0
      %6014 = vmatpush1.msra.mxu0 0.0
      %6015 = vmatprep.subr.mxu0 0.0
      %6016 = vmatpush1.msra.mxu0 0.0
      %6017 = vmatprep.subr.mxu0 0.0
      %6018 = vmatpush1.msra.mxu0 0.0
      %6019 = vmatprep.subr.mxu0 0.0
      %6020 = vmatpush1.msra.mxu0 0.0
      %6021 = vmatprep.subr.mxu0 0.0
      %6022 = vmatpush1.msra.mxu0 0.0
      %6023 = vmatprep.subr.mxu0 0.0
      %6024 = vmatpush1.msra.mxu0 0.0
      %6025 = vmatprep.subr.mxu0 0.0
      %6026 = vmatpush1.msra.mxu0 0.0
      %6027 = vmatprep.subr.mxu0 0.0
      %6028 = vmatpush1.msra.mxu0 0.0
      %6029 = vmatprep.subr.mxu0 0.0
      %6030 = vmatpush1.msra.mxu0 0.0
      %6031 = vmatprep.subr.mxu0 0.0
      %6032 = vmatpush1.msra.mxu0 0.0
      %6033 = vmatprep.subr.mxu0 0.0
      %6034 = vmatpush1.msra.mxu0 0.0
      %6035 = vmatprep.subr.mxu0 0.0
      %6036 = vmatpush1.msra.mxu0 0.0
      %6037 = vmatprep.subr.mxu0 0.0
      %6038 = vmatpush1.msra.mxu0 0.0
      %6039 = vmatprep.subr.mxu0 0.0
      %6040 = vmatpush1.msra.mxu0 0.0
      %6041 = vmatprep.subr.mxu0 0.0
      %6042 = vmatpush1.msra.mxu0 0.0
      %6043 = vmatprep.subr.mxu0 0.0
      %6044 = vmatpush1.msra.mxu0 0.0
      %6045 = vmatprep.subr.mxu0 0.0
      %6046 = vmatpush1.msra.mxu0 0.0
      %6047 = vmatprep.subr.mxu0 0.0
      %6048 = vmatpush1.msra.mxu0 0.0
      %6049 = vmatprep.subr.mxu0 0.0
      %6050 = vmatpush1.msra.mxu0 0.0
      %6051 = vmatprep.subr.mxu0 0.0
      %6052 = vmatpush1.msra.mxu0 0.0
      %6053 = vmatprep.subr.mxu0 0.0
      %6054 = vmatpush1.msra.mxu0 0.0
      %6055 = vmatprep.subr.mxu0 0.0
      %6056 = vmatpush1.msra.mxu0 0.0
      %6057 = vmatprep.subr.mxu0 0.0
      %6058 = vmatpush1.msra.mxu0 0.0
      %6059 = vmatprep.subr.mxu0 0.0
      %6060 = vmatpush1.msra.mxu0 0.0
      %6061 = vmatprep.subr.mxu0 0.0
      %6062 = vmatpush1.msra.mxu0 0.0
      %6063 = vmatprep.subr.mxu0 0.0
      %6064 = vmatpush1.msra.mxu0 0.0
      %6065 = vmatprep.subr.mxu0 0.0
      %6066 = vmatpush1.msra.mxu0 0.0
      %6067 = vmatprep.subr.mxu0 0.0
      %6068 = vmatpush1.msra.mxu0 0.0
      %6069 = vmatprep.subr.mxu0 0.0
      %6070 = vmatpush1.msra.mxu0 0.0
      %6071 = vmatprep.subr.mxu0 0.0
      %6072 = vmatpush1.msra.mxu0 0.0
      %6073 = vmatprep.subr.mxu0 0.0
      %6074 = vmatpush1.msra.mxu0 0.0
      %6075 = vmatprep.mubr.f32.mxu0 0.0
      %6076 = vmatmul.mubr.f32.gmra.mrb[0].mxu0 %v5916
      %v6077 = vpop.f32.mrb[0].mxu0
      %v6078 = vadd.f32 0.0, %v6077
      %v6079 = vpop.f32.mrb[0].mxu0
      %6080 = vmatprep.mubr.f32.mxu0 0.0
      %6081 = vmatmul.mubr.f32.gmra.mrb[0].mxu0 %v5919
      %v6082 = vpop.f32.mrb[0].mxu0
      %v6083 = vadd.f32 0.0, %v6082
      %v6084 = vpop.f32.mrb[0].mxu0
      %6085 = vmatprep.mubr.f32.mxu0 0.0
      %6086 = vmatmul.mubr.f32.gmra.mrb[0].mxu0 %v5922
      %v6087 = vpop.f32.mrb[0].mxu0
      %v6088 = vadd.f32 0.0, %v6087
      %v6089 = vpop.f32.mrb[0].mxu0
      %6090 = vmatprep.mubr.f32.mxu0 0.0
      %6091 = vmatmul.mubr.f32.gmra.mrb[0].mxu0 %v5925
      %v6092 = vpop.f32.mrb[0].mxu0
      %v6093 = vadd.f32 0.0, %v6092
      %v6094 = vpop.f32.mrb[0].mxu0
      %6095 = vmatprep.mubr.f32.mxu0 0.0
      %6096 = vmatmul.mubr.f32.gmra.mrb[0].mxu0 %v5928
      %v6097 = vpop.f32.mrb[0].mxu0
      %v6098 = vadd.f32 0.0, %v6097
      %v6099 = vpop.f32.mrb[0].mxu0
      %6100 = vmatprep.mubr.f32.mxu0 0.0
      %6101 = vmatmul.mubr.f32.gmra.mrb[0].mxu0 %v5931
      %v6102 = vpop.f32.mrb[0].mxu0
      %v6103 = vadd.f32 0.0, %v6102
      %v6104 = vpop.f32.mrb[0].mxu0
      %6105 = vmatprep.mubr.f32.mxu0 0.0
      %6106 = vmatmul.mubr.f32.gmra.mrb[0].mxu0 %v5934
      %v6107 = vpop.f32.mrb[0].mxu0
      %v6108 = vadd.f32 0.0, %v6107
      %v6109 = vpop.f32.mrb[0].mxu0
      %6110 = vmatprep.mubr.f32.mxu0 0.0
      %6111 = vmatmul.mubr.f32.gmra.mrb[0].mxu0 %v5937
      %v6112 = vpop.f32.mrb[0].mxu0
      %v6113 = vadd.f32 0.0, %v6112
      %v6114 = vpop.f32.mrb[0].mxu0
      %6115 = vmatprep.mubr.f32.mxu0 0.0
      %6116 = vmatmul.mubr.f32.gmra.mrb[0].mxu0 %v5940
      %v6117 = vpop.f32.mrb[0].mxu0
      %v6118 = vadd.f32 0.0, %v6117
      %v6119 = vpop.f32.mrb[0].mxu0
      %6120 = vmatprep.mubr.f32.mxu0 0.0
      %6121 = vmatmul.mubr.f32.gmra.mrb[0].mxu0 %v5943
      %v6122 = vpop.f32.mrb[0].mxu0
      %v6123 = vadd.f32 0.0, %v6122
      %v6124 = vpop.f32.mrb[0].mxu0
      %6125 = vmatprep.mubr.f32.mxu0 0.0
      %6126 = vmatmul.mubr.f32.gmra.mrb[0].mxu0 %v5946
      %v6127 = vpop.f32.mrb[0].mxu0
      %v6128 = vadd.f32 0.0, %v6127
      %v6129 = vpop.f32.mrb[0].mxu0
      %6130 = vmatprep.mubr.f32.mxu0 0.0
      %6131 = vmatmul.mubr.f32.gmra.mrb[0].mxu0 %v5949
      %v6132 = vpop.f32.mrb[0].mxu0
      %v6133 = vadd.f32 0.0, %v6132
      %v6134 = vpop.f32.mrb[0].mxu0
      %6135 = vmatprep.mubr.f32.mxu0 0.0
      %6136 = vmatmul.mubr.f32.gmra.mrb[0].mxu0 %v5952
      %v6137 = vpop.f32.mrb[0].mxu0
      %v6138 = vadd.f32 0.0, %v6137
      %v6139 = vpop.f32.mrb[0].mxu0
      %6140 = vmatprep.mubr.f32.mxu0 0.0
      %6141 = vmatmul.mubr.f32.gmra.mrb[0].mxu0 %v5955
      %v6142 = vpop.f32.mrb[0].mxu0
      %v6143 = vadd.f32 0.0, %v6142
      %v6144 = vpop.f32.mrb[0].mxu0
      %6145 = vmatprep.mubr.f32.mxu0 0.0
      %6146 = vmatmul.mubr.f32.gmra.mrb[0].mxu0 %v5958
      %v6147 = vpop.f32.mrb[0].mxu0
      %v6148 = vadd.f32 0.0, %v6147
      %v6149 = vpop.f32.mrb[0].mxu0
      %6150 = vmatprep.mubr.f32.mxu0 0.0
      %6151 = vmatmul.mubr.f32.gmra.mrb[0].mxu0 %v5961
      %v6152 = vpop.f32.mrb[0].mxu0
      %v6153 = vadd.f32 0.0, %v6152
      %v6154 = vpop.f32.mrb[0].mxu0
      %6155 = vmatprep.mubr.f32.mxu0 0.0
      %6156 = vmatmul.mubr.f32.gmra.mrb[0].mxu0 %v5964
      %v6157 = vpop.f32.mrb[0].mxu0
      %v6158 = vadd.f32 0.0, %v6157
      %v6159 = vpop.f32.mrb[0].mxu0
      %6160 = vmatprep.mubr.f32.mxu0 0.0
      %6161 = vmatmul.mubr.f32.gmra.mrb[0].mxu0 %v5967
      %v6162 = vpop.f32.mrb[0].mxu0
      %v6163 = vadd.f32 0.0, %v6162
      %v6164 = vpop.f32.mrb[0].mxu0
      %6165 = vmatprep.mubr.f32.mxu0 0.0
      %6166 = vmatmul.mubr.f32.gmra.mrb[0].mxu0 %v5970
      %v6167 = vpop.f32.mrb[0].mxu0
      %v6168 = vadd.f32 0.0, %v6167
      %v6169 = vpop.f32.mrb[0].mxu0
      %6170 = vmatprep.mubr.f32.mxu0 0.0
      %6171 = vmatmul.mubr.f32.gmra.mrb[0].mxu0 %v5973
      %v6172 = vpop.f32.mrb[0].mxu0
      %v6173 = vadd.f32 0.0, %v6172
      %v6174 = vpop.f32.mrb[0].mxu0
      %6175 = vmatprep.mubr.f32.mxu0 0.0
      %6176 = vmatmul.mubr.f32.gmra.mrb[0].mxu0 %v5976
      %v6177 = vpop.f32.mrb[0].mxu0
      %v6178 = vadd.f32 0.0, %v6177
      %v6179 = vpop.f32.mrb[0].mxu0
      %6180 = vmatprep.mubr.f32.mxu0 0.0
      %6181 = vmatmul.mubr.f32.gmra.mrb[0].mxu0 %v5979
      %v6182 = vpop.f32.mrb[0].mxu0
      %v6183 = vadd.f32 0.0, %v6182
      %v6184 = vpop.f32.mrb[0].mxu0
      %6185 = vmatprep.mubr.f32.mxu0 0.0
      %6186 = vmatmul.mubr.f32.gmra.mrb[0].mxu0 %v5982
      %v6187 = vpop.f32.mrb[0].mxu0
      %v6188 = vadd.f32 0.0, %v6187
      %v6189 = vpop.f32.mrb[0].mxu0
      %6190 = vmatprep.mubr.f32.mxu0 0.0
      %6191 = vmatmul.mubr.f32.gmra.mrb[0].mxu0 %v5985
      %v6192 = vpop.f32.mrb[0].mxu0
      %v6193 = vadd.f32 0.0, %v6192
      %v6194 = vpop.f32.mrb[0].mxu0
      %6195 = vmatprep.mubr.f32.mxu0 0.0
      %6196 = vmatmul.mubr.f32.gmra.mrb[0].mxu0 %v5988
      %v6197 = vpop.f32.mrb[0].mxu0
      %v6198 = vadd.f32 0.0, %v6197
      %v6199 = vpop.f32.mrb[0].mxu0
      %6200 = vmatprep.mubr.f32.mxu0 0.0
      %6201 = vmatmul.mubr.f32.gmra.mrb[0].mxu0 %v5991
      %v6202 = vpop.f32.mrb[0].mxu0
      %v6203 = vadd.f32 0.0, %v6202
      %v6204 = vpop.f32.mrb[0].mxu0
      %6205 = vmatprep.mubr.f32.mxu0 0.0
      %6206 = vmatmul.mubr.f32.gmra.mrb[0].mxu0 %v5994
      %v6207 = vpop.f32.mrb[0].mxu0
      %v6208 = vadd.f32 0.0, %v6207
      %v6209 = vpop.f32.mrb[0].mxu0
      %6210 = vmatprep.mubr.f32.mxu0 0.0
      %6211 = vmatmul.mubr.f32.gmra.mrb[0].mxu0 %v5997
      %v6212 = vpop.f32.mrb[0].mxu0
      %v6213 = vadd.f32 0.0, %v6212
      %v6214 = vpop.f32.mrb[0].mxu0
      %6215 = vmatprep.mubr.f32.mxu0 0.0
      %6216 = vmatmul.mubr.f32.gmra.mrb[0].mxu0 %v6000
      %v6217 = vpop.f32.mrb[0].mxu0
      %v6218 = vadd.f32 0.0, %v6217
      %v6219 = vpop.f32.mrb[0].mxu0
      %6220 = vmatprep.mubr.f32.mxu0 0.0
      %6221 = vmatmul.mubr.f32.gmra.mrb[0].mxu0 %v6003
      %v6222 = vpop.f32.mrb[0].mxu0
      %v6223 = vadd.f32 0.0, %v6222
      %v6224 = vpop.f32.mrb[0].mxu0
      %6225 = vmatprep.mubr.f32.mxu0 0.0
      %6226 = vmatmul.mubr.f32.gmra.mrb[0].mxu0 %v6006
      %v6227 = vpop.f32.mrb[0].mxu0
      %v6228 = vadd.f32 0.0, %v6227
      %v6229 = vpop.f32.mrb[0].mxu0
      %6230 = vmatprep.mubr.f32.mxu0 0.0
      %6231 = vmatmul.mubr.f32.gmra.mrb[0].mxu0 %v6009
      %v6232 = vpop.f32.mrb[0].mxu0
      %v6233 = vadd.f32 0.0, %v6232
      %v6234 = vpop.f32.mrb[0].mxu0
      %6235 = vdwg.mxu0
      %v6236 = vadd.f32 %v5851, %v6078
      %v6237 = vadd.f32 %v5852, %v6083
      %v6238 = vadd.f32 %v5853, %v6088
      %v6239 = vadd.f32 %v5854, %v6093
      %v6240 = vadd.f32 %v5855, %v6098
      %v6241 = vadd.f32 %v5856, %v6103
      %v6242 = vadd.f32 %v5857, %v6108
      %v6243 = vadd.f32 %v5858, %v6113
      %v6244 = vadd.f32 %v5859, %v6118
      %v6245 = vadd.f32 %v5860, %v6123
      %v6246 = vadd.f32 %v5861, %v6128
      %v6247 = vadd.f32 %v5862, %v6133
      %v6248 = vadd.f32 %v5863, %v6138
      %v6249 = vadd.f32 %v5864, %v6143
      %v6250 = vadd.f32 %v5865, %v6148
      %v6251 = vadd.f32 %v5866, %v6153
      %v6252 = vadd.f32 %v5867, %v6158
      %v6253 = vadd.f32 %v5868, %v6163
      %v6254 = vadd.f32 %v5869, %v6168
      %v6255 = vadd.f32 %v5870, %v6173
      %v6256 = vadd.f32 %v5871, %v6178
      %v6257 = vadd.f32 %v5872, %v6183
      %v6258 = vadd.f32 %v5873, %v6188
      %v6259 = vadd.f32 %v5874, %v6193
      %v6260 = vadd.f32 %v5875, %v6198
      %v6261 = vadd.f32 %v5876, %v6203
      %v6262 = vadd.f32 %v5877, %v6208
      %v6263 = vadd.f32 %v5878, %v6213
      %v6264 = vadd.f32 %v5879, %v6218
      %v6265 = vadd.f32 %v5880, %v6223
      %v6266 = vadd.f32 %v5881, %v6228
      %v6267 = vadd.f32 %v5882, %v6233
      %s6268 = scalar_lea.vmem [#allocation3], 48
      %v6269 = vld [vmem:[%s6268] sm:$0xff]
      %v6270 = vld [vmem:[%s6268 + $0x8] sm:$0xff]
      %v6271 = vld [vmem:[%s6268 + $0x18] sm:$0xff]
      %v6272 = vld [vmem:[%s6268 + $0x20] sm:$0xff]
      %v6273 = vld [vmem:[%s6268 + $0x30] sm:$0xff]
      %v6274 = vld [vmem:[%s6268 + $0x38] sm:$0xff]
      %v6275 = vld [vmem:[%s6268 + $0x48] sm:$0xff]
      %v6276 = vld [vmem:[%s6268 + $0x50] sm:$0xff]
      %v6277 = vld [vmem:[%s6268 + $0x60] sm:$0xff]
      %v6278 = vld [vmem:[%s6268 + $0x68] sm:$0xff]
      %v6279 = vld [vmem:[%s6268 + $0x78] sm:$0xff]
      %v6280 = vld [vmem:[%s6268 + $0x80] sm:$0xff]
      %v6281 = vld [vmem:[%s6268 + $0x90] sm:$0xff]
      %v6282 = vld [vmem:[%s6268 + $0x98] sm:$0xff]
      %v6283 = vld [vmem:[%s6268 + $0xa8] sm:$0xff]
      %v6284 = vld [vmem:[%s6268 + $0xb0] sm:$0xff]
      %v6285 = vld [vmem:[%s6268 + $0xc0] sm:$0xff]
      %v6286 = vld [vmem:[%s6268 + $0xc8] sm:$0xff]
      %v6287 = vld [vmem:[%s6268 + $0xd8] sm:$0xff]
      %v6288 = vld [vmem:[%s6268 + $0xe0] sm:$0xff]
      %v6289 = vld [vmem:[%s6268 + $0xf0] sm:$0xff]
      %v6290 = vld [vmem:[%s6268 + $0xf8] sm:$0xff]
      %v6291 = vld [vmem:[%s6268 + $0x108] sm:$0xff]
      %v6292 = vld [vmem:[%s6268 + $0x110] sm:$0xff]
      %v6293 = vld [vmem:[%s6268 + $0x120] sm:$0xff]
      %v6294 = vld [vmem:[%s6268 + $0x128] sm:$0xff]
      %v6295 = vld [vmem:[%s6268 + $0x138] sm:$0xff]
      %v6296 = vld [vmem:[%s6268 + $0x140] sm:$0xff]
      %v6297 = vld [vmem:[%s6268 + $0x150] sm:$0xff]
      %v6298 = vld [vmem:[%s6268 + $0x158] sm:$0xff]
      %v6299 = vld [vmem:[%s6268 + $0x168] sm:$0xff]
      %v6300 = vld [vmem:[%s6268 + $0x170] sm:$0xff]
      %v6302 = vsel %vm3924, %v6269, 0
      %v6305 = vsel %vm3924, %v6270, 0
      %v6308 = vsel %vm3924, %v6271, 0
      %v6311 = vsel %vm3924, %v6272, 0
      %v6314 = vsel %vm3924, %v6273, 0
      %v6317 = vsel %vm3924, %v6274, 0
      %v6320 = vsel %vm3924, %v6275, 0
      %v6323 = vsel %vm3924, %v6276, 0
      %v6326 = vsel %vm3924, %v6277, 0
      %v6329 = vsel %vm3924, %v6278, 0
      %v6332 = vsel %vm3924, %v6279, 0
      %v6335 = vsel %vm3924, %v6280, 0
      %v6338 = vsel %vm3924, %v6281, 0
      %v6341 = vsel %vm3924, %v6282, 0
      %v6344 = vsel %vm3924, %v6283, 0
      %v6347 = vsel %vm3924, %v6284, 0
      %v6350 = vsel %vm3924, %v6285, 0
      %v6353 = vsel %vm3924, %v6286, 0
      %v6356 = vsel %vm3924, %v6287, 0
      %v6359 = vsel %vm3924, %v6288, 0
      %v6362 = vsel %vm3924, %v6289, 0
      %v6365 = vsel %vm3924, %v6290, 0
      %v6368 = vsel %vm3924, %v6291, 0
      %v6371 = vsel %vm3924, %v6292, 0
      %v6374 = vsel %vm3924, %v6293, 0
      %v6377 = vsel %vm3924, %v6294, 0
      %v6380 = vsel %vm3924, %v6295, 0
      %v6383 = vsel %vm3924, %v6296, 0
      %v6386 = vsel %vm3924, %v6297, 0
      %v6389 = vsel %vm3924, %v6298, 0
      %v6392 = vsel %vm3924, %v6299, 0
      %v6395 = vsel %vm3924, %v6300, 0
      %6397 = vmatprep.subr.mxu0 0.0
      %6398 = vmatpush1.msra.mxu0 %v4019
      %6399 = vmatprep.subr.mxu0 0.0
      %6400 = vmatpush1.msra.mxu0 0.0
      %6401 = vmatprep.subr.mxu0 0.0
      %6402 = vmatpush1.msra.mxu0 0.0
      %6403 = vmatprep.subr.mxu0 0.0
      %6404 = vmatpush1.msra.mxu0 0.0
      %6405 = vmatprep.subr.mxu0 0.0
      %6406 = vmatpush1.msra.mxu0 0.0
      %6407 = vmatprep.subr.mxu0 0.0
      %6408 = vmatpush1.msra.mxu0 0.0
      %6409 = vmatprep.subr.mxu0 0.0
      %6410 = vmatpush1.msra.mxu0 0.0
      %6411 = vmatprep.subr.mxu0 0.0
      %6412 = vmatpush1.msra.mxu0 0.0
      %6413 = vmatprep.subr.mxu0 0.0
      %6414 = vmatpush1.msra.mxu0 0.0
      %6415 = vmatprep.subr.mxu0 0.0
      %6416 = vmatpush1.msra.mxu0 0.0
      %6417 = vmatprep.subr.mxu0 0.0
      %6418 = vmatpush1.msra.mxu0 0.0
      %6419 = vmatprep.subr.mxu0 0.0
      %6420 = vmatpush1.msra.mxu0 0.0
      %6421 = vmatprep.subr.mxu0 0.0
      %6422 = vmatpush1.msra.mxu0 0.0
      %6423 = vmatprep.subr.mxu0 0.0
      %6424 = vmatpush1.msra.mxu0 0.0
      %6425 = vmatprep.subr.mxu0 0.0
      %6426 = vmatpush1.msra.mxu0 0.0
      %6427 = vmatprep.subr.mxu0 0.0
      %6428 = vmatpush1.msra.mxu0 0.0
      %6429 = vmatprep.subr.mxu0 0.0
      %6430 = vmatpush1.msra.mxu0 0.0
      %6431 = vmatprep.subr.mxu0 0.0
      %6432 = vmatpush1.msra.mxu0 0.0
      %6433 = vmatprep.subr.mxu0 0.0
      %6434 = vmatpush1.msra.mxu0 0.0
      %6435 = vmatprep.subr.mxu0 0.0
      %6436 = vmatpush1.msra.mxu0 0.0
      %6437 = vmatprep.subr.mxu0 0.0
      %6438 = vmatpush1.msra.mxu0 0.0
      %6439 = vmatprep.subr.mxu0 0.0
      %6440 = vmatpush1.msra.mxu0 0.0
      %6441 = vmatprep.subr.mxu0 0.0
      %6442 = vmatpush1.msra.mxu0 0.0
      %6443 = vmatprep.subr.mxu0 0.0
      %6444 = vmatpush1.msra.mxu0 0.0
      %6445 = vmatprep.subr.mxu0 0.0
      %6446 = vmatpush1.msra.mxu0 0.0
      %6447 = vmatprep.subr.mxu0 0.0
      %6448 = vmatpush1.msra.mxu0 0.0
      %6449 = vmatprep.subr.mxu0 0.0
      %6450 = vmatpush1.msra.mxu0 0.0
      %6451 = vmatprep.subr.mxu0 0.0
      %6452 = vmatpush1.msra.mxu0 0.0
      %6453 = vmatprep.subr.mxu0 0.0
      %6454 = vmatpush1.msra.mxu0 0.0
      %6455 = vmatprep.subr.mxu0 0.0
      %6456 = vmatpush1.msra.mxu0 0.0
      %6457 = vmatprep.subr.mxu0 0.0
      %6458 = vmatpush1.msra.mxu0 0.0
      %6459 = vmatprep.subr.mxu0 0.0
      %6460 = vmatpush1.msra.mxu0 0.0
      %6461 = vmatprep.mubr.f32.mxu0 0.0
      %6462 = vmatmul.mubr.f32.gmra.mrb[0].mxu0 %v6302
      %v6463 = vpop.f32.mrb[0].mxu0
      %v6464 = vadd.f32 0.0, %v6463
      %v6465 = vpop.f32.mrb[0].mxu0
      %6466 = vmatprep.mubr.f32.mxu0 0.0
      %6467 = vmatmul.mubr.f32.gmra.mrb[0].mxu0 %v6305
      %v6468 = vpop.f32.mrb[0].mxu0
      %v6469 = vadd.f32 0.0, %v6468
      %v6470 = vpop.f32.mrb[0].mxu0
      %6471 = vmatprep.mubr.f32.mxu0 0.0
      %6472 = vmatmul.mubr.f32.gmra.mrb[0].mxu0 %v6308
      %v6473 = vpop.f32.mrb[0].mxu0
      %v6474 = vadd.f32 0.0, %v6473
      %v6475 = vpop.f32.mrb[0].mxu0
      %6476 = vmatprep.mubr.f32.mxu0 0.0
      %6477 = vmatmul.mubr.f32.gmra.mrb[0].mxu0 %v6311
      %v6478 = vpop.f32.mrb[0].mxu0
      %v6479 = vadd.f32 0.0, %v6478
      %v6480 = vpop.f32.mrb[0].mxu0
      %6481 = vmatprep.mubr.f32.mxu0 0.0
      %6482 = vmatmul.mubr.f32.gmra.mrb[0].mxu0 %v6314
      %v6483 = vpop.f32.mrb[0].mxu0
      %v6484 = vadd.f32 0.0, %v6483
      %v6485 = vpop.f32.mrb[0].mxu0
      %6486 = vmatprep.mubr.f32.mxu0 0.0
      %6487 = vmatmul.mubr.f32.gmra.mrb[0].mxu0 %v6317
      %v6488 = vpop.f32.mrb[0].mxu0
      %v6489 = vadd.f32 0.0, %v6488
      %v6490 = vpop.f32.mrb[0].mxu0
      %6491 = vmatprep.mubr.f32.mxu0 0.0
      %6492 = vmatmul.mubr.f32.gmra.mrb[0].mxu0 %v6320
      %v6493 = vpop.f32.mrb[0].mxu0
      %v6494 = vadd.f32 0.0, %v6493
      %v6495 = vpop.f32.mrb[0].mxu0
      %6496 = vmatprep.mubr.f32.mxu0 0.0
      %6497 = vmatmul.mubr.f32.gmra.mrb[0].mxu0 %v6323
      %v6498 = vpop.f32.mrb[0].mxu0
      %v6499 = vadd.f32 0.0, %v6498
      %v6500 = vpop.f32.mrb[0].mxu0
      %6501 = vmatprep.mubr.f32.mxu0 0.0
      %6502 = vmatmul.mubr.f32.gmra.mrb[0].mxu0 %v6326
      %v6503 = vpop.f32.mrb[0].mxu0
      %v6504 = vadd.f32 0.0, %v6503
      %v6505 = vpop.f32.mrb[0].mxu0
      %6506 = vmatprep.mubr.f32.mxu0 0.0
      %6507 = vmatmul.mubr.f32.gmra.mrb[0].mxu0 %v6329
      %v6508 = vpop.f32.mrb[0].mxu0
      %v6509 = vadd.f32 0.0, %v6508
      %v6510 = vpop.f32.mrb[0].mxu0
      %6511 = vmatprep.mubr.f32.mxu0 0.0
      %6512 = vmatmul.mubr.f32.gmra.mrb[0].mxu0 %v6332
      %v6513 = vpop.f32.mrb[0].mxu0
      %v6514 = vadd.f32 0.0, %v6513
      %v6515 = vpop.f32.mrb[0].mxu0
      %6516 = vmatprep.mubr.f32.mxu0 0.0
      %6517 = vmatmul.mubr.f32.gmra.mrb[0].mxu0 %v6335
      %v6518 = vpop.f32.mrb[0].mxu0
      %v6519 = vadd.f32 0.0, %v6518
      %v6520 = vpop.f32.mrb[0].mxu0
      %6521 = vmatprep.mubr.f32.mxu0 0.0
      %6522 = vmatmul.mubr.f32.gmra.mrb[0].mxu0 %v6338
      %v6523 = vpop.f32.mrb[0].mxu0
      %v6524 = vadd.f32 0.0, %v6523
      %v6525 = vpop.f32.mrb[0].mxu0
      %6526 = vmatprep.mubr.f32.mxu0 0.0
      %6527 = vmatmul.mubr.f32.gmra.mrb[0].mxu0 %v6341
      %v6528 = vpop.f32.mrb[0].mxu0
      %v6529 = vadd.f32 0.0, %v6528
      %v6530 = vpop.f32.mrb[0].mxu0
      %6531 = vmatprep.mubr.f32.mxu0 0.0
      %6532 = vmatmul.mubr.f32.gmra.mrb[0].mxu0 %v6344
      %v6533 = vpop.f32.mrb[0].mxu0
      %v6534 = vadd.f32 0.0, %v6533
      %v6535 = vpop.f32.mrb[0].mxu0
      %6536 = vmatprep.mubr.f32.mxu0 0.0
      %6537 = vmatmul.mubr.f32.gmra.mrb[0].mxu0 %v6347
      %v6538 = vpop.f32.mrb[0].mxu0
      %v6539 = vadd.f32 0.0, %v6538
      %v6540 = vpop.f32.mrb[0].mxu0
      %6541 = vmatprep.mubr.f32.mxu0 0.0
      %6542 = vmatmul.mubr.f32.gmra.mrb[0].mxu0 %v6350
      %v6543 = vpop.f32.mrb[0].mxu0
      %v6544 = vadd.f32 0.0, %v6543
      %v6545 = vpop.f32.mrb[0].mxu0
      %6546 = vmatprep.mubr.f32.mxu0 0.0
      %6547 = vmatmul.mubr.f32.gmra.mrb[0].mxu0 %v6353
      %v6548 = vpop.f32.mrb[0].mxu0
      %v6549 = vadd.f32 0.0, %v6548
      %v6550 = vpop.f32.mrb[0].mxu0
      %6551 = vmatprep.mubr.f32.mxu0 0.0
      %6552 = vmatmul.mubr.f32.gmra.mrb[0].mxu0 %v6356
      %v6553 = vpop.f32.mrb[0].mxu0
      %v6554 = vadd.f32 0.0, %v6553
      %v6555 = vpop.f32.mrb[0].mxu0
      %6556 = vmatprep.mubr.f32.mxu0 0.0
      %6557 = vmatmul.mubr.f32.gmra.mrb[0].mxu0 %v6359
      %v6558 = vpop.f32.mrb[0].mxu0
      %v6559 = vadd.f32 0.0, %v6558
      %v6560 = vpop.f32.mrb[0].mxu0
      %6561 = vmatprep.mubr.f32.mxu0 0.0
      %6562 = vmatmul.mubr.f32.gmra.mrb[0].mxu0 %v6362
      %v6563 = vpop.f32.mrb[0].mxu0
      %v6564 = vadd.f32 0.0, %v6563
      %v6565 = vpop.f32.mrb[0].mxu0
      %6566 = vmatprep.mubr.f32.mxu0 0.0
      %6567 = vmatmul.mubr.f32.gmra.mrb[0].mxu0 %v6365
      %v6568 = vpop.f32.mrb[0].mxu0
      %v6569 = vadd.f32 0.0, %v6568
      %v6570 = vpop.f32.mrb[0].mxu0
      %6571 = vmatprep.mubr.f32.mxu0 0.0
      %6572 = vmatmul.mubr.f32.gmra.mrb[0].mxu0 %v6368
      %v6573 = vpop.f32.mrb[0].mxu0
      %v6574 = vadd.f32 0.0, %v6573
      %v6575 = vpop.f32.mrb[0].mxu0
      %6576 = vmatprep.mubr.f32.mxu0 0.0
      %6577 = vmatmul.mubr.f32.gmra.mrb[0].mxu0 %v6371
      %v6578 = vpop.f32.mrb[0].mxu0
      %v6579 = vadd.f32 0.0, %v6578
      %v6580 = vpop.f32.mrb[0].mxu0
      %6581 = vmatprep.mubr.f32.mxu0 0.0
      %6582 = vmatmul.mubr.f32.gmra.mrb[0].mxu0 %v6374
      %v6583 = vpop.f32.mrb[0].mxu0
      %v6584 = vadd.f32 0.0, %v6583
      %v6585 = vpop.f32.mrb[0].mxu0
      %6586 = vmatprep.mubr.f32.mxu0 0.0
      %6587 = vmatmul.mubr.f32.gmra.mrb[0].mxu0 %v6377
      %v6588 = vpop.f32.mrb[0].mxu0
      %v6589 = vadd.f32 0.0, %v6588
      %v6590 = vpop.f32.mrb[0].mxu0
      %6591 = vmatprep.mubr.f32.mxu0 0.0
      %6592 = vmatmul.mubr.f32.gmra.mrb[0].mxu0 %v6380
      %v6593 = vpop.f32.mrb[0].mxu0
      %v6594 = vadd.f32 0.0, %v6593
      %v6595 = vpop.f32.mrb[0].mxu0
      %6596 = vmatprep.mubr.f32.mxu0 0.0
      %6597 = vmatmul.mubr.f32.gmra.mrb[0].mxu0 %v6383
      %v6598 = vpop.f32.mrb[0].mxu0
      %v6599 = vadd.f32 0.0, %v6598
      %v6600 = vpop.f32.mrb[0].mxu0
      %6601 = vmatprep.mubr.f32.mxu0 0.0
      %6602 = vmatmul.mubr.f32.gmra.mrb[0].mxu0 %v6386
      %v6603 = vpop.f32.mrb[0].mxu0
      %v6604 = vadd.f32 0.0, %v6603
      %v6605 = vpop.f32.mrb[0].mxu0
      %6606 = vmatprep.mubr.f32.mxu0 0.0
      %6607 = vmatmul.mubr.f32.gmra.mrb[0].mxu0 %v6389
      %v6608 = vpop.f32.mrb[0].mxu0
      %v6609 = vadd.f32 0.0, %v6608
      %v6610 = vpop.f32.mrb[0].mxu0
      %6611 = vmatprep.mubr.f32.mxu0 0.0
      %6612 = vmatmul.mubr.f32.gmra.mrb[0].mxu0 %v6392
      %v6613 = vpop.f32.mrb[0].mxu0
      %v6614 = vadd.f32 0.0, %v6613
      %v6615 = vpop.f32.mrb[0].mxu0
      %6616 = vmatprep.mubr.f32.mxu0 0.0
      %6617 = vmatmul.mubr.f32.gmra.mrb[0].mxu0 %v6395
      %v6618 = vpop.f32.mrb[0].mxu0
      %v6619 = vadd.f32 0.0, %v6618
      %v6620 = vpop.f32.mrb[0].mxu0
      %6621 = vdwg.mxu0
      %v6622 = vadd.f32 %v6236, %v6464
      %v6623 = vadd.f32 %v6237, %v6469
      %v6624 = vadd.f32 %v6238, %v6474
      %v6625 = vadd.f32 %v6239, %v6479
      %v6626 = vadd.f32 %v6240, %v6484
      %v6627 = vadd.f32 %v6241, %v6489
      %v6628 = vadd.f32 %v6242, %v6494
      %v6629 = vadd.f32 %v6243, %v6499
      %v6630 = vadd.f32 %v6244, %v6504
      %v6631 = vadd.f32 %v6245, %v6509
      %v6632 = vadd.f32 %v6246, %v6514
      %v6633 = vadd.f32 %v6247, %v6519
      %v6634 = vadd.f32 %v6248, %v6524
      %v6635 = vadd.f32 %v6249, %v6529
      %v6636 = vadd.f32 %v6250, %v6534
      %v6637 = vadd.f32 %v6251, %v6539
      %v6638 = vadd.f32 %v6252, %v6544
      %v6639 = vadd.f32 %v6253, %v6549
      %v6640 = vadd.f32 %v6254, %v6554
      %v6641 = vadd.f32 %v6255, %v6559
      %v6642 = vadd.f32 %v6256, %v6564
      %v6643 = vadd.f32 %v6257, %v6569
      %v6644 = vadd.f32 %v6258, %v6574
      %v6645 = vadd.f32 %v6259, %v6579
      %v6646 = vadd.f32 %v6260, %v6584
      %v6647 = vadd.f32 %v6261, %v6589
      %v6648 = vadd.f32 %v6262, %v6594
      %v6649 = vadd.f32 %v6263, %v6599
      %v6650 = vadd.f32 %v6264, %v6604
      %v6651 = vadd.f32 %v6265, %v6609
      %v6652 = vadd.f32 %v6266, %v6614
      %v6653 = vadd.f32 %v6267, %v6619
      %v6654 = vld [vmem:[%s6268 + $0x1] sm:$0xff]
      %v6655 = vld [vmem:[%s6268 + $0x9] sm:$0xff]
      %v6656 = vld [vmem:[%s6268 + $0x19] sm:$0xff]
      %v6657 = vld [vmem:[%s6268 + $0x21] sm:$0xff]
      %v6658 = vld [vmem:[%s6268 + $0x31] sm:$0xff]
      %v6659 = vld [vmem:[%s6268 + $0x39] sm:$0xff]
      %v6660 = vld [vmem:[%s6268 + $0x49] sm:$0xff]
      %v6661 = vld [vmem:[%s6268 + $0x51] sm:$0xff]
      %v6662 = vld [vmem:[%s6268 + $0x61] sm:$0xff]
      %v6663 = vld [vmem:[%s6268 + $0x69] sm:$0xff]
      %v6664 = vld [vmem:[%s6268 + $0x79] sm:$0xff]
      %v6665 = vld [vmem:[%s6268 + $0x81] sm:$0xff]
      %v6666 = vld [vmem:[%s6268 + $0x91] sm:$0xff]
      %v6667 = vld [vmem:[%s6268 + $0x99] sm:$0xff]
      %v6668 = vld [vmem:[%s6268 + $0xa9] sm:$0xff]
      %v6669 = vld [vmem:[%s6268 + $0xb1] sm:$0xff]
      %v6670 = vld [vmem:[%s6268 + $0xc1] sm:$0xff]
      %v6671 = vld [vmem:[%s6268 + $0xc9] sm:$0xff]
      %v6672 = vld [vmem:[%s6268 + $0xd9] sm:$0xff]
      %v6673 = vld [vmem:[%s6268 + $0xe1] sm:$0xff]
      %v6674 = vld [vmem:[%s6268 + $0xf1] sm:$0xff]
      %v6675 = vld [vmem:[%s6268 + $0xf9] sm:$0xff]
      %v6676 = vld [vmem:[%s6268 + $0x109] sm:$0xff]
      %v6677 = vld [vmem:[%s6268 + $0x111] sm:$0xff]
      %v6678 = vld [vmem:[%s6268 + $0x121] sm:$0xff]
      %v6679 = vld [vmem:[%s6268 + $0x129] sm:$0xff]
      %v6680 = vld [vmem:[%s6268 + $0x139] sm:$0xff]
      %v6681 = vld [vmem:[%s6268 + $0x141] sm:$0xff]
      %v6682 = vld [vmem:[%s6268 + $0x151] sm:$0xff]
      %v6683 = vld [vmem:[%s6268 + $0x159] sm:$0xff]
      %v6684 = vld [vmem:[%s6268 + $0x169] sm:$0xff]
      %v6685 = vld [vmem:[%s6268 + $0x171] sm:$0xff]
      %v6687 = vsel %vm3924, %v6654, 0
      %v6690 = vsel %vm3924, %v6655, 0
      %v6693 = vsel %vm3924, %v6656, 0
      %v6696 = vsel %vm3924, %v6657, 0
      %v6699 = vsel %vm3924, %v6658, 0
      %v6702 = vsel %vm3924, %v6659, 0
      %v6705 = vsel %vm3924, %v6660, 0
      %v6708 = vsel %vm3924, %v6661, 0
      %v6711 = vsel %vm3924, %v6662, 0
      %v6714 = vsel %vm3924, %v6663, 0
      %v6717 = vsel %vm3924, %v6664, 0
      %v6720 = vsel %vm3924, %v6665, 0
      %v6723 = vsel %vm3924, %v6666, 0
      %v6726 = vsel %vm3924, %v6667, 0
      %v6729 = vsel %vm3924, %v6668, 0
      %v6732 = vsel %vm3924, %v6669, 0
      %v6735 = vsel %vm3924, %v6670, 0
      %v6738 = vsel %vm3924, %v6671, 0
      %v6741 = vsel %vm3924, %v6672, 0
      %v6744 = vsel %vm3924, %v6673, 0
      %v6747 = vsel %vm3924, %v6674, 0
      %v6750 = vsel %vm3924, %v6675, 0
      %v6753 = vsel %vm3924, %v6676, 0
      %v6756 = vsel %vm3924, %v6677, 0
      %v6759 = vsel %vm3924, %v6678, 0
      %v6762 = vsel %vm3924, %v6679, 0
      %v6765 = vsel %vm3924, %v6680, 0
      %v6768 = vsel %vm3924, %v6681, 0
      %v6771 = vsel %vm3924, %v6682, 0
      %v6774 = vsel %vm3924, %v6683, 0
      %v6777 = vsel %vm3924, %v6684, 0
      %v6780 = vsel %vm3924, %v6685, 0
      %6782 = vmatprep.subr.mxu0 0.0
      %6783 = vmatpush1.msra.mxu0 %v4020
      %6784 = vmatprep.subr.mxu0 0.0
      %6785 = vmatpush1.msra.mxu0 0.0
      %6786 = vmatprep.subr.mxu0 0.0
      %6787 = vmatpush1.msra.mxu0 0.0
      %6788 = vmatprep.subr.mxu0 0.0
      %6789 = vmatpush1.msra.mxu0 0.0
      %6790 = vmatprep.subr.mxu0 0.0
      %6791 = vmatpush1.msra.mxu0 0.0
      %6792 = vmatprep.subr.mxu0 0.0
      %6793 = vmatpush1.msra.mxu0 0.0
      %6794 = vmatprep.subr.mxu0 0.0
      %6795 = vmatpush1.msra.mxu0 0.0
      %6796 = vmatprep.subr.mxu0 0.0
      %6797 = vmatpush1.msra.mxu0 0.0
      %6798 = vmatprep.subr.mxu0 0.0
      %6799 = vmatpush1.msra.mxu0 0.0
      %6800 = vmatprep.subr.mxu0 0.0
      %6801 = vmatpush1.msra.mxu0 0.0
      %6802 = vmatprep.subr.mxu0 0.0
      %6803 = vmatpush1.msra.mxu0 0.0
      %6804 = vmatprep.subr.mxu0 0.0
      %6805 = vmatpush1.msra.mxu0 0.0
      %6806 = vmatprep.subr.mxu0 0.0
      %6807 = vmatpush1.msra.mxu0 0.0
      %6808 = vmatprep.subr.mxu0 0.0
      %6809 = vmatpush1.msra.mxu0 0.0
      %6810 = vmatprep.subr.mxu0 0.0
      %6811 = vmatpush1.msra.mxu0 0.0
      %6812 = vmatprep.subr.mxu0 0.0
      %6813 = vmatpush1.msra.mxu0 0.0
      %6814 = vmatprep.subr.mxu0 0.0
      %6815 = vmatpush1.msra.mxu0 0.0
      %6816 = vmatprep.subr.mxu0 0.0
      %6817 = vmatpush1.msra.mxu0 0.0
      %6818 = vmatprep.subr.mxu0 0.0
      %6819 = vmatpush1.msra.mxu0 0.0
      %6820 = vmatprep.subr.mxu0 0.0
      %6821 = vmatpush1.msra.mxu0 0.0
      %6822 = vmatprep.subr.mxu0 0.0
      %6823 = vmatpush1.msra.mxu0 0.0
      %6824 = vmatprep.subr.mxu0 0.0
      %6825 = vmatpush1.msra.mxu0 0.0
      %6826 = vmatprep.subr.mxu0 0.0
      %6827 = vmatpush1.msra.mxu0 0.0
      %6828 = vmatprep.subr.mxu0 0.0
      %6829 = vmatpush1.msra.mxu0 0.0
      %6830 = vmatprep.subr.mxu0 0.0
      %6831 = vmatpush1.msra.mxu0 0.0
      %6832 = vmatprep.subr.mxu0 0.0
      %6833 = vmatpush1.msra.mxu0 0.0
      %6834 = vmatprep.subr.mxu0 0.0
      %6835 = vmatpush1.msra.mxu0 0.0
      %6836 = vmatprep.subr.mxu0 0.0
      %6837 = vmatpush1.msra.mxu0 0.0
      %6838 = vmatprep.subr.mxu0 0.0
      %6839 = vmatpush1.msra.mxu0 0.0
      %6840 = vmatprep.subr.mxu0 0.0
      %6841 = vmatpush1.msra.mxu0 0.0
      %6842 = vmatprep.subr.mxu0 0.0
      %6843 = vmatpush1.msra.mxu0 0.0
      %6844 = vmatprep.subr.mxu0 0.0
      %6845 = vmatpush1.msra.mxu0 0.0
      %6846 = vmatprep.mubr.f32.mxu0 0.0
      %6847 = vmatmul.mubr.f32.gmra.mrb[0].mxu0 %v6687
      %v6848 = vpop.f32.mrb[0].mxu0
      %v6849 = vadd.f32 0.0, %v6848
      %v6850 = vpop.f32.mrb[0].mxu0
      %6851 = vmatprep.mubr.f32.mxu0 0.0
      %6852 = vmatmul.mubr.f32.gmra.mrb[0].mxu0 %v6690
      %v6853 = vpop.f32.mrb[0].mxu0
      %v6854 = vadd.f32 0.0, %v6853
      %v6855 = vpop.f32.mrb[0].mxu0
      %6856 = vmatprep.mubr.f32.mxu0 0.0
      %6857 = vmatmul.mubr.f32.gmra.mrb[0].mxu0 %v6693
      %v6858 = vpop.f32.mrb[0].mxu0
      %v6859 = vadd.f32 0.0, %v6858
      %v6860 = vpop.f32.mrb[0].mxu0
      %6861 = vmatprep.mubr.f32.mxu0 0.0
      %6862 = vmatmul.mubr.f32.gmra.mrb[0].mxu0 %v6696
      %v6863 = vpop.f32.mrb[0].mxu0
      %v6864 = vadd.f32 0.0, %v6863
      %v6865 = vpop.f32.mrb[0].mxu0
      %6866 = vmatprep.mubr.f32.mxu0 0.0
      %6867 = vmatmul.mubr.f32.gmra.mrb[0].mxu0 %v6699
      %v6868 = vpop.f32.mrb[0].mxu0
      %v6869 = vadd.f32 0.0, %v6868
      %v6870 = vpop.f32.mrb[0].mxu0
      %6871 = vmatprep.mubr.f32.mxu0 0.0
      %6872 = vmatmul.mubr.f32.gmra.mrb[0].mxu0 %v6702
      %v6873 = vpop.f32.mrb[0].mxu0
      %v6874 = vadd.f32 0.0, %v6873
      %v6875 = vpop.f32.mrb[0].mxu0
      %6876 = vmatprep.mubr.f32.mxu0 0.0
      %6877 = vmatmul.mubr.f32.gmra.mrb[0].mxu0 %v6705
      %v6878 = vpop.f32.mrb[0].mxu0
      %v6879 = vadd.f32 0.0, %v6878
      %v6880 = vpop.f32.mrb[0].mxu0
      %6881 = vmatprep.mubr.f32.mxu0 0.0
      %6882 = vmatmul.mubr.f32.gmra.mrb[0].mxu0 %v6708
      %v6883 = vpop.f32.mrb[0].mxu0
      %v6884 = vadd.f32 0.0, %v6883
      %v6885 = vpop.f32.mrb[0].mxu0
      %6886 = vmatprep.mubr.f32.mxu0 0.0
      %6887 = vmatmul.mubr.f32.gmra.mrb[0].mxu0 %v6711
      %v6888 = vpop.f32.mrb[0].mxu0
      %v6889 = vadd.f32 0.0, %v6888
      %v6890 = vpop.f32.mrb[0].mxu0
      %6891 = vmatprep.mubr.f32.mxu0 0.0
      %6892 = vmatmul.mubr.f32.gmra.mrb[0].mxu0 %v6714
      %v6893 = vpop.f32.mrb[0].mxu0
      %v6894 = vadd.f32 0.0, %v6893
      %v6895 = vpop.f32.mrb[0].mxu0
      %6896 = vmatprep.mubr.f32.mxu0 0.0
      %6897 = vmatmul.mubr.f32.gmra.mrb[0].mxu0 %v6717
      %v6898 = vpop.f32.mrb[0].mxu0
      %v6899 = vadd.f32 0.0, %v6898
      %v6900 = vpop.f32.mrb[0].mxu0
      %6901 = vmatprep.mubr.f32.mxu0 0.0
      %6902 = vmatmul.mubr.f32.gmra.mrb[0].mxu0 %v6720
      %v6903 = vpop.f32.mrb[0].mxu0
      %v6904 = vadd.f32 0.0, %v6903
      %v6905 = vpop.f32.mrb[0].mxu0
      %6906 = vmatprep.mubr.f32.mxu0 0.0
      %6907 = vmatmul.mubr.f32.gmra.mrb[0].mxu0 %v6723
      %v6908 = vpop.f32.mrb[0].mxu0
      %v6909 = vadd.f32 0.0, %v6908
      %v6910 = vpop.f32.mrb[0].mxu0
      %6911 = vmatprep.mubr.f32.mxu0 0.0
      %6912 = vmatmul.mubr.f32.gmra.mrb[0].mxu0 %v6726
      %v6913 = vpop.f32.mrb[0].mxu0
      %v6914 = vadd.f32 0.0, %v6913
      %v6915 = vpop.f32.mrb[0].mxu0
      %6916 = vmatprep.mubr.f32.mxu0 0.0
      %6917 = vmatmul.mubr.f32.gmra.mrb[0].mxu0 %v6729
      %v6918 = vpop.f32.mrb[0].mxu0
      %v6919 = vadd.f32 0.0, %v6918
      %v6920 = vpop.f32.mrb[0].mxu0
      %6921 = vmatprep.mubr.f32.mxu0 0.0
      %6922 = vmatmul.mubr.f32.gmra.mrb[0].mxu0 %v6732
      %v6923 = vpop.f32.mrb[0].mxu0
      %v6924 = vadd.f32 0.0, %v6923
      %v6925 = vpop.f32.mrb[0].mxu0
      %6926 = vmatprep.mubr.f32.mxu0 0.0
      %6927 = vmatmul.mubr.f32.gmra.mrb[0].mxu0 %v6735
      %v6928 = vpop.f32.mrb[0].mxu0
      %v6929 = vadd.f32 0.0, %v6928
      %v6930 = vpop.f32.mrb[0].mxu0
      %6931 = vmatprep.mubr.f32.mxu0 0.0
      %6932 = vmatmul.mubr.f32.gmra.mrb[0].mxu0 %v6738
      %v6933 = vpop.f32.mrb[0].mxu0
      %v6934 = vadd.f32 0.0, %v6933
      %v6935 = vpop.f32.mrb[0].mxu0
      %6936 = vmatprep.mubr.f32.mxu0 0.0
      %6937 = vmatmul.mubr.f32.gmra.mrb[0].mxu0 %v6741
      %v6938 = vpop.f32.mrb[0].mxu0
      %v6939 = vadd.f32 0.0, %v6938
      %v6940 = vpop.f32.mrb[0].mxu0
      %6941 = vmatprep.mubr.f32.mxu0 0.0
      %6942 = vmatmul.mubr.f32.gmra.mrb[0].mxu0 %v6744
      %v6943 = vpop.f32.mrb[0].mxu0
      %v6944 = vadd.f32 0.0, %v6943
      %v6945 = vpop.f32.mrb[0].mxu0
      %6946 = vmatprep.mubr.f32.mxu0 0.0
      %6947 = vmatmul.mubr.f32.gmra.mrb[0].mxu0 %v6747
      %v6948 = vpop.f32.mrb[0].mxu0
      %v6949 = vadd.f32 0.0, %v6948
      %v6950 = vpop.f32.mrb[0].mxu0
      %6951 = vmatprep.mubr.f32.mxu0 0.0
      %6952 = vmatmul.mubr.f32.gmra.mrb[0].mxu0 %v6750
      %v6953 = vpop.f32.mrb[0].mxu0
      %v6954 = vadd.f32 0.0, %v6953
      %v6955 = vpop.f32.mrb[0].mxu0
      %6956 = vmatprep.mubr.f32.mxu0 0.0
      %6957 = vmatmul.mubr.f32.gmra.mrb[0].mxu0 %v6753
      %v6958 = vpop.f32.mrb[0].mxu0
      %v6959 = vadd.f32 0.0, %v6958
      %v6960 = vpop.f32.mrb[0].mxu0
      %6961 = vmatprep.mubr.f32.mxu0 0.0
      %6962 = vmatmul.mubr.f32.gmra.mrb[0].mxu0 %v6756
      %v6963 = vpop.f32.mrb[0].mxu0
      %v6964 = vadd.f32 0.0, %v6963
      %v6965 = vpop.f32.mrb[0].mxu0
      %6966 = vmatprep.mubr.f32.mxu0 0.0
      %6967 = vmatmul.mubr.f32.gmra.mrb[0].mxu0 %v6759
      %v6968 = vpop.f32.mrb[0].mxu0
      %v6969 = vadd.f32 0.0, %v6968
      %v6970 = vpop.f32.mrb[0].mxu0
      %6971 = vmatprep.mubr.f32.mxu0 0.0
      %6972 = vmatmul.mubr.f32.gmra.mrb[0].mxu0 %v6762
      %v6973 = vpop.f32.mrb[0].mxu0
      %v6974 = vadd.f32 0.0, %v6973
      %v6975 = vpop.f32.mrb[0].mxu0
      %6976 = vmatprep.mubr.f32.mxu0 0.0
      %6977 = vmatmul.mubr.f32.gmra.mrb[0].mxu0 %v6765
      %v6978 = vpop.f32.mrb[0].mxu0
      %v6979 = vadd.f32 0.0, %v6978
      %v6980 = vpop.f32.mrb[0].mxu0
      %6981 = vmatprep.mubr.f32.mxu0 0.0
      %6982 = vmatmul.mubr.f32.gmra.mrb[0].mxu0 %v6768
      %v6983 = vpop.f32.mrb[0].mxu0
      %v6984 = vadd.f32 0.0, %v6983
      %v6985 = vpop.f32.mrb[0].mxu0
      %6986 = vmatprep.mubr.f32.mxu0 0.0
      %6987 = vmatmul.mubr.f32.gmra.mrb[0].mxu0 %v6771
      %v6988 = vpop.f32.mrb[0].mxu0
      %v6989 = vadd.f32 0.0, %v6988
      %v6990 = vpop.f32.mrb[0].mxu0
      %6991 = vmatprep.mubr.f32.mxu0 0.0
      %6992 = vmatmul.mubr.f32.gmra.mrb[0].mxu0 %v6774
      %v6993 = vpop.f32.mrb[0].mxu0
      %v6994 = vadd.f32 0.0, %v6993
      %v6995 = vpop.f32.mrb[0].mxu0
      %6996 = vmatprep.mubr.f32.mxu0 0.0
      %6997 = vmatmul.mubr.f32.gmra.mrb[0].mxu0 %v6777
      %v6998 = vpop.f32.mrb[0].mxu0
      %v6999 = vadd.f32 0.0, %v6998
      %v7000 = vpop.f32.mrb[0].mxu0
      %7001 = vmatprep.mubr.f32.mxu0 0.0
      %7002 = vmatmul.mubr.f32.gmra.mrb[0].mxu0 %v6780
      %v7003 = vpop.f32.mrb[0].mxu0
      %v7004 = vadd.f32 0.0, %v7003
      %v7005 = vpop.f32.mrb[0].mxu0
      %7006 = vdwg.mxu0
      %v7007 = vadd.f32 %v6622, %v6849
      %v7008 = vadd.f32 %v6623, %v6854
      %v7009 = vadd.f32 %v6624, %v6859
      %v7010 = vadd.f32 %v6625, %v6864
      %v7011 = vadd.f32 %v6626, %v6869
      %v7012 = vadd.f32 %v6627, %v6874
      %v7013 = vadd.f32 %v6628, %v6879
      %v7014 = vadd.f32 %v6629, %v6884
      %v7015 = vadd.f32 %v6630, %v6889
      %v7016 = vadd.f32 %v6631, %v6894
      %v7017 = vadd.f32 %v6632, %v6899
      %v7018 = vadd.f32 %v6633, %v6904
      %v7019 = vadd.f32 %v6634, %v6909
      %v7020 = vadd.f32 %v6635, %v6914
      %v7021 = vadd.f32 %v6636, %v6919
      %v7022 = vadd.f32 %v6637, %v6924
      %v7023 = vadd.f32 %v6638, %v6929
      %v7024 = vadd.f32 %v6639, %v6934
      %v7025 = vadd.f32 %v6640, %v6939
      %v7026 = vadd.f32 %v6641, %v6944
      %v7027 = vadd.f32 %v6642, %v6949
      %v7028 = vadd.f32 %v6643, %v6954
      %v7029 = vadd.f32 %v6644, %v6959
      %v7030 = vadd.f32 %v6645, %v6964
      %v7031 = vadd.f32 %v6646, %v6969
      %v7032 = vadd.f32 %v6647, %v6974
      %v7033 = vadd.f32 %v6648, %v6979
      %v7034 = vadd.f32 %v6649, %v6984
      %v7035 = vadd.f32 %v6650, %v6989
      %v7036 = vadd.f32 %v6651, %v6994
      %v7037 = vadd.f32 %v6652, %v6999
      %v7038 = vadd.f32 %v6653, %v7004
      %v7039 = vld [vmem:[%s6268 + $0x2] sm:$0xff]
      %v7040 = vld [vmem:[%s6268 + $0xa] sm:$0xff]
      %v7041 = vld [vmem:[%s6268 + $0x1a] sm:$0xff]
      %v7042 = vld [vmem:[%s6268 + $0x22] sm:$0xff]
      %v7043 = vld [vmem:[%s6268 + $0x32] sm:$0xff]
      %v7044 = vld [vmem:[%s6268 + $0x3a] sm:$0xff]
      %v7045 = vld [vmem:[%s6268 + $0x4a] sm:$0xff]
      %v7046 = vld [vmem:[%s6268 + $0x52] sm:$0xff]
      %v7047 = vld [vmem:[%s6268 + $0x62] sm:$0xff]
      %v7048 = vld [vmem:[%s6268 + $0x6a] sm:$0xff]
      %v7049 = vld [vmem:[%s6268 + $0x7a] sm:$0xff]
      %v7050 = vld [vmem:[%s6268 + $0x82] sm:$0xff]
      %v7051 = vld [vmem:[%s6268 + $0x92] sm:$0xff]
      %v7052 = vld [vmem:[%s6268 + $0x9a] sm:$0xff]
      %v7053 = vld [vmem:[%s6268 + $0xaa] sm:$0xff]
      %v7054 = vld [vmem:[%s6268 + $0xb2] sm:$0xff]
      %v7055 = vld [vmem:[%s6268 + $0xc2] sm:$0xff]
      %v7056 = vld [vmem:[%s6268 + $0xca] sm:$0xff]
      %v7057 = vld [vmem:[%s6268 + $0xda] sm:$0xff]
      %v7058 = vld [vmem:[%s6268 + $0xe2] sm:$0xff]
      %v7059 = vld [vmem:[%s6268 + $0xf2] sm:$0xff]
      %v7060 = vld [vmem:[%s6268 + $0xfa] sm:$0xff]
      %v7061 = vld [vmem:[%s6268 + $0x10a] sm:$0xff]
      %v7062 = vld [vmem:[%s6268 + $0x112] sm:$0xff]
      %v7063 = vld [vmem:[%s6268 + $0x122] sm:$0xff]
      %v7064 = vld [vmem:[%s6268 + $0x12a] sm:$0xff]
      %v7065 = vld [vmem:[%s6268 + $0x13a] sm:$0xff]
      %v7066 = vld [vmem:[%s6268 + $0x142] sm:$0xff]
      %v7067 = vld [vmem:[%s6268 + $0x152] sm:$0xff]
      %v7068 = vld [vmem:[%s6268 + $0x15a] sm:$0xff]
      %v7069 = vld [vmem:[%s6268 + $0x16a] sm:$0xff]
      %v7070 = vld [vmem:[%s6268 + $0x172] sm:$0xff]
      %v7072 = vsel %vm3924, %v7039, 0
      %v7075 = vsel %vm3924, %v7040, 0
      %v7078 = vsel %vm3924, %v7041, 0
      %v7081 = vsel %vm3924, %v7042, 0
      %v7084 = vsel %vm3924, %v7043, 0
      %v7087 = vsel %vm3924, %v7044, 0
      %v7090 = vsel %vm3924, %v7045, 0
      %v7093 = vsel %vm3924, %v7046, 0
      %v7096 = vsel %vm3924, %v7047, 0
      %v7099 = vsel %vm3924, %v7048, 0
      %v7102 = vsel %vm3924, %v7049, 0
      %v7105 = vsel %vm3924, %v7050, 0
      %v7108 = vsel %vm3924, %v7051, 0
      %v7111 = vsel %vm3924, %v7052, 0
      %v7114 = vsel %vm3924, %v7053, 0
      %v7117 = vsel %vm3924, %v7054, 0
      %v7120 = vsel %vm3924, %v7055, 0
      %v7123 = vsel %vm3924, %v7056, 0
      %v7126 = vsel %vm3924, %v7057, 0
      %v7129 = vsel %vm3924, %v7058, 0
      %v7132 = vsel %vm3924, %v7059, 0
      %v7135 = vsel %vm3924, %v7060, 0
      %v7138 = vsel %vm3924, %v7061, 0
      %v7141 = vsel %vm3924, %v7062, 0
      %v7144 = vsel %vm3924, %v7063, 0
      %v7147 = vsel %vm3924, %v7064, 0
      %v7150 = vsel %vm3924, %v7065, 0
      %v7153 = vsel %vm3924, %v7066, 0
      %v7156 = vsel %vm3924, %v7067, 0
      %v7159 = vsel %vm3924, %v7068, 0
      %v7162 = vsel %vm3924, %v7069, 0
      %v7165 = vsel %vm3924, %v7070, 0
      %7167 = vmatprep.subr.mxu0 0.0
      %7168 = vmatpush1.msra.mxu0 %v4021
      %7169 = vmatprep.subr.mxu0 0.0
      %7170 = vmatpush1.msra.mxu0 0.0
      %7171 = vmatprep.subr.mxu0 0.0
      %7172 = vmatpush1.msra.mxu0 0.0
      %7173 = vmatprep.subr.mxu0 0.0
      %7174 = vmatpush1.msra.mxu0 0.0
      %7175 = vmatprep.subr.mxu0 0.0
      %7176 = vmatpush1.msra.mxu0 0.0
      %7177 = vmatprep.subr.mxu0 0.0
      %7178 = vmatpush1.msra.mxu0 0.0
      %7179 = vmatprep.subr.mxu0 0.0
      %7180 = vmatpush1.msra.mxu0 0.0
      %7181 = vmatprep.subr.mxu0 0.0
      %7182 = vmatpush1.msra.mxu0 0.0
      %7183 = vmatprep.subr.mxu0 0.0
      %7184 = vmatpush1.msra.mxu0 0.0
      %7185 = vmatprep.subr.mxu0 0.0
      %7186 = vmatpush1.msra.mxu0 0.0
      %7187 = vmatprep.subr.mxu0 0.0
      %7188 = vmatpush1.msra.mxu0 0.0
      %7189 = vmatprep.subr.mxu0 0.0
      %7190 = vmatpush1.msra.mxu0 0.0
      %7191 = vmatprep.subr.mxu0 0.0
      %7192 = vmatpush1.msra.mxu0 0.0
      %7193 = vmatprep.subr.mxu0 0.0
      %7194 = vmatpush1.msra.mxu0 0.0
      %7195 = vmatprep.subr.mxu0 0.0
      %7196 = vmatpush1.msra.mxu0 0.0
      %7197 = vmatprep.subr.mxu0 0.0
      %7198 = vmatpush1.msra.mxu0 0.0
      %7199 = vmatprep.subr.mxu0 0.0
      %7200 = vmatpush1.msra.mxu0 0.0
      %7201 = vmatprep.subr.mxu0 0.0
      %7202 = vmatpush1.msra.mxu0 0.0
      %7203 = vmatprep.subr.mxu0 0.0
      %7204 = vmatpush1.msra.mxu0 0.0
      %7205 = vmatprep.subr.mxu0 0.0
      %7206 = vmatpush1.msra.mxu0 0.0
      %7207 = vmatprep.subr.mxu0 0.0
      %7208 = vmatpush1.msra.mxu0 0.0
      %7209 = vmatprep.subr.mxu0 0.0
      %7210 = vmatpush1.msra.mxu0 0.0
      %7211 = vmatprep.subr.mxu0 0.0
      %7212 = vmatpush1.msra.mxu0 0.0
      %7213 = vmatprep.subr.mxu0 0.0
      %7214 = vmatpush1.msra.mxu0 0.0
      %7215 = vmatprep.subr.mxu0 0.0
      %7216 = vmatpush1.msra.mxu0 0.0
      %7217 = vmatprep.subr.mxu0 0.0
      %7218 = vmatpush1.msra.mxu0 0.0
      %7219 = vmatprep.subr.mxu0 0.0
      %7220 = vmatpush1.msra.mxu0 0.0
      %7221 = vmatprep.subr.mxu0 0.0
      %7222 = vmatpush1.msra.mxu0 0.0
      %7223 = vmatprep.subr.mxu0 0.0
      %7224 = vmatpush1.msra.mxu0 0.0
      %7225 = vmatprep.subr.mxu0 0.0
      %7226 = vmatpush1.msra.mxu0 0.0
      %7227 = vmatprep.subr.mxu0 0.0
      %7228 = vmatpush1.msra.mxu0 0.0
      %7229 = vmatprep.subr.mxu0 0.0
      %7230 = vmatpush1.msra.mxu0 0.0
      %7231 = vmatprep.mubr.f32.mxu0 0.0
      %7232 = vmatmul.mubr.f32.gmra.mrb[0].mxu0 %v7072
      %v7233 = vpop.f32.mrb[0].mxu0
      %v7234 = vadd.f32 0.0, %v7233
      %v7235 = vpop.f32.mrb[0].mxu0
      %7236 = vmatprep.mubr.f32.mxu0 0.0
      %7237 = vmatmul.mubr.f32.gmra.mrb[0].mxu0 %v7075
      %v7238 = vpop.f32.mrb[0].mxu0
      %v7239 = vadd.f32 0.0, %v7238
      %v7240 = vpop.f32.mrb[0].mxu0
      %7241 = vmatprep.mubr.f32.mxu0 0.0
      %7242 = vmatmul.mubr.f32.gmra.mrb[0].mxu0 %v7078
      %v7243 = vpop.f32.mrb[0].mxu0
      %v7244 = vadd.f32 0.0, %v7243
      %v7245 = vpop.f32.mrb[0].mxu0
      %7246 = vmatprep.mubr.f32.mxu0 0.0
      %7247 = vmatmul.mubr.f32.gmra.mrb[0].mxu0 %v7081
      %v7248 = vpop.f32.mrb[0].mxu0
      %v7249 = vadd.f32 0.0, %v7248
      %v7250 = vpop.f32.mrb[0].mxu0
      %7251 = vmatprep.mubr.f32.mxu0 0.0
      %7252 = vmatmul.mubr.f32.gmra.mrb[0].mxu0 %v7084
      %v7253 = vpop.f32.mrb[0].mxu0
      %v7254 = vadd.f32 0.0, %v7253
      %v7255 = vpop.f32.mrb[0].mxu0
      %7256 = vmatprep.mubr.f32.mxu0 0.0
      %7257 = vmatmul.mubr.f32.gmra.mrb[0].mxu0 %v7087
      %v7258 = vpop.f32.mrb[0].mxu0
      %v7259 = vadd.f32 0.0, %v7258
      %v7260 = vpop.f32.mrb[0].mxu0
      %7261 = vmatprep.mubr.f32.mxu0 0.0
      %7262 = vmatmul.mubr.f32.gmra.mrb[0].mxu0 %v7090
      %v7263 = vpop.f32.mrb[0].mxu0
      %v7264 = vadd.f32 0.0, %v7263
      %v7265 = vpop.f32.mrb[0].mxu0
      %7266 = vmatprep.mubr.f32.mxu0 0.0
      %7267 = vmatmul.mubr.f32.gmra.mrb[0].mxu0 %v7093
      %v7268 = vpop.f32.mrb[0].mxu0
      %v7269 = vadd.f32 0.0, %v7268
      %v7270 = vpop.f32.mrb[0].mxu0
      %7271 = vmatprep.mubr.f32.mxu0 0.0
      %7272 = vmatmul.mubr.f32.gmra.mrb[0].mxu0 %v7096
      %v7273 = vpop.f32.mrb[0].mxu0
      %v7274 = vadd.f32 0.0, %v7273
      %v7275 = vpop.f32.mrb[0].mxu0
      %7276 = vmatprep.mubr.f32.mxu0 0.0
      %7277 = vmatmul.mubr.f32.gmra.mrb[0].mxu0 %v7099
      %v7278 = vpop.f32.mrb[0].mxu0
      %v7279 = vadd.f32 0.0, %v7278
      %v7280 = vpop.f32.mrb[0].mxu0
      %7281 = vmatprep.mubr.f32.mxu0 0.0
      %7282 = vmatmul.mubr.f32.gmra.mrb[0].mxu0 %v7102
      %v7283 = vpop.f32.mrb[0].mxu0
      %v7284 = vadd.f32 0.0, %v7283
      %v7285 = vpop.f32.mrb[0].mxu0
      %7286 = vmatprep.mubr.f32.mxu0 0.0
      %7287 = vmatmul.mubr.f32.gmra.mrb[0].mxu0 %v7105
      %v7288 = vpop.f32.mrb[0].mxu0
      %v7289 = vadd.f32 0.0, %v7288
      %v7290 = vpop.f32.mrb[0].mxu0
      %7291 = vmatprep.mubr.f32.mxu0 0.0
      %7292 = vmatmul.mubr.f32.gmra.mrb[0].mxu0 %v7108
      %v7293 = vpop.f32.mrb[0].mxu0
      %v7294 = vadd.f32 0.0, %v7293
      %v7295 = vpop.f32.mrb[0].mxu0
      %7296 = vmatprep.mubr.f32.mxu0 0.0
      %7297 = vmatmul.mubr.f32.gmra.mrb[0].mxu0 %v7111
      %v7298 = vpop.f32.mrb[0].mxu0
      %v7299 = vadd.f32 0.0, %v7298
      %v7300 = vpop.f32.mrb[0].mxu0
      %7301 = vmatprep.mubr.f32.mxu0 0.0
      %7302 = vmatmul.mubr.f32.gmra.mrb[0].mxu0 %v7114
      %v7303 = vpop.f32.mrb[0].mxu0
      %v7304 = vadd.f32 0.0, %v7303
      %v7305 = vpop.f32.mrb[0].mxu0
      %7306 = vmatprep.mubr.f32.mxu0 0.0
      %7307 = vmatmul.mubr.f32.gmra.mrb[0].mxu0 %v7117
      %v7308 = vpop.f32.mrb[0].mxu0
      %v7309 = vadd.f32 0.0, %v7308
      %v7310 = vpop.f32.mrb[0].mxu0
      %7311 = vmatprep.mubr.f32.mxu0 0.0
      %7312 = vmatmul.mubr.f32.gmra.mrb[0].mxu0 %v7120
      %v7313 = vpop.f32.mrb[0].mxu0
      %v7314 = vadd.f32 0.0, %v7313
      %v7315 = vpop.f32.mrb[0].mxu0
      %7316 = vmatprep.mubr.f32.mxu0 0.0
      %7317 = vmatmul.mubr.f32.gmra.mrb[0].mxu0 %v7123
      %v7318 = vpop.f32.mrb[0].mxu0
      %v7319 = vadd.f32 0.0, %v7318
      %v7320 = vpop.f32.mrb[0].mxu0
      %7321 = vmatprep.mubr.f32.mxu0 0.0
      %7322 = vmatmul.mubr.f32.gmra.mrb[0].mxu0 %v7126
      %v7323 = vpop.f32.mrb[0].mxu0
      %v7324 = vadd.f32 0.0, %v7323
      %v7325 = vpop.f32.mrb[0].mxu0
      %7326 = vmatprep.mubr.f32.mxu0 0.0
      %7327 = vmatmul.mubr.f32.gmra.mrb[0].mxu0 %v7129
      %v7328 = vpop.f32.mrb[0].mxu0
      %v7329 = vadd.f32 0.0, %v7328
      %v7330 = vpop.f32.mrb[0].mxu0
      %7331 = vmatprep.mubr.f32.mxu0 0.0
      %7332 = vmatmul.mubr.f32.gmra.mrb[0].mxu0 %v7132
      %v7333 = vpop.f32.mrb[0].mxu0
      %v7334 = vadd.f32 0.0, %v7333
      %v7335 = vpop.f32.mrb[0].mxu0
      %7336 = vmatprep.mubr.f32.mxu0 0.0
      %7337 = vmatmul.mubr.f32.gmra.mrb[0].mxu0 %v7135
      %v7338 = vpop.f32.mrb[0].mxu0
      %v7339 = vadd.f32 0.0, %v7338
      %v7340 = vpop.f32.mrb[0].mxu0
      %7341 = vmatprep.mubr.f32.mxu0 0.0
      %7342 = vmatmul.mubr.f32.gmra.mrb[0].mxu0 %v7138
      %v7343 = vpop.f32.mrb[0].mxu0
      %v7344 = vadd.f32 0.0, %v7343
      %v7345 = vpop.f32.mrb[0].mxu0
      %7346 = vmatprep.mubr.f32.mxu0 0.0
      %7347 = vmatmul.mubr.f32.gmra.mrb[0].mxu0 %v7141
      %v7348 = vpop.f32.mrb[0].mxu0
      %v7349 = vadd.f32 0.0, %v7348
      %v7350 = vpop.f32.mrb[0].mxu0
      %7351 = vmatprep.mubr.f32.mxu0 0.0
      %7352 = vmatmul.mubr.f32.gmra.mrb[0].mxu0 %v7144
      %v7353 = vpop.f32.mrb[0].mxu0
      %v7354 = vadd.f32 0.0, %v7353
      %v7355 = vpop.f32.mrb[0].mxu0
      %7356 = vmatprep.mubr.f32.mxu0 0.0
      %7357 = vmatmul.mubr.f32.gmra.mrb[0].mxu0 %v7147
      %v7358 = vpop.f32.mrb[0].mxu0
      %v7359 = vadd.f32 0.0, %v7358
      %v7360 = vpop.f32.mrb[0].mxu0
      %7361 = vmatprep.mubr.f32.mxu0 0.0
      %7362 = vmatmul.mubr.f32.gmra.mrb[0].mxu0 %v7150
      %v7363 = vpop.f32.mrb[0].mxu0
      %v7364 = vadd.f32 0.0, %v7363
      %v7365 = vpop.f32.mrb[0].mxu0
      %7366 = vmatprep.mubr.f32.mxu0 0.0
      %7367 = vmatmul.mubr.f32.gmra.mrb[0].mxu0 %v7153
      %v7368 = vpop.f32.mrb[0].mxu0
      %v7369 = vadd.f32 0.0, %v7368
      %v7370 = vpop.f32.mrb[0].mxu0
      %7371 = vmatprep.mubr.f32.mxu0 0.0
      %7372 = vmatmul.mubr.f32.gmra.mrb[0].mxu0 %v7156
      %v7373 = vpop.f32.mrb[0].mxu0
      %v7374 = vadd.f32 0.0, %v7373
      %v7375 = vpop.f32.mrb[0].mxu0
      %7376 = vmatprep.mubr.f32.mxu0 0.0
      %7377 = vmatmul.mubr.f32.gmra.mrb[0].mxu0 %v7159
      %v7378 = vpop.f32.mrb[0].mxu0
      %v7379 = vadd.f32 0.0, %v7378
      %v7380 = vpop.f32.mrb[0].mxu0
      %7381 = vmatprep.mubr.f32.mxu0 0.0
      %7382 = vmatmul.mubr.f32.gmra.mrb[0].mxu0 %v7162
      %v7383 = vpop.f32.mrb[0].mxu0
      %v7384 = vadd.f32 0.0, %v7383
      %v7385 = vpop.f32.mrb[0].mxu0
      %7386 = vmatprep.mubr.f32.mxu0 0.0
      %7387 = vmatmul.mubr.f32.gmra.mrb[0].mxu0 %v7165
      %v7388 = vpop.f32.mrb[0].mxu0
      %v7389 = vadd.f32 0.0, %v7388
      %v7390 = vpop.f32.mrb[0].mxu0
      %7391 = vdwg.mxu0
      %v7392 = vadd.f32 %v7007, %v7234
      %v7393 = vadd.f32 %v7008, %v7239
      %v7394 = vadd.f32 %v7009, %v7244
      %v7395 = vadd.f32 %v7010, %v7249
      %v7396 = vadd.f32 %v7011, %v7254
      %v7397 = vadd.f32 %v7012, %v7259
      %v7398 = vadd.f32 %v7013, %v7264
      %v7399 = vadd.f32 %v7014, %v7269
      %v7400 = vadd.f32 %v7015, %v7274
      %v7401 = vadd.f32 %v7016, %v7279
      %v7402 = vadd.f32 %v7017, %v7284
      %v7403 = vadd.f32 %v7018, %v7289
      %v7404 = vadd.f32 %v7019, %v7294
      %v7405 = vadd.f32 %v7020, %v7299
      %v7406 = vadd.f32 %v7021, %v7304
      %v7407 = vadd.f32 %v7022, %v7309
      %v7408 = vadd.f32 %v7023, %v7314
      %v7409 = vadd.f32 %v7024, %v7319
      %v7410 = vadd.f32 %v7025, %v7324
      %v7411 = vadd.f32 %v7026, %v7329
      %v7412 = vadd.f32 %v7027, %v7334
      %v7413 = vadd.f32 %v7028, %v7339
      %v7414 = vadd.f32 %v7029, %v7344
      %v7415 = vadd.f32 %v7030, %v7349
      %v7416 = vadd.f32 %v7031, %v7354
      %v7417 = vadd.f32 %v7032, %v7359
      %v7418 = vadd.f32 %v7033, %v7364
      %v7419 = vadd.f32 %v7034, %v7369
      %v7420 = vadd.f32 %v7035, %v7374
      %v7421 = vadd.f32 %v7036, %v7379
      %v7422 = vadd.f32 %v7037, %v7384
      %v7423 = vadd.f32 %v7038, %v7389
      %v7424 = vld [vmem:[%s4] sm:$0x1]
      %v7426 = vlaneseq
      %v7427 = vshrl.u32 %v7426, 7
      %v7428 = vsub.s32 0, %v7427
      %v7429 = vrot.slane %v7424, %v7428
      %v7431 = vadd.f32 %v7392, %v7429
      %v7432 = vadd.f32 %v7393, %v7429
      %v7433 = vadd.f32 %v7394, %v7429
      %v7434 = vadd.f32 %v7395, %v7429
      %v7435 = vadd.f32 %v7396, %v7429
      %v7436 = vadd.f32 %v7397, %v7429
      %v7437 = vadd.f32 %v7398, %v7429
      %v7438 = vadd.f32 %v7399, %v7429
      %v7439 = vadd.f32 %v7400, %v7429
      %v7440 = vadd.f32 %v7401, %v7429
      %v7441 = vadd.f32 %v7402, %v7429
      %v7442 = vadd.f32 %v7403, %v7429
      %v7443 = vadd.f32 %v7404, %v7429
      %v7444 = vadd.f32 %v7405, %v7429
      %v7445 = vadd.f32 %v7406, %v7429
      %v7446 = vadd.f32 %v7407, %v7429
      %v7447 = vadd.f32 %v7408, %v7429
      %v7448 = vadd.f32 %v7409, %v7429
      %v7449 = vadd.f32 %v7410, %v7429
      %v7450 = vadd.f32 %v7411, %v7429
      %v7451 = vadd.f32 %v7412, %v7429
      %v7452 = vadd.f32 %v7413, %v7429
      %v7453 = vadd.f32 %v7414, %v7429
      %v7454 = vadd.f32 %v7415, %v7429
      %v7455 = vadd.f32 %v7416, %v7429
      %v7456 = vadd.f32 %v7417, %v7429
      %v7457 = vadd.f32 %v7418, %v7429
      %v7458 = vadd.f32 %v7419, %v7429
      %v7459 = vadd.f32 %v7420, %v7429
      %v7460 = vadd.f32 %v7421, %v7429
      %v7461 = vadd.f32 %v7422, %v7429
      %v7462 = vadd.f32 %v7423, %v7429
      %v7463 = vmax.f32 %v7431, 0.0
      %v7464 = vmax.f32 %v7432, 0.0
      %v7465 = vmax.f32 %v7433, 0.0
      %v7466 = vmax.f32 %v7434, 0.0
      %v7467 = vmax.f32 %v7435, 0.0
      %v7468 = vmax.f32 %v7436, 0.0
      %v7469 = vmax.f32 %v7437, 0.0
      %v7470 = vmax.f32 %v7438, 0.0
      %v7471 = vmax.f32 %v7439, 0.0
      %v7472 = vmax.f32 %v7440, 0.0
      %v7473 = vmax.f32 %v7441, 0.0
      %v7474 = vmax.f32 %v7442, 0.0
      %v7475 = vmax.f32 %v7443, 0.0
      %v7476 = vmax.f32 %v7444, 0.0
      %v7477 = vmax.f32 %v7445, 0.0
      %v7478 = vmax.f32 %v7446, 0.0
      %v7479 = vmax.f32 %v7447, 0.0
      %v7480 = vmax.f32 %v7448, 0.0
      %v7481 = vmax.f32 %v7449, 0.0
      %v7482 = vmax.f32 %v7450, 0.0
      %v7483 = vmax.f32 %v7451, 0.0
      %v7484 = vmax.f32 %v7452, 0.0
      %v7485 = vmax.f32 %v7453, 0.0
      %v7486 = vmax.f32 %v7454, 0.0
      %v7487 = vmax.f32 %v7455, 0.0
      %v7488 = vmax.f32 %v7456, 0.0
      %v7489 = vmax.f32 %v7457, 0.0
      %v7490 = vmax.f32 %v7458, 0.0
      %v7491 = vmax.f32 %v7459, 0.0
      %v7492 = vmax.f32 %v7460, 0.0
      %v7493 = vmax.f32 %v7461, 0.0
      %v7494 = vmax.f32 %v7462, 0.0
      %v7495 = vmin.f32 %v7463, 6.0
      %v7496 = vmin.f32 %v7464, 6.0
      %v7497 = vmin.f32 %v7465, 6.0
      %v7498 = vmin.f32 %v7466, 6.0
      %v7499 = vmin.f32 %v7467, 6.0
      %v7500 = vmin.f32 %v7468, 6.0
      %v7501 = vmin.f32 %v7469, 6.0
      %v7502 = vmin.f32 %v7470, 6.0
      %v7503 = vmin.f32 %v7471, 6.0
      %v7504 = vmin.f32 %v7472, 6.0
      %v7505 = vmin.f32 %v7473, 6.0
      %v7506 = vmin.f32 %v7474, 6.0
      %v7507 = vmin.f32 %v7475, 6.0
      %v7508 = vmin.f32 %v7476, 6.0
      %v7509 = vmin.f32 %v7477, 6.0
      %v7510 = vmin.f32 %v7478, 6.0
      %v7511 = vmin.f32 %v7479, 6.0
      %v7512 = vmin.f32 %v7480, 6.0
      %v7513 = vmin.f32 %v7481, 6.0
      %v7514 = vmin.f32 %v7482, 6.0
      %v7515 = vmin.f32 %v7483, 6.0
      %v7516 = vmin.f32 %v7484, 6.0
      %v7517 = vmin.f32 %v7485, 6.0
      %v7518 = vmin.f32 %v7486, 6.0
      %v7519 = vmin.f32 %v7487, 6.0
      %v7520 = vmin.f32 %v7488, 6.0
      %v7521 = vmin.f32 %v7489, 6.0
      %v7522 = vmin.f32 %v7490, 6.0
      %v7523 = vmin.f32 %v7491, 6.0
      %v7524 = vmin.f32 %v7492, 6.0
      %v7525 = vmin.f32 %v7493, 6.0
      %v7526 = vmin.f32 %v7494, 6.0
      %7527 = vxpose.xlu0.b32.start [1/16] %v7495, 128
      %7528 = vxpose.xlu0.b32.cont [2/16] %v7496, 128
      %7529 = vxpose.xlu0.b32.cont [3/16] %v7497, 128
      %7530 = vxpose.xlu0.b32.cont [4/16] %v7498, 128
      %7531 = vxpose.xlu0.b32.cont [5/16] %v7499, 128
      %7532 = vxpose.xlu0.b32.cont [6/16] %v7500, 128
      %7533 = vxpose.xlu0.b32.cont [7/16] %v7501, 128
      %7534 = vxpose.xlu0.b32.cont [8/16] %v7502, 128
      %7535 = vxpose.xlu0.b32.cont [9/16] %v7503, 128
      %7536 = vxpose.xlu0.b32.cont [10/16] %v7504, 128
      %7537 = vxpose.xlu0.b32.cont [11/16] %v7505, 128
      %7538 = vxpose.xlu0.b32.cont [12/16] %v7506, 128
      %7539 = vxpose.xlu0.b32.cont [13/16] %v7507, 128
      %7540 = vxpose.xlu0.b32.cont [14/16] %v7508, 128
      %7541 = vxpose.xlu0.b32.cont [15/16] %v7509, 128
      %7542 = vxpose.xlu0.b32.end [16/16] %v7510, 128
      %v7543 = vpop.trf.xlu0
      %v7544 = vpop.trf.xlu0
      %v7545 = vpop.trf.xlu0
      %v7546 = vpop.trf.xlu0
      %v7547 = vpop.trf.xlu0
      %v7548 = vpop.trf.xlu0
      %v7549 = vpop.trf.xlu0
      %v7550 = vpop.trf.xlu0
      %v7551 = vpop.trf.xlu0
      %v7552 = vpop.trf.xlu0
      %v7553 = vpop.trf.xlu0
      %v7554 = vpop.trf.xlu0
      %v7555 = vpop.trf.xlu0
      %v7556 = vpop.trf.xlu0
      %v7557 = vpop.trf.xlu0
      %v7558 = vpop.trf.xlu0
      %7559 = vxpose.xlu0.b32.start [1/16] %v7511, 128
      %7560 = vxpose.xlu0.b32.cont [2/16] %v7512, 128
      %7561 = vxpose.xlu0.b32.cont [3/16] %v7513, 128
      %7562 = vxpose.xlu0.b32.cont [4/16] %v7514, 128
      %7563 = vxpose.xlu0.b32.cont [5/16] %v7515, 128
      %7564 = vxpose.xlu0.b32.cont [6/16] %v7516, 128
      %7565 = vxpose.xlu0.b32.cont [7/16] %v7517, 128
      %7566 = vxpose.xlu0.b32.cont [8/16] %v7518, 128
      %7567 = vxpose.xlu0.b32.cont [9/16] %v7519, 128
      %7568 = vxpose.xlu0.b32.cont [10/16] %v7520, 128
      %7569 = vxpose.xlu0.b32.cont [11/16] %v7521, 128
      %7570 = vxpose.xlu0.b32.cont [12/16] %v7522, 128
      %7571 = vxpose.xlu0.b32.cont [13/16] %v7523, 128
      %7572 = vxpose.xlu0.b32.cont [14/16] %v7524, 128
      %7573 = vxpose.xlu0.b32.cont [15/16] %v7525, 128
      %7574 = vxpose.xlu0.b32.end [16/16] %v7526, 128
      %v7575 = vpop.trf.xlu0
      %v7576 = vpop.trf.xlu0
      %v7577 = vpop.trf.xlu0
      %v7578 = vpop.trf.xlu0
      %v7579 = vpop.trf.xlu0
      %v7580 = vpop.trf.xlu0
      %v7581 = vpop.trf.xlu0
      %v7582 = vpop.trf.xlu0
      %v7583 = vpop.trf.xlu0
      %v7584 = vpop.trf.xlu0
      %v7585 = vpop.trf.xlu0
      %v7586 = vpop.trf.xlu0
      %v7587 = vpop.trf.xlu0
      %v7588 = vpop.trf.xlu0
      %v7589 = vpop.trf.xlu0
      %v7590 = vpop.trf.xlu0
      %7591 = vst [vmem:[%s224] sm:$0xff] %v7543
      %7592 = vst [vmem:[%s224 + $0x8] sm:$0xff] %v7575
      %p7593 = scmp.lt.s32.totalorder %s16, 1
      %s7594 = scalar_select %p7593, %s16, 1
      %s7595 = smul.addr %s7594, 2
      %s7596 = smul.addr %s7595, 8
      %s7597 = scalar_lea.vmem %s5, %s7596
      // Predicated region
      $region41: #{double_conv.1} parent=39 // pred_check
        %p7598 = pneg %p144
      $region42: #{double_conv.1} parent=39 // pred_check_branch
        %7600 = sbr.rel (%p7598) target = $region44
      $region43: #{double_conv.1} parent=39 // pred_region
        _
      $region44: #{double_conv.1} parent=39 // pred_fallthru
        _
    $region40: #{double_conv.1} parent=5 // pred_fallthru
      _
    %p7601 = scmp.le.s32.totalorder 2, %s11
    // Predicated region
    $region45: #{double_conv.1} parent=5 // pred_check
      %p7602 = pneg %p7601
    $region46: #{double_conv.1} parent=5 // pred_check_branch
      %7604 = sbr.rel (%p7602) target = $region48
    $region47: #{double_conv.1} parent=5 // pred_region
      %s7605 = ssub.s32 %s11, 2
      // Predicated region
      $region49: #{double_conv.1} parent=47 // pred_check
        %p7606 = pneg %p150
      $region50: #{double_conv.1} parent=47 // pred_check_branch
        %7608 = sbr.rel (%p7606) target = $region52
      $region51: #{double_conv.1} parent=47 // pred_region
        %p7609 = scmp.lt.s32.totalorder %s17, 1
        %s7610 = scalar_select %p7609, %s17, 1
        %s7611 = smul.addr %s7610, 2
        %s7612 = smul.addr %s7611, 8
        %s7613 = scalar_lea.vmem %s5, %s7612
      $region52: #{double_conv.1} parent=47 // pred_fallthru
        _
    $region48: #{double_conv.1} parent=5 // pred_fallthru
      _
  $region6: #{double_conv.1} parent=0 // loop_footer
    %s15 = sadd.s32 1, %s11
  $region7: #{double_conv.1} parent=0 // loop_footer_branch
    %10 = sbr.rel target = $region3
  $region8: #{double_conv.1} parent=0 // loop_exit
    _

</llo_original>
